<compile_context>
chip_gen: v5e
topology: v5e:2x2
jax: 0.10.0
libtpu: 0.0.40
codegen_flags: <defaults>
</compile_context>

<pallas_src>
import functools

import numpy as np
import jax
import jax.numpy as jnp
from jax import lax
from jax.experimental import pallas as pl
from jax.experimental.pallas import tpu as pltpu

KSIZE = 3         # conv1 / conv2 kernel size
SP_K = 7          # CBAM spatial-gate kernel size
PAD = SP_K // 2   # unified zero-halo width (covers both 3x3 and 7x7 convs)
CA_RED = 8        # reduction ratio in CALayer / PALayer (channel // 8)
CBAM_RED = 8      # reduction ratio in CBAM channel MLP
NEG_INF = -1e30


def _shift_lanes(a, off):
    """b[:, i] = a[:, i + off], zero where i + off falls outside the array."""
    if off == 0:
        return a
    rows = a.shape[0]
    z = jnp.zeros((rows, abs(off)), jnp.float32)
    if off > 0:
        return jnp.concatenate([a[:, off:], z], axis=1)
    return jnp.concatenate([z, a[:, :off]], axis=1)


def block_kernel(x_ref, mask_ref,
                 w1_ref, b1_ref, w2_ref, b2_ref,
                 ca_w1_ref, ca_b1_ref, ca_w2_ref, ca_b2_ref,
                 pa_w1_ref, pa_b1_ref, pa_w2_ref, pa_b2_ref,
                 cm_w1_ref, cm_b1_ref, cm_w2_ref, cm_b2_ref,
                 sp_w_ref, sp_b_ref,
                 out_ref,
                 p_scr,
                 *, H, W, Wp):
    C = out_ref.shape[1]
    S = out_ref.shape[2]

    ax = x_ref[0]             # (C, S) zero-halo padded input
    mask = mask_ref[...]      # (1, S): 1.0 at interior, 0.0 at halo

    def conv3x3(a, w_ref, b_ref):
        # im2col: 9 lane-shifted copies of `a` written into the (9C, S)
        # scratch at 8-aligned sublane offsets, then ONE K=9C matmul.
        for dy in range(KSIZE):
            for dx in range(KSIZE):
                t = dy * KSIZE + dx
                off = (dy - 1) * Wp + (dx - 1)
                p_scr[t * C:(t + 1) * C, :] = _shift_lanes(a, off)
        return jnp.dot(w_ref[...], p_scr[...],
                       preferred_element_type=jnp.float32) + b_ref[...]

    # ---- res = relu(conv1(x)) + x   (halo re-zeroed before conv2) ----
    t1 = conv3x3(ax, w1_ref, b1_ref)
    res = (jnp.maximum(t1, 0.0) + ax) * mask

    # ---- temp = conv2(res) ----
    temp = conv3x3(res, w2_ref, b2_ref)           # (C, S); halo is garbage
    tm = temp * mask                              # halo-zeroed copy

    # ---- shared channel statistics over the interior (CA + CBAM) ----
    inv_hw = 1.0 / float(H * W)
    avg = jnp.sum(tm, axis=1, keepdims=True) * inv_hw                    # (C,1)
    mx = jnp.max(jnp.where(mask > 0.0, temp, NEG_INF),
                 axis=1, keepdims=True)                                  # (C,1)

    # ---- CALayer channel gate ----
    h_ca = jnp.maximum(
        jnp.dot(ca_w1_ref[...], avg, preferred_element_type=jnp.float32)
        + ca_b1_ref[...], 0.0)
    ca = jax.nn.sigmoid(
        jnp.dot(ca_w2_ref[...], h_ca, preferred_element_type=jnp.float32)
        + ca_b2_ref[...])                                                # (C,1)

    # ---- CBAM channel gate: shared MLP over stacked [avg | max] ----
    v = jnp.concatenate([avg, mx], axis=1)                               # (C,2)
    h_cm = jnp.maximum(
        jnp.dot(cm_w1_ref[...], v, preferred_element_type=jnp.float32)
        + cm_b1_ref[...], 0.0)                                           # (Cm,2)
    z = (jnp.dot(cm_w2_ref[...], h_cm, preferred_element_type=jnp.float32)
         + cm_b2_ref[...])                                               # (C,2)
    cg = jax.nn.sigmoid(z[:, 0:1] + z[:, 1:2])                           # (C,1)

    # ---- PALayer pixel gate (its input is temp * ca) ----
    res1_in = temp * ca                                                  # (C,S)
    ph = jnp.maximum(
        jnp.dot(pa_w1_ref[...], res1_in, preferred_element_type=jnp.float32)
        + pa_b1_ref[...], 0.0)                                           # (Cr,S)
    pa = jax.nn.sigmoid(
        jnp.dot(pa_w2_ref[...], ph, preferred_element_type=jnp.float32)
        + pa_b2_ref[...])                                                # (1,S)

    # ---- CBAM spatial gate: 7x7 conv over [max_c, mean_c] on the VPU ----
    tcg = tm * cg                                  # (C,S); zero halo == zero pad
    cmax = jnp.max(tcg, axis=0, keepdims=True)     # (1,S)
    cmean = jnp.mean(tcg, axis=0, keepdims=True)   # (1,S)
    sg_lin = jnp.zeros((1, S), jnp.float32)
    for dy in range(SP_K):
        for dx in range(SP_K):
            t = dy * SP_K + dx
            off = (dy - PAD) * Wp + (dx - PAD)
            sg_lin = (sg_lin
                      + _shift_lanes(cmax, off) * sp_w_ref[2 * t]
                      + _shift_lanes(cmean, off) * sp_w_ref[2 * t + 1])
    sg = jax.nn.sigmoid(sg_lin + sp_b_ref[0])                            # (1,S)

    # ---- fused combine: res1 * res2 + x = temp^2 * (ca*cg) * (pa*sg) + x ----
    out_ref[0] = (temp * temp) * (ca * cg) * (pa * sg) + ax


def block_forward(x_nchw, params):
    """x_nchw: (N, C, H, W) float32, matching the PyTorch module's input."""
    N, C, H, W = x_nchw.shape
    Hp, Wp = H + 2 * PAD, W + 2 * PAD
    S = Hp * Wp
    Cr = C // CA_RED
    Cm = C // CBAM_RED
    kk = KSIZE * KSIZE

    # channel-major, padded-flat-spatial input: (N, C, S) with a zero halo.
    x = x_nchw.astype(jnp.float32)
    xpf = jnp.pad(x, ((0, 0), (0, 0), (PAD, PAD), (PAD, PAD))).reshape(N, C, S)

    # interior mask (1, S)
    m = np.zeros((Hp, Wp), np.float32)
    m[PAD:PAD + H, PAD:PAD + W] = 1.0
    mask = jnp.asarray(m.reshape(1, S))

    # weights in channel-major / weight-stationary form.
    w1m = jnp.transpose(params['w1'], (2, 0, 1)).reshape(C, kk * C)
    w2m = jnp.transpose(params['w2'], (2, 0, 1)).reshape(C, kk * C)
    b1 = params['b1'].reshape(C, 1)
    b2 = params['b2'].reshape(C, 1)
    ca_w1t = params['ca_w1'].T
    ca_b1t = params['ca_b1'].reshape(Cr, 1)
    ca_w2t = params['ca_w2'].T
    ca_b2t = params['ca_b2'].reshape(C, 1)
    pa_w1t = params['pa_w1'].T
    pa_b1t = params['pa_b1'].reshape(Cr, 1)
    pa_w2t = params['pa_w2'].T
    pa_b2t = params['pa_b2'].reshape(1, 1)
    cm_w1t = params['cm_w1'].T
    cm_b1t = params['cm_b1'].reshape(Cm, 1)
    cm_w2t = params['cm_w2'].T
    cm_b2t = params['cm_b2'].reshape(C, 1)
    sp_w_flat = params['sp_w'].reshape(SP_K * SP_K * 2)
    sp_b_flat = params['sp_b'].reshape(1)

    const = lambda n: (0, 0)
    out_flat = pl.pallas_call(
        functools.partial(block_kernel, H=H, W=W, Wp=Wp),
        out_shape=jax.ShapeDtypeStruct((N, C, S), jnp.float32),
        grid_spec=pltpu.PrefetchScalarGridSpec(
            num_scalar_prefetch=0,
            grid=(N,),
            in_specs=[
                pl.BlockSpec((1, C, S), lambda n: (n, 0, 0)),
                pl.BlockSpec((1, S), const),
                pl.BlockSpec((C, kk * C), const),
                pl.BlockSpec((C, 1), const),
                pl.BlockSpec((C, kk * C), const),
                pl.BlockSpec((C, 1), const),
                pl.BlockSpec((Cr, C), const),
                pl.BlockSpec((Cr, 1), const),
                pl.BlockSpec((C, Cr), const),
                pl.BlockSpec((C, 1), const),
                pl.BlockSpec((Cr, C), const),
                pl.BlockSpec((Cr, 1), const),
                pl.BlockSpec((1, Cr), const),
                pl.BlockSpec((1, 1), const),
                pl.BlockSpec((Cm, C), const),
                pl.BlockSpec((Cm, 1), const),
                pl.BlockSpec((C, Cm), const),
                pl.BlockSpec((C, 1), const),
                pl.BlockSpec(memory_space=pltpu.MemorySpace.SMEM),
                pl.BlockSpec(memory_space=pltpu.MemorySpace.SMEM),
            ],
            out_specs=pl.BlockSpec((1, C, S), lambda n: (n, 0, 0)),
            scratch_shapes=[pltpu.VMEM((kk * C, S), jnp.float32)],
        ),
        compiler_params=pltpu.CompilerParams(
            dimension_semantics=("parallel",)),
    )(xpf, mask, w1m, b1, w2m, b2,
      ca_w1t, ca_b1t, ca_w2t, ca_b2t,
      pa_w1t, pa_b1t, pa_w2t, pa_b2t,
      cm_w1t, cm_b1t, cm_w2t, cm_b2t,
      sp_w_flat, sp_b_flat)

    out = out_flat.reshape(N, C, Hp, Wp)[:, :, PAD:PAD + H, PAD:PAD + W]
    return out


# ------------------------- pure-JAX reference ------------------------------
def _conv2d_ref(x, w, b, k):
    wk = w.reshape(k, k, w.shape[1], w.shape[2])
    out = lax.conv_general_dilated(x, wk, (1, 1), 'SAME',
                                   dimension_numbers=('NHWC', 'HWIO', 'NHWC'))
    return out + b.reshape(1, 1, 1, -1)


def block_ref(x, p):
    res = jax.nn.relu(_conv2d_ref(x, p['w1'], p['b1'], KSIZE)) + x
    temp = _conv2d_ref(res, p['w2'], p['b2'], KSIZE)
    # CALayer
    y = jnp.mean(temp, axis=(1, 2), keepdims=True)
    h = jax.nn.relu(jnp.einsum('nijc,cd->nijd', y, p['ca_w1']) + p['ca_b1'])
    ca = jax.nn.sigmoid(jnp.einsum('nijd,dc->nijc', h, p['ca_w2']) + p['ca_b2'])
    res1 = temp * ca
    # PALayer
    ph = jax.nn.relu(jnp.einsum('nhwc,cd->nhwd', res1, p['pa_w1']) + p['pa_b1'])
    pa = jax.nn.sigmoid(jnp.einsum('nhwd,de->nhwe', ph, p['pa_w2']) + p['pa_b2'])
    res1 = res1 * pa
    # CBAM channel gate
    avg = jnp.mean(temp, axis=(1, 2))
    mx = jnp.max(temp, axis=(1, 2))

    def mlp(v):
        hh = jax.nn.relu(v @ p['cm_w1'] + p['cm_b1'])
        return hh @ p['cm_w2'] + p['cm_b2']

    cg = jax.nn.sigmoid(mlp(avg) + mlp(mx))[:, None, None, :]
    tcg = temp * cg
    comp = jnp.concatenate([jnp.max(tcg, axis=3, keepdims=True),
                            jnp.mean(tcg, axis=3, keepdims=True)], axis=3)
    sg = jax.nn.sigmoid(_conv2d_ref(comp, p['sp_w'], p['sp_b'], SP_K))
    res2 = tcg * sg
    return res1 * res2 + x


# ------------------------- deterministic params ----------------------------
def init_params(key, dim):
    Cr = dim // CA_RED
    Cm = dim // CBAM_RED
    ks = jax.random.split(key, 18)

    def w(k_, shape, scale=0.1):
        return (scale * jax.random.normal(k_, shape)).astype(jnp.float32)

    return dict(
        w1=w(ks[0], (KSIZE * KSIZE, dim, dim)), b1=w(ks[1], (1, dim), 0.05),
        w2=w(ks[2], (KSIZE * KSIZE, dim, dim)), b2=w(ks[3], (1, dim), 0.05),
        ca_w1=w(ks[4], (dim, Cr)), ca_b1=w(ks[5], (1, Cr), 0.05),
        ca_w2=w(ks[6], (Cr, dim)), ca_b2=w(ks[7], (1, dim), 0.05),
        pa_w1=w(ks[8], (dim, Cr)), pa_b1=w(ks[9], (1, Cr), 0.05),
        pa_w2=w(ks[10], (Cr, 1)), pa_b2=w(ks[11], (1, 1), 0.05),
        cm_w1=w(ks[12], (dim, Cm)), cm_b1=w(ks[13], (1, Cm), 0.05),
        cm_w2=w(ks[14], (Cm, dim)), cm_b2=w(ks[15], (1, dim), 0.05),
        sp_w=w(ks[16], (SP_K * SP_K, 2, 1)), sp_b=w(ks[17], (1, 1), 0.05),
    )


if __name__ == "__main__":
    key = jax.random.PRNGKey(0)
    kx, kp = jax.random.split(key)
    N, C, H, W = 2, 16, 16, 16           # dim=16 so dim//8 = 2
    x = jax.random.normal(kx, (N, C, H, W), jnp.float32)
    params = init_params(kp, C)

    out = block_forward(x, params)
    out = jax.block_until_ready(out)
    assert out.shape == (N, C, H, W)

    ref = jnp.transpose(block_ref(jnp.transpose(x, (0, 2, 3, 1)), params),
                        (0, 3, 1, 2))
    np.testing.assert_allclose(np.asarray(out), np.asarray(ref),
                               rtol=1e-4, atol=1e-4)
    print("KERNEL_OK")
</pallas_src>

<mosaic_0001>
module attributes {stable_mosaic.version = 11 : i64} {
  func.func @block_kernel(%arg0: i32, %arg1: memref<1x16x484xf32, #tpu.memory_space<vmem>>, %arg2: memref<1x484xf32, #tpu.memory_space<vmem>>, %arg3: memref<16x144xf32, #tpu.memory_space<vmem>>, %arg4: memref<16x1xf32, #tpu.memory_space<vmem>>, %arg5: memref<16x144xf32, #tpu.memory_space<vmem>>, %arg6: memref<16x1xf32, #tpu.memory_space<vmem>>, %arg7: memref<2x16xf32, #tpu.memory_space<vmem>>, %arg8: memref<2x1xf32, #tpu.memory_space<vmem>>, %arg9: memref<16x2xf32, #tpu.memory_space<vmem>>, %arg10: memref<16x1xf32, #tpu.memory_space<vmem>>, %arg11: memref<2x16xf32, #tpu.memory_space<vmem>>, %arg12: memref<2x1xf32, #tpu.memory_space<vmem>>, %arg13: memref<1x2xf32, #tpu.memory_space<vmem>>, %arg14: memref<1x1xf32, #tpu.memory_space<vmem>>, %arg15: memref<2x16xf32, #tpu.memory_space<vmem>>, %arg16: memref<2x1xf32, #tpu.memory_space<vmem>>, %arg17: memref<16x2xf32, #tpu.memory_space<vmem>>, %arg18: memref<16x1xf32, #tpu.memory_space<vmem>>, %arg19: memref<98xf32, #tpu.memory_space<smem>>, %arg20: memref<1xf32, #tpu.memory_space<smem>>, %arg21: memref<1x16x484xf32, #tpu.memory_space<vmem>>, %arg22: memref<144x484xf32, #tpu.memory_space<vmem>>) attributes {dimension_semantics = [#tpu.dimension_semantics<parallel>], iteration_bounds = array<i64: 2>, scalar_prefetch = 0 : i64, scratch_operands = 1 : i64, tpu.core_type = #tpu.core_type<tc>, window_params = [{transform_indices = @transform_0, window_bounds = array<i64: 1, 16, 484>}, {pipeline_mode = #tpu.pipeline_mode<synchronous>, transform_indices = @transform_1, window_bounds = array<i64: 1, 484>}, {pipeline_mode = #tpu.pipeline_mode<synchronous>, transform_indices = @transform_2, window_bounds = array<i64: 16, 144>}, {pipeline_mode = #tpu.pipeline_mode<synchronous>, transform_indices = @transform_3, window_bounds = array<i64: 16, 1>}, {pipeline_mode = #tpu.pipeline_mode<synchronous>, transform_indices = @transform_4, window_bounds = array<i64: 16, 144>}, {pipeline_mode = #tpu.pipeline_mode<synchronous>, transform_indices = @transform_5, window_bounds = array<i64: 16, 1>}, {pipeline_mode = #tpu.pipeline_mode<synchronous>, transform_indices = @transform_6, window_bounds = array<i64: 2, 16>}, {pipeline_mode = #tpu.pipeline_mode<synchronous>, transform_indices = @transform_7, window_bounds = array<i64: 2, 1>}, {pipeline_mode = #tpu.pipeline_mode<synchronous>, transform_indices = @transform_8, window_bounds = array<i64: 16, 2>}, {pipeline_mode = #tpu.pipeline_mode<synchronous>, transform_indices = @transform_9, window_bounds = array<i64: 16, 1>}, {pipeline_mode = #tpu.pipeline_mode<synchronous>, transform_indices = @transform_10, window_bounds = array<i64: 2, 16>}, {pipeline_mode = #tpu.pipeline_mode<synchronous>, transform_indices = @transform_11, window_bounds = array<i64: 2, 1>}, {pipeline_mode = #tpu.pipeline_mode<synchronous>, transform_indices = @transform_12, window_bounds = array<i64: 1, 2>}, {pipeline_mode = #tpu.pipeline_mode<synchronous>, transform_indices = @transform_13, window_bounds = array<i64: 1, 1>}, {pipeline_mode = #tpu.pipeline_mode<synchronous>, transform_indices = @transform_14, window_bounds = array<i64: 2, 16>}, {pipeline_mode = #tpu.pipeline_mode<synchronous>, transform_indices = @transform_15, window_bounds = array<i64: 2, 1>}, {pipeline_mode = #tpu.pipeline_mode<synchronous>, transform_indices = @transform_16, window_bounds = array<i64: 16, 2>}, {pipeline_mode = #tpu.pipeline_mode<synchronous>, transform_indices = @transform_17, window_bounds = array<i64: 16, 1>}, {transform_indices = @transform_18, window_bounds = array<i64: 98>}, {transform_indices = @transform_19, window_bounds = array<i64: 1>}, {transform_indices = @transform_20, window_bounds = array<i64: 1, 16, 484>}]} {
    %c0 = arith.constant 0 : index
    %c0_0 = arith.constant 0 : index
    %c0_1 = arith.constant 0 : index
    %0 = vector.load %arg1[%c0, %c0_0, %c0_1] : memref<1x16x484xf32, #tpu.memory_space<vmem>>, vector<1x16x484xf32>
    %1 = vector.shape_cast %0 : vector<1x16x484xf32> to vector<16x484xf32>
    %c0_2 = arith.constant 0 : index
    %c0_3 = arith.constant 0 : index
    %2 = vector.load %arg2[%c0_2, %c0_3] : memref<1x484xf32, #tpu.memory_space<vmem>>, vector<1x484xf32>
    %cst = arith.constant 0.000000e+00 : f32
    %3 = vector.broadcast %cst : f32 to vector<16x23xf32>
    %4 = vector.extract_strided_slice %1 {offsets = [0, 0], sizes = [16, 461], strides = [1, 1]} : vector<16x484xf32> to vector<16x461xf32>
    %5 = tpu.concatenate %3, %4 in 1 : vector<16x23xf32>, vector<16x461xf32> -> vector<16x484xf32>
    %c0_4 = arith.constant 0 : index
    %c0_5 = arith.constant 0 : index
    %6 = vector.load %arg22[%c0_4, %c0_5] : memref<144x484xf32, #tpu.memory_space<vmem>>, vector<16x484xf32>
    tpu.vector_store %arg22[%c0_4, %c0_5], %5 {strides = array<i32>} : memref<144x484xf32, #tpu.memory_space<vmem>>, vector<16x484xf32>,
    %cst_6 = arith.constant 0.000000e+00 : f32
    %7 = vector.broadcast %cst_6 : f32 to vector<16x22xf32>
    %8 = vector.extract_strided_slice %1 {offsets = [0, 0], sizes = [16, 462], strides = [1, 1]} : vector<16x484xf32> to vector<16x462xf32>
    %9 = tpu.concatenate %7, %8 in 1 : vector<16x22xf32>, vector<16x462xf32> -> vector<16x484xf32>
    %c16 = arith.constant 16 : index
    %c0_7 = arith.constant 0 : index
    %10 = vector.load %arg22[%c16, %c0_7] : memref<144x484xf32, #tpu.memory_space<vmem>>, vector<16x484xf32>
    tpu.vector_store %arg22[%c16, %c0_7], %9 {strides = array<i32>} : memref<144x484xf32, #tpu.memory_space<vmem>>, vector<16x484xf32>,
    %cst_8 = arith.constant 0.000000e+00 : f32
    %11 = vector.broadcast %cst_8 : f32 to vector<16x21xf32>
    %12 = vector.extract_strided_slice %1 {offsets = [0, 0], sizes = [16, 463], strides = [1, 1]} : vector<16x484xf32> to vector<16x463xf32>
    %13 = tpu.concatenate %11, %12 in 1 : vector<16x21xf32>, vector<16x463xf32> -> vector<16x484xf32>
    %c32 = arith.constant 32 : index
    %c0_9 = arith.constant 0 : index
    %14 = vector.load %arg22[%c32, %c0_9] : memref<144x484xf32, #tpu.memory_space<vmem>>, vector<16x484xf32>
    tpu.vector_store %arg22[%c32, %c0_9], %13 {strides = array<i32>} : memref<144x484xf32, #tpu.memory_space<vmem>>, vector<16x484xf32>,
    %cst_10 = arith.constant 0.000000e+00 : f32
    %15 = vector.broadcast %cst_10 : f32 to vector<16x1xf32>
    %16 = vector.extract_strided_slice %1 {offsets = [0, 0], sizes = [16, 483], strides = [1, 1]} : vector<16x484xf32> to vector<16x483xf32>
    %17 = tpu.concatenate %15, %16 in 1 : vector<16x1xf32>, vector<16x483xf32> -> vector<16x484xf32>
    %c48 = arith.constant 48 : index
    %c0_11 = arith.constant 0 : index
    %18 = vector.load %arg22[%c48, %c0_11] : memref<144x484xf32, #tpu.memory_space<vmem>>, vector<16x484xf32>
    tpu.vector_store %arg22[%c48, %c0_11], %17 {strides = array<i32>} : memref<144x484xf32, #tpu.memory_space<vmem>>, vector<16x484xf32>,
    %c64 = arith.constant 64 : index
    %c0_12 = arith.constant 0 : index
    %19 = vector.load %arg22[%c64, %c0_12] : memref<144x484xf32, #tpu.memory_space<vmem>>, vector<16x484xf32>
    tpu.vector_store %arg22[%c64, %c0_12], %1 {strides = array<i32>} : memref<144x484xf32, #tpu.memory_space<vmem>>, vector<16x484xf32>,
    %cst_13 = arith.constant 0.000000e+00 : f32
    %20 = vector.broadcast %cst_13 : f32 to vector<16x1xf32>
    %21 = vector.extract_strided_slice %1 {offsets = [0, 1], sizes = [16, 483], strides = [1, 1]} : vector<16x484xf32> to vector<16x483xf32>
    %22 = tpu.concatenate %21, %20 in 1 : vector<16x483xf32>, vector<16x1xf32> -> vector<16x484xf32>
    %c80 = arith.constant 80 : index
    %c0_14 = arith.constant 0 : index
    %23 = vector.load %arg22[%c80, %c0_14] : memref<144x484xf32, #tpu.memory_space<vmem>>, vector<16x484xf32>
    tpu.vector_store %arg22[%c80, %c0_14], %22 {strides = array<i32>} : memref<144x484xf32, #tpu.memory_space<vmem>>, vector<16x484xf32>,
    %cst_15 = arith.constant 0.000000e+00 : f32
    %24 = vector.broadcast %cst_15 : f32 to vector<16x21xf32>
    %25 = vector.extract_strided_slice %1 {offsets = [0, 21], sizes = [16, 463], strides = [1, 1]} : vector<16x484xf32> to vector<16x463xf32>
    %26 = tpu.concatenate %25, %24 in 1 : vector<16x463xf32>, vector<16x21xf32> -> vector<16x484xf32>
    %c96 = arith.constant 96 : index
    %c0_16 = arith.constant 0 : index
    %27 = vector.load %arg22[%c96, %c0_16] : memref<144x484xf32, #tpu.memory_space<vmem>>, vector<16x484xf32>
    tpu.vector_store %arg22[%c96, %c0_16], %26 {strides = array<i32>} : memref<144x484xf32, #tpu.memory_space<vmem>>, vector<16x484xf32>,
    %cst_17 = arith.constant 0.000000e+00 : f32
    %28 = vector.broadcast %cst_17 : f32 to vector<16x22xf32>
    %29 = vector.extract_strided_slice %1 {offsets = [0, 22], sizes = [16, 462], strides = [1, 1]} : vector<16x484xf32> to vector<16x462xf32>
    %30 = tpu.concatenate %29, %28 in 1 : vector<16x462xf32>, vector<16x22xf32> -> vector<16x484xf32>
    %c112 = arith.constant 112 : index
    %c0_18 = arith.constant 0 : index
    %31 = vector.load %arg22[%c112, %c0_18] : memref<144x484xf32, #tpu.memory_space<vmem>>, vector<16x484xf32>
    tpu.vector_store %arg22[%c112, %c0_18], %30 {strides = array<i32>} : memref<144x484xf32, #tpu.memory_space<vmem>>, vector<16x484xf32>,
    %cst_19 = arith.constant 0.000000e+00 : f32
    %32 = vector.broadcast %cst_19 : f32 to vector<16x23xf32>
    %33 = vector.extract_strided_slice %1 {offsets = [0, 23], sizes = [16, 461], strides = [1, 1]} : vector<16x484xf32> to vector<16x461xf32>
    %34 = tpu.concatenate %33, %32 in 1 : vector<16x461xf32>, vector<16x23xf32> -> vector<16x484xf32>
    %c128 = arith.constant 128 : index
    %c0_20 = arith.constant 0 : index
    %35 = vector.load %arg22[%c128, %c0_20] : memref<144x484xf32, #tpu.memory_space<vmem>>, vector<16x484xf32>
    tpu.vector_store %arg22[%c128, %c0_20], %34 {strides = array<i32>} : memref<144x484xf32, #tpu.memory_space<vmem>>, vector<16x484xf32>,
    %c0_21 = arith.constant 0 : index
    %c0_22 = arith.constant 0 : index
    %36 = vector.load %arg3[%c0_21, %c0_22] : memref<16x144xf32, #tpu.memory_space<vmem>>, vector<16x144xf32>
    %c0_23 = arith.constant 0 : index
    %c0_24 = arith.constant 0 : index
    %37 = vector.load %arg22[%c0_23, %c0_24] : memref<144x484xf32, #tpu.memory_space<vmem>>, vector<144x484xf32>
    %cst_25 = arith.constant dense<0.000000e+00> : vector<16x484xf32>
    %38 = tpu.matmul %36, %37, %cst_25 {dimension_numbers = #tpu.dot_dimension_numbers<[1], [0], [0], [1], [0, 0, 1, 1], [], []>} : vector<16x144xf32>, vector<144x484xf32>, vector<16x484xf32> -> vector<16x484xf32>
    %c0_26 = arith.constant 0 : index
    %c0_27 = arith.constant 0 : index
    %39 = vector.load %arg4[%c0_26, %c0_27] : memref<16x1xf32, #tpu.memory_space<vmem>>, vector<16x1xf32>
    %40 = vector.broadcast %39 : vector<16x1xf32> to vector<16x484xf32>
    %41 = arith.addf %38, %40 : vector<16x484xf32>
    %cst_28 = arith.constant 0.000000e+00 : f32
    %42 = vector.broadcast %cst_28 : f32 to vector<16x484xf32>
    %43 = arith.maximumf %41, %42 : vector<16x484xf32>
    %44 = arith.addf %43, %1 : vector<16x484xf32>
    %45 = vector.broadcast %2 : vector<1x484xf32> to vector<16x484xf32>
    %46 = arith.mulf %44, %45 : vector<16x484xf32>
    %cst_29 = arith.constant 0.000000e+00 : f32
    %47 = vector.broadcast %cst_29 : f32 to vector<16x23xf32>
    %48 = vector.extract_strided_slice %46 {offsets = [0, 0], sizes = [16, 461], strides = [1, 1]} : vector<16x484xf32> to vector<16x461xf32>
    %49 = tpu.concatenate %47, %48 in 1 : vector<16x23xf32>, vector<16x461xf32> -> vector<16x484xf32>
    %c0_30 = arith.constant 0 : index
    %c0_31 = arith.constant 0 : index
    %50 = vector.load %arg22[%c0_30, %c0_31] : memref<144x484xf32, #tpu.memory_space<vmem>>, vector<16x484xf32>
    tpu.vector_store %arg22[%c0_30, %c0_31], %49 {strides = array<i32>} : memref<144x484xf32, #tpu.memory_space<vmem>>, vector<16x484xf32>,
    %cst_32 = arith.constant 0.000000e+00 : f32
    %51 = vector.broadcast %cst_32 : f32 to vector<16x22xf32>
    %52 = vector.extract_strided_slice %46 {offsets = [0, 0], sizes = [16, 462], strides = [1, 1]} : vector<16x484xf32> to vector<16x462xf32>
    %53 = tpu.concatenate %51, %52 in 1 : vector<16x22xf32>, vector<16x462xf32> -> vector<16x484xf32>
    %c16_33 = arith.constant 16 : index
    %c0_34 = arith.constant 0 : index
    %54 = vector.load %arg22[%c16_33, %c0_34] : memref<144x484xf32, #tpu.memory_space<vmem>>, vector<16x484xf32>
    tpu.vector_store %arg22[%c16_33, %c0_34], %53 {strides = array<i32>} : memref<144x484xf32, #tpu.memory_space<vmem>>, vector<16x484xf32>,
    %cst_35 = arith.constant 0.000000e+00 : f32
    %55 = vector.broadcast %cst_35 : f32 to vector<16x21xf32>
    %56 = vector.extract_strided_slice %46 {offsets = [0, 0], sizes = [16, 463], strides = [1, 1]} : vector<16x484xf32> to vector<16x463xf32>
    %57 = tpu.concatenate %55, %56 in 1 : vector<16x21xf32>, vector<16x463xf32> -> vector<16x484xf32>
    %c32_36 = arith.constant 32 : index
    %c0_37 = arith.constant 0 : index
    %58 = vector.load %arg22[%c32_36, %c0_37] : memref<144x484xf32, #tpu.memory_space<vmem>>, vector<16x484xf32>
    tpu.vector_store %arg22[%c32_36, %c0_37], %57 {strides = array<i32>} : memref<144x484xf32, #tpu.memory_space<vmem>>, vector<16x484xf32>,
    %cst_38 = arith.constant 0.000000e+00 : f32
    %59 = vector.broadcast %cst_38 : f32 to vector<16x1xf32>
    %60 = vector.extract_strided_slice %46 {offsets = [0, 0], sizes = [16, 483], strides = [1, 1]} : vector<16x484xf32> to vector<16x483xf32>
    %61 = tpu.concatenate %59, %60 in 1 : vector<16x1xf32>, vector<16x483xf32> -> vector<16x484xf32>
    %c48_39 = arith.constant 48 : index
    %c0_40 = arith.constant 0 : index
    %62 = vector.load %arg22[%c48_39, %c0_40] : memref<144x484xf32, #tpu.memory_space<vmem>>, vector<16x484xf32>
    tpu.vector_store %arg22[%c48_39, %c0_40], %61 {strides = array<i32>} : memref<144x484xf32, #tpu.memory_space<vmem>>, vector<16x484xf32>,
    %c64_41 = arith.constant 64 : index
    %c0_42 = arith.constant 0 : index
    %63 = vector.load %arg22[%c64_41, %c0_42] : memref<144x484xf32, #tpu.memory_space<vmem>>, vector<16x484xf32>
    tpu.vector_store %arg22[%c64_41, %c0_42], %46 {strides = array<i32>} : memref<144x484xf32, #tpu.memory_space<vmem>>, vector<16x484xf32>,
    %cst_43 = arith.constant 0.000000e+00 : f32
    %64 = vector.broadcast %cst_43 : f32 to vector<16x1xf32>
    %65 = vector.extract_strided_slice %46 {offsets = [0, 1], sizes = [16, 483], strides = [1, 1]} : vector<16x484xf32> to vector<16x483xf32>
    %66 = tpu.concatenate %65, %64 in 1 : vector<16x483xf32>, vector<16x1xf32> -> vector<16x484xf32>
    %c80_44 = arith.constant 80 : index
    %c0_45 = arith.constant 0 : index
    %67 = vector.load %arg22[%c80_44, %c0_45] : memref<144x484xf32, #tpu.memory_space<vmem>>, vector<16x484xf32>
    tpu.vector_store %arg22[%c80_44, %c0_45], %66 {strides = array<i32>} : memref<144x484xf32, #tpu.memory_space<vmem>>, vector<16x484xf32>,
    %cst_46 = arith.constant 0.000000e+00 : f32
    %68 = vector.broadcast %cst_46 : f32 to vector<16x21xf32>
    %69 = vector.extract_strided_slice %46 {offsets = [0, 21], sizes = [16, 463], strides = [1, 1]} : vector<16x484xf32> to vector<16x463xf32>
    %70 = tpu.concatenate %69, %68 in 1 : vector<16x463xf32>, vector<16x21xf32> -> vector<16x484xf32>
    %c96_47 = arith.constant 96 : index
    %c0_48 = arith.constant 0 : index
    %71 = vector.load %arg22[%c96_47, %c0_48] : memref<144x484xf32, #tpu.memory_space<vmem>>, vector<16x484xf32>
    tpu.vector_store %arg22[%c96_47, %c0_48], %70 {strides = array<i32>} : memref<144x484xf32, #tpu.memory_space<vmem>>, vector<16x484xf32>,
    %cst_49 = arith.constant 0.000000e+00 : f32
    %72 = vector.broadcast %cst_49 : f32 to vector<16x22xf32>
    %73 = vector.extract_strided_slice %46 {offsets = [0, 22], sizes = [16, 462], strides = [1, 1]} : vector<16x484xf32> to vector<16x462xf32>
    %74 = tpu.concatenate %73, %72 in 1 : vector<16x462xf32>, vector<16x22xf32> -> vector<16x484xf32>
    %c112_50 = arith.constant 112 : index
    %c0_51 = arith.constant 0 : index
    %75 = vector.load %arg22[%c112_50, %c0_51] : memref<144x484xf32, #tpu.memory_space<vmem>>, vector<16x484xf32>
    tpu.vector_store %arg22[%c112_50, %c0_51], %74 {strides = array<i32>} : memref<144x484xf32, #tpu.memory_space<vmem>>, vector<16x484xf32>,
    %cst_52 = arith.constant 0.000000e+00 : f32
    %76 = vector.broadcast %cst_52 : f32 to vector<16x23xf32>
    %77 = vector.extract_strided_slice %46 {offsets = [0, 23], sizes = [16, 461], strides = [1, 1]} : vector<16x484xf32> to vector<16x461xf32>
    %78 = tpu.concatenate %77, %76 in 1 : vector<16x461xf32>, vector<16x23xf32> -> vector<16x484xf32>
    %c128_53 = arith.constant 128 : index
    %c0_54 = arith.constant 0 : index
    %79 = vector.load %arg22[%c128_53, %c0_54] : memref<144x484xf32, #tpu.memory_space<vmem>>, vector<16x484xf32>
    tpu.vector_store %arg22[%c128_53, %c0_54], %78 {strides = array<i32>} : memref<144x484xf32, #tpu.memory_space<vmem>>, vector<16x484xf32>,
    %c0_55 = arith.constant 0 : index
    %c0_56 = arith.constant 0 : index
    %80 = vector.load %arg5[%c0_55, %c0_56] : memref<16x144xf32, #tpu.memory_space<vmem>>, vector<16x144xf32>
    %c0_57 = arith.constant 0 : index
    %c0_58 = arith.constant 0 : index
    %81 = vector.load %arg22[%c0_57, %c0_58] : memref<144x484xf32, #tpu.memory_space<vmem>>, vector<144x484xf32>
    %cst_59 = arith.constant dense<0.000000e+00> : vector<16x484xf32>
    %82 = tpu.matmul %80, %81, %cst_59 {dimension_numbers = #tpu.dot_dimension_numbers<[1], [0], [0], [1], [0, 0, 1, 1], [], []>} : vector<16x144xf32>, vector<144x484xf32>, vector<16x484xf32> -> vector<16x484xf32>
    %c0_60 = arith.constant 0 : index
    %c0_61 = arith.constant 0 : index
    %83 = vector.load %arg6[%c0_60, %c0_61] : memref<16x1xf32, #tpu.memory_space<vmem>>, vector<16x1xf32>
    %84 = vector.broadcast %83 : vector<16x1xf32> to vector<16x484xf32>
    %85 = arith.addf %82, %84 : vector<16x484xf32>
    %86 = vector.broadcast %2 : vector<1x484xf32> to vector<16x484xf32>
    %87 = arith.mulf %85, %86 : vector<16x484xf32>
    %cst_62 = arith.constant dense<0.000000e+00> : vector<16xf32>
    %88 = vector.multi_reduction <add>, %87, %cst_62 [1] : vector<16x484xf32> to vector<16xf32>
    %89 = vector.shape_cast %88 : vector<16xf32> to vector<16x1xf32>
    %cst_63 = arith.constant 3.906250e-03 : f32
    %90 = vector.broadcast %cst_63 : f32 to vector<16x1xf32>
    %91 = arith.mulf %89, %90 : vector<16x1xf32>
    %cst_64 = arith.constant 0.000000e+00 : f32
    %92 = vector.broadcast %cst_64 : f32 to vector<1x484xf32>
    %93 = arith.cmpf ogt, %2, %92 : vector<1x484xf32>
    %cst_65 = arith.constant -1.000000e+30 : f32
    %94 = vector.shape_cast %93 : vector<1x484xi1> to vector<1x484xi1>
    %95 = vector.broadcast %94 : vector<1x484xi1> to vector<16x484xi1>
    %96 = vector.broadcast %cst_65 : f32 to vector<16x484xf32>
    %97 = arith.select %95, %85, %96 : vector<16x484xi1>, vector<16x484xf32>
    %cst_66 = arith.constant dense<0xFF800000> : vector<16xf32>
    %98 = vector.multi_reduction <maximumf>, %97, %cst_66 [1] : vector<16x484xf32> to vector<16xf32>
    %99 = vector.shape_cast %98 : vector<16xf32> to vector<16x1xf32>
    %c0_67 = arith.constant 0 : index
    %c0_68 = arith.constant 0 : index
    %100 = vector.load %arg7[%c0_67, %c0_68] : memref<2x16xf32, #tpu.memory_space<vmem>>, vector<2x16xf32>
    %cst_69 = arith.constant dense<0.000000e+00> : vector<2x1xf32>
    %101 = tpu.matmul %100, %91, %cst_69 {dimension_numbers = #tpu.dot_dimension_numbers<[1], [0], [0], [1], [0, 0, 1, 1], [], []>} : vector<2x16xf32>, vector<16x1xf32>, vector<2x1xf32> -> vector<2x1xf32>
    %c0_70 = arith.constant 0 : index
    %c0_71 = arith.constant 0 : index
    %102 = vector.load %arg8[%c0_70, %c0_71] : memref<2x1xf32, #tpu.memory_space<vmem>>, vector<2x1xf32>
    %103 = arith.addf %101, %102 : vector<2x1xf32>
    %cst_72 = arith.constant 0.000000e+00 : f32
    %104 = vector.broadcast %cst_72 : f32 to vector<2x1xf32>
    %105 = arith.maximumf %103, %104 : vector<2x1xf32>
    %c0_73 = arith.constant 0 : index
    %c0_74 = arith.constant 0 : index
    %106 = vector.load %arg9[%c0_73, %c0_74] : memref<16x2xf32, #tpu.memory_space<vmem>>, vector<16x2xf32>
    %cst_75 = arith.constant dense<0.000000e+00> : vector<16x1xf32>
    %107 = tpu.matmul %106, %105, %cst_75 {dimension_numbers = #tpu.dot_dimension_numbers<[1], [0], [0], [1], [0, 0, 1, 1], [], []>} : vector<16x2xf32>, vector<2x1xf32>, vector<16x1xf32> -> vector<16x1xf32>
    %c0_76 = arith.constant 0 : index
    %c0_77 = arith.constant 0 : index
    %108 = vector.load %arg10[%c0_76, %c0_77] : memref<16x1xf32, #tpu.memory_space<vmem>>, vector<16x1xf32>
    %109 = arith.addf %107, %108 : vector<16x1xf32>
    %110 = arith.negf %109 : vector<16x1xf32>
    %111 = math.exp %110 : vector<16x1xf32>
    %cst_78 = arith.constant 1.000000e+00 : f32
    %112 = vector.broadcast %cst_78 : f32 to vector<16x1xf32>
    %113 = arith.addf %112, %111 : vector<16x1xf32>
    %114 = arith.divf %112, %113 : vector<16x1xf32>
    %115 = tpu.concatenate %91, %99 in 1 : vector<16x1xf32>, vector<16x1xf32> -> vector<16x2xf32>
    %c0_79 = arith.constant 0 : index
    %c0_80 = arith.constant 0 : index
    %116 = vector.load %arg15[%c0_79, %c0_80] : memref<2x16xf32, #tpu.memory_space<vmem>>, vector<2x16xf32>
    %cst_81 = arith.constant dense<0.000000e+00> : vector<2x2xf32>
    %117 = tpu.matmul %116, %115, %cst_81 {dimension_numbers = #tpu.dot_dimension_numbers<[1], [0], [0], [1], [0, 0, 1, 1], [], []>} : vector<2x16xf32>, vector<16x2xf32>, vector<2x2xf32> -> vector<2x2xf32>
    %c0_82 = arith.constant 0 : index
    %c0_83 = arith.constant 0 : index
    %118 = vector.load %arg16[%c0_82, %c0_83] : memref<2x1xf32, #tpu.memory_space<vmem>>, vector<2x1xf32>
    %119 = vector.broadcast %118 : vector<2x1xf32> to vector<2x2xf32>
    %120 = arith.addf %117, %119 : vector<2x2xf32>
    %cst_84 = arith.constant 0.000000e+00 : f32
    %121 = vector.broadcast %cst_84 : f32 to vector<2x2xf32>
    %122 = arith.maximumf %120, %121 : vector<2x2xf32>
    %c0_85 = arith.constant 0 : index
    %c0_86 = arith.constant 0 : index
    %123 = vector.load %arg17[%c0_85, %c0_86] : memref<16x2xf32, #tpu.memory_space<vmem>>, vector<16x2xf32>
    %cst_87 = arith.constant dense<0.000000e+00> : vector<16x2xf32>
    %124 = tpu.matmul %123, %122, %cst_87 {dimension_numbers = #tpu.dot_dimension_numbers<[1], [0], [0], [1], [0, 0, 1, 1], [], []>} : vector<16x2xf32>, vector<2x2xf32>, vector<16x2xf32> -> vector<16x2xf32>
    %c0_88 = arith.constant 0 : index
    %c0_89 = arith.constant 0 : index
    %125 = vector.load %arg18[%c0_88, %c0_89] : memref<16x1xf32, #tpu.memory_space<vmem>>, vector<16x1xf32>
    %126 = vector.broadcast %125 : vector<16x1xf32> to vector<16x2xf32>
    %127 = arith.addf %124, %126 : vector<16x2xf32>
    %128 = vector.extract_strided_slice %127 {offsets = [0, 0], sizes = [16, 1], strides = [1, 1]} : vector<16x2xf32> to vector<16x1xf32>
    %129 = vector.extract_strided_slice %127 {offsets = [0, 1], sizes = [16, 1], strides = [1, 1]} : vector<16x2xf32> to vector<16x1xf32>
    %130 = arith.addf %128, %129 : vector<16x1xf32>
    %131 = arith.negf %130 : vector<16x1xf32>
    %132 = math.exp %131 : vector<16x1xf32>
    %cst_90 = arith.constant 1.000000e+00 : f32
    %133 = vector.broadcast %cst_90 : f32 to vector<16x1xf32>
    %134 = arith.addf %133, %132 : vector<16x1xf32>
    %135 = arith.divf %133, %134 : vector<16x1xf32>
    %136 = vector.broadcast %114 : vector<16x1xf32> to vector<16x484xf32>
    %137 = arith.mulf %85, %136 : vector<16x484xf32>
    %c0_91 = arith.constant 0 : index
    %c0_92 = arith.constant 0 : index
    %138 = vector.load %arg11[%c0_91, %c0_92] : memref<2x16xf32, #tpu.memory_space<vmem>>, vector<2x16xf32>
    %cst_93 = arith.constant dense<0.000000e+00> : vector<2x484xf32>
    %139 = tpu.matmul %138, %137, %cst_93 {dimension_numbers = #tpu.dot_dimension_numbers<[1], [0], [0], [1], [0, 0, 1, 1], [], []>} : vector<2x16xf32>, vector<16x484xf32>, vector<2x484xf32> -> vector<2x484xf32>
    %c0_94 = arith.constant 0 : index
    %c0_95 = arith.constant 0 : index
    %140 = vector.load %arg12[%c0_94, %c0_95] : memref<2x1xf32, #tpu.memory_space<vmem>>, vector<2x1xf32>
    %141 = vector.broadcast %140 : vector<2x1xf32> to vector<2x484xf32>
    %142 = arith.addf %139, %141 : vector<2x484xf32>
    %cst_96 = arith.constant 0.000000e+00 : f32
    %143 = vector.broadcast %cst_96 : f32 to vector<2x484xf32>
    %144 = arith.maximumf %142, %143 : vector<2x484xf32>
    %c0_97 = arith.constant 0 : index
    %c0_98 = arith.constant 0 : index
    %145 = vector.load %arg13[%c0_97, %c0_98] : memref<1x2xf32, #tpu.memory_space<vmem>>, vector<1x2xf32>
    %cst_99 = arith.constant dense<0.000000e+00> : vector<1x484xf32>
    %146 = tpu.matmul %145, %144, %cst_99 {dimension_numbers = #tpu.dot_dimension_numbers<[1], [0], [0], [1], [0, 0, 1, 1], [], []>} : vector<1x2xf32>, vector<2x484xf32>, vector<1x484xf32> -> vector<1x484xf32>
    %c0_100 = arith.constant 0 : index
    %c0_101 = arith.constant 0 : index
    %147 = vector.load %arg14[%c0_100, %c0_101] : memref<1x1xf32, #tpu.memory_space<vmem>>, vector<1x1xf32>
    %148 = vector.broadcast %147 : vector<1x1xf32> to vector<1x484xf32>
    %149 = arith.addf %146, %148 : vector<1x484xf32>
    %150 = arith.negf %149 : vector<1x484xf32>
    %151 = math.exp %150 : vector<1x484xf32>
    %cst_102 = arith.constant 1.000000e+00 : f32
    %152 = vector.broadcast %cst_102 : f32 to vector<1x484xf32>
    %153 = arith.addf %152, %151 : vector<1x484xf32>
    %154 = arith.divf %152, %153 : vector<1x484xf32>
    %155 = vector.broadcast %135 : vector<16x1xf32> to vector<16x484xf32>
    %156 = arith.mulf %87, %155 : vector<16x484xf32>
    %cst_103 = arith.constant dense<0xFF800000> : vector<484xf32>
    %157 = vector.multi_reduction <maximumf>, %156, %cst_103 [0] : vector<16x484xf32> to vector<484xf32>
    %158 = vector.shape_cast %157 : vector<484xf32> to vector<1x484xf32>
    %cst_104 = arith.constant dense<0.000000e+00> : vector<484xf32>
    %159 = vector.multi_reduction <add>, %156, %cst_104 [0] : vector<16x484xf32> to vector<484xf32>
    %160 = vector.shape_cast %159 : vector<484xf32> to vector<1x484xf32>
    %cst_105 = arith.constant 1.600000e+01 : f32
    %161 = vector.broadcast %cst_105 : f32 to vector<1x484xf32>
    %162 = arith.divf %160, %161 : vector<1x484xf32>
    %cst_106 = arith.constant 0.000000e+00 : f32
    %163 = vector.broadcast %cst_106 : f32 to vector<1x484xf32>
    %cst_107 = arith.constant 0.000000e+00 : f32
    %164 = vector.broadcast %cst_107 : f32 to vector<1x69xf32>
    %165 = vector.extract_strided_slice %158 {offsets = [0, 0], sizes = [1, 415], strides = [1, 1]} : vector<1x484xf32> to vector<1x415xf32>
    %166 = tpu.concatenate %164, %165 in 1 : vector<1x69xf32>, vector<1x415xf32> -> vector<1x484xf32>
    %c0_108 = arith.constant 0 : index
    %167 = memref.load %arg19[%c0_108] : memref<98xf32, #tpu.memory_space<smem>>
    %168 = vector.broadcast %167 : f32 to vector<1x484xf32>
    %169 = arith.mulf %166, %168 : vector<1x484xf32>
    %170 = arith.addf %163, %169 : vector<1x484xf32>
    %cst_109 = arith.constant 0.000000e+00 : f32
    %171 = vector.broadcast %cst_109 : f32 to vector<1x69xf32>
    %172 = vector.extract_strided_slice %162 {offsets = [0, 0], sizes = [1, 415], strides = [1, 1]} : vector<1x484xf32> to vector<1x415xf32>
    %173 = tpu.concatenate %171, %172 in 1 : vector<1x69xf32>, vector<1x415xf32> -> vector<1x484xf32>
    %c1 = arith.constant 1 : index
    %174 = memref.load %arg19[%c1] : memref<98xf32, #tpu.memory_space<smem>>
    %175 = vector.broadcast %174 : f32 to vector<1x484xf32>
    %176 = arith.mulf %173, %175 : vector<1x484xf32>
    %177 = arith.addf %170, %176 : vector<1x484xf32>
    %cst_110 = arith.constant 0.000000e+00 : f32
    %178 = vector.broadcast %cst_110 : f32 to vector<1x68xf32>
    %179 = vector.extract_strided_slice %158 {offsets = [0, 0], sizes = [1, 416], strides = [1, 1]} : vector<1x484xf32> to vector<1x416xf32>
    %180 = tpu.concatenate %178, %179 in 1 : vector<1x68xf32>, vector<1x416xf32> -> vector<1x484xf32>
    %c2 = arith.constant 2 : index
    %181 = memref.load %arg19[%c2] : memref<98xf32, #tpu.memory_space<smem>>
    %182 = vector.broadcast %181 : f32 to vector<1x484xf32>
    %183 = arith.mulf %180, %182 : vector<1x484xf32>
    %184 = arith.addf %177, %183 : vector<1x484xf32>
    %cst_111 = arith.constant 0.000000e+00 : f32
    %185 = vector.broadcast %cst_111 : f32 to vector<1x68xf32>
    %186 = vector.extract_strided_slice %162 {offsets = [0, 0], sizes = [1, 416], strides = [1, 1]} : vector<1x484xf32> to vector<1x416xf32>
    %187 = tpu.concatenate %185, %186 in 1 : vector<1x68xf32>, vector<1x416xf32> -> vector<1x484xf32>
    %c3 = arith.constant 3 : index
    %188 = memref.load %arg19[%c3] : memref<98xf32, #tpu.memory_space<smem>>
    %189 = vector.broadcast %188 : f32 to vector<1x484xf32>
    %190 = arith.mulf %187, %189 : vector<1x484xf32>
    %191 = arith.addf %184, %190 : vector<1x484xf32>
    %cst_112 = arith.constant 0.000000e+00 : f32
    %192 = vector.broadcast %cst_112 : f32 to vector<1x67xf32>
    %193 = vector.extract_strided_slice %158 {offsets = [0, 0], sizes = [1, 417], strides = [1, 1]} : vector<1x484xf32> to vector<1x417xf32>
    %194 = tpu.concatenate %192, %193 in 1 : vector<1x67xf32>, vector<1x417xf32> -> vector<1x484xf32>
    %c4 = arith.constant 4 : index
    %195 = memref.load %arg19[%c4] : memref<98xf32, #tpu.memory_space<smem>>
    %196 = vector.broadcast %195 : f32 to vector<1x484xf32>
    %197 = arith.mulf %194, %196 : vector<1x484xf32>
    %198 = arith.addf %191, %197 : vector<1x484xf32>
    %cst_113 = arith.constant 0.000000e+00 : f32
    %199 = vector.broadcast %cst_113 : f32 to vector<1x67xf32>
    %200 = vector.extract_strided_slice %162 {offsets = [0, 0], sizes = [1, 417], strides = [1, 1]} : vector<1x484xf32> to vector<1x417xf32>
    %201 = tpu.concatenate %199, %200 in 1 : vector<1x67xf32>, vector<1x417xf32> -> vector<1x484xf32>
    %c5 = arith.constant 5 : index
    %202 = memref.load %arg19[%c5] : memref<98xf32, #tpu.memory_space<smem>>
    %203 = vector.broadcast %202 : f32 to vector<1x484xf32>
    %204 = arith.mulf %201, %203 : vector<1x484xf32>
    %205 = arith.addf %198, %204 : vector<1x484xf32>
    %cst_114 = arith.constant 0.000000e+00 : f32
    %206 = vector.broadcast %cst_114 : f32 to vector<1x66xf32>
    %207 = vector.extract_strided_slice %158 {offsets = [0, 0], sizes = [1, 418], strides = [1, 1]} : vector<1x484xf32> to vector<1x418xf32>
    %208 = tpu.concatenate %206, %207 in 1 : vector<1x66xf32>, vector<1x418xf32> -> vector<1x484xf32>
    %c6 = arith.constant 6 : index
    %209 = memref.load %arg19[%c6] : memref<98xf32, #tpu.memory_space<smem>>
    %210 = vector.broadcast %209 : f32 to vector<1x484xf32>
    %211 = arith.mulf %208, %210 : vector<1x484xf32>
    %212 = arith.addf %205, %211 : vector<1x484xf32>
    %cst_115 = arith.constant 0.000000e+00 : f32
    %213 = vector.broadcast %cst_115 : f32 to vector<1x66xf32>
    %214 = vector.extract_strided_slice %162 {offsets = [0, 0], sizes = [1, 418], strides = [1, 1]} : vector<1x484xf32> to vector<1x418xf32>
    %215 = tpu.concatenate %213, %214 in 1 : vector<1x66xf32>, vector<1x418xf32> -> vector<1x484xf32>
    %c7 = arith.constant 7 : index
    %216 = memref.load %arg19[%c7] : memref<98xf32, #tpu.memory_space<smem>>
    %217 = vector.broadcast %216 : f32 to vector<1x484xf32>
    %218 = arith.mulf %215, %217 : vector<1x484xf32>
    %219 = arith.addf %212, %218 : vector<1x484xf32>
    %cst_116 = arith.constant 0.000000e+00 : f32
    %220 = vector.broadcast %cst_116 : f32 to vector<1x65xf32>
    %221 = vector.extract_strided_slice %158 {offsets = [0, 0], sizes = [1, 419], strides = [1, 1]} : vector<1x484xf32> to vector<1x419xf32>
    %222 = tpu.concatenate %220, %221 in 1 : vector<1x65xf32>, vector<1x419xf32> -> vector<1x484xf32>
    %c8 = arith.constant 8 : index
    %223 = memref.load %arg19[%c8] : memref<98xf32, #tpu.memory_space<smem>>
    %224 = vector.broadcast %223 : f32 to vector<1x484xf32>
    %225 = arith.mulf %222, %224 : vector<1x484xf32>
    %226 = arith.addf %219, %225 : vector<1x484xf32>
    %cst_117 = arith.constant 0.000000e+00 : f32
    %227 = vector.broadcast %cst_117 : f32 to vector<1x65xf32>
    %228 = vector.extract_strided_slice %162 {offsets = [0, 0], sizes = [1, 419], strides = [1, 1]} : vector<1x484xf32> to vector<1x419xf32>
    %229 = tpu.concatenate %227, %228 in 1 : vector<1x65xf32>, vector<1x419xf32> -> vector<1x484xf32>
    %c9 = arith.constant 9 : index
    %230 = memref.load %arg19[%c9] : memref<98xf32, #tpu.memory_space<smem>>
    %231 = vector.broadcast %230 : f32 to vector<1x484xf32>
    %232 = arith.mulf %229, %231 : vector<1x484xf32>
    %233 = arith.addf %226, %232 : vector<1x484xf32>
    %cst_118 = arith.constant 0.000000e+00 : f32
    %234 = vector.broadcast %cst_118 : f32 to vector<1x64xf32>
    %235 = vector.extract_strided_slice %158 {offsets = [0, 0], sizes = [1, 420], strides = [1, 1]} : vector<1x484xf32> to vector<1x420xf32>
    %236 = tpu.concatenate %234, %235 in 1 : vector<1x64xf32>, vector<1x420xf32> -> vector<1x484xf32>
    %c10 = arith.constant 10 : index
    %237 = memref.load %arg19[%c10] : memref<98xf32, #tpu.memory_space<smem>>
    %238 = vector.broadcast %237 : f32 to vector<1x484xf32>
    %239 = arith.mulf %236, %238 : vector<1x484xf32>
    %240 = arith.addf %233, %239 : vector<1x484xf32>
    %cst_119 = arith.constant 0.000000e+00 : f32
    %241 = vector.broadcast %cst_119 : f32 to vector<1x64xf32>
    %242 = vector.extract_strided_slice %162 {offsets = [0, 0], sizes = [1, 420], strides = [1, 1]} : vector<1x484xf32> to vector<1x420xf32>
    %243 = tpu.concatenate %241, %242 in 1 : vector<1x64xf32>, vector<1x420xf32> -> vector<1x484xf32>
    %c11 = arith.constant 11 : index
    %244 = memref.load %arg19[%c11] : memref<98xf32, #tpu.memory_space<smem>>
    %245 = vector.broadcast %244 : f32 to vector<1x484xf32>
    %246 = arith.mulf %243, %245 : vector<1x484xf32>
    %247 = arith.addf %240, %246 : vector<1x484xf32>
    %cst_120 = arith.constant 0.000000e+00 : f32
    %248 = vector.broadcast %cst_120 : f32 to vector<1x63xf32>
    %249 = vector.extract_strided_slice %158 {offsets = [0, 0], sizes = [1, 421], strides = [1, 1]} : vector<1x484xf32> to vector<1x421xf32>
    %250 = tpu.concatenate %248, %249 in 1 : vector<1x63xf32>, vector<1x421xf32> -> vector<1x484xf32>
    %c12 = arith.constant 12 : index
    %251 = memref.load %arg19[%c12] : memref<98xf32, #tpu.memory_space<smem>>
    %252 = vector.broadcast %251 : f32 to vector<1x484xf32>
    %253 = arith.mulf %250, %252 : vector<1x484xf32>
    %254 = arith.addf %247, %253 : vector<1x484xf32>
    %cst_121 = arith.constant 0.000000e+00 : f32
    %255 = vector.broadcast %cst_121 : f32 to vector<1x63xf32>
    %256 = vector.extract_strided_slice %162 {offsets = [0, 0], sizes = [1, 421], strides = [1, 1]} : vector<1x484xf32> to vector<1x421xf32>
    %257 = tpu.concatenate %255, %256 in 1 : vector<1x63xf32>, vector<1x421xf32> -> vector<1x484xf32>
    %c13 = arith.constant 13 : index
    %258 = memref.load %arg19[%c13] : memref<98xf32, #tpu.memory_space<smem>>
    %259 = vector.broadcast %258 : f32 to vector<1x484xf32>
    %260 = arith.mulf %257, %259 : vector<1x484xf32>
    %261 = arith.addf %254, %260 : vector<1x484xf32>
    %cst_122 = arith.constant 0.000000e+00 : f32
    %262 = vector.broadcast %cst_122 : f32 to vector<1x47xf32>
    %263 = vector.extract_strided_slice %158 {offsets = [0, 0], sizes = [1, 437], strides = [1, 1]} : vector<1x484xf32> to vector<1x437xf32>
    %264 = tpu.concatenate %262, %263 in 1 : vector<1x47xf32>, vector<1x437xf32> -> vector<1x484xf32>
    %c14 = arith.constant 14 : index
    %265 = memref.load %arg19[%c14] : memref<98xf32, #tpu.memory_space<smem>>
    %266 = vector.broadcast %265 : f32 to vector<1x484xf32>
    %267 = arith.mulf %264, %266 : vector<1x484xf32>
    %268 = arith.addf %261, %267 : vector<1x484xf32>
    %cst_123 = arith.constant 0.000000e+00 : f32
    %269 = vector.broadcast %cst_123 : f32 to vector<1x47xf32>
    %270 = vector.extract_strided_slice %162 {offsets = [0, 0], sizes = [1, 437], strides = [1, 1]} : vector<1x484xf32> to vector<1x437xf32>
    %271 = tpu.concatenate %269, %270 in 1 : vector<1x47xf32>, vector<1x437xf32> -> vector<1x484xf32>
    %c15 = arith.constant 15 : index
    %272 = memref.load %arg19[%c15] : memref<98xf32, #tpu.memory_space<smem>>
    %273 = vector.broadcast %272 : f32 to vector<1x484xf32>
    %274 = arith.mulf %271, %273 : vector<1x484xf32>
    %275 = arith.addf %268, %274 : vector<1x484xf32>
    %cst_124 = arith.constant 0.000000e+00 : f32
    %276 = vector.broadcast %cst_124 : f32 to vector<1x46xf32>
    %277 = vector.extract_strided_slice %158 {offsets = [0, 0], sizes = [1, 438], strides = [1, 1]} : vector<1x484xf32> to vector<1x438xf32>
    %278 = tpu.concatenate %276, %277 in 1 : vector<1x46xf32>, vector<1x438xf32> -> vector<1x484xf32>
    %c16_125 = arith.constant 16 : index
    %279 = memref.load %arg19[%c16_125] : memref<98xf32, #tpu.memory_space<smem>>
    %280 = vector.broadcast %279 : f32 to vector<1x484xf32>
    %281 = arith.mulf %278, %280 : vector<1x484xf32>
    %282 = arith.addf %275, %281 : vector<1x484xf32>
    %cst_126 = arith.constant 0.000000e+00 : f32
    %283 = vector.broadcast %cst_126 : f32 to vector<1x46xf32>
    %284 = vector.extract_strided_slice %162 {offsets = [0, 0], sizes = [1, 438], strides = [1, 1]} : vector<1x484xf32> to vector<1x438xf32>
    %285 = tpu.concatenate %283, %284 in 1 : vector<1x46xf32>, vector<1x438xf32> -> vector<1x484xf32>
    %c17 = arith.constant 17 : index
    %286 = memref.load %arg19[%c17] : memref<98xf32, #tpu.memory_space<smem>>
    %287 = vector.broadcast %286 : f32 to vector<1x484xf32>
    %288 = arith.mulf %285, %287 : vector<1x484xf32>
    %289 = arith.addf %282, %288 : vector<1x484xf32>
    %cst_127 = arith.constant 0.000000e+00 : f32
    %290 = vector.broadcast %cst_127 : f32 to vector<1x45xf32>
    %291 = vector.extract_strided_slice %158 {offsets = [0, 0], sizes = [1, 439], strides = [1, 1]} : vector<1x484xf32> to vector<1x439xf32>
    %292 = tpu.concatenate %290, %291 in 1 : vector<1x45xf32>, vector<1x439xf32> -> vector<1x484xf32>
    %c18 = arith.constant 18 : index
    %293 = memref.load %arg19[%c18] : memref<98xf32, #tpu.memory_space<smem>>
    %294 = vector.broadcast %293 : f32 to vector<1x484xf32>
    %295 = arith.mulf %292, %294 : vector<1x484xf32>
    %296 = arith.addf %289, %295 : vector<1x484xf32>
    %cst_128 = arith.constant 0.000000e+00 : f32
    %297 = vector.broadcast %cst_128 : f32 to vector<1x45xf32>
    %298 = vector.extract_strided_slice %162 {offsets = [0, 0], sizes = [1, 439], strides = [1, 1]} : vector<1x484xf32> to vector<1x439xf32>
    %299 = tpu.concatenate %297, %298 in 1 : vector<1x45xf32>, vector<1x439xf32> -> vector<1x484xf32>
    %c19 = arith.constant 19 : index
    %300 = memref.load %arg19[%c19] : memref<98xf32, #tpu.memory_space<smem>>
    %301 = vector.broadcast %300 : f32 to vector<1x484xf32>
    %302 = arith.mulf %299, %301 : vector<1x484xf32>
    %303 = arith.addf %296, %302 : vector<1x484xf32>
    %cst_129 = arith.constant 0.000000e+00 : f32
    %304 = vector.broadcast %cst_129 : f32 to vector<1x44xf32>
    %305 = vector.extract_strided_slice %158 {offsets = [0, 0], sizes = [1, 440], strides = [1, 1]} : vector<1x484xf32> to vector<1x440xf32>
    %306 = tpu.concatenate %304, %305 in 1 : vector<1x44xf32>, vector<1x440xf32> -> vector<1x484xf32>
    %c20 = arith.constant 20 : index
    %307 = memref.load %arg19[%c20] : memref<98xf32, #tpu.memory_space<smem>>
    %308 = vector.broadcast %307 : f32 to vector<1x484xf32>
    %309 = arith.mulf %306, %308 : vector<1x484xf32>
    %310 = arith.addf %303, %309 : vector<1x484xf32>
    %cst_130 = arith.constant 0.000000e+00 : f32
    %311 = vector.broadcast %cst_130 : f32 to vector<1x44xf32>
    %312 = vector.extract_strided_slice %162 {offsets = [0, 0], sizes = [1, 440], strides = [1, 1]} : vector<1x484xf32> to vector<1x440xf32>
    %313 = tpu.concatenate %311, %312 in 1 : vector<1x44xf32>, vector<1x440xf32> -> vector<1x484xf32>
    %c21 = arith.constant 21 : index
    %314 = memref.load %arg19[%c21] : memref<98xf32, #tpu.memory_space<smem>>
    %315 = vector.broadcast %314 : f32 to vector<1x484xf32>
    %316 = arith.mulf %313, %315 : vector<1x484xf32>
    %317 = arith.addf %310, %316 : vector<1x484xf32>
    %cst_131 = arith.constant 0.000000e+00 : f32
    %318 = vector.broadcast %cst_131 : f32 to vector<1x43xf32>
    %319 = vector.extract_strided_slice %158 {offsets = [0, 0], sizes = [1, 441], strides = [1, 1]} : vector<1x484xf32> to vector<1x441xf32>
    %320 = tpu.concatenate %318, %319 in 1 : vector<1x43xf32>, vector<1x441xf32> -> vector<1x484xf32>
    %c22 = arith.constant 22 : index
    %321 = memref.load %arg19[%c22] : memref<98xf32, #tpu.memory_space<smem>>
    %322 = vector.broadcast %321 : f32 to vector<1x484xf32>
    %323 = arith.mulf %320, %322 : vector<1x484xf32>
    %324 = arith.addf %317, %323 : vector<1x484xf32>
    %cst_132 = arith.constant 0.000000e+00 : f32
    %325 = vector.broadcast %cst_132 : f32 to vector<1x43xf32>
    %326 = vector.extract_strided_slice %162 {offsets = [0, 0], sizes = [1, 441], strides = [1, 1]} : vector<1x484xf32> to vector<1x441xf32>
    %327 = tpu.concatenate %325, %326 in 1 : vector<1x43xf32>, vector<1x441xf32> -> vector<1x484xf32>
    %c23 = arith.constant 23 : index
    %328 = memref.load %arg19[%c23] : memref<98xf32, #tpu.memory_space<smem>>
    %329 = vector.broadcast %328 : f32 to vector<1x484xf32>
    %330 = arith.mulf %327, %329 : vector<1x484xf32>
    %331 = arith.addf %324, %330 : vector<1x484xf32>
    %cst_133 = arith.constant 0.000000e+00 : f32
    %332 = vector.broadcast %cst_133 : f32 to vector<1x42xf32>
    %333 = vector.extract_strided_slice %158 {offsets = [0, 0], sizes = [1, 442], strides = [1, 1]} : vector<1x484xf32> to vector<1x442xf32>
    %334 = tpu.concatenate %332, %333 in 1 : vector<1x42xf32>, vector<1x442xf32> -> vector<1x484xf32>
    %c24 = arith.constant 24 : index
    %335 = memref.load %arg19[%c24] : memref<98xf32, #tpu.memory_space<smem>>
    %336 = vector.broadcast %335 : f32 to vector<1x484xf32>
    %337 = arith.mulf %334, %336 : vector<1x484xf32>
    %338 = arith.addf %331, %337 : vector<1x484xf32>
    %cst_134 = arith.constant 0.000000e+00 : f32
    %339 = vector.broadcast %cst_134 : f32 to vector<1x42xf32>
    %340 = vector.extract_strided_slice %162 {offsets = [0, 0], sizes = [1, 442], strides = [1, 1]} : vector<1x484xf32> to vector<1x442xf32>
    %341 = tpu.concatenate %339, %340 in 1 : vector<1x42xf32>, vector<1x442xf32> -> vector<1x484xf32>
    %c25 = arith.constant 25 : index
    %342 = memref.load %arg19[%c25] : memref<98xf32, #tpu.memory_space<smem>>
    %343 = vector.broadcast %342 : f32 to vector<1x484xf32>
    %344 = arith.mulf %341, %343 : vector<1x484xf32>
    %345 = arith.addf %338, %344 : vector<1x484xf32>
    %cst_135 = arith.constant 0.000000e+00 : f32
    %346 = vector.broadcast %cst_135 : f32 to vector<1x41xf32>
    %347 = vector.extract_strided_slice %158 {offsets = [0, 0], sizes = [1, 443], strides = [1, 1]} : vector<1x484xf32> to vector<1x443xf32>
    %348 = tpu.concatenate %346, %347 in 1 : vector<1x41xf32>, vector<1x443xf32> -> vector<1x484xf32>
    %c26 = arith.constant 26 : index
    %349 = memref.load %arg19[%c26] : memref<98xf32, #tpu.memory_space<smem>>
    %350 = vector.broadcast %349 : f32 to vector<1x484xf32>
    %351 = arith.mulf %348, %350 : vector<1x484xf32>
    %352 = arith.addf %345, %351 : vector<1x484xf32>
    %cst_136 = arith.constant 0.000000e+00 : f32
    %353 = vector.broadcast %cst_136 : f32 to vector<1x41xf32>
    %354 = vector.extract_strided_slice %162 {offsets = [0, 0], sizes = [1, 443], strides = [1, 1]} : vector<1x484xf32> to vector<1x443xf32>
    %355 = tpu.concatenate %353, %354 in 1 : vector<1x41xf32>, vector<1x443xf32> -> vector<1x484xf32>
    %c27 = arith.constant 27 : index
    %356 = memref.load %arg19[%c27] : memref<98xf32, #tpu.memory_space<smem>>
    %357 = vector.broadcast %356 : f32 to vector<1x484xf32>
    %358 = arith.mulf %355, %357 : vector<1x484xf32>
    %359 = arith.addf %352, %358 : vector<1x484xf32>
    %cst_137 = arith.constant 0.000000e+00 : f32
    %360 = vector.broadcast %cst_137 : f32 to vector<1x25xf32>
    %361 = vector.extract_strided_slice %158 {offsets = [0, 0], sizes = [1, 459], strides = [1, 1]} : vector<1x484xf32> to vector<1x459xf32>
    %362 = tpu.concatenate %360, %361 in 1 : vector<1x25xf32>, vector<1x459xf32> -> vector<1x484xf32>
    %c28 = arith.constant 28 : index
    %363 = memref.load %arg19[%c28] : memref<98xf32, #tpu.memory_space<smem>>
    %364 = vector.broadcast %363 : f32 to vector<1x484xf32>
    %365 = arith.mulf %362, %364 : vector<1x484xf32>
    %366 = arith.addf %359, %365 : vector<1x484xf32>
    %cst_138 = arith.constant 0.000000e+00 : f32
    %367 = vector.broadcast %cst_138 : f32 to vector<1x25xf32>
    %368 = vector.extract_strided_slice %162 {offsets = [0, 0], sizes = [1, 459], strides = [1, 1]} : vector<1x484xf32> to vector<1x459xf32>
    %369 = tpu.concatenate %367, %368 in 1 : vector<1x25xf32>, vector<1x459xf32> -> vector<1x484xf32>
    %c29 = arith.constant 29 : index
    %370 = memref.load %arg19[%c29] : memref<98xf32, #tpu.memory_space<smem>>
    %371 = vector.broadcast %370 : f32 to vector<1x484xf32>
    %372 = arith.mulf %369, %371 : vector<1x484xf32>
    %373 = arith.addf %366, %372 : vector<1x484xf32>
    %cst_139 = arith.constant 0.000000e+00 : f32
    %374 = vector.broadcast %cst_139 : f32 to vector<1x24xf32>
    %375 = vector.extract_strided_slice %158 {offsets = [0, 0], sizes = [1, 460], strides = [1, 1]} : vector<1x484xf32> to vector<1x460xf32>
    %376 = tpu.concatenate %374, %375 in 1 : vector<1x24xf32>, vector<1x460xf32> -> vector<1x484xf32>
    %c30 = arith.constant 30 : index
    %377 = memref.load %arg19[%c30] : memref<98xf32, #tpu.memory_space<smem>>
    %378 = vector.broadcast %377 : f32 to vector<1x484xf32>
    %379 = arith.mulf %376, %378 : vector<1x484xf32>
    %380 = arith.addf %373, %379 : vector<1x484xf32>
    %cst_140 = arith.constant 0.000000e+00 : f32
    %381 = vector.broadcast %cst_140 : f32 to vector<1x24xf32>
    %382 = vector.extract_strided_slice %162 {offsets = [0, 0], sizes = [1, 460], strides = [1, 1]} : vector<1x484xf32> to vector<1x460xf32>
    %383 = tpu.concatenate %381, %382 in 1 : vector<1x24xf32>, vector<1x460xf32> -> vector<1x484xf32>
    %c31 = arith.constant 31 : index
    %384 = memref.load %arg19[%c31] : memref<98xf32, #tpu.memory_space<smem>>
    %385 = vector.broadcast %384 : f32 to vector<1x484xf32>
    %386 = arith.mulf %383, %385 : vector<1x484xf32>
    %387 = arith.addf %380, %386 : vector<1x484xf32>
    %cst_141 = arith.constant 0.000000e+00 : f32
    %388 = vector.broadcast %cst_141 : f32 to vector<1x23xf32>
    %389 = vector.extract_strided_slice %158 {offsets = [0, 0], sizes = [1, 461], strides = [1, 1]} : vector<1x484xf32> to vector<1x461xf32>
    %390 = tpu.concatenate %388, %389 in 1 : vector<1x23xf32>, vector<1x461xf32> -> vector<1x484xf32>
    %c32_142 = arith.constant 32 : index
    %391 = memref.load %arg19[%c32_142] : memref<98xf32, #tpu.memory_space<smem>>
    %392 = vector.broadcast %391 : f32 to vector<1x484xf32>
    %393 = arith.mulf %390, %392 : vector<1x484xf32>
    %394 = arith.addf %387, %393 : vector<1x484xf32>
    %cst_143 = arith.constant 0.000000e+00 : f32
    %395 = vector.broadcast %cst_143 : f32 to vector<1x23xf32>
    %396 = vector.extract_strided_slice %162 {offsets = [0, 0], sizes = [1, 461], strides = [1, 1]} : vector<1x484xf32> to vector<1x461xf32>
    %397 = tpu.concatenate %395, %396 in 1 : vector<1x23xf32>, vector<1x461xf32> -> vector<1x484xf32>
    %c33 = arith.constant 33 : index
    %398 = memref.load %arg19[%c33] : memref<98xf32, #tpu.memory_space<smem>>
    %399 = vector.broadcast %398 : f32 to vector<1x484xf32>
    %400 = arith.mulf %397, %399 : vector<1x484xf32>
    %401 = arith.addf %394, %400 : vector<1x484xf32>
    %cst_144 = arith.constant 0.000000e+00 : f32
    %402 = vector.broadcast %cst_144 : f32 to vector<1x22xf32>
    %403 = vector.extract_strided_slice %158 {offsets = [0, 0], sizes = [1, 462], strides = [1, 1]} : vector<1x484xf32> to vector<1x462xf32>
    %404 = tpu.concatenate %402, %403 in 1 : vector<1x22xf32>, vector<1x462xf32> -> vector<1x484xf32>
    %c34 = arith.constant 34 : index
    %405 = memref.load %arg19[%c34] : memref<98xf32, #tpu.memory_space<smem>>
    %406 = vector.broadcast %405 : f32 to vector<1x484xf32>
    %407 = arith.mulf %404, %406 : vector<1x484xf32>
    %408 = arith.addf %401, %407 : vector<1x484xf32>
    %cst_145 = arith.constant 0.000000e+00 : f32
    %409 = vector.broadcast %cst_145 : f32 to vector<1x22xf32>
    %410 = vector.extract_strided_slice %162 {offsets = [0, 0], sizes = [1, 462], strides = [1, 1]} : vector<1x484xf32> to vector<1x462xf32>
    %411 = tpu.concatenate %409, %410 in 1 : vector<1x22xf32>, vector<1x462xf32> -> vector<1x484xf32>
    %c35 = arith.constant 35 : index
    %412 = memref.load %arg19[%c35] : memref<98xf32, #tpu.memory_space<smem>>
    %413 = vector.broadcast %412 : f32 to vector<1x484xf32>
    %414 = arith.mulf %411, %413 : vector<1x484xf32>
    %415 = arith.addf %408, %414 : vector<1x484xf32>
    %cst_146 = arith.constant 0.000000e+00 : f32
    %416 = vector.broadcast %cst_146 : f32 to vector<1x21xf32>
    %417 = vector.extract_strided_slice %158 {offsets = [0, 0], sizes = [1, 463], strides = [1, 1]} : vector<1x484xf32> to vector<1x463xf32>
    %418 = tpu.concatenate %416, %417 in 1 : vector<1x21xf32>, vector<1x463xf32> -> vector<1x484xf32>
    %c36 = arith.constant 36 : index
    %419 = memref.load %arg19[%c36] : memref<98xf32, #tpu.memory_space<smem>>
    %420 = vector.broadcast %419 : f32 to vector<1x484xf32>
    %421 = arith.mulf %418, %420 : vector<1x484xf32>
    %422 = arith.addf %415, %421 : vector<1x484xf32>
    %cst_147 = arith.constant 0.000000e+00 : f32
    %423 = vector.broadcast %cst_147 : f32 to vector<1x21xf32>
    %424 = vector.extract_strided_slice %162 {offsets = [0, 0], sizes = [1, 463], strides = [1, 1]} : vector<1x484xf32> to vector<1x463xf32>
    %425 = tpu.concatenate %423, %424 in 1 : vector<1x21xf32>, vector<1x463xf32> -> vector<1x484xf32>
    %c37 = arith.constant 37 : index
    %426 = memref.load %arg19[%c37] : memref<98xf32, #tpu.memory_space<smem>>
    %427 = vector.broadcast %426 : f32 to vector<1x484xf32>
    %428 = arith.mulf %425, %427 : vector<1x484xf32>
    %429 = arith.addf %422, %428 : vector<1x484xf32>
    %cst_148 = arith.constant 0.000000e+00 : f32
    %430 = vector.broadcast %cst_148 : f32 to vector<1x20xf32>
    %431 = vector.extract_strided_slice %158 {offsets = [0, 0], sizes = [1, 464], strides = [1, 1]} : vector<1x484xf32> to vector<1x464xf32>
    %432 = tpu.concatenate %430, %431 in 1 : vector<1x20xf32>, vector<1x464xf32> -> vector<1x484xf32>
    %c38 = arith.constant 38 : index
    %433 = memref.load %arg19[%c38] : memref<98xf32, #tpu.memory_space<smem>>
    %434 = vector.broadcast %433 : f32 to vector<1x484xf32>
    %435 = arith.mulf %432, %434 : vector<1x484xf32>
    %436 = arith.addf %429, %435 : vector<1x484xf32>
    %cst_149 = arith.constant 0.000000e+00 : f32
    %437 = vector.broadcast %cst_149 : f32 to vector<1x20xf32>
    %438 = vector.extract_strided_slice %162 {offsets = [0, 0], sizes = [1, 464], strides = [1, 1]} : vector<1x484xf32> to vector<1x464xf32>
    %439 = tpu.concatenate %437, %438 in 1 : vector<1x20xf32>, vector<1x464xf32> -> vector<1x484xf32>
    %c39 = arith.constant 39 : index
    %440 = memref.load %arg19[%c39] : memref<98xf32, #tpu.memory_space<smem>>
    %441 = vector.broadcast %440 : f32 to vector<1x484xf32>
    %442 = arith.mulf %439, %441 : vector<1x484xf32>
    %443 = arith.addf %436, %442 : vector<1x484xf32>
    %cst_150 = arith.constant 0.000000e+00 : f32
    %444 = vector.broadcast %cst_150 : f32 to vector<1x19xf32>
    %445 = vector.extract_strided_slice %158 {offsets = [0, 0], sizes = [1, 465], strides = [1, 1]} : vector<1x484xf32> to vector<1x465xf32>
    %446 = tpu.concatenate %444, %445 in 1 : vector<1x19xf32>, vector<1x465xf32> -> vector<1x484xf32>
    %c40 = arith.constant 40 : index
    %447 = memref.load %arg19[%c40] : memref<98xf32, #tpu.memory_space<smem>>
    %448 = vector.broadcast %447 : f32 to vector<1x484xf32>
    %449 = arith.mulf %446, %448 : vector<1x484xf32>
    %450 = arith.addf %443, %449 : vector<1x484xf32>
    %cst_151 = arith.constant 0.000000e+00 : f32
    %451 = vector.broadcast %cst_151 : f32 to vector<1x19xf32>
    %452 = vector.extract_strided_slice %162 {offsets = [0, 0], sizes = [1, 465], strides = [1, 1]} : vector<1x484xf32> to vector<1x465xf32>
    %453 = tpu.concatenate %451, %452 in 1 : vector<1x19xf32>, vector<1x465xf32> -> vector<1x484xf32>
    %c41 = arith.constant 41 : index
    %454 = memref.load %arg19[%c41] : memref<98xf32, #tpu.memory_space<smem>>
    %455 = vector.broadcast %454 : f32 to vector<1x484xf32>
    %456 = arith.mulf %453, %455 : vector<1x484xf32>
    %457 = arith.addf %450, %456 : vector<1x484xf32>
    %cst_152 = arith.constant 0.000000e+00 : f32
    %458 = vector.broadcast %cst_152 : f32 to vector<1x3xf32>
    %459 = vector.extract_strided_slice %158 {offsets = [0, 0], sizes = [1, 481], strides = [1, 1]} : vector<1x484xf32> to vector<1x481xf32>
    %460 = tpu.concatenate %458, %459 in 1 : vector<1x3xf32>, vector<1x481xf32> -> vector<1x484xf32>
    %c42 = arith.constant 42 : index
    %461 = memref.load %arg19[%c42] : memref<98xf32, #tpu.memory_space<smem>>
    %462 = vector.broadcast %461 : f32 to vector<1x484xf32>
    %463 = arith.mulf %460, %462 : vector<1x484xf32>
    %464 = arith.addf %457, %463 : vector<1x484xf32>
    %cst_153 = arith.constant 0.000000e+00 : f32
    %465 = vector.broadcast %cst_153 : f32 to vector<1x3xf32>
    %466 = vector.extract_strided_slice %162 {offsets = [0, 0], sizes = [1, 481], strides = [1, 1]} : vector<1x484xf32> to vector<1x481xf32>
    %467 = tpu.concatenate %465, %466 in 1 : vector<1x3xf32>, vector<1x481xf32> -> vector<1x484xf32>
    %c43 = arith.constant 43 : index
    %468 = memref.load %arg19[%c43] : memref<98xf32, #tpu.memory_space<smem>>
    %469 = vector.broadcast %468 : f32 to vector<1x484xf32>
    %470 = arith.mulf %467, %469 : vector<1x484xf32>
    %471 = arith.addf %464, %470 : vector<1x484xf32>
    %cst_154 = arith.constant 0.000000e+00 : f32
    %472 = vector.broadcast %cst_154 : f32 to vector<1x2xf32>
    %473 = vector.extract_strided_slice %158 {offsets = [0, 0], sizes = [1, 482], strides = [1, 1]} : vector<1x484xf32> to vector<1x482xf32>
    %474 = tpu.concatenate %472, %473 in 1 : vector<1x2xf32>, vector<1x482xf32> -> vector<1x484xf32>
    %c44 = arith.constant 44 : index
    %475 = memref.load %arg19[%c44] : memref<98xf32, #tpu.memory_space<smem>>
    %476 = vector.broadcast %475 : f32 to vector<1x484xf32>
    %477 = arith.mulf %474, %476 : vector<1x484xf32>
    %478 = arith.addf %471, %477 : vector<1x484xf32>
    %cst_155 = arith.constant 0.000000e+00 : f32
    %479 = vector.broadcast %cst_155 : f32 to vector<1x2xf32>
    %480 = vector.extract_strided_slice %162 {offsets = [0, 0], sizes = [1, 482], strides = [1, 1]} : vector<1x484xf32> to vector<1x482xf32>
    %481 = tpu.concatenate %479, %480 in 1 : vector<1x2xf32>, vector<1x482xf32> -> vector<1x484xf32>
    %c45 = arith.constant 45 : index
    %482 = memref.load %arg19[%c45] : memref<98xf32, #tpu.memory_space<smem>>
    %483 = vector.broadcast %482 : f32 to vector<1x484xf32>
    %484 = arith.mulf %481, %483 : vector<1x484xf32>
    %485 = arith.addf %478, %484 : vector<1x484xf32>
    %cst_156 = arith.constant 0.000000e+00 : f32
    %486 = vector.broadcast %cst_156 : f32 to vector<1x1xf32>
    %487 = vector.extract_strided_slice %158 {offsets = [0, 0], sizes = [1, 483], strides = [1, 1]} : vector<1x484xf32> to vector<1x483xf32>
    %488 = tpu.concatenate %486, %487 in 1 : vector<1x1xf32>, vector<1x483xf32> -> vector<1x484xf32>
    %c46 = arith.constant 46 : index
    %489 = memref.load %arg19[%c46] : memref<98xf32, #tpu.memory_space<smem>>
    %490 = vector.broadcast %489 : f32 to vector<1x484xf32>
    %491 = arith.mulf %488, %490 : vector<1x484xf32>
    %492 = arith.addf %485, %491 : vector<1x484xf32>
    %cst_157 = arith.constant 0.000000e+00 : f32
    %493 = vector.broadcast %cst_157 : f32 to vector<1x1xf32>
    %494 = vector.extract_strided_slice %162 {offsets = [0, 0], sizes = [1, 483], strides = [1, 1]} : vector<1x484xf32> to vector<1x483xf32>
    %495 = tpu.concatenate %493, %494 in 1 : vector<1x1xf32>, vector<1x483xf32> -> vector<1x484xf32>
    %c47 = arith.constant 47 : index
    %496 = memref.load %arg19[%c47] : memref<98xf32, #tpu.memory_space<smem>>
    %497 = vector.broadcast %496 : f32 to vector<1x484xf32>
    %498 = arith.mulf %495, %497 : vector<1x484xf32>
    %499 = arith.addf %492, %498 : vector<1x484xf32>
    %c48_158 = arith.constant 48 : index
    %500 = memref.load %arg19[%c48_158] : memref<98xf32, #tpu.memory_space<smem>>
    %501 = vector.broadcast %500 : f32 to vector<1x484xf32>
    %502 = arith.mulf %158, %501 : vector<1x484xf32>
    %503 = arith.addf %499, %502 : vector<1x484xf32>
    %c49 = arith.constant 49 : index
    %504 = memref.load %arg19[%c49] : memref<98xf32, #tpu.memory_space<smem>>
    %505 = vector.broadcast %504 : f32 to vector<1x484xf32>
    %506 = arith.mulf %162, %505 : vector<1x484xf32>
    %507 = arith.addf %503, %506 : vector<1x484xf32>
    %cst_159 = arith.constant 0.000000e+00 : f32
    %508 = vector.broadcast %cst_159 : f32 to vector<1x1xf32>
    %509 = vector.extract_strided_slice %158 {offsets = [0, 1], sizes = [1, 483], strides = [1, 1]} : vector<1x484xf32> to vector<1x483xf32>
    %510 = tpu.concatenate %509, %508 in 1 : vector<1x483xf32>, vector<1x1xf32> -> vector<1x484xf32>
    %c50 = arith.constant 50 : index
    %511 = memref.load %arg19[%c50] : memref<98xf32, #tpu.memory_space<smem>>
    %512 = vector.broadcast %511 : f32 to vector<1x484xf32>
    %513 = arith.mulf %510, %512 : vector<1x484xf32>
    %514 = arith.addf %507, %513 : vector<1x484xf32>
    %cst_160 = arith.constant 0.000000e+00 : f32
    %515 = vector.broadcast %cst_160 : f32 to vector<1x1xf32>
    %516 = vector.extract_strided_slice %162 {offsets = [0, 1], sizes = [1, 483], strides = [1, 1]} : vector<1x484xf32> to vector<1x483xf32>
    %517 = tpu.concatenate %516, %515 in 1 : vector<1x483xf32>, vector<1x1xf32> -> vector<1x484xf32>
    %c51 = arith.constant 51 : index
    %518 = memref.load %arg19[%c51] : memref<98xf32, #tpu.memory_space<smem>>
    %519 = vector.broadcast %518 : f32 to vector<1x484xf32>
    %520 = arith.mulf %517, %519 : vector<1x484xf32>
    %521 = arith.addf %514, %520 : vector<1x484xf32>
    %cst_161 = arith.constant 0.000000e+00 : f32
    %522 = vector.broadcast %cst_161 : f32 to vector<1x2xf32>
    %523 = vector.extract_strided_slice %158 {offsets = [0, 2], sizes = [1, 482], strides = [1, 1]} : vector<1x484xf32> to vector<1x482xf32>
    %524 = tpu.concatenate %523, %522 in 1 : vector<1x482xf32>, vector<1x2xf32> -> vector<1x484xf32>
    %c52 = arith.constant 52 : index
    %525 = memref.load %arg19[%c52] : memref<98xf32, #tpu.memory_space<smem>>
    %526 = vector.broadcast %525 : f32 to vector<1x484xf32>
    %527 = arith.mulf %524, %526 : vector<1x484xf32>
    %528 = arith.addf %521, %527 : vector<1x484xf32>
    %cst_162 = arith.constant 0.000000e+00 : f32
    %529 = vector.broadcast %cst_162 : f32 to vector<1x2xf32>
    %530 = vector.extract_strided_slice %162 {offsets = [0, 2], sizes = [1, 482], strides = [1, 1]} : vector<1x484xf32> to vector<1x482xf32>
    %531 = tpu.concatenate %530, %529 in 1 : vector<1x482xf32>, vector<1x2xf32> -> vector<1x484xf32>
    %c53 = arith.constant 53 : index
    %532 = memref.load %arg19[%c53] : memref<98xf32, #tpu.memory_space<smem>>
    %533 = vector.broadcast %532 : f32 to vector<1x484xf32>
    %534 = arith.mulf %531, %533 : vector<1x484xf32>
    %535 = arith.addf %528, %534 : vector<1x484xf32>
    %cst_163 = arith.constant 0.000000e+00 : f32
    %536 = vector.broadcast %cst_163 : f32 to vector<1x3xf32>
    %537 = vector.extract_strided_slice %158 {offsets = [0, 3], sizes = [1, 481], strides = [1, 1]} : vector<1x484xf32> to vector<1x481xf32>
    %538 = tpu.concatenate %537, %536 in 1 : vector<1x481xf32>, vector<1x3xf32> -> vector<1x484xf32>
    %c54 = arith.constant 54 : index
    %539 = memref.load %arg19[%c54] : memref<98xf32, #tpu.memory_space<smem>>
    %540 = vector.broadcast %539 : f32 to vector<1x484xf32>
    %541 = arith.mulf %538, %540 : vector<1x484xf32>
    %542 = arith.addf %535, %541 : vector<1x484xf32>
    %cst_164 = arith.constant 0.000000e+00 : f32
    %543 = vector.broadcast %cst_164 : f32 to vector<1x3xf32>
    %544 = vector.extract_strided_slice %162 {offsets = [0, 3], sizes = [1, 481], strides = [1, 1]} : vector<1x484xf32> to vector<1x481xf32>
    %545 = tpu.concatenate %544, %543 in 1 : vector<1x481xf32>, vector<1x3xf32> -> vector<1x484xf32>
    %c55 = arith.constant 55 : index
    %546 = memref.load %arg19[%c55] : memref<98xf32, #tpu.memory_space<smem>>
    %547 = vector.broadcast %546 : f32 to vector<1x484xf32>
    %548 = arith.mulf %545, %547 : vector<1x484xf32>
    %549 = arith.addf %542, %548 : vector<1x484xf32>
    %cst_165 = arith.constant 0.000000e+00 : f32
    %550 = vector.broadcast %cst_165 : f32 to vector<1x19xf32>
    %551 = vector.extract_strided_slice %158 {offsets = [0, 19], sizes = [1, 465], strides = [1, 1]} : vector<1x484xf32> to vector<1x465xf32>
    %552 = tpu.concatenate %551, %550 in 1 : vector<1x465xf32>, vector<1x19xf32> -> vector<1x484xf32>
    %c56 = arith.constant 56 : index
    %553 = memref.load %arg19[%c56] : memref<98xf32, #tpu.memory_space<smem>>
    %554 = vector.broadcast %553 : f32 to vector<1x484xf32>
    %555 = arith.mulf %552, %554 : vector<1x484xf32>
    %556 = arith.addf %549, %555 : vector<1x484xf32>
    %cst_166 = arith.constant 0.000000e+00 : f32
    %557 = vector.broadcast %cst_166 : f32 to vector<1x19xf32>
    %558 = vector.extract_strided_slice %162 {offsets = [0, 19], sizes = [1, 465], strides = [1, 1]} : vector<1x484xf32> to vector<1x465xf32>
    %559 = tpu.concatenate %558, %557 in 1 : vector<1x465xf32>, vector<1x19xf32> -> vector<1x484xf32>
    %c57 = arith.constant 57 : index
    %560 = memref.load %arg19[%c57] : memref<98xf32, #tpu.memory_space<smem>>
    %561 = vector.broadcast %560 : f32 to vector<1x484xf32>
    %562 = arith.mulf %559, %561 : vector<1x484xf32>
    %563 = arith.addf %556, %562 : vector<1x484xf32>
    %cst_167 = arith.constant 0.000000e+00 : f32
    %564 = vector.broadcast %cst_167 : f32 to vector<1x20xf32>
    %565 = vector.extract_strided_slice %158 {offsets = [0, 20], sizes = [1, 464], strides = [1, 1]} : vector<1x484xf32> to vector<1x464xf32>
    %566 = tpu.concatenate %565, %564 in 1 : vector<1x464xf32>, vector<1x20xf32> -> vector<1x484xf32>
    %c58 = arith.constant 58 : index
    %567 = memref.load %arg19[%c58] : memref<98xf32, #tpu.memory_space<smem>>
    %568 = vector.broadcast %567 : f32 to vector<1x484xf32>
    %569 = arith.mulf %566, %568 : vector<1x484xf32>
    %570 = arith.addf %563, %569 : vector<1x484xf32>
    %cst_168 = arith.constant 0.000000e+00 : f32
    %571 = vector.broadcast %cst_168 : f32 to vector<1x20xf32>
    %572 = vector.extract_strided_slice %162 {offsets = [0, 20], sizes = [1, 464], strides = [1, 1]} : vector<1x484xf32> to vector<1x464xf32>
    %573 = tpu.concatenate %572, %571 in 1 : vector<1x464xf32>, vector<1x20xf32> -> vector<1x484xf32>
    %c59 = arith.constant 59 : index
    %574 = memref.load %arg19[%c59] : memref<98xf32, #tpu.memory_space<smem>>
    %575 = vector.broadcast %574 : f32 to vector<1x484xf32>
    %576 = arith.mulf %573, %575 : vector<1x484xf32>
    %577 = arith.addf %570, %576 : vector<1x484xf32>
    %cst_169 = arith.constant 0.000000e+00 : f32
    %578 = vector.broadcast %cst_169 : f32 to vector<1x21xf32>
    %579 = vector.extract_strided_slice %158 {offsets = [0, 21], sizes = [1, 463], strides = [1, 1]} : vector<1x484xf32> to vector<1x463xf32>
    %580 = tpu.concatenate %579, %578 in 1 : vector<1x463xf32>, vector<1x21xf32> -> vector<1x484xf32>
    %c60 = arith.constant 60 : index
    %581 = memref.load %arg19[%c60] : memref<98xf32, #tpu.memory_space<smem>>
    %582 = vector.broadcast %581 : f32 to vector<1x484xf32>
    %583 = arith.mulf %580, %582 : vector<1x484xf32>
    %584 = arith.addf %577, %583 : vector<1x484xf32>
    %cst_170 = arith.constant 0.000000e+00 : f32
    %585 = vector.broadcast %cst_170 : f32 to vector<1x21xf32>
    %586 = vector.extract_strided_slice %162 {offsets = [0, 21], sizes = [1, 463], strides = [1, 1]} : vector<1x484xf32> to vector<1x463xf32>
    %587 = tpu.concatenate %586, %585 in 1 : vector<1x463xf32>, vector<1x21xf32> -> vector<1x484xf32>
    %c61 = arith.constant 61 : index
    %588 = memref.load %arg19[%c61] : memref<98xf32, #tpu.memory_space<smem>>
    %589 = vector.broadcast %588 : f32 to vector<1x484xf32>
    %590 = arith.mulf %587, %589 : vector<1x484xf32>
    %591 = arith.addf %584, %590 : vector<1x484xf32>
    %cst_171 = arith.constant 0.000000e+00 : f32
    %592 = vector.broadcast %cst_171 : f32 to vector<1x22xf32>
    %593 = vector.extract_strided_slice %158 {offsets = [0, 22], sizes = [1, 462], strides = [1, 1]} : vector<1x484xf32> to vector<1x462xf32>
    %594 = tpu.concatenate %593, %592 in 1 : vector<1x462xf32>, vector<1x22xf32> -> vector<1x484xf32>
    %c62 = arith.constant 62 : index
    %595 = memref.load %arg19[%c62] : memref<98xf32, #tpu.memory_space<smem>>
    %596 = vector.broadcast %595 : f32 to vector<1x484xf32>
    %597 = arith.mulf %594, %596 : vector<1x484xf32>
    %598 = arith.addf %591, %597 : vector<1x484xf32>
    %cst_172 = arith.constant 0.000000e+00 : f32
    %599 = vector.broadcast %cst_172 : f32 to vector<1x22xf32>
    %600 = vector.extract_strided_slice %162 {offsets = [0, 22], sizes = [1, 462], strides = [1, 1]} : vector<1x484xf32> to vector<1x462xf32>
    %601 = tpu.concatenate %600, %599 in 1 : vector<1x462xf32>, vector<1x22xf32> -> vector<1x484xf32>
    %c63 = arith.constant 63 : index
    %602 = memref.load %arg19[%c63] : memref<98xf32, #tpu.memory_space<smem>>
    %603 = vector.broadcast %602 : f32 to vector<1x484xf32>
    %604 = arith.mulf %601, %603 : vector<1x484xf32>
    %605 = arith.addf %598, %604 : vector<1x484xf32>
    %cst_173 = arith.constant 0.000000e+00 : f32
    %606 = vector.broadcast %cst_173 : f32 to vector<1x23xf32>
    %607 = vector.extract_strided_slice %158 {offsets = [0, 23], sizes = [1, 461], strides = [1, 1]} : vector<1x484xf32> to vector<1x461xf32>
    %608 = tpu.concatenate %607, %606 in 1 : vector<1x461xf32>, vector<1x23xf32> -> vector<1x484xf32>
    %c64_174 = arith.constant 64 : index
    %609 = memref.load %arg19[%c64_174] : memref<98xf32, #tpu.memory_space<smem>>
    %610 = vector.broadcast %609 : f32 to vector<1x484xf32>
    %611 = arith.mulf %608, %610 : vector<1x484xf32>
    %612 = arith.addf %605, %611 : vector<1x484xf32>
    %cst_175 = arith.constant 0.000000e+00 : f32
    %613 = vector.broadcast %cst_175 : f32 to vector<1x23xf32>
    %614 = vector.extract_strided_slice %162 {offsets = [0, 23], sizes = [1, 461], strides = [1, 1]} : vector<1x484xf32> to vector<1x461xf32>
    %615 = tpu.concatenate %614, %613 in 1 : vector<1x461xf32>, vector<1x23xf32> -> vector<1x484xf32>
    %c65 = arith.constant 65 : index
    %616 = memref.load %arg19[%c65] : memref<98xf32, #tpu.memory_space<smem>>
    %617 = vector.broadcast %616 : f32 to vector<1x484xf32>
    %618 = arith.mulf %615, %617 : vector<1x484xf32>
    %619 = arith.addf %612, %618 : vector<1x484xf32>
    %cst_176 = arith.constant 0.000000e+00 : f32
    %620 = vector.broadcast %cst_176 : f32 to vector<1x24xf32>
    %621 = vector.extract_strided_slice %158 {offsets = [0, 24], sizes = [1, 460], strides = [1, 1]} : vector<1x484xf32> to vector<1x460xf32>
    %622 = tpu.concatenate %621, %620 in 1 : vector<1x460xf32>, vector<1x24xf32> -> vector<1x484xf32>
    %c66 = arith.constant 66 : index
    %623 = memref.load %arg19[%c66] : memref<98xf32, #tpu.memory_space<smem>>
    %624 = vector.broadcast %623 : f32 to vector<1x484xf32>
    %625 = arith.mulf %622, %624 : vector<1x484xf32>
    %626 = arith.addf %619, %625 : vector<1x484xf32>
    %cst_177 = arith.constant 0.000000e+00 : f32
    %627 = vector.broadcast %cst_177 : f32 to vector<1x24xf32>
    %628 = vector.extract_strided_slice %162 {offsets = [0, 24], sizes = [1, 460], strides = [1, 1]} : vector<1x484xf32> to vector<1x460xf32>
    %629 = tpu.concatenate %628, %627 in 1 : vector<1x460xf32>, vector<1x24xf32> -> vector<1x484xf32>
    %c67 = arith.constant 67 : index
    %630 = memref.load %arg19[%c67] : memref<98xf32, #tpu.memory_space<smem>>
    %631 = vector.broadcast %630 : f32 to vector<1x484xf32>
    %632 = arith.mulf %629, %631 : vector<1x484xf32>
    %633 = arith.addf %626, %632 : vector<1x484xf32>
    %cst_178 = arith.constant 0.000000e+00 : f32
    %634 = vector.broadcast %cst_178 : f32 to vector<1x25xf32>
    %635 = vector.extract_strided_slice %158 {offsets = [0, 25], sizes = [1, 459], strides = [1, 1]} : vector<1x484xf32> to vector<1x459xf32>
    %636 = tpu.concatenate %635, %634 in 1 : vector<1x459xf32>, vector<1x25xf32> -> vector<1x484xf32>
    %c68 = arith.constant 68 : index
    %637 = memref.load %arg19[%c68] : memref<98xf32, #tpu.memory_space<smem>>
    %638 = vector.broadcast %637 : f32 to vector<1x484xf32>
    %639 = arith.mulf %636, %638 : vector<1x484xf32>
    %640 = arith.addf %633, %639 : vector<1x484xf32>
    %cst_179 = arith.constant 0.000000e+00 : f32
    %641 = vector.broadcast %cst_179 : f32 to vector<1x25xf32>
    %642 = vector.extract_strided_slice %162 {offsets = [0, 25], sizes = [1, 459], strides = [1, 1]} : vector<1x484xf32> to vector<1x459xf32>
    %643 = tpu.concatenate %642, %641 in 1 : vector<1x459xf32>, vector<1x25xf32> -> vector<1x484xf32>
    %c69 = arith.constant 69 : index
    %644 = memref.load %arg19[%c69] : memref<98xf32, #tpu.memory_space<smem>>
    %645 = vector.broadcast %644 : f32 to vector<1x484xf32>
    %646 = arith.mulf %643, %645 : vector<1x484xf32>
    %647 = arith.addf %640, %646 : vector<1x484xf32>
    %cst_180 = arith.constant 0.000000e+00 : f32
    %648 = vector.broadcast %cst_180 : f32 to vector<1x41xf32>
    %649 = vector.extract_strided_slice %158 {offsets = [0, 41], sizes = [1, 443], strides = [1, 1]} : vector<1x484xf32> to vector<1x443xf32>
    %650 = tpu.concatenate %649, %648 in 1 : vector<1x443xf32>, vector<1x41xf32> -> vector<1x484xf32>
    %c70 = arith.constant 70 : index
    %651 = memref.load %arg19[%c70] : memref<98xf32, #tpu.memory_space<smem>>
    %652 = vector.broadcast %651 : f32 to vector<1x484xf32>
    %653 = arith.mulf %650, %652 : vector<1x484xf32>
    %654 = arith.addf %647, %653 : vector<1x484xf32>
    %cst_181 = arith.constant 0.000000e+00 : f32
    %655 = vector.broadcast %cst_181 : f32 to vector<1x41xf32>
    %656 = vector.extract_strided_slice %162 {offsets = [0, 41], sizes = [1, 443], strides = [1, 1]} : vector<1x484xf32> to vector<1x443xf32>
    %657 = tpu.concatenate %656, %655 in 1 : vector<1x443xf32>, vector<1x41xf32> -> vector<1x484xf32>
    %c71 = arith.constant 71 : index
    %658 = memref.load %arg19[%c71] : memref<98xf32, #tpu.memory_space<smem>>
    %659 = vector.broadcast %658 : f32 to vector<1x484xf32>
    %660 = arith.mulf %657, %659 : vector<1x484xf32>
    %661 = arith.addf %654, %660 : vector<1x484xf32>
    %cst_182 = arith.constant 0.000000e+00 : f32
    %662 = vector.broadcast %cst_182 : f32 to vector<1x42xf32>
    %663 = vector.extract_strided_slice %158 {offsets = [0, 42], sizes = [1, 442], strides = [1, 1]} : vector<1x484xf32> to vector<1x442xf32>
    %664 = tpu.concatenate %663, %662 in 1 : vector<1x442xf32>, vector<1x42xf32> -> vector<1x484xf32>
    %c72 = arith.constant 72 : index
    %665 = memref.load %arg19[%c72] : memref<98xf32, #tpu.memory_space<smem>>
    %666 = vector.broadcast %665 : f32 to vector<1x484xf32>
    %667 = arith.mulf %664, %666 : vector<1x484xf32>
    %668 = arith.addf %661, %667 : vector<1x484xf32>
    %cst_183 = arith.constant 0.000000e+00 : f32
    %669 = vector.broadcast %cst_183 : f32 to vector<1x42xf32>
    %670 = vector.extract_strided_slice %162 {offsets = [0, 42], sizes = [1, 442], strides = [1, 1]} : vector<1x484xf32> to vector<1x442xf32>
    %671 = tpu.concatenate %670, %669 in 1 : vector<1x442xf32>, vector<1x42xf32> -> vector<1x484xf32>
    %c73 = arith.constant 73 : index
    %672 = memref.load %arg19[%c73] : memref<98xf32, #tpu.memory_space<smem>>
    %673 = vector.broadcast %672 : f32 to vector<1x484xf32>
    %674 = arith.mulf %671, %673 : vector<1x484xf32>
    %675 = arith.addf %668, %674 : vector<1x484xf32>
    %cst_184 = arith.constant 0.000000e+00 : f32
    %676 = vector.broadcast %cst_184 : f32 to vector<1x43xf32>
    %677 = vector.extract_strided_slice %158 {offsets = [0, 43], sizes = [1, 441], strides = [1, 1]} : vector<1x484xf32> to vector<1x441xf32>
    %678 = tpu.concatenate %677, %676 in 1 : vector<1x441xf32>, vector<1x43xf32> -> vector<1x484xf32>
    %c74 = arith.constant 74 : index
    %679 = memref.load %arg19[%c74] : memref<98xf32, #tpu.memory_space<smem>>
    %680 = vector.broadcast %679 : f32 to vector<1x484xf32>
    %681 = arith.mulf %678, %680 : vector<1x484xf32>
    %682 = arith.addf %675, %681 : vector<1x484xf32>
    %cst_185 = arith.constant 0.000000e+00 : f32
    %683 = vector.broadcast %cst_185 : f32 to vector<1x43xf32>
    %684 = vector.extract_strided_slice %162 {offsets = [0, 43], sizes = [1, 441], strides = [1, 1]} : vector<1x484xf32> to vector<1x441xf32>
    %685 = tpu.concatenate %684, %683 in 1 : vector<1x441xf32>, vector<1x43xf32> -> vector<1x484xf32>
    %c75 = arith.constant 75 : index
    %686 = memref.load %arg19[%c75] : memref<98xf32, #tpu.memory_space<smem>>
    %687 = vector.broadcast %686 : f32 to vector<1x484xf32>
    %688 = arith.mulf %685, %687 : vector<1x484xf32>
    %689 = arith.addf %682, %688 : vector<1x484xf32>
    %cst_186 = arith.constant 0.000000e+00 : f32
    %690 = vector.broadcast %cst_186 : f32 to vector<1x44xf32>
    %691 = vector.extract_strided_slice %158 {offsets = [0, 44], sizes = [1, 440], strides = [1, 1]} : vector<1x484xf32> to vector<1x440xf32>
    %692 = tpu.concatenate %691, %690 in 1 : vector<1x440xf32>, vector<1x44xf32> -> vector<1x484xf32>
    %c76 = arith.constant 76 : index
    %693 = memref.load %arg19[%c76] : memref<98xf32, #tpu.memory_space<smem>>
    %694 = vector.broadcast %693 : f32 to vector<1x484xf32>
    %695 = arith.mulf %692, %694 : vector<1x484xf32>
    %696 = arith.addf %689, %695 : vector<1x484xf32>
    %cst_187 = arith.constant 0.000000e+00 : f32
    %697 = vector.broadcast %cst_187 : f32 to vector<1x44xf32>
    %698 = vector.extract_strided_slice %162 {offsets = [0, 44], sizes = [1, 440], strides = [1, 1]} : vector<1x484xf32> to vector<1x440xf32>
    %699 = tpu.concatenate %698, %697 in 1 : vector<1x440xf32>, vector<1x44xf32> -> vector<1x484xf32>
    %c77 = arith.constant 77 : index
    %700 = memref.load %arg19[%c77] : memref<98xf32, #tpu.memory_space<smem>>
    %701 = vector.broadcast %700 : f32 to vector<1x484xf32>
    %702 = arith.mulf %699, %701 : vector<1x484xf32>
    %703 = arith.addf %696, %702 : vector<1x484xf32>
    %cst_188 = arith.constant 0.000000e+00 : f32
    %704 = vector.broadcast %cst_188 : f32 to vector<1x45xf32>
    %705 = vector.extract_strided_slice %158 {offsets = [0, 45], sizes = [1, 439], strides = [1, 1]} : vector<1x484xf32> to vector<1x439xf32>
    %706 = tpu.concatenate %705, %704 in 1 : vector<1x439xf32>, vector<1x45xf32> -> vector<1x484xf32>
    %c78 = arith.constant 78 : index
    %707 = memref.load %arg19[%c78] : memref<98xf32, #tpu.memory_space<smem>>
    %708 = vector.broadcast %707 : f32 to vector<1x484xf32>
    %709 = arith.mulf %706, %708 : vector<1x484xf32>
    %710 = arith.addf %703, %709 : vector<1x484xf32>
    %cst_189 = arith.constant 0.000000e+00 : f32
    %711 = vector.broadcast %cst_189 : f32 to vector<1x45xf32>
    %712 = vector.extract_strided_slice %162 {offsets = [0, 45], sizes = [1, 439], strides = [1, 1]} : vector<1x484xf32> to vector<1x439xf32>
    %713 = tpu.concatenate %712, %711 in 1 : vector<1x439xf32>, vector<1x45xf32> -> vector<1x484xf32>
    %c79 = arith.constant 79 : index
    %714 = memref.load %arg19[%c79] : memref<98xf32, #tpu.memory_space<smem>>
    %715 = vector.broadcast %714 : f32 to vector<1x484xf32>
    %716 = arith.mulf %713, %715 : vector<1x484xf32>
    %717 = arith.addf %710, %716 : vector<1x484xf32>
    %cst_190 = arith.constant 0.000000e+00 : f32
    %718 = vector.broadcast %cst_190 : f32 to vector<1x46xf32>
    %719 = vector.extract_strided_slice %158 {offsets = [0, 46], sizes = [1, 438], strides = [1, 1]} : vector<1x484xf32> to vector<1x438xf32>
    %720 = tpu.concatenate %719, %718 in 1 : vector<1x438xf32>, vector<1x46xf32> -> vector<1x484xf32>
    %c80_191 = arith.constant 80 : index
    %721 = memref.load %arg19[%c80_191] : memref<98xf32, #tpu.memory_space<smem>>
    %722 = vector.broadcast %721 : f32 to vector<1x484xf32>
    %723 = arith.mulf %720, %722 : vector<1x484xf32>
    %724 = arith.addf %717, %723 : vector<1x484xf32>
    %cst_192 = arith.constant 0.000000e+00 : f32
    %725 = vector.broadcast %cst_192 : f32 to vector<1x46xf32>
    %726 = vector.extract_strided_slice %162 {offsets = [0, 46], sizes = [1, 438], strides = [1, 1]} : vector<1x484xf32> to vector<1x438xf32>
    %727 = tpu.concatenate %726, %725 in 1 : vector<1x438xf32>, vector<1x46xf32> -> vector<1x484xf32>
    %c81 = arith.constant 81 : index
    %728 = memref.load %arg19[%c81] : memref<98xf32, #tpu.memory_space<smem>>
    %729 = vector.broadcast %728 : f32 to vector<1x484xf32>
    %730 = arith.mulf %727, %729 : vector<1x484xf32>
    %731 = arith.addf %724, %730 : vector<1x484xf32>
    %cst_193 = arith.constant 0.000000e+00 : f32
    %732 = vector.broadcast %cst_193 : f32 to vector<1x47xf32>
    %733 = vector.extract_strided_slice %158 {offsets = [0, 47], sizes = [1, 437], strides = [1, 1]} : vector<1x484xf32> to vector<1x437xf32>
    %734 = tpu.concatenate %733, %732 in 1 : vector<1x437xf32>, vector<1x47xf32> -> vector<1x484xf32>
    %c82 = arith.constant 82 : index
    %735 = memref.load %arg19[%c82] : memref<98xf32, #tpu.memory_space<smem>>
    %736 = vector.broadcast %735 : f32 to vector<1x484xf32>
    %737 = arith.mulf %734, %736 : vector<1x484xf32>
    %738 = arith.addf %731, %737 : vector<1x484xf32>
    %cst_194 = arith.constant 0.000000e+00 : f32
    %739 = vector.broadcast %cst_194 : f32 to vector<1x47xf32>
    %740 = vector.extract_strided_slice %162 {offsets = [0, 47], sizes = [1, 437], strides = [1, 1]} : vector<1x484xf32> to vector<1x437xf32>
    %741 = tpu.concatenate %740, %739 in 1 : vector<1x437xf32>, vector<1x47xf32> -> vector<1x484xf32>
    %c83 = arith.constant 83 : index
    %742 = memref.load %arg19[%c83] : memref<98xf32, #tpu.memory_space<smem>>
    %743 = vector.broadcast %742 : f32 to vector<1x484xf32>
    %744 = arith.mulf %741, %743 : vector<1x484xf32>
    %745 = arith.addf %738, %744 : vector<1x484xf32>
    %cst_195 = arith.constant 0.000000e+00 : f32
    %746 = vector.broadcast %cst_195 : f32 to vector<1x63xf32>
    %747 = vector.extract_strided_slice %158 {offsets = [0, 63], sizes = [1, 421], strides = [1, 1]} : vector<1x484xf32> to vector<1x421xf32>
    %748 = tpu.concatenate %747, %746 in 1 : vector<1x421xf32>, vector<1x63xf32> -> vector<1x484xf32>
    %c84 = arith.constant 84 : index
    %749 = memref.load %arg19[%c84] : memref<98xf32, #tpu.memory_space<smem>>
    %750 = vector.broadcast %749 : f32 to vector<1x484xf32>
    %751 = arith.mulf %748, %750 : vector<1x484xf32>
    %752 = arith.addf %745, %751 : vector<1x484xf32>
    %cst_196 = arith.constant 0.000000e+00 : f32
    %753 = vector.broadcast %cst_196 : f32 to vector<1x63xf32>
    %754 = vector.extract_strided_slice %162 {offsets = [0, 63], sizes = [1, 421], strides = [1, 1]} : vector<1x484xf32> to vector<1x421xf32>
    %755 = tpu.concatenate %754, %753 in 1 : vector<1x421xf32>, vector<1x63xf32> -> vector<1x484xf32>
    %c85 = arith.constant 85 : index
    %756 = memref.load %arg19[%c85] : memref<98xf32, #tpu.memory_space<smem>>
    %757 = vector.broadcast %756 : f32 to vector<1x484xf32>
    %758 = arith.mulf %755, %757 : vector<1x484xf32>
    %759 = arith.addf %752, %758 : vector<1x484xf32>
    %cst_197 = arith.constant 0.000000e+00 : f32
    %760 = vector.broadcast %cst_197 : f32 to vector<1x64xf32>
    %761 = vector.extract_strided_slice %158 {offsets = [0, 64], sizes = [1, 420], strides = [1, 1]} : vector<1x484xf32> to vector<1x420xf32>
    %762 = tpu.concatenate %761, %760 in 1 : vector<1x420xf32>, vector<1x64xf32> -> vector<1x484xf32>
    %c86 = arith.constant 86 : index
    %763 = memref.load %arg19[%c86] : memref<98xf32, #tpu.memory_space<smem>>
    %764 = vector.broadcast %763 : f32 to vector<1x484xf32>
    %765 = arith.mulf %762, %764 : vector<1x484xf32>
    %766 = arith.addf %759, %765 : vector<1x484xf32>
    %cst_198 = arith.constant 0.000000e+00 : f32
    %767 = vector.broadcast %cst_198 : f32 to vector<1x64xf32>
    %768 = vector.extract_strided_slice %162 {offsets = [0, 64], sizes = [1, 420], strides = [1, 1]} : vector<1x484xf32> to vector<1x420xf32>
    %769 = tpu.concatenate %768, %767 in 1 : vector<1x420xf32>, vector<1x64xf32> -> vector<1x484xf32>
    %c87 = arith.constant 87 : index
    %770 = memref.load %arg19[%c87] : memref<98xf32, #tpu.memory_space<smem>>
    %771 = vector.broadcast %770 : f32 to vector<1x484xf32>
    %772 = arith.mulf %769, %771 : vector<1x484xf32>
    %773 = arith.addf %766, %772 : vector<1x484xf32>
    %cst_199 = arith.constant 0.000000e+00 : f32
    %774 = vector.broadcast %cst_199 : f32 to vector<1x65xf32>
    %775 = vector.extract_strided_slice %158 {offsets = [0, 65], sizes = [1, 419], strides = [1, 1]} : vector<1x484xf32> to vector<1x419xf32>
    %776 = tpu.concatenate %775, %774 in 1 : vector<1x419xf32>, vector<1x65xf32> -> vector<1x484xf32>
    %c88 = arith.constant 88 : index
    %777 = memref.load %arg19[%c88] : memref<98xf32, #tpu.memory_space<smem>>
    %778 = vector.broadcast %777 : f32 to vector<1x484xf32>
    %779 = arith.mulf %776, %778 : vector<1x484xf32>
    %780 = arith.addf %773, %779 : vector<1x484xf32>
    %cst_200 = arith.constant 0.000000e+00 : f32
    %781 = vector.broadcast %cst_200 : f32 to vector<1x65xf32>
    %782 = vector.extract_strided_slice %162 {offsets = [0, 65], sizes = [1, 419], strides = [1, 1]} : vector<1x484xf32> to vector<1x419xf32>
    %783 = tpu.concatenate %782, %781 in 1 : vector<1x419xf32>, vector<1x65xf32> -> vector<1x484xf32>
    %c89 = arith.constant 89 : index
    %784 = memref.load %arg19[%c89] : memref<98xf32, #tpu.memory_space<smem>>
    %785 = vector.broadcast %784 : f32 to vector<1x484xf32>
    %786 = arith.mulf %783, %785 : vector<1x484xf32>
    %787 = arith.addf %780, %786 : vector<1x484xf32>
    %cst_201 = arith.constant 0.000000e+00 : f32
    %788 = vector.broadcast %cst_201 : f32 to vector<1x66xf32>
    %789 = vector.extract_strided_slice %158 {offsets = [0, 66], sizes = [1, 418], strides = [1, 1]} : vector<1x484xf32> to vector<1x418xf32>
    %790 = tpu.concatenate %789, %788 in 1 : vector<1x418xf32>, vector<1x66xf32> -> vector<1x484xf32>
    %c90 = arith.constant 90 : index
    %791 = memref.load %arg19[%c90] : memref<98xf32, #tpu.memory_space<smem>>
    %792 = vector.broadcast %791 : f32 to vector<1x484xf32>
    %793 = arith.mulf %790, %792 : vector<1x484xf32>
    %794 = arith.addf %787, %793 : vector<1x484xf32>
    %cst_202 = arith.constant 0.000000e+00 : f32
    %795 = vector.broadcast %cst_202 : f32 to vector<1x66xf32>
    %796 = vector.extract_strided_slice %162 {offsets = [0, 66], sizes = [1, 418], strides = [1, 1]} : vector<1x484xf32> to vector<1x418xf32>
    %797 = tpu.concatenate %796, %795 in 1 : vector<1x418xf32>, vector<1x66xf32> -> vector<1x484xf32>
    %c91 = arith.constant 91 : index
    %798 = memref.load %arg19[%c91] : memref<98xf32, #tpu.memory_space<smem>>
    %799 = vector.broadcast %798 : f32 to vector<1x484xf32>
    %800 = arith.mulf %797, %799 : vector<1x484xf32>
    %801 = arith.addf %794, %800 : vector<1x484xf32>
    %cst_203 = arith.constant 0.000000e+00 : f32
    %802 = vector.broadcast %cst_203 : f32 to vector<1x67xf32>
    %803 = vector.extract_strided_slice %158 {offsets = [0, 67], sizes = [1, 417], strides = [1, 1]} : vector<1x484xf32> to vector<1x417xf32>
    %804 = tpu.concatenate %803, %802 in 1 : vector<1x417xf32>, vector<1x67xf32> -> vector<1x484xf32>
    %c92 = arith.constant 92 : index
    %805 = memref.load %arg19[%c92] : memref<98xf32, #tpu.memory_space<smem>>
    %806 = vector.broadcast %805 : f32 to vector<1x484xf32>
    %807 = arith.mulf %804, %806 : vector<1x484xf32>
    %808 = arith.addf %801, %807 : vector<1x484xf32>
    %cst_204 = arith.constant 0.000000e+00 : f32
    %809 = vector.broadcast %cst_204 : f32 to vector<1x67xf32>
    %810 = vector.extract_strided_slice %162 {offsets = [0, 67], sizes = [1, 417], strides = [1, 1]} : vector<1x484xf32> to vector<1x417xf32>
    %811 = tpu.concatenate %810, %809 in 1 : vector<1x417xf32>, vector<1x67xf32> -> vector<1x484xf32>
    %c93 = arith.constant 93 : index
    %812 = memref.load %arg19[%c93] : memref<98xf32, #tpu.memory_space<smem>>
    %813 = vector.broadcast %812 : f32 to vector<1x484xf32>
    %814 = arith.mulf %811, %813 : vector<1x484xf32>
    %815 = arith.addf %808, %814 : vector<1x484xf32>
    %cst_205 = arith.constant 0.000000e+00 : f32
    %816 = vector.broadcast %cst_205 : f32 to vector<1x68xf32>
    %817 = vector.extract_strided_slice %158 {offsets = [0, 68], sizes = [1, 416], strides = [1, 1]} : vector<1x484xf32> to vector<1x416xf32>
    %818 = tpu.concatenate %817, %816 in 1 : vector<1x416xf32>, vector<1x68xf32> -> vector<1x484xf32>
    %c94 = arith.constant 94 : index
    %819 = memref.load %arg19[%c94] : memref<98xf32, #tpu.memory_space<smem>>
    %820 = vector.broadcast %819 : f32 to vector<1x484xf32>
    %821 = arith.mulf %818, %820 : vector<1x484xf32>
    %822 = arith.addf %815, %821 : vector<1x484xf32>
    %cst_206 = arith.constant 0.000000e+00 : f32
    %823 = vector.broadcast %cst_206 : f32 to vector<1x68xf32>
    %824 = vector.extract_strided_slice %162 {offsets = [0, 68], sizes = [1, 416], strides = [1, 1]} : vector<1x484xf32> to vector<1x416xf32>
    %825 = tpu.concatenate %824, %823 in 1 : vector<1x416xf32>, vector<1x68xf32> -> vector<1x484xf32>
    %c95 = arith.constant 95 : index
    %826 = memref.load %arg19[%c95] : memref<98xf32, #tpu.memory_space<smem>>
    %827 = vector.broadcast %826 : f32 to vector<1x484xf32>
    %828 = arith.mulf %825, %827 : vector<1x484xf32>
    %829 = arith.addf %822, %828 : vector<1x484xf32>
    %cst_207 = arith.constant 0.000000e+00 : f32
    %830 = vector.broadcast %cst_207 : f32 to vector<1x69xf32>
    %831 = vector.extract_strided_slice %158 {offsets = [0, 69], sizes = [1, 415], strides = [1, 1]} : vector<1x484xf32> to vector<1x415xf32>
    %832 = tpu.concatenate %831, %830 in 1 : vector<1x415xf32>, vector<1x69xf32> -> vector<1x484xf32>
    %c96_208 = arith.constant 96 : index
    %833 = memref.load %arg19[%c96_208] : memref<98xf32, #tpu.memory_space<smem>>
    %834 = vector.broadcast %833 : f32 to vector<1x484xf32>
    %835 = arith.mulf %832, %834 : vector<1x484xf32>
    %836 = arith.addf %829, %835 : vector<1x484xf32>
    %cst_209 = arith.constant 0.000000e+00 : f32
    %837 = vector.broadcast %cst_209 : f32 to vector<1x69xf32>
    %838 = vector.extract_strided_slice %162 {offsets = [0, 69], sizes = [1, 415], strides = [1, 1]} : vector<1x484xf32> to vector<1x415xf32>
    %839 = tpu.concatenate %838, %837 in 1 : vector<1x415xf32>, vector<1x69xf32> -> vector<1x484xf32>
    %c97 = arith.constant 97 : index
    %840 = memref.load %arg19[%c97] : memref<98xf32, #tpu.memory_space<smem>>
    %841 = vector.broadcast %840 : f32 to vector<1x484xf32>
    %842 = arith.mulf %839, %841 : vector<1x484xf32>
    %843 = arith.addf %836, %842 : vector<1x484xf32>
    %c0_210 = arith.constant 0 : index
    %844 = memref.load %arg20[%c0_210] : memref<1xf32, #tpu.memory_space<smem>>
    %845 = vector.broadcast %844 : f32 to vector<1x484xf32>
    %846 = arith.addf %843, %845 : vector<1x484xf32>
    %847 = arith.negf %846 : vector<1x484xf32>
    %848 = math.exp %847 : vector<1x484xf32>
    %cst_211 = arith.constant 1.000000e+00 : f32
    %849 = vector.broadcast %cst_211 : f32 to vector<1x484xf32>
    %850 = arith.addf %849, %848 : vector<1x484xf32>
    %851 = arith.divf %849, %850 : vector<1x484xf32>
    %852 = arith.mulf %85, %85 : vector<16x484xf32>
    %853 = arith.mulf %114, %135 : vector<16x1xf32>
    %854 = vector.broadcast %853 : vector<16x1xf32> to vector<16x484xf32>
    %855 = arith.mulf %852, %854 : vector<16x484xf32>
    %856 = arith.mulf %154, %851 : vector<1x484xf32>
    %857 = vector.broadcast %856 : vector<1x484xf32> to vector<16x484xf32>
    %858 = arith.mulf %855, %857 : vector<16x484xf32>
    %859 = arith.addf %858, %1 : vector<16x484xf32>
    %c0_212 = arith.constant 0 : index
    %c0_213 = arith.constant 0 : index
    %c0_214 = arith.constant 0 : index
    %860 = vector.load %arg21[%c0_212, %c0_213, %c0_214] : memref<1x16x484xf32, #tpu.memory_space<vmem>>, vector<1x16x484xf32>
    %861 = vector.shape_cast %860 : vector<1x16x484xf32> to vector<16x484xf32>
    %862 = vector.shape_cast %859 : vector<16x484xf32> to vector<1x16x484xf32>
    tpu.vector_store %arg21[%c0_212, %c0_213, %c0_214], %862 {strides = array<i32>} : memref<1x16x484xf32, #tpu.memory_space<vmem>>, vector<1x16x484xf32>,
    return
  }
  func.func @transform_0(%arg0: i32) -> (i32, i32, i32) {
    %c0_i32 = arith.constant 0 : i32
    %c0_i32_0 = arith.constant 0 : i32
    %c0_i32_1 = arith.constant 0 : i32
    return %arg0, %c0_i32, %c0_i32_0 : i32, i32, i32
  }
  func.func @transform_1(%arg0: i32) -> (i32, i32) {
    %c0_i32 = arith.constant 0 : i32
    %c0_i32_0 = arith.constant 0 : i32
    %c0_i32_1 = arith.constant 0 : i32
    return %c0_i32, %c0_i32_0 : i32, i32
  }
  func.func @transform_2(%arg0: i32) -> (i32, i32) {
    %c0_i32 = arith.constant 0 : i32
    %c0_i32_0 = arith.constant 0 : i32
    %c0_i32_1 = arith.constant 0 : i32
    return %c0_i32, %c0_i32_0 : i32, i32
  }
  func.func @transform_3(%arg0: i32) -> (i32, i32) {
    %c0_i32 = arith.constant 0 : i32
    %c0_i32_0 = arith.constant 0 : i32
    %c0_i32_1 = arith.constant 0 : i32
    return %c0_i32, %c0_i32_0 : i32, i32
  }
  func.func @transform_4(%arg0: i32) -> (i32, i32) {
    %c0_i32 = arith.constant 0 : i32
    %c0_i32_0 = arith.constant 0 : i32
    %c0_i32_1 = arith.constant 0 : i32
    return %c0_i32, %c0_i32_0 : i32, i32
  }
  func.func @transform_5(%arg0: i32) -> (i32, i32) {
    %c0_i32 = arith.constant 0 : i32
    %c0_i32_0 = arith.constant 0 : i32
    %c0_i32_1 = arith.constant 0 : i32
    return %c0_i32, %c0_i32_0 : i32, i32
  }
  func.func @transform_6(%arg0: i32) -> (i32, i32) {
    %c0_i32 = arith.constant 0 : i32
    %c0_i32_0 = arith.constant 0 : i32
    %c0_i32_1 = arith.constant 0 : i32
    return %c0_i32, %c0_i32_0 : i32, i32
  }
  func.func @transform_7(%arg0: i32) -> (i32, i32) {
    %c0_i32 = arith.constant 0 : i32
    %c0_i32_0 = arith.constant 0 : i32
    %c0_i32_1 = arith.constant 0 : i32
    return %c0_i32, %c0_i32_0 : i32, i32
  }
  func.func @transform_8(%arg0: i32) -> (i32, i32) {
    %c0_i32 = arith.constant 0 : i32
    %c0_i32_0 = arith.constant 0 : i32
    %c0_i32_1 = arith.constant 0 : i32
    return %c0_i32, %c0_i32_0 : i32, i32
  }
  func.func @transform_9(%arg0: i32) -> (i32, i32) {
    %c0_i32 = arith.constant 0 : i32
    %c0_i32_0 = arith.constant 0 : i32
    %c0_i32_1 = arith.constant 0 : i32
    return %c0_i32, %c0_i32_0 : i32, i32
  }
  func.func @transform_10(%arg0: i32) -> (i32, i32) {
    %c0_i32 = arith.constant 0 : i32
    %c0_i32_0 = arith.constant 0 : i32
    %c0_i32_1 = arith.constant 0 : i32
    return %c0_i32, %c0_i32_0 : i32, i32
  }
  func.func @transform_11(%arg0: i32) -> (i32, i32) {
    %c0_i32 = arith.constant 0 : i32
    %c0_i32_0 = arith.constant 0 : i32
    %c0_i32_1 = arith.constant 0 : i32
    return %c0_i32, %c0_i32_0 : i32, i32
  }
  func.func @transform_12(%arg0: i32) -> (i32, i32) {
    %c0_i32 = arith.constant 0 : i32
    %c0_i32_0 = arith.constant 0 : i32
    %c0_i32_1 = arith.constant 0 : i32
    return %c0_i32, %c0_i32_0 : i32, i32
  }
  func.func @transform_13(%arg0: i32) -> (i32, i32) {
    %c0_i32 = arith.constant 0 : i32
    %c0_i32_0 = arith.constant 0 : i32
    %c0_i32_1 = arith.constant 0 : i32
    return %c0_i32, %c0_i32_0 : i32, i32
  }
  func.func @transform_14(%arg0: i32) -> (i32, i32) {
    %c0_i32 = arith.constant 0 : i32
    %c0_i32_0 = arith.constant 0 : i32
    %c0_i32_1 = arith.constant 0 : i32
    return %c0_i32, %c0_i32_0 : i32, i32
  }
  func.func @transform_15(%arg0: i32) -> (i32, i32) {
    %c0_i32 = arith.constant 0 : i32
    %c0_i32_0 = arith.constant 0 : i32
    %c0_i32_1 = arith.constant 0 : i32
    return %c0_i32, %c0_i32_0 : i32, i32
  }
  func.func @transform_16(%arg0: i32) -> (i32, i32) {
    %c0_i32 = arith.constant 0 : i32
    %c0_i32_0 = arith.constant 0 : i32
    %c0_i32_1 = arith.constant 0 : i32
    return %c0_i32, %c0_i32_0 : i32, i32
  }
  func.func @transform_17(%arg0: i32) -> (i32, i32) {
    %c0_i32 = arith.constant 0 : i32
    %c0_i32_0 = arith.constant 0 : i32
    %c0_i32_1 = arith.constant 0 : i32
    return %c0_i32, %c0_i32_0 : i32, i32
  }
  func.func @transform_18(%arg0: i32) -> i32 {
    %c0_i32 = arith.constant 0 : i32
    %c0_i32_0 = arith.constant 0 : i32
    return %c0_i32 : i32
  }
  func.func @transform_19(%arg0: i32) -> i32 {
    %c0_i32 = arith.constant 0 : i32
    %c0_i32_0 = arith.constant 0 : i32
    return %c0_i32 : i32
  }
  func.func @transform_20(%arg0: i32) -> (i32, i32, i32) {
    %c0_i32 = arith.constant 0 : i32
    %c0_i32_0 = arith.constant 0 : i32
    %c0_i32_1 = arith.constant 0 : i32
    return %arg0, %c0_i32, %c0_i32_0 : i32, i32, i32
  }
}

</mosaic_0001>

<llo_original>
// kernel: tpu_custom_call.1
$region0: #{tpu_custom_call.1}
  #allocation0 [shape = 'u32[]', space=smem, size = 0x4, offset = 0x4, fixed_abs, tag = 'smem constant byte address 0x4 - core index']
  #allocation1 [shape = 'u32[72,128]{1,0:T(1,128)}', space=vmem, size = 0x9000, scoped, tag = 'internal scratch']
  #allocation2 [shape = 'f32[144,484]{1,0:T(8,128)}', space=vmem, size = 0x48000, scoped, tag = 'scratch operand']
  #allocation3 [shape = 'f32[1,1]{1,0:T(1,128)S(1)}', space=vmem, size = 0x200, scoped, tag = 'scoped memory for tpu_custom_call.1']
  #allocation4 [shape = 'f32[1]{0:T(128)S(6)}', space=smem, size = 0x200, scoped, tag = 'scoped memory for tpu_custom_call.1']
  %s0 = inlined_call_operand.hbm [shape: f32[2,16,484], index: 0, kind: input, shape index: {}]
  %s1 = inlined_call_operand.vmem [shape: f32[1,484], index: 1, kind: input, shape index: {}]
  %s2 = inlined_call_operand.vmem [shape: f32[16,144], index: 2, kind: input, shape index: {}]
  %s3 = inlined_call_operand.vmem [shape: f32[16,1], index: 3, kind: input, shape index: {}]
  %s4 = inlined_call_operand.vmem [shape: f32[16,144], index: 4, kind: input, shape index: {}]
  %s5 = inlined_call_operand.vmem [shape: f32[16,1], index: 5, kind: input, shape index: {}]
  %s6 = inlined_call_operand.vmem [shape: f32[2,16], index: 6, kind: input, shape index: {}]
  %s7 = inlined_call_operand.vmem [shape: f32[2,1], index: 7, kind: input, shape index: {}]
  %s8 = inlined_call_operand.vmem [shape: f32[16,2], index: 8, kind: input, shape index: {}]
  %s9 = inlined_call_operand.vmem [shape: f32[16,1], index: 9, kind: input, shape index: {}]
  %s10 = inlined_call_operand.vmem [shape: f32[2,16], index: 10, kind: input, shape index: {}]
  %s11 = inlined_call_operand.vmem [shape: f32[2,1], index: 11, kind: input, shape index: {}]
  %s12 = inlined_call_operand.vmem [shape: f32[1,2], index: 12, kind: input, shape index: {}]
  %s13 = inlined_call_operand.<no memory space> [shape: f32[1,1], index: 13, kind: input, shape index: {}]
  %s14 = inlined_call_operand.vmem [shape: f32[2,16], index: 14, kind: input, shape index: {}]
  %s15 = inlined_call_operand.vmem [shape: f32[2,1], index: 15, kind: input, shape index: {}]
  %s16 = inlined_call_operand.vmem [shape: f32[16,2], index: 16, kind: input, shape index: {}]
  %s17 = inlined_call_operand.vmem [shape: f32[16,1], index: 17, kind: input, shape index: {}]
  %s18 = inlined_call_operand.vmem [shape: f32[98], index: 18, kind: input, shape index: {}]
  %s19 = inlined_call_operand.<no memory space> [shape: f32[1], index: 19, kind: input, shape index: {}]
  %s20 = inlined_call_operand.hbm [shape: f32[2,16,484], index: 20, kind: output, shape index: {}]
  %s21 = sld [smem:[#allocation0]]
  $region121: #{tpu_custom_call.1} parent=0
    _
  %s23 = ssub.s32 1, %s21
  %s24 = scalar_select 0, %s23, %s21
  %v25 = vstv %s13
  %26 = vst [vmem:[#allocation3] sm:$0x1] %v25
  %27 = sst [smem:[#allocation4]] %s19
  $region1: #{tpu_custom_call.1} parent=0
    #allocation5 [shape = 'u8[65536]{0}', space=vmem, size = 0x10000, scoped, tag = 'input window, operand 0']
    #allocation6 [shape = 's32[2]{0}', space=sflag, size = 0x8, scoped, tag = 'scoped memory for tpu_custom_call.1']
    #allocation7 [shape = 's32[2]{0}', space=sflag, size = 0x8, scoped, tag = 'scoped memory for tpu_custom_call.1']
    #allocation8 [shape = 's32[2]{0}', space=sflag, size = 0x8, scoped, tag = 'scoped memory for tpu_custom_call.1']
    #allocation9 [shape = 'u8[512]{0}', space=smem, size = 0x200, scoped, tag = 'input window, operand 18, single buffered']
    #allocation10 [shape = 'u8[65536]{0}', space=vmem, size = 0x10000, scoped, tag = 'output window, operand 0']
    %28 = vsyncpa [#allocation6], 0
    %s29 = scalar_lea.sflag [#allocation6], 1
    %30 = vsyncpa %s29, 0
    %31 = vsyncpa [#allocation8], 0
    %32 = vsyncpa [#allocation7], 0
    %s33 = scalar_lea.sflag [#allocation7], 1
    %34 = vsyncpa %s33, 0
    loop: start=0, step=1, limit=4
    $region2: #{tpu_custom_call.1} parent=1 // loop_pre_header
      _
    $region3: #{tpu_custom_call.1} parent=1 // loop_header
      %s36 = sphi 0, %s40
      %p37 = scmp.ge.s32.totalorder %s36, 4
      %s46 = sphi 0, %s48
      %s49 = sphi 0, %s46
      %s50 = sphi 0, %s49
      %s66 = sphi 0, %s50
      %s70 = sphi 0, %s70
      %s72 = sphi 0, %s70
      %s73 = sphi 0, %s72
      %s87 = sphi 0, %s73
      %s91 = sphi 0, %s91
      %s93 = sphi 0, %s91
      %s94 = sphi 0, %s93
      %s108 = sphi 0, %s94
      %s112 = sphi 0, %s112
      %s114 = sphi 0, %s112
      %s115 = sphi 0, %s114
      %s129 = sphi 0, %s115
      %s133 = sphi 0, %s133
      %s135 = sphi 0, %s133
      %s136 = sphi 0, %s135
      %s150 = sphi 0, %s136
      %s154 = sphi 0, %s154
      %s156 = sphi 0, %s154
      %s157 = sphi 0, %s156
      %s171 = sphi 0, %s157
      %s175 = sphi 0, %s175
      %s177 = sphi 0, %s175
      %s178 = sphi 0, %s177
      %s192 = sphi 0, %s178
      %s196 = sphi 0, %s196
      %s198 = sphi 0, %s196
      %s199 = sphi 0, %s198
      %s213 = sphi 0, %s199
      %s217 = sphi 0, %s217
      %s219 = sphi 0, %s217
      %s220 = sphi 0, %s219
      %s234 = sphi 0, %s220
      %s238 = sphi 0, %s238
      %s240 = sphi 0, %s238
      %s241 = sphi 0, %s240
      %s255 = sphi 0, %s241
      %s259 = sphi 0, %s259
      %s261 = sphi 0, %s259
      %s262 = sphi 0, %s261
      %s276 = sphi 0, %s262
      %s280 = sphi 0, %s280
      %s282 = sphi 0, %s280
      %s283 = sphi 0, %s282
      %s297 = sphi 0, %s283
      %s301 = sphi 0, %s301
      %s303 = sphi 0, %s301
      %s304 = sphi 0, %s303
      %s318 = sphi 0, %s304
      %s322 = sphi 0, %s322
      %s324 = sphi 0, %s322
      %s325 = sphi 0, %s324
      %s339 = sphi 0, %s325
      %s343 = sphi 0, %s343
      %s345 = sphi 0, %s343
      %s346 = sphi 0, %s345
      %s360 = sphi 0, %s346
      %s364 = sphi 0, %s364
      %s366 = sphi 0, %s364
      %s367 = sphi 0, %s366
      %s381 = sphi 0, %s367
      %s385 = sphi 0, %s385
      %s387 = sphi 0, %s385
      %s388 = sphi 0, %s387
      %s402 = sphi 0, %s388
      %s406 = sphi 0, %s406
      %s408 = sphi 0, %s406
      %s409 = sphi 0, %s408
      %s423 = sphi 0, %s409
      %s427 = sphi 0, %s427
      %s429 = sphi 0, %s427
      %s430 = sphi 0, %s429
      %s444 = sphi 0, %s430
      %s448 = sphi 0, %s448
      %s450 = sphi 0, %s448
      %s451 = sphi 0, %s450
      %s465 = sphi 0, %s451
      %s471 = sphi 0, %s473
      %s474 = sphi 0, %s471
      %s475 = sphi 0, %s474
      %s491 = sphi 0, %s475
    $region4: #{tpu_custom_call.1} parent=1 // loop_header_branch
      %39 = sbr.rel (%p37) target = $region8
    $region5: #{tpu_custom_call.1} parent=1 // loop_body
      %s41 = ssub.s32 %s36, 1
      %s42 = ssub.s32 %s36, 2
      %s43 = sadd.s32 %s36, 1
      %s44 = ssub.s32 %s36, %s43
      %p45 = scmp.eq.s32.totalorder %s44, 0
      %s47 = sadd.s32 %s46, 1
      %s48 = scalar_select %p45, %s46, %s47
      %p51 = pneg %p45
      %p52 = scmp.eq.s32.totalorder %s36, 1
      %p53 = por %p51, %p52
      %p54 = scmp.ne.s32.totalorder %s46, %s49
      %p55 = scmp.eq.s32.totalorder %s36, 0
      %p56 = por %p54, %p55
      %p57 = scmp.ne.s32.totalorder %s46, %s49
      %p58 = scmp.eq.s32.totalorder %s41, 1
      %p59 = por %p57, %p58
      %p60 = scmp.ne.s32.totalorder %s49, %s50
      %p61 = scmp.eq.s32.totalorder %s41, 0
      %p62 = por %p60, %p61
      %p63 = scmp.ne.s32.totalorder %s49, %s50
      %p64 = scmp.eq.s32.totalorder %s42, 1
      %p65 = por %p63, %p64
      %p67 = scmp.ne.s32.totalorder %s50, %s66
      %p68 = scmp.eq.s32.totalorder %s42, 0
      %p69 = por %p67, %p68
      %s71 = sadd.s32 %s70, 1
      %p74 = scmp.eq.s32.totalorder %s36, 1
      %p75 = scmp.ne.s32.totalorder %s70, %s72
      %p76 = scmp.eq.s32.totalorder %s36, 0
      %p77 = por %p75, %p76
      %p78 = scmp.ne.s32.totalorder %s70, %s72
      %p79 = scmp.eq.s32.totalorder %s41, 1
      %p80 = por %p78, %p79
      %p81 = scmp.ne.s32.totalorder %s72, %s73
      %p82 = scmp.eq.s32.totalorder %s41, 0
      %p83 = por %p81, %p82
      %p84 = scmp.ne.s32.totalorder %s72, %s73
      %p85 = scmp.eq.s32.totalorder %s42, 1
      %p86 = por %p84, %p85
      %p88 = scmp.ne.s32.totalorder %s73, %s87
      %p89 = scmp.eq.s32.totalorder %s42, 0
      %p90 = por %p88, %p89
      %s92 = sadd.s32 %s91, 1
      %p95 = scmp.eq.s32.totalorder %s36, 1
      %p96 = scmp.ne.s32.totalorder %s91, %s93
      %p97 = scmp.eq.s32.totalorder %s36, 0
      %p98 = por %p96, %p97
      %p99 = scmp.ne.s32.totalorder %s91, %s93
      %p100 = scmp.eq.s32.totalorder %s41, 1
      %p101 = por %p99, %p100
      %p102 = scmp.ne.s32.totalorder %s93, %s94
      %p103 = scmp.eq.s32.totalorder %s41, 0
      %p104 = por %p102, %p103
      %p105 = scmp.ne.s32.totalorder %s93, %s94
      %p106 = scmp.eq.s32.totalorder %s42, 1
      %p107 = por %p105, %p106
      %p109 = scmp.ne.s32.totalorder %s94, %s108
      %p110 = scmp.eq.s32.totalorder %s42, 0
      %p111 = por %p109, %p110
      %s113 = sadd.s32 %s112, 1
      %p116 = scmp.eq.s32.totalorder %s36, 1
      %p117 = scmp.ne.s32.totalorder %s112, %s114
      %p118 = scmp.eq.s32.totalorder %s36, 0
      %p119 = por %p117, %p118
      %p120 = scmp.ne.s32.totalorder %s112, %s114
      %p121 = scmp.eq.s32.totalorder %s41, 1
      %p122 = por %p120, %p121
      %p123 = scmp.ne.s32.totalorder %s114, %s115
      %p124 = scmp.eq.s32.totalorder %s41, 0
      %p125 = por %p123, %p124
      %p126 = scmp.ne.s32.totalorder %s114, %s115
      %p127 = scmp.eq.s32.totalorder %s42, 1
      %p128 = por %p126, %p127
      %p130 = scmp.ne.s32.totalorder %s115, %s129
      %p131 = scmp.eq.s32.totalorder %s42, 0
      %p132 = por %p130, %p131
      %s134 = sadd.s32 %s133, 1
      %p137 = scmp.eq.s32.totalorder %s36, 1
      %p138 = scmp.ne.s32.totalorder %s133, %s135
      %p139 = scmp.eq.s32.totalorder %s36, 0
      %p140 = por %p138, %p139
      %p141 = scmp.ne.s32.totalorder %s133, %s135
      %p142 = scmp.eq.s32.totalorder %s41, 1
      %p143 = por %p141, %p142
      %p144 = scmp.ne.s32.totalorder %s135, %s136
      %p145 = scmp.eq.s32.totalorder %s41, 0
      %p146 = por %p144, %p145
      %p147 = scmp.ne.s32.totalorder %s135, %s136
      %p148 = scmp.eq.s32.totalorder %s42, 1
      %p149 = por %p147, %p148
      %p151 = scmp.ne.s32.totalorder %s136, %s150
      %p152 = scmp.eq.s32.totalorder %s42, 0
      %p153 = por %p151, %p152
      %s155 = sadd.s32 %s154, 1
      %p158 = scmp.eq.s32.totalorder %s36, 1
      %p159 = scmp.ne.s32.totalorder %s154, %s156
      %p160 = scmp.eq.s32.totalorder %s36, 0
      %p161 = por %p159, %p160
      %p162 = scmp.ne.s32.totalorder %s154, %s156
      %p163 = scmp.eq.s32.totalorder %s41, 1
      %p164 = por %p162, %p163
      %p165 = scmp.ne.s32.totalorder %s156, %s157
      %p166 = scmp.eq.s32.totalorder %s41, 0
      %p167 = por %p165, %p166
      %p168 = scmp.ne.s32.totalorder %s156, %s157
      %p169 = scmp.eq.s32.totalorder %s42, 1
      %p170 = por %p168, %p169
      %p172 = scmp.ne.s32.totalorder %s157, %s171
      %p173 = scmp.eq.s32.totalorder %s42, 0
      %p174 = por %p172, %p173
      %s176 = sadd.s32 %s175, 1
      %p179 = scmp.eq.s32.totalorder %s36, 1
      %p180 = scmp.ne.s32.totalorder %s175, %s177
      %p181 = scmp.eq.s32.totalorder %s36, 0
      %p182 = por %p180, %p181
      %p183 = scmp.ne.s32.totalorder %s175, %s177
      %p184 = scmp.eq.s32.totalorder %s41, 1
      %p185 = por %p183, %p184
      %p186 = scmp.ne.s32.totalorder %s177, %s178
      %p187 = scmp.eq.s32.totalorder %s41, 0
      %p188 = por %p186, %p187
      %p189 = scmp.ne.s32.totalorder %s177, %s178
      %p190 = scmp.eq.s32.totalorder %s42, 1
      %p191 = por %p189, %p190
      %p193 = scmp.ne.s32.totalorder %s178, %s192
      %p194 = scmp.eq.s32.totalorder %s42, 0
      %p195 = por %p193, %p194
      %s197 = sadd.s32 %s196, 1
      %p200 = scmp.eq.s32.totalorder %s36, 1
      %p201 = scmp.ne.s32.totalorder %s196, %s198
      %p202 = scmp.eq.s32.totalorder %s36, 0
      %p203 = por %p201, %p202
      %p204 = scmp.ne.s32.totalorder %s196, %s198
      %p205 = scmp.eq.s32.totalorder %s41, 1
      %p206 = por %p204, %p205
      %p207 = scmp.ne.s32.totalorder %s198, %s199
      %p208 = scmp.eq.s32.totalorder %s41, 0
      %p209 = por %p207, %p208
      %p210 = scmp.ne.s32.totalorder %s198, %s199
      %p211 = scmp.eq.s32.totalorder %s42, 1
      %p212 = por %p210, %p211
      %p214 = scmp.ne.s32.totalorder %s199, %s213
      %p215 = scmp.eq.s32.totalorder %s42, 0
      %p216 = por %p214, %p215
      %s218 = sadd.s32 %s217, 1
      %p221 = scmp.eq.s32.totalorder %s36, 1
      %p222 = scmp.ne.s32.totalorder %s217, %s219
      %p223 = scmp.eq.s32.totalorder %s36, 0
      %p224 = por %p222, %p223
      %p225 = scmp.ne.s32.totalorder %s217, %s219
      %p226 = scmp.eq.s32.totalorder %s41, 1
      %p227 = por %p225, %p226
      %p228 = scmp.ne.s32.totalorder %s219, %s220
      %p229 = scmp.eq.s32.totalorder %s41, 0
      %p230 = por %p228, %p229
      %p231 = scmp.ne.s32.totalorder %s219, %s220
      %p232 = scmp.eq.s32.totalorder %s42, 1
      %p233 = por %p231, %p232
      %p235 = scmp.ne.s32.totalorder %s220, %s234
      %p236 = scmp.eq.s32.totalorder %s42, 0
      %p237 = por %p235, %p236
      %s239 = sadd.s32 %s238, 1
      %p242 = scmp.eq.s32.totalorder %s36, 1
      %p243 = scmp.ne.s32.totalorder %s238, %s240
      %p244 = scmp.eq.s32.totalorder %s36, 0
      %p245 = por %p243, %p244
      %p246 = scmp.ne.s32.totalorder %s238, %s240
      %p247 = scmp.eq.s32.totalorder %s41, 1
      %p248 = por %p246, %p247
      %p249 = scmp.ne.s32.totalorder %s240, %s241
      %p250 = scmp.eq.s32.totalorder %s41, 0
      %p251 = por %p249, %p250
      %p252 = scmp.ne.s32.totalorder %s240, %s241
      %p253 = scmp.eq.s32.totalorder %s42, 1
      %p254 = por %p252, %p253
      %p256 = scmp.ne.s32.totalorder %s241, %s255
      %p257 = scmp.eq.s32.totalorder %s42, 0
      %p258 = por %p256, %p257
      %s260 = sadd.s32 %s259, 1
      %p263 = scmp.eq.s32.totalorder %s36, 1
      %p264 = scmp.ne.s32.totalorder %s259, %s261
      %p265 = scmp.eq.s32.totalorder %s36, 0
      %p266 = por %p264, %p265
      %p267 = scmp.ne.s32.totalorder %s259, %s261
      %p268 = scmp.eq.s32.totalorder %s41, 1
      %p269 = por %p267, %p268
      %p270 = scmp.ne.s32.totalorder %s261, %s262
      %p271 = scmp.eq.s32.totalorder %s41, 0
      %p272 = por %p270, %p271
      %p273 = scmp.ne.s32.totalorder %s261, %s262
      %p274 = scmp.eq.s32.totalorder %s42, 1
      %p275 = por %p273, %p274
      %p277 = scmp.ne.s32.totalorder %s262, %s276
      %p278 = scmp.eq.s32.totalorder %s42, 0
      %p279 = por %p277, %p278
      %s281 = sadd.s32 %s280, 1
      %p284 = scmp.eq.s32.totalorder %s36, 1
      %p285 = scmp.ne.s32.totalorder %s280, %s282
      %p286 = scmp.eq.s32.totalorder %s36, 0
      %p287 = por %p285, %p286
      %p288 = scmp.ne.s32.totalorder %s280, %s282
      %p289 = scmp.eq.s32.totalorder %s41, 1
      %p290 = por %p288, %p289
      %p291 = scmp.ne.s32.totalorder %s282, %s283
      %p292 = scmp.eq.s32.totalorder %s41, 0
      %p293 = por %p291, %p292
      %p294 = scmp.ne.s32.totalorder %s282, %s283
      %p295 = scmp.eq.s32.totalorder %s42, 1
      %p296 = por %p294, %p295
      %p298 = scmp.ne.s32.totalorder %s283, %s297
      %p299 = scmp.eq.s32.totalorder %s42, 0
      %p300 = por %p298, %p299
      %s302 = sadd.s32 %s301, 1
      %p305 = scmp.eq.s32.totalorder %s36, 1
      %p306 = scmp.ne.s32.totalorder %s301, %s303
      %p307 = scmp.eq.s32.totalorder %s36, 0
      %p308 = por %p306, %p307
      %p309 = scmp.ne.s32.totalorder %s301, %s303
      %p310 = scmp.eq.s32.totalorder %s41, 1
      %p311 = por %p309, %p310
      %p312 = scmp.ne.s32.totalorder %s303, %s304
      %p313 = scmp.eq.s32.totalorder %s41, 0
      %p314 = por %p312, %p313
      %p315 = scmp.ne.s32.totalorder %s303, %s304
      %p316 = scmp.eq.s32.totalorder %s42, 1
      %p317 = por %p315, %p316
      %p319 = scmp.ne.s32.totalorder %s304, %s318
      %p320 = scmp.eq.s32.totalorder %s42, 0
      %p321 = por %p319, %p320
      %s323 = sadd.s32 %s322, 1
      %p326 = scmp.eq.s32.totalorder %s36, 1
      %p327 = scmp.ne.s32.totalorder %s322, %s324
      %p328 = scmp.eq.s32.totalorder %s36, 0
      %p329 = por %p327, %p328
      %p330 = scmp.ne.s32.totalorder %s322, %s324
      %p331 = scmp.eq.s32.totalorder %s41, 1
      %p332 = por %p330, %p331
      %p333 = scmp.ne.s32.totalorder %s324, %s325
      %p334 = scmp.eq.s32.totalorder %s41, 0
      %p335 = por %p333, %p334
      %p336 = scmp.ne.s32.totalorder %s324, %s325
      %p337 = scmp.eq.s32.totalorder %s42, 1
      %p338 = por %p336, %p337
      %p340 = scmp.ne.s32.totalorder %s325, %s339
      %p341 = scmp.eq.s32.totalorder %s42, 0
      %p342 = por %p340, %p341
      %s344 = sadd.s32 %s343, 1
      %p347 = scmp.eq.s32.totalorder %s36, 1
      %p348 = scmp.ne.s32.totalorder %s343, %s345
      %p349 = scmp.eq.s32.totalorder %s36, 0
      %p350 = por %p348, %p349
      %p351 = scmp.ne.s32.totalorder %s343, %s345
      %p352 = scmp.eq.s32.totalorder %s41, 1
      %p353 = por %p351, %p352
      %p354 = scmp.ne.s32.totalorder %s345, %s346
      %p355 = scmp.eq.s32.totalorder %s41, 0
      %p356 = por %p354, %p355
      %p357 = scmp.ne.s32.totalorder %s345, %s346
      %p358 = scmp.eq.s32.totalorder %s42, 1
      %p359 = por %p357, %p358
      %p361 = scmp.ne.s32.totalorder %s346, %s360
      %p362 = scmp.eq.s32.totalorder %s42, 0
      %p363 = por %p361, %p362
      %s365 = sadd.s32 %s364, 1
      %p368 = scmp.eq.s32.totalorder %s36, 1
      %p369 = scmp.ne.s32.totalorder %s364, %s366
      %p370 = scmp.eq.s32.totalorder %s36, 0
      %p371 = por %p369, %p370
      %p372 = scmp.ne.s32.totalorder %s364, %s366
      %p373 = scmp.eq.s32.totalorder %s41, 1
      %p374 = por %p372, %p373
      %p375 = scmp.ne.s32.totalorder %s366, %s367
      %p376 = scmp.eq.s32.totalorder %s41, 0
      %p377 = por %p375, %p376
      %p378 = scmp.ne.s32.totalorder %s366, %s367
      %p379 = scmp.eq.s32.totalorder %s42, 1
      %p380 = por %p378, %p379
      %p382 = scmp.ne.s32.totalorder %s367, %s381
      %p383 = scmp.eq.s32.totalorder %s42, 0
      %p384 = por %p382, %p383
      %s386 = sadd.s32 %s385, 1
      %p389 = scmp.eq.s32.totalorder %s36, 1
      %p390 = scmp.ne.s32.totalorder %s385, %s387
      %p391 = scmp.eq.s32.totalorder %s36, 0
      %p392 = por %p390, %p391
      %p393 = scmp.ne.s32.totalorder %s385, %s387
      %p394 = scmp.eq.s32.totalorder %s41, 1
      %p395 = por %p393, %p394
      %p396 = scmp.ne.s32.totalorder %s387, %s388
      %p397 = scmp.eq.s32.totalorder %s41, 0
      %p398 = por %p396, %p397
      %p399 = scmp.ne.s32.totalorder %s387, %s388
      %p400 = scmp.eq.s32.totalorder %s42, 1
      %p401 = por %p399, %p400
      %p403 = scmp.ne.s32.totalorder %s388, %s402
      %p404 = scmp.eq.s32.totalorder %s42, 0
      %p405 = por %p403, %p404
      %s407 = sadd.s32 %s406, 1
      %p410 = scmp.eq.s32.totalorder %s36, 1
      %p411 = scmp.ne.s32.totalorder %s406, %s408
      %p412 = scmp.eq.s32.totalorder %s36, 0
      %p413 = por %p411, %p412
      %p414 = scmp.ne.s32.totalorder %s406, %s408
      %p415 = scmp.eq.s32.totalorder %s41, 1
      %p416 = por %p414, %p415
      %p417 = scmp.ne.s32.totalorder %s408, %s409
      %p418 = scmp.eq.s32.totalorder %s41, 0
      %p419 = por %p417, %p418
      %p420 = scmp.ne.s32.totalorder %s408, %s409
      %p421 = scmp.eq.s32.totalorder %s42, 1
      %p422 = por %p420, %p421
      %p424 = scmp.ne.s32.totalorder %s409, %s423
      %p425 = scmp.eq.s32.totalorder %s42, 0
      %p426 = por %p424, %p425
      %s428 = sadd.s32 %s427, 1
      %p431 = scmp.eq.s32.totalorder %s36, 1
      %p432 = scmp.ne.s32.totalorder %s427, %s429
      %p433 = scmp.eq.s32.totalorder %s36, 0
      %p434 = por %p432, %p433
      %p435 = scmp.ne.s32.totalorder %s427, %s429
      %p436 = scmp.eq.s32.totalorder %s41, 1
      %p437 = por %p435, %p436
      %p438 = scmp.ne.s32.totalorder %s429, %s430
      %p439 = scmp.eq.s32.totalorder %s41, 0
      %p440 = por %p438, %p439
      %p441 = scmp.ne.s32.totalorder %s429, %s430
      %p442 = scmp.eq.s32.totalorder %s42, 1
      %p443 = por %p441, %p442
      %p445 = scmp.ne.s32.totalorder %s430, %s444
      %p446 = scmp.eq.s32.totalorder %s42, 0
      %p447 = por %p445, %p446
      %s449 = sadd.s32 %s448, 1
      %p452 = scmp.eq.s32.totalorder %s36, 1
      %p453 = scmp.ne.s32.totalorder %s448, %s450
      %p454 = scmp.eq.s32.totalorder %s36, 0
      %p455 = por %p453, %p454
      %p456 = scmp.ne.s32.totalorder %s448, %s450
      %p457 = scmp.eq.s32.totalorder %s41, 1
      %p458 = por %p456, %p457
      %p459 = scmp.ne.s32.totalorder %s450, %s451
      %p460 = scmp.eq.s32.totalorder %s41, 0
      %p461 = por %p459, %p460
      %p462 = scmp.ne.s32.totalorder %s450, %s451
      %p463 = scmp.eq.s32.totalorder %s42, 1
      %p464 = por %p462, %p463
      %p466 = scmp.ne.s32.totalorder %s451, %s465
      %p467 = scmp.eq.s32.totalorder %s42, 0
      %p468 = por %p466, %p467
      %s469 = ssub.s32 %s36, %s43
      %p470 = scmp.eq.s32.totalorder %s469, 0
      %s472 = sadd.s32 %s471, 1
      %s473 = scalar_select %p470, %s471, %s472
      %p476 = pneg %p470
      %p477 = scmp.eq.s32.totalorder %s36, 1
      %p478 = por %p476, %p477
      %p479 = scmp.ne.s32.totalorder %s471, %s474
      %p480 = scmp.eq.s32.totalorder %s36, 0
      %p481 = por %p479, %p480
      %p482 = scmp.ne.s32.totalorder %s471, %s474
      %p483 = scmp.eq.s32.totalorder %s41, 1
      %p484 = por %p482, %p483
      %p485 = scmp.ne.s32.totalorder %s474, %s475
      %p486 = scmp.eq.s32.totalorder %s41, 0
      %p487 = por %p485, %p486
      %p488 = scmp.ne.s32.totalorder %s474, %s475
      %p489 = scmp.eq.s32.totalorder %s42, 1
      %p490 = por %p488, %p489
      %p492 = scmp.ne.s32.totalorder %s475, %s491
      %p493 = scmp.eq.s32.totalorder %s42, 0
      %p494 = por %p492, %p493
      %p495 = scmp.le.s32.totalorder 1, %s36
      %p496 = scmp.lt.s32.totalorder %s36, 3
      %p497 = pnand %p495, %p496
      %p498 = pneg %p497
      // Predicated region
      $region9: #{tpu_custom_call.1} parent=5 // pred_check
        _
      $region10: #{tpu_custom_call.1} parent=5 // pred_check_branch
        %500 = sbr.rel (%p497) target = $region12
      $region11: #{tpu_custom_call.1} parent=5 // pred_region
        %s501 = ssub.s32 %s36, 1
        // Predicated region
        $region13: #{tpu_custom_call.1} parent=11 // pred_check
          %p502 = pneg %p83
        $region14: #{tpu_custom_call.1} parent=11 // pred_check_branch
          %504 = sbr.rel (%p502) target = $region16
        $region15: #{tpu_custom_call.1} parent=11 // pred_region
          _
        $region16: #{tpu_custom_call.1} parent=11 // pred_fallthru
          _
        // Predicated region
        $region17: #{tpu_custom_call.1} parent=11 // pred_check
          %p505 = pneg %p104
        $region18: #{tpu_custom_call.1} parent=11 // pred_check_branch
          %507 = sbr.rel (%p505) target = $region20
        $region19: #{tpu_custom_call.1} parent=11 // pred_region
          _
        $region20: #{tpu_custom_call.1} parent=11 // pred_fallthru
          _
        // Predicated region
        $region21: #{tpu_custom_call.1} parent=11 // pred_check
          %p508 = pneg %p125
        $region22: #{tpu_custom_call.1} parent=11 // pred_check_branch
          %510 = sbr.rel (%p508) target = $region24
        $region23: #{tpu_custom_call.1} parent=11 // pred_region
          _
        $region24: #{tpu_custom_call.1} parent=11 // pred_fallthru
          _
        // Predicated region
        $region25: #{tpu_custom_call.1} parent=11 // pred_check
          %p511 = pneg %p146
        $region26: #{tpu_custom_call.1} parent=11 // pred_check_branch
          %513 = sbr.rel (%p511) target = $region28
        $region27: #{tpu_custom_call.1} parent=11 // pred_region
          _
        $region28: #{tpu_custom_call.1} parent=11 // pred_fallthru
          _
        // Predicated region
        $region29: #{tpu_custom_call.1} parent=11 // pred_check
          %p514 = pneg %p167
        $region30: #{tpu_custom_call.1} parent=11 // pred_check_branch
          %516 = sbr.rel (%p514) target = $region32
        $region31: #{tpu_custom_call.1} parent=11 // pred_region
          _
        $region32: #{tpu_custom_call.1} parent=11 // pred_fallthru
          _
        // Predicated region
        $region33: #{tpu_custom_call.1} parent=11 // pred_check
          %p517 = pneg %p188
        $region34: #{tpu_custom_call.1} parent=11 // pred_check_branch
          %519 = sbr.rel (%p517) target = $region36
        $region35: #{tpu_custom_call.1} parent=11 // pred_region
          _
        $region36: #{tpu_custom_call.1} parent=11 // pred_fallthru
          _
        // Predicated region
        $region37: #{tpu_custom_call.1} parent=11 // pred_check
          %p520 = pneg %p209
        $region38: #{tpu_custom_call.1} parent=11 // pred_check_branch
          %522 = sbr.rel (%p520) target = $region40
        $region39: #{tpu_custom_call.1} parent=11 // pred_region
          _
        $region40: #{tpu_custom_call.1} parent=11 // pred_fallthru
          _
        // Predicated region
        $region41: #{tpu_custom_call.1} parent=11 // pred_check
          %p523 = pneg %p230
        $region42: #{tpu_custom_call.1} parent=11 // pred_check_branch
          %525 = sbr.rel (%p523) target = $region44
        $region43: #{tpu_custom_call.1} parent=11 // pred_region
          _
        $region44: #{tpu_custom_call.1} parent=11 // pred_fallthru
          _
        // Predicated region
        $region45: #{tpu_custom_call.1} parent=11 // pred_check
          %p526 = pneg %p251
        $region46: #{tpu_custom_call.1} parent=11 // pred_check_branch
          %528 = sbr.rel (%p526) target = $region48
        $region47: #{tpu_custom_call.1} parent=11 // pred_region
          _
        $region48: #{tpu_custom_call.1} parent=11 // pred_fallthru
          _
        // Predicated region
        $region49: #{tpu_custom_call.1} parent=11 // pred_check
          %p529 = pneg %p272
        $region50: #{tpu_custom_call.1} parent=11 // pred_check_branch
          %531 = sbr.rel (%p529) target = $region52
        $region51: #{tpu_custom_call.1} parent=11 // pred_region
          _
        $region52: #{tpu_custom_call.1} parent=11 // pred_fallthru
          _
        // Predicated region
        $region53: #{tpu_custom_call.1} parent=11 // pred_check
          %p532 = pneg %p293
        $region54: #{tpu_custom_call.1} parent=11 // pred_check_branch
          %534 = sbr.rel (%p532) target = $region56
        $region55: #{tpu_custom_call.1} parent=11 // pred_region
          _
        $region56: #{tpu_custom_call.1} parent=11 // pred_fallthru
          _
        // Predicated region
        $region57: #{tpu_custom_call.1} parent=11 // pred_check
          %p535 = pneg %p314
        $region58: #{tpu_custom_call.1} parent=11 // pred_check_branch
          %537 = sbr.rel (%p535) target = $region60
        $region59: #{tpu_custom_call.1} parent=11 // pred_region
          _
        $region60: #{tpu_custom_call.1} parent=11 // pred_fallthru
          _
        // Predicated region
        $region61: #{tpu_custom_call.1} parent=11 // pred_check
          %p538 = pneg %p335
        $region62: #{tpu_custom_call.1} parent=11 // pred_check_branch
          %540 = sbr.rel (%p538) target = $region64
        $region63: #{tpu_custom_call.1} parent=11 // pred_region
          _
        $region64: #{tpu_custom_call.1} parent=11 // pred_fallthru
          _
        // Predicated region
        $region65: #{tpu_custom_call.1} parent=11 // pred_check
          %p541 = pneg %p356
        $region66: #{tpu_custom_call.1} parent=11 // pred_check_branch
          %543 = sbr.rel (%p541) target = $region68
        $region67: #{tpu_custom_call.1} parent=11 // pred_region
          _
        $region68: #{tpu_custom_call.1} parent=11 // pred_fallthru
          _
        // Predicated region
        $region69: #{tpu_custom_call.1} parent=11 // pred_check
          %p544 = pneg %p377
        $region70: #{tpu_custom_call.1} parent=11 // pred_check_branch
          %546 = sbr.rel (%p544) target = $region72
        $region71: #{tpu_custom_call.1} parent=11 // pred_region
          _
        $region72: #{tpu_custom_call.1} parent=11 // pred_fallthru
          _
        // Predicated region
        $region73: #{tpu_custom_call.1} parent=11 // pred_check
          %p547 = pneg %p398
        $region74: #{tpu_custom_call.1} parent=11 // pred_check_branch
          %549 = sbr.rel (%p547) target = $region76
        $region75: #{tpu_custom_call.1} parent=11 // pred_region
          _
        $region76: #{tpu_custom_call.1} parent=11 // pred_fallthru
          _
        // Predicated region
        $region77: #{tpu_custom_call.1} parent=11 // pred_check
          %p550 = pneg %p419
        $region78: #{tpu_custom_call.1} parent=11 // pred_check_branch
          %552 = sbr.rel (%p550) target = $region80
        $region79: #{tpu_custom_call.1} parent=11 // pred_region
          _
        $region80: #{tpu_custom_call.1} parent=11 // pred_fallthru
          _
        // Predicated region
        $region81: #{tpu_custom_call.1} parent=11 // pred_check
          %p553 = pneg %p440
        $region82: #{tpu_custom_call.1} parent=11 // pred_check_branch
          %555 = sbr.rel (%p553) target = $region84
        $region83: #{tpu_custom_call.1} parent=11 // pred_region
          %557 = vsyncadd [#allocation8], 0
          %s559 = sshll.u32 %s18, 4
          %s560 = int_to_ptr.vmem [resolvable:$true] %s559
          %562 = dma.vmem_to_smem %s560, 16, [#allocation9], [#allocation8]
        $region84: #{tpu_custom_call.1} parent=11 // pred_fallthru
          _
        // Predicated region
        $region85: #{tpu_custom_call.1} parent=11 // pred_check
          %p563 = pneg %p461
        $region86: #{tpu_custom_call.1} parent=11 // pred_check_branch
          %565 = sbr.rel (%p563) target = $region88
        $region87: #{tpu_custom_call.1} parent=11 // pred_region
          _
        $region88: #{tpu_custom_call.1} parent=11 // pred_fallthru
          _
      $region12: #{tpu_custom_call.1} parent=5 // pred_fallthru
        _
      %p566 = scmp.lt.s32.totalorder %s36, 2
      // Predicated region
      $region89: #{tpu_custom_call.1} parent=5 // pred_check
        %p567 = pneg %p566
      $region90: #{tpu_custom_call.1} parent=5 // pred_check_branch
        %569 = sbr.rel (%p567) target = $region92
      $region91: #{tpu_custom_call.1} parent=5 // pred_region
        // Predicated region
        $region93: #{tpu_custom_call.1} parent=91 // pred_check
          %p570 = pneg %p56
        $region94: #{tpu_custom_call.1} parent=91 // pred_check_branch
          %572 = sbr.rel (%p570) target = $region96
        $region95: #{tpu_custom_call.1} parent=91 // pred_region
          %s573 = sand.u32 %s46, 1
          %s574 = scalar_lea.sflag [#allocation6], %s573
          %s575 = sand.u32 %s46, 1
          %s576 = smul.addr %s575, 64
          %s577 = scalar_lea.vmem [#allocation5], %s576
          %579 = vsyncadd %s574, 0
          %s580 = smul.addr %s36, 8
          %s581 = smul.addr %s580, 8
          %s582 = scalar_lea.hbm %s0, %s581
          %s583 = sshll.u32 %s582, 4
          %s584 = int_to_ptr.hbm [resolvable:$true] %s583
          %s585 = sshll.u32 %s577, 4
          %s586 = int_to_ptr.vmem [resolvable:$true] %s585
          %591 = dma.hbm_to_vmem [thread:$0]  %s584, 1024, %s586, %s574, 512, 512, 32
        $region96: #{tpu_custom_call.1} parent=91 // pred_fallthru
          _
      $region92: #{tpu_custom_call.1} parent=5 // pred_fallthru
        _
      %p592 = scmp.le.s32.totalorder 1, %s36
      %p593 = scmp.lt.s32.totalorder %s36, 3
      %p594 = pnand %p592, %p593
      %p595 = pneg %p594
      // Predicated region
      $region97: #{tpu_custom_call.1} parent=5 // pred_check
        _
      $region98: #{tpu_custom_call.1} parent=5 // pred_check_branch
        %597 = sbr.rel (%p594) target = $region100
      $region99: #{tpu_custom_call.1} parent=5 // pred_region
        %s598 = ssub.s32 %s36, 1
        %s599 = sand.u32 %s49, 1
        %s600 = scalar_lea.sflag [#allocation6], %s599
        %s601 = sand.u32 %s49, 1
        %s602 = smul.addr %s601, 64
        %s603 = scalar_lea.vmem [#allocation5], %s602
        // Predicated region
        $region101: #{tpu_custom_call.1} parent=99 // pred_check
          %p604 = pneg %p62
        $region102: #{tpu_custom_call.1} parent=99 // pred_check_branch
          %606 = sbr.rel (%p604) target = $region104
        $region103: #{tpu_custom_call.1} parent=99 // pred_region
          %608 = dma.done %s600, 1024
        $region104: #{tpu_custom_call.1} parent=99 // pred_fallthru
          _
        // Predicated region
        $region105: #{tpu_custom_call.1} parent=99 // pred_check
          %p609 = pneg %p440
        $region106: #{tpu_custom_call.1} parent=99 // pred_check_branch
          %611 = sbr.rel (%p609) target = $region108
        $region107: #{tpu_custom_call.1} parent=99 // pred_region
          %613 = dma.done [#allocation8], 16
        $region108: #{tpu_custom_call.1} parent=99 // pred_fallthru
          _
        %614 = sfence
        %s615 = sand.u32 %s49, 1
        %s616 = scalar_lea.sflag [#allocation6], %s615
        %s617 = sand.u32 %s49, 1
        %s618 = smul.addr %s617, 64
        %s619 = scalar_lea.vmem [#allocation5], %s618
        %p620 = pneg %p62
        %p621 = pneg %p59
        %p622 = pneg %p83
        %p623 = pneg %p80
        %p624 = pneg %p104
        %p625 = pneg %p101
        %p626 = pneg %p125
        %p627 = pneg %p122
        %p628 = pneg %p146
        %p629 = pneg %p143
        %p630 = pneg %p167
        %p631 = pneg %p164
        %p632 = pneg %p188
        %p633 = pneg %p185
        %p634 = pneg %p209
        %p635 = pneg %p206
        %p636 = pneg %p230
        %p637 = pneg %p227
        %p638 = pneg %p251
        %p639 = pneg %p248
        %p640 = pneg %p272
        %p641 = pneg %p269
        %p642 = pneg %p293
        %p643 = pneg %p290
        %p644 = pneg %p314
        %p645 = pneg %p311
        %p646 = pneg %p335
        %p647 = pneg %p332
        %p648 = pneg %p356
        %p649 = pneg %p353
        %p650 = pneg %p377
        %p651 = pneg %p374
        %p652 = pneg %p398
        %p653 = pneg %p395
        %p654 = pneg %p419
        %p655 = pneg %p416
        %p656 = pneg %p440
        %p657 = pneg %p437
        %p658 = pneg %p461
        %p659 = pneg %p458
        %p660 = pneg %p487
        %p661 = pneg %p484
        %s662 = sand.u32 %s474, 1
        %s663 = scalar_lea.sflag [#allocation7], %s662
        %s664 = sand.u32 %s474, 1
        %s665 = smul.addr %s664, 64
        %s666 = scalar_lea.vmem [#allocation10], %s665
        %v667 = vld [vmem:[%s603] sm:$0xff]
        %v668 = vld [vmem:[%s603 + $0x8] sm:$0xff]
        %v669 = vld [vmem:[%s603 + $0x10] sm:$0xff]
        %v670 = vld [vmem:[%s603 + $0x18] sm:$0xff]
        %v671 = vld [vmem:[%s603 + $0x20] sm:$0xff]
        %v672 = vld [vmem:[%s603 + $0x28] sm:$0xff]
        %v673 = vld [vmem:[%s603 + $0x30] sm:$0xff]
        %v674 = vld [vmem:[%s603 + $0x38] sm:$0xff]
        %v675 = vld [vmem:[%s1] sm:$0xf]
        %684 = vrot.lane.b32.xlu0 %v667, 23
        %v685 = vpop.permute.xlu0 %684
        %686 = vrot.lane.b32.xlu0 %v668, 23
        %v687 = vpop.permute.xlu0 %686
        %688 = vrot.lane.b32.xlu0 %v669, 23
        %v689 = vpop.permute.xlu0 %688
        %690 = vrot.lane.b32.xlu0 %v670, 23
        %v691 = vpop.permute.xlu0 %690
        %692 = vrot.lane.b32.xlu0 %v671, 23
        %v693 = vpop.permute.xlu0 %692
        %694 = vrot.lane.b32.xlu0 %v672, 23
        %v695 = vpop.permute.xlu0 %694
        %696 = vrot.lane.b32.xlu0 %v673, 23
        %v697 = vpop.permute.xlu0 %696
        %698 = vrot.lane.b32.xlu0 %v674, 23
        %v699 = vpop.permute.xlu0 %698
        %vm700 = vcmask 187392
        %v701 = vsel %vm700, %v685, %v687
        %v702 = vsel %vm700, %v687, %v689
        %v703 = vsel %vm700, %v689, %v691
        %v704 = vsel %vm700, %v693, %v695
        %v705 = vsel %vm700, %v695, %v697
        %v706 = vsel %vm700, %v697, %v699
        %v715 = vsel %vm700, 0.0, %v685
        %v716 = vsel %vm700, 0.0, %v693
        %717 = vst [vmem:[#allocation2] sm:$0xff] %v715
        %718 = vst [vmem:[#allocation2 + $0x8] sm:$0xff] %v701
        %719 = vst [vmem:[#allocation2 + $0x10] sm:$0xff] %v702
        %vm720 = vcmask 818176
        %721 = vst.msk [vmem:[#allocation2 + $0x18] sm:$0xff] %vm720, %v703
        %722 = vst [vmem:[#allocation2 + $0x20] sm:$0xff] %v716
        %723 = vst [vmem:[#allocation2 + $0x28] sm:$0xff] %v704
        %724 = vst [vmem:[#allocation2 + $0x30] sm:$0xff] %v705
        %725 = vst.msk [vmem:[#allocation2 + $0x38] sm:$0xff] %vm720, %v706
        %726 = vrot.lane.b32.xlu0 %v667, 22
        %v727 = vpop.permute.xlu0 %726
        %728 = vrot.lane.b32.xlu0 %v668, 22
        %v729 = vpop.permute.xlu0 %728
        %730 = vrot.lane.b32.xlu0 %v669, 22
        %v731 = vpop.permute.xlu0 %730
        %732 = vrot.lane.b32.xlu0 %v670, 22
        %v733 = vpop.permute.xlu0 %732
        %734 = vrot.lane.b32.xlu0 %v671, 22
        %v735 = vpop.permute.xlu0 %734
        %736 = vrot.lane.b32.xlu0 %v672, 22
        %v737 = vpop.permute.xlu0 %736
        %738 = vrot.lane.b32.xlu0 %v673, 22
        %v739 = vpop.permute.xlu0 %738
        %740 = vrot.lane.b32.xlu0 %v674, 22
        %v741 = vpop.permute.xlu0 %740
        %vm742 = vcmask 179200
        %v743 = vsel %vm742, %v727, %v729
        %v744 = vsel %vm742, %v729, %v731
        %v745 = vsel %vm742, %v731, %v733
        %v746 = vsel %vm742, %v735, %v737
        %v747 = vsel %vm742, %v737, %v739
        %v748 = vsel %vm742, %v739, %v741
        %v757 = vsel %vm742, 0.0, %v727
        %v758 = vsel %vm742, 0.0, %v735
        %759 = vst [vmem:[#allocation2 + $0x40] sm:$0xff] %v757
        %760 = vst [vmem:[#allocation2 + $0x48] sm:$0xff] %v743
        %761 = vst [vmem:[#allocation2 + $0x50] sm:$0xff] %v744
        %762 = vst.msk [vmem:[#allocation2 + $0x58] sm:$0xff] %vm720, %v745
        %763 = vst [vmem:[#allocation2 + $0x60] sm:$0xff] %v758
        %764 = vst [vmem:[#allocation2 + $0x68] sm:$0xff] %v746
        %765 = vst [vmem:[#allocation2 + $0x70] sm:$0xff] %v747
        %766 = vst.msk [vmem:[#allocation2 + $0x78] sm:$0xff] %vm720, %v748
        %767 = vrot.lane.b32.xlu0 %v667, 21
        %v768 = vpop.permute.xlu0 %767
        %769 = vrot.lane.b32.xlu0 %v668, 21
        %v770 = vpop.permute.xlu0 %769
        %771 = vrot.lane.b32.xlu0 %v669, 21
        %v772 = vpop.permute.xlu0 %771
        %773 = vrot.lane.b32.xlu0 %v670, 21
        %v774 = vpop.permute.xlu0 %773
        %775 = vrot.lane.b32.xlu0 %v671, 21
        %v776 = vpop.permute.xlu0 %775
        %777 = vrot.lane.b32.xlu0 %v672, 21
        %v778 = vpop.permute.xlu0 %777
        %779 = vrot.lane.b32.xlu0 %v673, 21
        %v780 = vpop.permute.xlu0 %779
        %781 = vrot.lane.b32.xlu0 %v674, 21
        %v782 = vpop.permute.xlu0 %781
        %vm783 = vcmask 171008
        %v784 = vsel %vm783, %v768, %v770
        %v785 = vsel %vm783, %v770, %v772
        %v786 = vsel %vm783, %v772, %v774
        %v787 = vsel %vm783, %v776, %v778
        %v788 = vsel %vm783, %v778, %v780
        %v789 = vsel %vm783, %v780, %v782
        %v798 = vsel %vm783, 0.0, %v768
        %v799 = vsel %vm783, 0.0, %v776
        %800 = vst [vmem:[#allocation2 + $0x80] sm:$0xff] %v798
        %801 = vst [vmem:[#allocation2 + $0x88] sm:$0xff] %v784
        %802 = vst [vmem:[#allocation2 + $0x90] sm:$0xff] %v785
        %803 = vst.msk [vmem:[#allocation2 + $0x98] sm:$0xff] %vm720, %v786
        %804 = vst [vmem:[#allocation2 + $0xa0] sm:$0xff] %v799
        %805 = vst [vmem:[#allocation2 + $0xa8] sm:$0xff] %v787
        %806 = vst [vmem:[#allocation2 + $0xb0] sm:$0xff] %v788
        %807 = vst.msk [vmem:[#allocation2 + $0xb8] sm:$0xff] %vm720, %v789
        %808 = vrot.lane.b32.xlu0 %v667, 1
        %v809 = vpop.permute.xlu0 %808
        %810 = vrot.lane.b32.xlu0 %v668, 1
        %v811 = vpop.permute.xlu0 %810
        %812 = vrot.lane.b32.xlu0 %v669, 1
        %v813 = vpop.permute.xlu0 %812
        %814 = vrot.lane.b32.xlu0 %v670, 1
        %v815 = vpop.permute.xlu0 %814
        %816 = vrot.lane.b32.xlu0 %v671, 1
        %v817 = vpop.permute.xlu0 %816
        %818 = vrot.lane.b32.xlu0 %v672, 1
        %v819 = vpop.permute.xlu0 %818
        %820 = vrot.lane.b32.xlu0 %v673, 1
        %v821 = vpop.permute.xlu0 %820
        %822 = vrot.lane.b32.xlu0 %v674, 1
        %v823 = vpop.permute.xlu0 %822
        %vm824 = vcmask 7168
        %v825 = vsel %vm824, %v809, %v811
        %v826 = vsel %vm824, %v811, %v813
        %v827 = vsel %vm824, %v813, %v815
        %v828 = vsel %vm824, %v817, %v819
        %v829 = vsel %vm824, %v819, %v821
        %v830 = vsel %vm824, %v821, %v823
        %v839 = vsel %vm824, 0.0, %v809
        %v840 = vsel %vm824, 0.0, %v817
        %841 = vst [vmem:[#allocation2 + $0xc0] sm:$0xff] %v839
        %842 = vst [vmem:[#allocation2 + $0xc8] sm:$0xff] %v825
        %843 = vst [vmem:[#allocation2 + $0xd0] sm:$0xff] %v826
        %844 = vst.msk [vmem:[#allocation2 + $0xd8] sm:$0xff] %vm720, %v827
        %845 = vst [vmem:[#allocation2 + $0xe0] sm:$0xff] %v840
        %846 = vst [vmem:[#allocation2 + $0xe8] sm:$0xff] %v828
        %847 = vst [vmem:[#allocation2 + $0xf0] sm:$0xff] %v829
        %848 = vst.msk [vmem:[#allocation2 + $0xf8] sm:$0xff] %vm720, %v830
        %849 = vst [vmem:[#allocation2 + $0x100] sm:$0xff] %v667
        %850 = vst [vmem:[#allocation2 + $0x108] sm:$0xff] %v668
        %851 = vst [vmem:[#allocation2 + $0x110] sm:$0xff] %v669
        %852 = vst.msk [vmem:[#allocation2 + $0x118] sm:$0xff] %vm720, %v670
        %853 = vst [vmem:[#allocation2 + $0x120] sm:$0xff] %v671
        %854 = vst [vmem:[#allocation2 + $0x128] sm:$0xff] %v672
        %855 = vst [vmem:[#allocation2 + $0x130] sm:$0xff] %v673
        %856 = vst.msk [vmem:[#allocation2 + $0x138] sm:$0xff] %vm720, %v674
        %857 = vrot.lane.b32.xlu0 %v667, 127
        %v858 = vpop.permute.xlu0 %857
        %859 = vrot.lane.b32.xlu0 %v668, 127
        %v860 = vpop.permute.xlu0 %859
        %861 = vrot.lane.b32.xlu0 %v669, 127
        %v862 = vpop.permute.xlu0 %861
        %863 = vrot.lane.b32.xlu0 %v670, 127
        %v864 = vpop.permute.xlu0 %863
        %865 = vrot.lane.b32.xlu0 %v671, 127
        %v866 = vpop.permute.xlu0 %865
        %867 = vrot.lane.b32.xlu0 %v672, 127
        %v868 = vpop.permute.xlu0 %867
        %869 = vrot.lane.b32.xlu0 %v673, 127
        %v870 = vpop.permute.xlu0 %869
        %871 = vrot.lane.b32.xlu0 %v674, 127
        %v872 = vpop.permute.xlu0 %871
        %vm873 = vcmask 1039360
        %v874 = vsel %vm873, %v858, %v860
        %v875 = vsel %vm873, %v860, %v862
        %v876 = vsel %vm873, %v862, %v864
        %v877 = vsel %vm873, %v866, %v868
        %v878 = vsel %vm873, %v868, %v870
        %v879 = vsel %vm873, %v870, %v872
        %vm888 = vcmask 809984
        %v889 = vsel %vm888, %v864, 0.0
        %v890 = vsel %vm888, %v872, 0.0
        %891 = vst [vmem:[#allocation2 + $0x140] sm:$0xff] %v874
        %892 = vst [vmem:[#allocation2 + $0x148] sm:$0xff] %v875
        %893 = vst [vmem:[#allocation2 + $0x150] sm:$0xff] %v876
        %894 = vst.msk [vmem:[#allocation2 + $0x158] sm:$0xff] %vm720, %v889
        %895 = vst [vmem:[#allocation2 + $0x160] sm:$0xff] %v877
        %896 = vst [vmem:[#allocation2 + $0x168] sm:$0xff] %v878
        %897 = vst [vmem:[#allocation2 + $0x170] sm:$0xff] %v879
        %898 = vst.msk [vmem:[#allocation2 + $0x178] sm:$0xff] %vm720, %v890
        %899 = vrot.lane.b32.xlu0 %v667, 107
        %v900 = vpop.permute.xlu0 %899
        %901 = vrot.lane.b32.xlu0 %v668, 107
        %v902 = vpop.permute.xlu0 %901
        %903 = vrot.lane.b32.xlu0 %v669, 107
        %v904 = vpop.permute.xlu0 %903
        %905 = vrot.lane.b32.xlu0 %v670, 107
        %v906 = vpop.permute.xlu0 %905
        %907 = vrot.lane.b32.xlu0 %v671, 107
        %v908 = vpop.permute.xlu0 %907
        %909 = vrot.lane.b32.xlu0 %v672, 107
        %v910 = vpop.permute.xlu0 %909
        %911 = vrot.lane.b32.xlu0 %v673, 107
        %v912 = vpop.permute.xlu0 %911
        %913 = vrot.lane.b32.xlu0 %v674, 107
        %v914 = vpop.permute.xlu0 %913
        %vm915 = vcmask 875520
        %v916 = vsel %vm915, %v900, %v902
        %v917 = vsel %vm915, %v902, %v904
        %v918 = vsel %vm915, %v904, %v906
        %v919 = vsel %vm915, %v908, %v910
        %v920 = vsel %vm915, %v910, %v912
        %v921 = vsel %vm915, %v912, %v914
        %vm930 = vcmask 646144
        %v931 = vsel %vm930, %v906, 0.0
        %v932 = vsel %vm930, %v914, 0.0
        %933 = vst [vmem:[#allocation2 + $0x180] sm:$0xff] %v916
        %934 = vst [vmem:[#allocation2 + $0x188] sm:$0xff] %v917
        %935 = vst [vmem:[#allocation2 + $0x190] sm:$0xff] %v918
        %936 = vst.msk [vmem:[#allocation2 + $0x198] sm:$0xff] %vm720, %v931
        %937 = vst [vmem:[#allocation2 + $0x1a0] sm:$0xff] %v919
        %938 = vst [vmem:[#allocation2 + $0x1a8] sm:$0xff] %v920
        %939 = vst [vmem:[#allocation2 + $0x1b0] sm:$0xff] %v921
        %940 = vst.msk [vmem:[#allocation2 + $0x1b8] sm:$0xff] %vm720, %v932
        %941 = vrot.lane.b32.xlu0 %v667, 106
        %v942 = vpop.permute.xlu0 %941
        %943 = vrot.lane.b32.xlu0 %v668, 106
        %v944 = vpop.permute.xlu0 %943
        %945 = vrot.lane.b32.xlu0 %v669, 106
        %v946 = vpop.permute.xlu0 %945
        %947 = vrot.lane.b32.xlu0 %v670, 106
        %v948 = vpop.permute.xlu0 %947
        %949 = vrot.lane.b32.xlu0 %v671, 106
        %v950 = vpop.permute.xlu0 %949
        %951 = vrot.lane.b32.xlu0 %v672, 106
        %v952 = vpop.permute.xlu0 %951
        %953 = vrot.lane.b32.xlu0 %v673, 106
        %v954 = vpop.permute.xlu0 %953
        %955 = vrot.lane.b32.xlu0 %v674, 106
        %v956 = vpop.permute.xlu0 %955
        %vm957 = vcmask 867328
        %v958 = vsel %vm957, %v942, %v944
        %v959 = vsel %vm957, %v944, %v946
        %v960 = vsel %vm957, %v946, %v948
        %v961 = vsel %vm957, %v950, %v952
        %v962 = vsel %vm957, %v952, %v954
        %v963 = vsel %vm957, %v954, %v956
        %vm972 = vcmask 637952
        %v973 = vsel %vm972, %v948, 0.0
        %v974 = vsel %vm972, %v956, 0.0
        %975 = vst [vmem:[#allocation2 + $0x1c0] sm:$0xff] %v958
        %976 = vst [vmem:[#allocation2 + $0x1c8] sm:$0xff] %v959
        %977 = vst [vmem:[#allocation2 + $0x1d0] sm:$0xff] %v960
        %978 = vst.msk [vmem:[#allocation2 + $0x1d8] sm:$0xff] %vm720, %v973
        %979 = vst [vmem:[#allocation2 + $0x1e0] sm:$0xff] %v961
        %980 = vst [vmem:[#allocation2 + $0x1e8] sm:$0xff] %v962
        %981 = vst [vmem:[#allocation2 + $0x1f0] sm:$0xff] %v963
        %982 = vst.msk [vmem:[#allocation2 + $0x1f8] sm:$0xff] %vm720, %v974
        %983 = vrot.lane.b32.xlu0 %v667, 105
        %v984 = vpop.permute.xlu0 %983
        %985 = vrot.lane.b32.xlu0 %v668, 105
        %v986 = vpop.permute.xlu0 %985
        %987 = vrot.lane.b32.xlu0 %v669, 105
        %v988 = vpop.permute.xlu0 %987
        %989 = vrot.lane.b32.xlu0 %v670, 105
        %v990 = vpop.permute.xlu0 %989
        %991 = vrot.lane.b32.xlu0 %v671, 105
        %v992 = vpop.permute.xlu0 %991
        %993 = vrot.lane.b32.xlu0 %v672, 105
        %v994 = vpop.permute.xlu0 %993
        %995 = vrot.lane.b32.xlu0 %v673, 105
        %v996 = vpop.permute.xlu0 %995
        %997 = vrot.lane.b32.xlu0 %v674, 105
        %v998 = vpop.permute.xlu0 %997
        %vm999 = vcmask 859136
        %v1000 = vsel %vm999, %v984, %v986
        %v1001 = vsel %vm999, %v986, %v988
        %v1002 = vsel %vm999, %v988, %v990
        %v1003 = vsel %vm999, %v992, %v994
        %v1004 = vsel %vm999, %v994, %v996
        %v1005 = vsel %vm999, %v996, %v998
        %vm1014 = vcmask 629760
        %v1015 = vsel %vm1014, %v990, 0.0
        %v1016 = vsel %vm1014, %v998, 0.0
        %1017 = vst [vmem:[#allocation2 + $0x200] sm:$0xff] %v1000
        %1018 = vst [vmem:[#allocation2 + $0x208] sm:$0xff] %v1001
        %1019 = vst [vmem:[#allocation2 + $0x210] sm:$0xff] %v1002
        %1020 = vst.msk [vmem:[#allocation2 + $0x218] sm:$0xff] %vm720, %v1015
        %1021 = vst [vmem:[#allocation2 + $0x220] sm:$0xff] %v1003
        %1022 = vst [vmem:[#allocation2 + $0x228] sm:$0xff] %v1004
        %1023 = vst [vmem:[#allocation2 + $0x230] sm:$0xff] %v1005
        %1024 = vst.msk [vmem:[#allocation2 + $0x238] sm:$0xff] %vm720, %v1016
        %v1025 = vld [vmem:[%s2] sm:$0xff]
        %v1026 = vld [vmem:[%s2 + $0x8] sm:$0xff]
        %v1027 = vld [vmem:[%s2 + $0x10] sm:$0xff]
        %v1028 = vld [vmem:[%s2 + $0x18] sm:$0xff]
        %v1029 = vld [vmem:[#allocation2] sm:$0xff]
        %v1030 = vld [vmem:[#allocation2 + $0x8] sm:$0xff]
        %v1031 = vld [vmem:[#allocation2 + $0x10] sm:$0xff]
        %v1032 = vld [vmem:[#allocation2 + $0x18] sm:$0xff]
        %v1033 = vld [vmem:[#allocation2 + $0x20] sm:$0xff]
        %v1034 = vld [vmem:[#allocation2 + $0x28] sm:$0xff]
        %v1035 = vld [vmem:[#allocation2 + $0x30] sm:$0xff]
        %v1036 = vld [vmem:[#allocation2 + $0x38] sm:$0xff]
        %v1037 = vld [vmem:[#allocation2 + $0x40] sm:$0xff]
        %v1038 = vld [vmem:[#allocation2 + $0x48] sm:$0xff]
        %v1039 = vld [vmem:[#allocation2 + $0x50] sm:$0xff]
        %v1040 = vld [vmem:[#allocation2 + $0x58] sm:$0xff]
        %v1041 = vld [vmem:[#allocation2 + $0x60] sm:$0xff]
        %v1042 = vld [vmem:[#allocation2 + $0x68] sm:$0xff]
        %v1043 = vld [vmem:[#allocation2 + $0x70] sm:$0xff]
        %v1044 = vld [vmem:[#allocation2 + $0x78] sm:$0xff]
        %v1045 = vld [vmem:[#allocation2 + $0x80] sm:$0xff]
        %v1046 = vld [vmem:[#allocation2 + $0x88] sm:$0xff]
        %v1047 = vld [vmem:[#allocation2 + $0x90] sm:$0xff]
        %v1048 = vld [vmem:[#allocation2 + $0x98] sm:$0xff]
        %v1049 = vld [vmem:[#allocation2 + $0xa0] sm:$0xff]
        %v1050 = vld [vmem:[#allocation2 + $0xa8] sm:$0xff]
        %v1051 = vld [vmem:[#allocation2 + $0xb0] sm:$0xff]
        %v1052 = vld [vmem:[#allocation2 + $0xb8] sm:$0xff]
        %v1053 = vld [vmem:[#allocation2 + $0xc0] sm:$0xff]
        %v1054 = vld [vmem:[#allocation2 + $0xc8] sm:$0xff]
        %v1055 = vld [vmem:[#allocation2 + $0xd0] sm:$0xff]
        %v1056 = vld [vmem:[#allocation2 + $0xd8] sm:$0xff]
        %v1057 = vld [vmem:[#allocation2 + $0xe0] sm:$0xff]
        %v1058 = vld [vmem:[#allocation2 + $0xe8] sm:$0xff]
        %v1059 = vld [vmem:[#allocation2 + $0xf0] sm:$0xff]
        %v1060 = vld [vmem:[#allocation2 + $0xf8] sm:$0xff]
        %v1061 = vld [vmem:[#allocation2 + $0x100] sm:$0xff]
        %v1062 = vld [vmem:[#allocation2 + $0x108] sm:$0xff]
        %v1063 = vld [vmem:[#allocation2 + $0x110] sm:$0xff]
        %v1064 = vld [vmem:[#allocation2 + $0x118] sm:$0xff]
        %v1065 = vld [vmem:[#allocation2 + $0x120] sm:$0xff]
        %v1066 = vld [vmem:[#allocation2 + $0x128] sm:$0xff]
        %v1067 = vld [vmem:[#allocation2 + $0x130] sm:$0xff]
        %v1068 = vld [vmem:[#allocation2 + $0x138] sm:$0xff]
        %v1069 = vld [vmem:[#allocation2 + $0x140] sm:$0xff]
        %v1070 = vld [vmem:[#allocation2 + $0x148] sm:$0xff]
        %v1071 = vld [vmem:[#allocation2 + $0x150] sm:$0xff]
        %v1072 = vld [vmem:[#allocation2 + $0x158] sm:$0xff]
        %v1073 = vld [vmem:[#allocation2 + $0x160] sm:$0xff]
        %v1074 = vld [vmem:[#allocation2 + $0x168] sm:$0xff]
        %v1075 = vld [vmem:[#allocation2 + $0x170] sm:$0xff]
        %v1076 = vld [vmem:[#allocation2 + $0x178] sm:$0xff]
        %v1077 = vld [vmem:[#allocation2 + $0x180] sm:$0xff]
        %v1078 = vld [vmem:[#allocation2 + $0x188] sm:$0xff]
        %v1079 = vld [vmem:[#allocation2 + $0x190] sm:$0xff]
        %v1080 = vld [vmem:[#allocation2 + $0x198] sm:$0xff]
        %v1081 = vld [vmem:[#allocation2 + $0x1a0] sm:$0xff]
        %v1082 = vld [vmem:[#allocation2 + $0x1a8] sm:$0xff]
        %v1083 = vld [vmem:[#allocation2 + $0x1b0] sm:$0xff]
        %v1084 = vld [vmem:[#allocation2 + $0x1b8] sm:$0xff]
        %v1085 = vld [vmem:[#allocation2 + $0x1c0] sm:$0xff]
        %v1086 = vld [vmem:[#allocation2 + $0x1c8] sm:$0xff]
        %v1087 = vld [vmem:[#allocation2 + $0x1d0] sm:$0xff]
        %v1088 = vld [vmem:[#allocation2 + $0x1d8] sm:$0xff]
        %v1089 = vld [vmem:[#allocation2 + $0x1e0] sm:$0xff]
        %v1090 = vld [vmem:[#allocation2 + $0x1e8] sm:$0xff]
        %v1091 = vld [vmem:[#allocation2 + $0x1f0] sm:$0xff]
        %v1092 = vld [vmem:[#allocation2 + $0x1f8] sm:$0xff]
        %v1093 = vld [vmem:[#allocation2 + $0x200] sm:$0xff]
        %v1094 = vld [vmem:[#allocation2 + $0x208] sm:$0xff]
        %v1095 = vld [vmem:[#allocation2 + $0x210] sm:$0xff]
        %v1096 = vld [vmem:[#allocation2 + $0x218] sm:$0xff]
        %v1097 = vld [vmem:[#allocation2 + $0x220] sm:$0xff]
        %v1098 = vld [vmem:[#allocation2 + $0x228] sm:$0xff]
        %v1099 = vld [vmem:[#allocation2 + $0x230] sm:$0xff]
        %v1100 = vld [vmem:[#allocation2 + $0x238] sm:$0xff]
        %v1101 = vld [vmem:[%s3] sm:$0xff]
        %v1102 = vld [vmem:[%s3 + $0x8] sm:$0xff]
        %1104 = vset.pattern.permute.xlu0 0
        %1105 = vperm.xlu0 %1104, %v1101
        %v1106 = vpop.permute.xlu0 %1105
        %1109 = vset.pattern.permute.xlu0 0
        %1110 = vperm.xlu0 %1109, %v1102
        %v1111 = vpop.permute.xlu0 %1110
        %vm1113 = vcmask 130048
        %v1115 = vsel %vm1113, %v1026, 0
        %v1118 = vsel %vm1113, %v1028, 0
        %1120 = vmatpush.msra.mxu0 %v1089
        %1121 = vmatpush.msra.mxu0 %v1085
        %1122 = vmatpush.msra.mxu0 %v1081
        %1123 = vmatpush.msra.mxu0 %v1077
        %1124 = vmatpush.msra.mxu0 %v1073
        %1125 = vmatpush.msra.mxu0 %v1069
        %1126 = vmatpush.msra.mxu0 %v1065
        %1127 = vmatpush.msra.mxu0 %v1061
        %1128 = vmatpush.msra.mxu0 %v1057
        %1129 = vmatpush.msra.mxu0 %v1053
        %1130 = vmatpush.msra.mxu0 %v1049
        %1131 = vmatpush.msra.mxu0 %v1045
        %1132 = vmatpush.msra.mxu0 %v1041
        %1133 = vmatpush.msra.mxu0 %v1037
        %1134 = vmatpush.msra.mxu0 %v1033
        %1135 = vmatpush.msra.mxu0 %v1029
        %1136 = vmatmul.f32.gmra.mxu0 %v1025
        %v1137 = vpop.f32.mrf.mxu0
        %v1138 = vadd.f32 %v1106, %v1137
        %1139 = vmatmul.f32.gmra.mxu0 %v1027
        %v1140 = vpop.f32.mrf.mxu0
        %v1141 = vadd.f32 %v1111, %v1140
        %1142 = vdwg.mxu0
        %1143 = vmatpush.msra.mxu0 0.0
        %1144 = vmatpush.msra.mxu0 0.0
        %1145 = vmatpush.msra.mxu0 0.0
        %1146 = vmatpush.msra.mxu0 0.0
        %1147 = vmatpush.msra.mxu0 0.0
        %1148 = vmatpush.msra.mxu0 0.0
        %1149 = vmatpush.msra.mxu0 0.0
        %1150 = vmatpush.msra.mxu0 0.0
        %1151 = vmatpush.msra.mxu0 0.0
        %1152 = vmatpush.msra.mxu0 0.0
        %1153 = vmatpush.msra.mxu0 0.0
        %1154 = vmatpush.msra.mxu0 0.0
        %1155 = vmatpush.msra.mxu0 0.0
        %1156 = vmatpush.msra.mxu0 0.0
        %1157 = vmatpush.msra.mxu0 %v1097
        %1158 = vmatpush.msra.mxu0 %v1093
        %1159 = vmatmul.f32.gmra.mxu0 %v1115
        %v1160 = vpop.f32.mrf.mxu0
        %v1161 = vadd.f32 %v1138, %v1160
        %1162 = vmatmul.f32.gmra.mxu0 %v1118
        %v1163 = vpop.f32.mrf.mxu0
        %v1164 = vadd.f32 %v1141, %v1163
        %1165 = vdwg.mxu0
        %1166 = vmatpush.msra.mxu0 %v1090
        %1167 = vmatpush.msra.mxu0 %v1086
        %1168 = vmatpush.msra.mxu0 %v1082
        %1169 = vmatpush.msra.mxu0 %v1078
        %1170 = vmatpush.msra.mxu0 %v1074
        %1171 = vmatpush.msra.mxu0 %v1070
        %1172 = vmatpush.msra.mxu0 %v1066
        %1173 = vmatpush.msra.mxu0 %v1062
        %1174 = vmatpush.msra.mxu0 %v1058
        %1175 = vmatpush.msra.mxu0 %v1054
        %1176 = vmatpush.msra.mxu0 %v1050
        %1177 = vmatpush.msra.mxu0 %v1046
        %1178 = vmatpush.msra.mxu0 %v1042
        %1179 = vmatpush.msra.mxu0 %v1038
        %1180 = vmatpush.msra.mxu0 %v1034
        %1181 = vmatpush.msra.mxu0 %v1030
        %1182 = vmatmul.f32.gmra.mxu0 %v1025
        %v1183 = vpop.f32.mrf.mxu0
        %v1184 = vadd.f32 %v1106, %v1183
        %1185 = vmatmul.f32.gmra.mxu0 %v1027
        %v1186 = vpop.f32.mrf.mxu0
        %v1187 = vadd.f32 %v1111, %v1186
        %1188 = vdwg.mxu0
        %1189 = vmatpush.msra.mxu0 0.0
        %1190 = vmatpush.msra.mxu0 0.0
        %1191 = vmatpush.msra.mxu0 0.0
        %1192 = vmatpush.msra.mxu0 0.0
        %1193 = vmatpush.msra.mxu0 0.0
        %1194 = vmatpush.msra.mxu0 0.0
        %1195 = vmatpush.msra.mxu0 0.0
        %1196 = vmatpush.msra.mxu0 0.0
        %1197 = vmatpush.msra.mxu0 0.0
        %1198 = vmatpush.msra.mxu0 0.0
        %1199 = vmatpush.msra.mxu0 0.0
        %1200 = vmatpush.msra.mxu0 0.0
        %1201 = vmatpush.msra.mxu0 0.0
        %1202 = vmatpush.msra.mxu0 0.0
        %1203 = vmatpush.msra.mxu0 %v1098
        %1204 = vmatpush.msra.mxu0 %v1094
        %1205 = vmatmul.f32.gmra.mxu0 %v1115
        %v1206 = vpop.f32.mrf.mxu0
        %v1207 = vadd.f32 %v1184, %v1206
        %1208 = vmatmul.f32.gmra.mxu0 %v1118
        %v1209 = vpop.f32.mrf.mxu0
        %v1210 = vadd.f32 %v1187, %v1209
        %1211 = vdwg.mxu0
        %1212 = vmatpush.msra.mxu0 %v1091
        %1213 = vmatpush.msra.mxu0 %v1087
        %1214 = vmatpush.msra.mxu0 %v1083
        %1215 = vmatpush.msra.mxu0 %v1079
        %1216 = vmatpush.msra.mxu0 %v1075
        %1217 = vmatpush.msra.mxu0 %v1071
        %1218 = vmatpush.msra.mxu0 %v1067
        %1219 = vmatpush.msra.mxu0 %v1063
        %1220 = vmatpush.msra.mxu0 %v1059
        %1221 = vmatpush.msra.mxu0 %v1055
        %1222 = vmatpush.msra.mxu0 %v1051
        %1223 = vmatpush.msra.mxu0 %v1047
        %1224 = vmatpush.msra.mxu0 %v1043
        %1225 = vmatpush.msra.mxu0 %v1039
        %1226 = vmatpush.msra.mxu0 %v1035
        %1227 = vmatpush.msra.mxu0 %v1031
        %1228 = vmatmul.f32.gmra.mxu0 %v1025
        %v1229 = vpop.f32.mrf.mxu0
        %v1230 = vadd.f32 %v1106, %v1229
        %1231 = vmatmul.f32.gmra.mxu0 %v1027
        %v1232 = vpop.f32.mrf.mxu0
        %v1233 = vadd.f32 %v1111, %v1232
        %1234 = vdwg.mxu0
        %1235 = vmatpush.msra.mxu0 0.0
        %1236 = vmatpush.msra.mxu0 0.0
        %1237 = vmatpush.msra.mxu0 0.0
        %1238 = vmatpush.msra.mxu0 0.0
        %1239 = vmatpush.msra.mxu0 0.0
        %1240 = vmatpush.msra.mxu0 0.0
        %1241 = vmatpush.msra.mxu0 0.0
        %1242 = vmatpush.msra.mxu0 0.0
        %1243 = vmatpush.msra.mxu0 0.0
        %1244 = vmatpush.msra.mxu0 0.0
        %1245 = vmatpush.msra.mxu0 0.0
        %1246 = vmatpush.msra.mxu0 0.0
        %1247 = vmatpush.msra.mxu0 0.0
        %1248 = vmatpush.msra.mxu0 0.0
        %1249 = vmatpush.msra.mxu0 %v1099
        %1250 = vmatpush.msra.mxu0 %v1095
        %1251 = vmatmul.f32.gmra.mxu0 %v1115
        %v1252 = vpop.f32.mrf.mxu0
        %v1253 = vadd.f32 %v1230, %v1252
        %1254 = vmatmul.f32.gmra.mxu0 %v1118
        %v1255 = vpop.f32.mrf.mxu0
        %v1256 = vadd.f32 %v1233, %v1255
        %1257 = vdwg.mxu0
        %1258 = vmatpush.msra.mxu0 %v1092
        %1259 = vmatpush.msra.mxu0 %v1088
        %1260 = vmatpush.msra.mxu0 %v1084
        %1261 = vmatpush.msra.mxu0 %v1080
        %1262 = vmatpush.msra.mxu0 %v1076
        %1263 = vmatpush.msra.mxu0 %v1072
        %1264 = vmatpush.msra.mxu0 %v1068
        %1265 = vmatpush.msra.mxu0 %v1064
        %1266 = vmatpush.msra.mxu0 %v1060
        %1267 = vmatpush.msra.mxu0 %v1056
        %1268 = vmatpush.msra.mxu0 %v1052
        %1269 = vmatpush.msra.mxu0 %v1048
        %1270 = vmatpush.msra.mxu0 %v1044
        %1271 = vmatpush.msra.mxu0 %v1040
        %1272 = vmatpush.msra.mxu0 %v1036
        %1273 = vmatpush.msra.mxu0 %v1032
        %1274 = vmatmul.f32.gmra.mxu0 %v1025
        %v1275 = vpop.f32.mrf.mxu0
        %v1276 = vadd.f32 %v1106, %v1275
        %1277 = vmatmul.f32.gmra.mxu0 %v1027
        %v1278 = vpop.f32.mrf.mxu0
        %v1279 = vadd.f32 %v1111, %v1278
        %1280 = vdwg.mxu0
        %1281 = vmatpush.msra.mxu0 0.0
        %1282 = vmatpush.msra.mxu0 0.0
        %1283 = vmatpush.msra.mxu0 0.0
        %1284 = vmatpush.msra.mxu0 0.0
        %1285 = vmatpush.msra.mxu0 0.0
        %1286 = vmatpush.msra.mxu0 0.0
        %1287 = vmatpush.msra.mxu0 0.0
        %1288 = vmatpush.msra.mxu0 0.0
        %1289 = vmatpush.msra.mxu0 0.0
        %1290 = vmatpush.msra.mxu0 0.0
        %1291 = vmatpush.msra.mxu0 0.0
        %1292 = vmatpush.msra.mxu0 0.0
        %1293 = vmatpush.msra.mxu0 0.0
        %1294 = vmatpush.msra.mxu0 0.0
        %1295 = vmatpush.msra.mxu0 %v1100
        %1296 = vmatpush.msra.mxu0 %v1096
        %1297 = vmatmul.f32.gmra.mxu0 %v1115
        %v1298 = vpop.f32.mrf.mxu0
        %v1299 = vadd.f32 %v1276, %v1298
        %1300 = vmatmul.f32.gmra.mxu0 %v1118
        %v1301 = vpop.f32.mrf.mxu0
        %v1302 = vadd.f32 %v1279, %v1301
        %1303 = vdwg.mxu0
        %v1304 = vmax.f32 %v1161, 0.0
        %v1305 = vmax.f32 %v1207, 0.0
        %v1306 = vmax.f32 %v1253, 0.0
        %v1307 = vmax.f32 %v1299, 0.0
        %v1308 = vmax.f32 %v1164, 0.0
        %v1309 = vmax.f32 %v1210, 0.0
        %v1310 = vmax.f32 %v1256, 0.0
        %v1311 = vmax.f32 %v1302, 0.0
        %v1312 = vadd.f32 %v1304, %v667
        %v1313 = vadd.f32 %v1305, %v668
        %v1314 = vadd.f32 %v1306, %v669
        %v1315 = vadd.f32 %v1307, %v670
        %v1316 = vadd.f32 %v1308, %v671
        %v1317 = vadd.f32 %v1309, %v672
        %v1318 = vadd.f32 %v1310, %v673
        %v1319 = vadd.f32 %v1311, %v674
        %v1321 = vperm.slane %v675, 0
        %v1322 = vperm.slane %v675, 1
        %v1323 = vperm.slane %v675, 2
        %v1324 = vperm.slane %v675, 3
        %v1329 = vmul.f32 %v1312, %v1321
        %v1330 = vmul.f32 %v1313, %v1322
        %v1331 = vmul.f32 %v1314, %v1323
        %v1332 = vmul.f32 %v1315, %v1324
        %v1333 = vmul.f32 %v1316, %v1321
        %v1334 = vmul.f32 %v1317, %v1322
        %v1335 = vmul.f32 %v1318, %v1323
        %v1336 = vmul.f32 %v1319, %v1324
        %1345 = vrot.lane.b32.xlu0 %v1329, 23
        %v1346 = vpop.permute.xlu0 %1345
        %1347 = vrot.lane.b32.xlu0 %v1330, 23
        %v1348 = vpop.permute.xlu0 %1347
        %1349 = vrot.lane.b32.xlu0 %v1331, 23
        %v1350 = vpop.permute.xlu0 %1349
        %1351 = vrot.lane.b32.xlu0 %v1332, 23
        %v1352 = vpop.permute.xlu0 %1351
        %1353 = vrot.lane.b32.xlu0 %v1333, 23
        %v1354 = vpop.permute.xlu0 %1353
        %1355 = vrot.lane.b32.xlu0 %v1334, 23
        %v1356 = vpop.permute.xlu0 %1355
        %1357 = vrot.lane.b32.xlu0 %v1335, 23
        %v1358 = vpop.permute.xlu0 %1357
        %1359 = vrot.lane.b32.xlu0 %v1336, 23
        %v1360 = vpop.permute.xlu0 %1359
        %v1361 = vsel %vm700, %v1346, %v1348
        %v1362 = vsel %vm700, %v1348, %v1350
        %v1363 = vsel %vm700, %v1350, %v1352
        %v1364 = vsel %vm700, %v1354, %v1356
        %v1365 = vsel %vm700, %v1356, %v1358
        %v1366 = vsel %vm700, %v1358, %v1360
        %v1375 = vsel %vm700, 0.0, %v1346
        %v1376 = vsel %vm700, 0.0, %v1354
        %1377 = vst [vmem:[#allocation2] sm:$0xff] %v1375
        %1378 = vst [vmem:[#allocation2 + $0x8] sm:$0xff] %v1361
        %1379 = vst [vmem:[#allocation2 + $0x10] sm:$0xff] %v1362
        %1380 = vst.msk [vmem:[#allocation2 + $0x18] sm:$0xff] %vm720, %v1363
        %1381 = vst [vmem:[#allocation2 + $0x20] sm:$0xff] %v1376
        %1382 = vst [vmem:[#allocation2 + $0x28] sm:$0xff] %v1364
        %1383 = vst [vmem:[#allocation2 + $0x30] sm:$0xff] %v1365
        %1384 = vst.msk [vmem:[#allocation2 + $0x38] sm:$0xff] %vm720, %v1366
        %1385 = vrot.lane.b32.xlu0 %v1329, 22
        %v1386 = vpop.permute.xlu0 %1385
        %1387 = vrot.lane.b32.xlu0 %v1330, 22
        %v1388 = vpop.permute.xlu0 %1387
        %1389 = vrot.lane.b32.xlu0 %v1331, 22
        %v1390 = vpop.permute.xlu0 %1389
        %1391 = vrot.lane.b32.xlu0 %v1332, 22
        %v1392 = vpop.permute.xlu0 %1391
        %1393 = vrot.lane.b32.xlu0 %v1333, 22
        %v1394 = vpop.permute.xlu0 %1393
        %1395 = vrot.lane.b32.xlu0 %v1334, 22
        %v1396 = vpop.permute.xlu0 %1395
        %1397 = vrot.lane.b32.xlu0 %v1335, 22
        %v1398 = vpop.permute.xlu0 %1397
        %1399 = vrot.lane.b32.xlu0 %v1336, 22
        %v1400 = vpop.permute.xlu0 %1399
        %v1401 = vsel %vm742, %v1386, %v1388
        %v1402 = vsel %vm742, %v1388, %v1390
        %v1403 = vsel %vm742, %v1390, %v1392
        %v1404 = vsel %vm742, %v1394, %v1396
        %v1405 = vsel %vm742, %v1396, %v1398
        %v1406 = vsel %vm742, %v1398, %v1400
        %v1415 = vsel %vm742, 0.0, %v1386
        %v1416 = vsel %vm742, 0.0, %v1394
        %1417 = vst [vmem:[#allocation2 + $0x40] sm:$0xff] %v1415
        %1418 = vst [vmem:[#allocation2 + $0x48] sm:$0xff] %v1401
        %1419 = vst [vmem:[#allocation2 + $0x50] sm:$0xff] %v1402
        %1420 = vst.msk [vmem:[#allocation2 + $0x58] sm:$0xff] %vm720, %v1403
        %1421 = vst [vmem:[#allocation2 + $0x60] sm:$0xff] %v1416
        %1422 = vst [vmem:[#allocation2 + $0x68] sm:$0xff] %v1404
        %1423 = vst [vmem:[#allocation2 + $0x70] sm:$0xff] %v1405
        %1424 = vst.msk [vmem:[#allocation2 + $0x78] sm:$0xff] %vm720, %v1406
        %1425 = vrot.lane.b32.xlu0 %v1329, 21
        %v1426 = vpop.permute.xlu0 %1425
        %1427 = vrot.lane.b32.xlu0 %v1330, 21
        %v1428 = vpop.permute.xlu0 %1427
        %1429 = vrot.lane.b32.xlu0 %v1331, 21
        %v1430 = vpop.permute.xlu0 %1429
        %1431 = vrot.lane.b32.xlu0 %v1332, 21
        %v1432 = vpop.permute.xlu0 %1431
        %1433 = vrot.lane.b32.xlu0 %v1333, 21
        %v1434 = vpop.permute.xlu0 %1433
        %1435 = vrot.lane.b32.xlu0 %v1334, 21
        %v1436 = vpop.permute.xlu0 %1435
        %1437 = vrot.lane.b32.xlu0 %v1335, 21
        %v1438 = vpop.permute.xlu0 %1437
        %1439 = vrot.lane.b32.xlu0 %v1336, 21
        %v1440 = vpop.permute.xlu0 %1439
        %v1441 = vsel %vm783, %v1426, %v1428
        %v1442 = vsel %vm783, %v1428, %v1430
        %v1443 = vsel %vm783, %v1430, %v1432
        %v1444 = vsel %vm783, %v1434, %v1436
        %v1445 = vsel %vm783, %v1436, %v1438
        %v1446 = vsel %vm783, %v1438, %v1440
        %v1455 = vsel %vm783, 0.0, %v1426
        %v1456 = vsel %vm783, 0.0, %v1434
        %1457 = vst [vmem:[#allocation2 + $0x80] sm:$0xff] %v1455
        %1458 = vst [vmem:[#allocation2 + $0x88] sm:$0xff] %v1441
        %1459 = vst [vmem:[#allocation2 + $0x90] sm:$0xff] %v1442
        %1460 = vst.msk [vmem:[#allocation2 + $0x98] sm:$0xff] %vm720, %v1443
        %1461 = vst [vmem:[#allocation2 + $0xa0] sm:$0xff] %v1456
        %1462 = vst [vmem:[#allocation2 + $0xa8] sm:$0xff] %v1444
        %1463 = vst [vmem:[#allocation2 + $0xb0] sm:$0xff] %v1445
        %1464 = vst.msk [vmem:[#allocation2 + $0xb8] sm:$0xff] %vm720, %v1446
        %1465 = vrot.lane.b32.xlu0 %v1329, 1
        %v1466 = vpop.permute.xlu0 %1465
        %1467 = vrot.lane.b32.xlu0 %v1330, 1
        %v1468 = vpop.permute.xlu0 %1467
        %1469 = vrot.lane.b32.xlu0 %v1331, 1
        %v1470 = vpop.permute.xlu0 %1469
        %1471 = vrot.lane.b32.xlu0 %v1332, 1
        %v1472 = vpop.permute.xlu0 %1471
        %1473 = vrot.lane.b32.xlu0 %v1333, 1
        %v1474 = vpop.permute.xlu0 %1473
        %1475 = vrot.lane.b32.xlu0 %v1334, 1
        %v1476 = vpop.permute.xlu0 %1475
        %1477 = vrot.lane.b32.xlu0 %v1335, 1
        %v1478 = vpop.permute.xlu0 %1477
        %1479 = vrot.lane.b32.xlu0 %v1336, 1
        %v1480 = vpop.permute.xlu0 %1479
        %v1481 = vsel %vm824, %v1466, %v1468
        %v1482 = vsel %vm824, %v1468, %v1470
        %v1483 = vsel %vm824, %v1470, %v1472
        %v1484 = vsel %vm824, %v1474, %v1476
        %v1485 = vsel %vm824, %v1476, %v1478
        %v1486 = vsel %vm824, %v1478, %v1480
        %v1495 = vsel %vm824, 0.0, %v1466
        %v1496 = vsel %vm824, 0.0, %v1474
        %1497 = vst [vmem:[#allocation2 + $0xc0] sm:$0xff] %v1495
        %1498 = vst [vmem:[#allocation2 + $0xc8] sm:$0xff] %v1481
        %1499 = vst [vmem:[#allocation2 + $0xd0] sm:$0xff] %v1482
        %1500 = vst.msk [vmem:[#allocation2 + $0xd8] sm:$0xff] %vm720, %v1483
        %1501 = vst [vmem:[#allocation2 + $0xe0] sm:$0xff] %v1496
        %1502 = vst [vmem:[#allocation2 + $0xe8] sm:$0xff] %v1484
        %1503 = vst [vmem:[#allocation2 + $0xf0] sm:$0xff] %v1485
        %1504 = vst.msk [vmem:[#allocation2 + $0xf8] sm:$0xff] %vm720, %v1486
        %1505 = vst [vmem:[#allocation2 + $0x100] sm:$0xff] %v1329
        %1506 = vst [vmem:[#allocation2 + $0x108] sm:$0xff] %v1330
        %1507 = vst [vmem:[#allocation2 + $0x110] sm:$0xff] %v1331
        %1508 = vst.msk [vmem:[#allocation2 + $0x118] sm:$0xff] %vm720, %v1332
        %1509 = vst [vmem:[#allocation2 + $0x120] sm:$0xff] %v1333
        %1510 = vst [vmem:[#allocation2 + $0x128] sm:$0xff] %v1334
        %1511 = vst [vmem:[#allocation2 + $0x130] sm:$0xff] %v1335
        %1512 = vst.msk [vmem:[#allocation2 + $0x138] sm:$0xff] %vm720, %v1336
        %1513 = vrot.lane.b32.xlu0 %v1329, 127
        %v1514 = vpop.permute.xlu0 %1513
        %1515 = vrot.lane.b32.xlu0 %v1330, 127
        %v1516 = vpop.permute.xlu0 %1515
        %1517 = vrot.lane.b32.xlu0 %v1331, 127
        %v1518 = vpop.permute.xlu0 %1517
        %1519 = vrot.lane.b32.xlu0 %v1332, 127
        %v1520 = vpop.permute.xlu0 %1519
        %1521 = vrot.lane.b32.xlu0 %v1333, 127
        %v1522 = vpop.permute.xlu0 %1521
        %1523 = vrot.lane.b32.xlu0 %v1334, 127
        %v1524 = vpop.permute.xlu0 %1523
        %1525 = vrot.lane.b32.xlu0 %v1335, 127
        %v1526 = vpop.permute.xlu0 %1525
        %1527 = vrot.lane.b32.xlu0 %v1336, 127
        %v1528 = vpop.permute.xlu0 %1527
        %v1529 = vsel %vm873, %v1514, %v1516
        %v1530 = vsel %vm873, %v1516, %v1518
        %v1531 = vsel %vm873, %v1518, %v1520
        %v1532 = vsel %vm873, %v1522, %v1524
        %v1533 = vsel %vm873, %v1524, %v1526
        %v1534 = vsel %vm873, %v1526, %v1528
        %v1543 = vsel %vm888, %v1520, 0.0
        %v1544 = vsel %vm888, %v1528, 0.0
        %1545 = vst [vmem:[#allocation2 + $0x140] sm:$0xff] %v1529
        %1546 = vst [vmem:[#allocation2 + $0x148] sm:$0xff] %v1530
        %1547 = vst [vmem:[#allocation2 + $0x150] sm:$0xff] %v1531
        %1548 = vst.msk [vmem:[#allocation2 + $0x158] sm:$0xff] %vm720, %v1543
        %1549 = vst [vmem:[#allocation2 + $0x160] sm:$0xff] %v1532
        %1550 = vst [vmem:[#allocation2 + $0x168] sm:$0xff] %v1533
        %1551 = vst [vmem:[#allocation2 + $0x170] sm:$0xff] %v1534
        %1552 = vst.msk [vmem:[#allocation2 + $0x178] sm:$0xff] %vm720, %v1544
        %1553 = vrot.lane.b32.xlu0 %v1329, 107
        %v1554 = vpop.permute.xlu0 %1553
        %1555 = vrot.lane.b32.xlu0 %v1330, 107
        %v1556 = vpop.permute.xlu0 %1555
        %1557 = vrot.lane.b32.xlu0 %v1331, 107
        %v1558 = vpop.permute.xlu0 %1557
        %1559 = vrot.lane.b32.xlu0 %v1332, 107
        %v1560 = vpop.permute.xlu0 %1559
        %1561 = vrot.lane.b32.xlu0 %v1333, 107
        %v1562 = vpop.permute.xlu0 %1561
        %1563 = vrot.lane.b32.xlu0 %v1334, 107
        %v1564 = vpop.permute.xlu0 %1563
        %1565 = vrot.lane.b32.xlu0 %v1335, 107
        %v1566 = vpop.permute.xlu0 %1565
        %1567 = vrot.lane.b32.xlu0 %v1336, 107
        %v1568 = vpop.permute.xlu0 %1567
        %v1569 = vsel %vm915, %v1554, %v1556
        %v1570 = vsel %vm915, %v1556, %v1558
        %v1571 = vsel %vm915, %v1558, %v1560
        %v1572 = vsel %vm915, %v1562, %v1564
        %v1573 = vsel %vm915, %v1564, %v1566
        %v1574 = vsel %vm915, %v1566, %v1568
        %v1583 = vsel %vm930, %v1560, 0.0
        %v1584 = vsel %vm930, %v1568, 0.0
        %1585 = vst [vmem:[#allocation2 + $0x180] sm:$0xff] %v1569
        %1586 = vst [vmem:[#allocation2 + $0x188] sm:$0xff] %v1570
        %1587 = vst [vmem:[#allocation2 + $0x190] sm:$0xff] %v1571
        %1588 = vst.msk [vmem:[#allocation2 + $0x198] sm:$0xff] %vm720, %v1583
        %1589 = vst [vmem:[#allocation2 + $0x1a0] sm:$0xff] %v1572
        %1590 = vst [vmem:[#allocation2 + $0x1a8] sm:$0xff] %v1573
        %1591 = vst [vmem:[#allocation2 + $0x1b0] sm:$0xff] %v1574
        %1592 = vst.msk [vmem:[#allocation2 + $0x1b8] sm:$0xff] %vm720, %v1584
        %1593 = vrot.lane.b32.xlu0 %v1329, 106
        %v1594 = vpop.permute.xlu0 %1593
        %1595 = vrot.lane.b32.xlu0 %v1330, 106
        %v1596 = vpop.permute.xlu0 %1595
        %1597 = vrot.lane.b32.xlu0 %v1331, 106
        %v1598 = vpop.permute.xlu0 %1597
        %1599 = vrot.lane.b32.xlu0 %v1332, 106
        %v1600 = vpop.permute.xlu0 %1599
        %1601 = vrot.lane.b32.xlu0 %v1333, 106
        %v1602 = vpop.permute.xlu0 %1601
        %1603 = vrot.lane.b32.xlu0 %v1334, 106
        %v1604 = vpop.permute.xlu0 %1603
        %1605 = vrot.lane.b32.xlu0 %v1335, 106
        %v1606 = vpop.permute.xlu0 %1605
        %1607 = vrot.lane.b32.xlu0 %v1336, 106
        %v1608 = vpop.permute.xlu0 %1607
        %v1609 = vsel %vm957, %v1594, %v1596
        %v1610 = vsel %vm957, %v1596, %v1598
        %v1611 = vsel %vm957, %v1598, %v1600
        %v1612 = vsel %vm957, %v1602, %v1604
        %v1613 = vsel %vm957, %v1604, %v1606
        %v1614 = vsel %vm957, %v1606, %v1608
        %v1623 = vsel %vm972, %v1600, 0.0
        %v1624 = vsel %vm972, %v1608, 0.0
        %1625 = vst [vmem:[#allocation2 + $0x1c0] sm:$0xff] %v1609
        %1626 = vst [vmem:[#allocation2 + $0x1c8] sm:$0xff] %v1610
        %1627 = vst [vmem:[#allocation2 + $0x1d0] sm:$0xff] %v1611
        %1628 = vst.msk [vmem:[#allocation2 + $0x1d8] sm:$0xff] %vm720, %v1623
        %1629 = vst [vmem:[#allocation2 + $0x1e0] sm:$0xff] %v1612
        %1630 = vst [vmem:[#allocation2 + $0x1e8] sm:$0xff] %v1613
        %1631 = vst [vmem:[#allocation2 + $0x1f0] sm:$0xff] %v1614
        %1632 = vst.msk [vmem:[#allocation2 + $0x1f8] sm:$0xff] %vm720, %v1624
        %1633 = vrot.lane.b32.xlu0 %v1329, 105
        %v1634 = vpop.permute.xlu0 %1633
        %1635 = vrot.lane.b32.xlu0 %v1330, 105
        %v1636 = vpop.permute.xlu0 %1635
        %1637 = vrot.lane.b32.xlu0 %v1331, 105
        %v1638 = vpop.permute.xlu0 %1637
        %1639 = vrot.lane.b32.xlu0 %v1332, 105
        %v1640 = vpop.permute.xlu0 %1639
        %1641 = vrot.lane.b32.xlu0 %v1333, 105
        %v1642 = vpop.permute.xlu0 %1641
        %1643 = vrot.lane.b32.xlu0 %v1334, 105
        %v1644 = vpop.permute.xlu0 %1643
        %1645 = vrot.lane.b32.xlu0 %v1335, 105
        %v1646 = vpop.permute.xlu0 %1645
        %1647 = vrot.lane.b32.xlu0 %v1336, 105
        %v1648 = vpop.permute.xlu0 %1647
        %v1649 = vsel %vm999, %v1634, %v1636
        %v1650 = vsel %vm999, %v1636, %v1638
        %v1651 = vsel %vm999, %v1638, %v1640
        %v1652 = vsel %vm999, %v1642, %v1644
        %v1653 = vsel %vm999, %v1644, %v1646
        %v1654 = vsel %vm999, %v1646, %v1648
        %v1663 = vsel %vm1014, %v1640, 0.0
        %v1664 = vsel %vm1014, %v1648, 0.0
        %1665 = vst [vmem:[#allocation2 + $0x200] sm:$0xff] %v1649
        %1666 = vst [vmem:[#allocation2 + $0x208] sm:$0xff] %v1650
        %1667 = vst [vmem:[#allocation2 + $0x210] sm:$0xff] %v1651
        %1668 = vst.msk [vmem:[#allocation2 + $0x218] sm:$0xff] %vm720, %v1663
        %1669 = vst [vmem:[#allocation2 + $0x220] sm:$0xff] %v1652
        %1670 = vst [vmem:[#allocation2 + $0x228] sm:$0xff] %v1653
        %1671 = vst [vmem:[#allocation2 + $0x230] sm:$0xff] %v1654
        %1672 = vst.msk [vmem:[#allocation2 + $0x238] sm:$0xff] %vm720, %v1664
        %v1673 = vld [vmem:[%s4] sm:$0xff]
        %v1674 = vld [vmem:[%s4 + $0x8] sm:$0xff]
        %v1675 = vld [vmem:[%s4 + $0x10] sm:$0xff]
        %v1676 = vld [vmem:[%s4 + $0x18] sm:$0xff]
        %v1677 = vld [vmem:[#allocation2] sm:$0xff]
        %v1678 = vld [vmem:[#allocation2 + $0x8] sm:$0xff]
        %v1679 = vld [vmem:[#allocation2 + $0x10] sm:$0xff]
        %v1680 = vld [vmem:[#allocation2 + $0x18] sm:$0xff]
        %v1681 = vld [vmem:[#allocation2 + $0x20] sm:$0xff]
        %v1682 = vld [vmem:[#allocation2 + $0x28] sm:$0xff]
        %v1683 = vld [vmem:[#allocation2 + $0x30] sm:$0xff]
        %v1684 = vld [vmem:[#allocation2 + $0x38] sm:$0xff]
        %v1685 = vld [vmem:[#allocation2 + $0x40] sm:$0xff]
        %v1686 = vld [vmem:[#allocation2 + $0x48] sm:$0xff]
        %v1687 = vld [vmem:[#allocation2 + $0x50] sm:$0xff]
        %v1688 = vld [vmem:[#allocation2 + $0x58] sm:$0xff]
        %v1689 = vld [vmem:[#allocation2 + $0x60] sm:$0xff]
        %v1690 = vld [vmem:[#allocation2 + $0x68] sm:$0xff]
        %v1691 = vld [vmem:[#allocation2 + $0x70] sm:$0xff]
        %v1692 = vld [vmem:[#allocation2 + $0x78] sm:$0xff]
        %v1693 = vld [vmem:[#allocation2 + $0x80] sm:$0xff]
        %v1694 = vld [vmem:[#allocation2 + $0x88] sm:$0xff]
        %v1695 = vld [vmem:[#allocation2 + $0x90] sm:$0xff]
        %v1696 = vld [vmem:[#allocation2 + $0x98] sm:$0xff]
        %v1697 = vld [vmem:[#allocation2 + $0xa0] sm:$0xff]
        %v1698 = vld [vmem:[#allocation2 + $0xa8] sm:$0xff]
        %v1699 = vld [vmem:[#allocation2 + $0xb0] sm:$0xff]
        %v1700 = vld [vmem:[#allocation2 + $0xb8] sm:$0xff]
        %v1701 = vld [vmem:[#allocation2 + $0xc0] sm:$0xff]
        %v1702 = vld [vmem:[#allocation2 + $0xc8] sm:$0xff]
        %v1703 = vld [vmem:[#allocation2 + $0xd0] sm:$0xff]
        %v1704 = vld [vmem:[#allocation2 + $0xd8] sm:$0xff]
        %v1705 = vld [vmem:[#allocation2 + $0xe0] sm:$0xff]
        %v1706 = vld [vmem:[#allocation2 + $0xe8] sm:$0xff]
        %v1707 = vld [vmem:[#allocation2 + $0xf0] sm:$0xff]
        %v1708 = vld [vmem:[#allocation2 + $0xf8] sm:$0xff]
        %v1709 = vld [vmem:[#allocation2 + $0x100] sm:$0xff]
        %v1710 = vld [vmem:[#allocation2 + $0x108] sm:$0xff]
        %v1711 = vld [vmem:[#allocation2 + $0x110] sm:$0xff]
        %v1712 = vld [vmem:[#allocation2 + $0x118] sm:$0xff]
        %v1713 = vld [vmem:[#allocation2 + $0x120] sm:$0xff]
        %v1714 = vld [vmem:[#allocation2 + $0x128] sm:$0xff]
        %v1715 = vld [vmem:[#allocation2 + $0x130] sm:$0xff]
        %v1716 = vld [vmem:[#allocation2 + $0x138] sm:$0xff]
        %v1717 = vld [vmem:[#allocation2 + $0x140] sm:$0xff]
        %v1718 = vld [vmem:[#allocation2 + $0x148] sm:$0xff]
        %v1719 = vld [vmem:[#allocation2 + $0x150] sm:$0xff]
        %v1720 = vld [vmem:[#allocation2 + $0x158] sm:$0xff]
        %v1721 = vld [vmem:[#allocation2 + $0x160] sm:$0xff]
        %v1722 = vld [vmem:[#allocation2 + $0x168] sm:$0xff]
        %v1723 = vld [vmem:[#allocation2 + $0x170] sm:$0xff]
        %v1724 = vld [vmem:[#allocation2 + $0x178] sm:$0xff]
        %v1725 = vld [vmem:[#allocation2 + $0x180] sm:$0xff]
        %v1726 = vld [vmem:[#allocation2 + $0x188] sm:$0xff]
        %v1727 = vld [vmem:[#allocation2 + $0x190] sm:$0xff]
        %v1728 = vld [vmem:[#allocation2 + $0x198] sm:$0xff]
        %v1729 = vld [vmem:[#allocation2 + $0x1a0] sm:$0xff]
        %v1730 = vld [vmem:[#allocation2 + $0x1a8] sm:$0xff]
        %v1731 = vld [vmem:[#allocation2 + $0x1b0] sm:$0xff]
        %v1732 = vld [vmem:[#allocation2 + $0x1b8] sm:$0xff]
        %v1733 = vld [vmem:[#allocation2 + $0x1c0] sm:$0xff]
        %v1734 = vld [vmem:[#allocation2 + $0x1c8] sm:$0xff]
        %v1735 = vld [vmem:[#allocation2 + $0x1d0] sm:$0xff]
        %v1736 = vld [vmem:[#allocation2 + $0x1d8] sm:$0xff]
        %v1737 = vld [vmem:[#allocation2 + $0x1e0] sm:$0xff]
        %v1738 = vld [vmem:[#allocation2 + $0x1e8] sm:$0xff]
        %v1739 = vld [vmem:[#allocation2 + $0x1f0] sm:$0xff]
        %v1740 = vld [vmem:[#allocation2 + $0x1f8] sm:$0xff]
        %v1741 = vld [vmem:[#allocation2 + $0x200] sm:$0xff]
        %v1742 = vld [vmem:[#allocation2 + $0x208] sm:$0xff]
        %v1743 = vld [vmem:[#allocation2 + $0x210] sm:$0xff]
        %v1744 = vld [vmem:[#allocation2 + $0x218] sm:$0xff]
        %v1745 = vld [vmem:[#allocation2 + $0x220] sm:$0xff]
        %v1746 = vld [vmem:[#allocation2 + $0x228] sm:$0xff]
        %v1747 = vld [vmem:[#allocation2 + $0x230] sm:$0xff]
        %v1748 = vld [vmem:[#allocation2 + $0x238] sm:$0xff]
        %v1749 = vld [vmem:[%s5] sm:$0xff]
        %v1750 = vld [vmem:[%s5 + $0x8] sm:$0xff]
        %1752 = vset.pattern.permute.xlu0 0
        %1753 = vperm.xlu0 %1752, %v1749
        %v1754 = vpop.permute.xlu0 %1753
        %1757 = vset.pattern.permute.xlu0 0
        %1758 = vperm.xlu0 %1757, %v1750
        %v1759 = vpop.permute.xlu0 %1758
        %v1762 = vsel %vm1113, %v1674, 0
        %v1765 = vsel %vm1113, %v1676, 0
        %1767 = vmatpush.msra.mxu0 %v1737
        %1768 = vmatpush.msra.mxu0 %v1733
        %1769 = vmatpush.msra.mxu0 %v1729
        %1770 = vmatpush.msra.mxu0 %v1725
        %1771 = vmatpush.msra.mxu0 %v1721
        %1772 = vmatpush.msra.mxu0 %v1717
        %1773 = vmatpush.msra.mxu0 %v1713
        %1774 = vmatpush.msra.mxu0 %v1709
        %1775 = vmatpush.msra.mxu0 %v1705
        %1776 = vmatpush.msra.mxu0 %v1701
        %1777 = vmatpush.msra.mxu0 %v1697
        %1778 = vmatpush.msra.mxu0 %v1693
        %1779 = vmatpush.msra.mxu0 %v1689
        %1780 = vmatpush.msra.mxu0 %v1685
        %1781 = vmatpush.msra.mxu0 %v1681
        %1782 = vmatpush.msra.mxu0 %v1677
        %1783 = vmatmul.f32.gmra.mxu0 %v1673
        %v1784 = vpop.f32.mrf.mxu0
        %v1785 = vadd.f32 %v1754, %v1784
        %1786 = vmatmul.f32.gmra.mxu0 %v1675
        %v1787 = vpop.f32.mrf.mxu0
        %v1788 = vadd.f32 %v1759, %v1787
        %1789 = vdwg.mxu0
        %1790 = vmatpush.msra.mxu0 0.0
        %1791 = vmatpush.msra.mxu0 0.0
        %1792 = vmatpush.msra.mxu0 0.0
        %1793 = vmatpush.msra.mxu0 0.0
        %1794 = vmatpush.msra.mxu0 0.0
        %1795 = vmatpush.msra.mxu0 0.0
        %1796 = vmatpush.msra.mxu0 0.0
        %1797 = vmatpush.msra.mxu0 0.0
        %1798 = vmatpush.msra.mxu0 0.0
        %1799 = vmatpush.msra.mxu0 0.0
        %1800 = vmatpush.msra.mxu0 0.0
        %1801 = vmatpush.msra.mxu0 0.0
        %1802 = vmatpush.msra.mxu0 0.0
        %1803 = vmatpush.msra.mxu0 0.0
        %1804 = vmatpush.msra.mxu0 %v1745
        %1805 = vmatpush.msra.mxu0 %v1741
        %1806 = vmatmul.f32.gmra.mxu0 %v1762
        %v1807 = vpop.f32.mrf.mxu0
        %v1808 = vadd.f32 %v1785, %v1807
        %1809 = vmatmul.f32.gmra.mxu0 %v1765
        %v1810 = vpop.f32.mrf.mxu0
        %v1811 = vadd.f32 %v1788, %v1810
        %1812 = vdwg.mxu0
        %1813 = vmatpush.msra.mxu0 %v1738
        %1814 = vmatpush.msra.mxu0 %v1734
        %1815 = vmatpush.msra.mxu0 %v1730
        %1816 = vmatpush.msra.mxu0 %v1726
        %1817 = vmatpush.msra.mxu0 %v1722
        %1818 = vmatpush.msra.mxu0 %v1718
        %1819 = vmatpush.msra.mxu0 %v1714
        %1820 = vmatpush.msra.mxu0 %v1710
        %1821 = vmatpush.msra.mxu0 %v1706
        %1822 = vmatpush.msra.mxu0 %v1702
        %1823 = vmatpush.msra.mxu0 %v1698
        %1824 = vmatpush.msra.mxu0 %v1694
        %1825 = vmatpush.msra.mxu0 %v1690
        %1826 = vmatpush.msra.mxu0 %v1686
        %1827 = vmatpush.msra.mxu0 %v1682
        %1828 = vmatpush.msra.mxu0 %v1678
        %1829 = vmatmul.f32.gmra.mxu0 %v1673
        %v1830 = vpop.f32.mrf.mxu0
        %v1831 = vadd.f32 %v1754, %v1830
        %1832 = vmatmul.f32.gmra.mxu0 %v1675
        %v1833 = vpop.f32.mrf.mxu0
        %v1834 = vadd.f32 %v1759, %v1833
        %1835 = vdwg.mxu0
        %1836 = vmatpush.msra.mxu0 0.0
        %1837 = vmatpush.msra.mxu0 0.0
        %1838 = vmatpush.msra.mxu0 0.0
        %1839 = vmatpush.msra.mxu0 0.0
        %1840 = vmatpush.msra.mxu0 0.0
        %1841 = vmatpush.msra.mxu0 0.0
        %1842 = vmatpush.msra.mxu0 0.0
        %1843 = vmatpush.msra.mxu0 0.0
        %1844 = vmatpush.msra.mxu0 0.0
        %1845 = vmatpush.msra.mxu0 0.0
        %1846 = vmatpush.msra.mxu0 0.0
        %1847 = vmatpush.msra.mxu0 0.0
        %1848 = vmatpush.msra.mxu0 0.0
        %1849 = vmatpush.msra.mxu0 0.0
        %1850 = vmatpush.msra.mxu0 %v1746
        %1851 = vmatpush.msra.mxu0 %v1742
        %1852 = vmatmul.f32.gmra.mxu0 %v1762
        %v1853 = vpop.f32.mrf.mxu0
        %v1854 = vadd.f32 %v1831, %v1853
        %1855 = vmatmul.f32.gmra.mxu0 %v1765
        %v1856 = vpop.f32.mrf.mxu0
        %v1857 = vadd.f32 %v1834, %v1856
        %1858 = vdwg.mxu0
        %1859 = vmatpush.msra.mxu0 %v1739
        %1860 = vmatpush.msra.mxu0 %v1735
        %1861 = vmatpush.msra.mxu0 %v1731
        %1862 = vmatpush.msra.mxu0 %v1727
        %1863 = vmatpush.msra.mxu0 %v1723
        %1864 = vmatpush.msra.mxu0 %v1719
        %1865 = vmatpush.msra.mxu0 %v1715
        %1866 = vmatpush.msra.mxu0 %v1711
        %1867 = vmatpush.msra.mxu0 %v1707
        %1868 = vmatpush.msra.mxu0 %v1703
        %1869 = vmatpush.msra.mxu0 %v1699
        %1870 = vmatpush.msra.mxu0 %v1695
        %1871 = vmatpush.msra.mxu0 %v1691
        %1872 = vmatpush.msra.mxu0 %v1687
        %1873 = vmatpush.msra.mxu0 %v1683
        %1874 = vmatpush.msra.mxu0 %v1679
        %1875 = vmatmul.f32.gmra.mxu0 %v1673
        %v1876 = vpop.f32.mrf.mxu0
        %v1877 = vadd.f32 %v1754, %v1876
        %1878 = vmatmul.f32.gmra.mxu0 %v1675
        %v1879 = vpop.f32.mrf.mxu0
        %v1880 = vadd.f32 %v1759, %v1879
        %1881 = vdwg.mxu0
        %1882 = vmatpush.msra.mxu0 0.0
        %1883 = vmatpush.msra.mxu0 0.0
        %1884 = vmatpush.msra.mxu0 0.0
        %1885 = vmatpush.msra.mxu0 0.0
        %1886 = vmatpush.msra.mxu0 0.0
        %1887 = vmatpush.msra.mxu0 0.0
        %1888 = vmatpush.msra.mxu0 0.0
        %1889 = vmatpush.msra.mxu0 0.0
        %1890 = vmatpush.msra.mxu0 0.0
        %1891 = vmatpush.msra.mxu0 0.0
        %1892 = vmatpush.msra.mxu0 0.0
        %1893 = vmatpush.msra.mxu0 0.0
        %1894 = vmatpush.msra.mxu0 0.0
        %1895 = vmatpush.msra.mxu0 0.0
        %1896 = vmatpush.msra.mxu0 %v1747
        %1897 = vmatpush.msra.mxu0 %v1743
        %1898 = vmatmul.f32.gmra.mxu0 %v1762
        %v1899 = vpop.f32.mrf.mxu0
        %v1900 = vadd.f32 %v1877, %v1899
        %1901 = vmatmul.f32.gmra.mxu0 %v1765
        %v1902 = vpop.f32.mrf.mxu0
        %v1903 = vadd.f32 %v1880, %v1902
        %1904 = vdwg.mxu0
        %1905 = vmatpush.msra.mxu0 %v1740
        %1906 = vmatpush.msra.mxu0 %v1736
        %1907 = vmatpush.msra.mxu0 %v1732
        %1908 = vmatpush.msra.mxu0 %v1728
        %1909 = vmatpush.msra.mxu0 %v1724
        %1910 = vmatpush.msra.mxu0 %v1720
        %1911 = vmatpush.msra.mxu0 %v1716
        %1912 = vmatpush.msra.mxu0 %v1712
        %1913 = vmatpush.msra.mxu0 %v1708
        %1914 = vmatpush.msra.mxu0 %v1704
        %1915 = vmatpush.msra.mxu0 %v1700
        %1916 = vmatpush.msra.mxu0 %v1696
        %1917 = vmatpush.msra.mxu0 %v1692
        %1918 = vmatpush.msra.mxu0 %v1688
        %1919 = vmatpush.msra.mxu0 %v1684
        %1920 = vmatpush.msra.mxu0 %v1680
        %1921 = vmatmul.f32.gmra.mxu0 %v1673
        %v1922 = vpop.f32.mrf.mxu0
        %v1923 = vadd.f32 %v1754, %v1922
        %1924 = vmatmul.f32.gmra.mxu0 %v1675
        %v1925 = vpop.f32.mrf.mxu0
        %v1926 = vadd.f32 %v1759, %v1925
        %1927 = vdwg.mxu0
        %1928 = vmatpush.msra.mxu0 0.0
        %1929 = vmatpush.msra.mxu0 0.0
        %1930 = vmatpush.msra.mxu0 0.0
        %1931 = vmatpush.msra.mxu0 0.0
        %1932 = vmatpush.msra.mxu0 0.0
        %1933 = vmatpush.msra.mxu0 0.0
        %1934 = vmatpush.msra.mxu0 0.0
        %1935 = vmatpush.msra.mxu0 0.0
        %1936 = vmatpush.msra.mxu0 0.0
        %1937 = vmatpush.msra.mxu0 0.0
        %1938 = vmatpush.msra.mxu0 0.0
        %1939 = vmatpush.msra.mxu0 0.0
        %1940 = vmatpush.msra.mxu0 0.0
        %1941 = vmatpush.msra.mxu0 0.0
        %1942 = vmatpush.msra.mxu0 %v1748
        %1943 = vmatpush.msra.mxu0 %v1744
        %1944 = vmatmul.f32.gmra.mxu0 %v1762
        %v1945 = vpop.f32.mrf.mxu0
        %v1946 = vadd.f32 %v1923, %v1945
        %1947 = vmatmul.f32.gmra.mxu0 %v1765
        %v1948 = vpop.f32.mrf.mxu0
        %v1949 = vadd.f32 %v1926, %v1948
        %1950 = vdwg.mxu0
        %v1951 = vmul.f32 %v1808, %v1321
        %v1952 = vmul.f32 %v1854, %v1322
        %v1953 = vmul.f32 %v1900, %v1323
        %v1954 = vmul.f32 %v1946, %v1324
        %v1955 = vmul.f32 %v1811, %v1321
        %v1956 = vmul.f32 %v1857, %v1322
        %v1957 = vmul.f32 %v1903, %v1323
        %v1958 = vmul.f32 %v1949, %v1324
        %v1959 = vadd.f32 %v1951, %v1952
        %v1960 = vadd.f32 %v1959, %v1953
        %v1961 = vsel %vm720, %v1954, 0.0
        %v1962 = vadd.f32 %v1960, %v1961
        %1963 = vadd.xlane.f32.xlu0 %v1962
        %v1964 = vpop.xlane.xlu0 %1963
        %v1965 = vadd.f32 %v1955, %v1956
        %v1966 = vadd.f32 %v1965, %v1957
        %v1967 = vsel %vm720, %v1958, 0.0
        %v1968 = vadd.f32 %v1966, %v1967
        %1969 = vadd.xlane.f32.xlu0 %v1968
        %v1970 = vpop.xlane.xlu0 %1969
        %v1971 = vmul.f32 %v1964, 0.00390625
        %v1972 = vmul.f32 %v1970, 0.00390625
        %vm1973 = vcmp.gt.f32.partialorder %v675, 0.0
        %v1974 = vsel %vm1973, 1, 0
        %v1975 = vperm.slane %v1974, 0
        %v1976 = vperm.slane %v1974, 1
        %v1977 = vperm.slane %v1974, 2
        %v1978 = vperm.slane %v1974, 3
        %vm1979 = vcmp.eq.s32.totalorder %v1975, 1
        %vm1980 = vcmp.eq.s32.totalorder %v1976, 1
        %vm1981 = vcmp.eq.s32.totalorder %v1977, 1
        %vm1982 = vcmp.eq.s32.totalorder %v1978, 1
        %v1983 = vsel %vm1979, %v1808, -1e+30
        %v1984 = vsel %vm1980, %v1854, -1e+30
        %v1985 = vsel %vm1981, %v1900, -1e+30
        %v1986 = vsel %vm1982, %v1946, -1e+30
        %v1987 = vsel %vm1979, %v1811, -1e+30
        %v1988 = vsel %vm1980, %v1857, -1e+30
        %v1989 = vsel %vm1981, %v1903, -1e+30
        %v1990 = vsel %vm1982, %v1949, -1e+30
        %v1991 = vmax.f32 %v1983, %v1985
        %v1992 = vsel %vm720, %v1986, -inf
        %v1993 = vmax.f32 %v1984, %v1992
        %v1994 = vmax.f32 %v1991, %v1993
        %1995 = vmax.xlane.f32.xlu0 %v1994
        %v1996 = vpop.xlane.xlu0 %1995
        %v1997 = vmax.f32 %v1987, %v1989
        %v1998 = vsel %vm720, %v1990, -inf
        %v1999 = vmax.f32 %v1988, %v1998
        %v2000 = vmax.f32 %v1997, %v1999
        %2001 = vmax.xlane.f32.xlu0 %v2000
        %v2002 = vpop.xlane.xlu0 %2001
        %v2003 = vld [vmem:[%s6] sm:$0x3]
        %v2004 = vld [vmem:[%s7] sm:$0x3]
        %v2006 = vsel %vm1113, %v2003, 0
        %2008 = vmatpush.msra.mxu0 0.0
        %2009 = vmatpush.msra.mxu0 0.0
        %2010 = vmatpush.msra.mxu0 0.0
        %2011 = vmatpush.msra.mxu0 0.0
        %2012 = vmatpush.msra.mxu0 0.0
        %2013 = vmatpush.msra.mxu0 0.0
        %2014 = vmatpush.msra.mxu0 0.0
        %2015 = vmatpush.msra.mxu0 0.0
        %2016 = vmatpush.msra.mxu0 0.0
        %2017 = vmatpush.msra.mxu0 0.0
        %2018 = vmatpush.msra.mxu0 0.0
        %2019 = vmatpush.msra.mxu0 0.0
        %2020 = vmatpush.msra.mxu0 0.0
        %2021 = vmatpush.msra.mxu0 0.0
        %2022 = vmatpush.msra.mxu0 %v1972
        %2023 = vmatpush.msra.mxu0 %v1971
        %2024 = vmatmul.f32.gmra.mxu0 %v2006
        %v2025 = vpop.f32.mrf.mxu0
        %v2026 = vadd.f32 %v2004, %v2025
        %2027 = vdwg.mxu0
        %v2028 = vmax.f32 %v2026, 0.0
        %v2029 = vld [vmem:[%s8] sm:$0xff]
        %v2030 = vld [vmem:[%s8 + $0x8] sm:$0xff]
        %v2031 = vld [vmem:[%s9] sm:$0xff]
        %v2032 = vld [vmem:[%s9 + $0x8] sm:$0xff]
        %vm2033 = vcmask 15360
        %v2035 = vsel %vm2033, %v2029, 0
        %v2038 = vsel %vm2033, %v2030, 0
        %vm2040 = vcmask 1041408
        %v2042 = vsel %vm2040, %v2028, 0
        %2044 = vmatpush.msra.mxu0 0.0
        %2045 = vmatpush.msra.mxu0 0.0
        %2046 = vmatpush.msra.mxu0 0.0
        %2047 = vmatpush.msra.mxu0 0.0
        %2048 = vmatpush.msra.mxu0 0.0
        %2049 = vmatpush.msra.mxu0 0.0
        %2050 = vmatpush.msra.mxu0 0.0
        %2051 = vmatpush.msra.mxu0 0.0
        %2052 = vmatpush.msra.mxu0 0.0
        %2053 = vmatpush.msra.mxu0 0.0
        %2054 = vmatpush.msra.mxu0 0.0
        %2055 = vmatpush.msra.mxu0 0.0
        %2056 = vmatpush.msra.mxu0 0.0
        %2057 = vmatpush.msra.mxu0 0.0
        %2058 = vmatpush.msra.mxu0 0.0
        %2059 = vmatpush.msra.mxu0 %v2042
        %2060 = vmatmul.f32.gmra.mxu0 %v2035
        %v2061 = vpop.f32.mrf.mxu0
        %v2062 = vadd.f32 %v2031, %v2061
        %2063 = vmatmul.f32.gmra.mxu0 %v2038
        %v2064 = vpop.f32.mrf.mxu0
        %v2065 = vadd.f32 %v2032, %v2064
        %2066 = vdwg.mxu0
        %v2067 = vxor.u32 %v2062, 2147483648
        %v2068 = vxor.u32 %v2065, 2147483648
        %v2069 = vmul.f32 %v2067, 1.442695
        %v2070 = vpow.pop %v2069
        %v2071 = vmul.f32 %v2068, 1.442695
        %v2072 = vpow.pop %v2071
        %v2073 = vadd.f32 %v2070, 1.0
        %v2074 = vadd.f32 %v2072, 1.0
        %v2075 = vrcp.pop %v2073
        %v2076 = vmul.f32 %v2073, %v2075
        %v2077 = vsub.f32 1.0, %v2076
        %v2078 = vmul.f32 %v2075, %v2077
        %v2079 = vadd.f32 %v2075, %v2078
        %vm2080 = vweird.f32 %v2073
        %vm2081 = vweird.f32 %v2075
        %vm2082 = vmor %vm2080, %vm2081
        %v2083 = vsel %vm2082, %v2075, %v2079
        %v2084 = vand.u32 2147483647, %v2073
        %vm2085 = vcmp.eq.f32.partialorder %v2084, 8.507059e+37
        %v2086 = vand.u32 %v2073, 2147483648
        %v2087 = vor.u32 1.1754944e-38, %v2086
        %v2088 = vsel %vm2085, %v2087, %v2083
        %v2089 = vmul.f32 1.0, %v2088
        %v2090 = vrcp.pop %v2074
        %v2091 = vmul.f32 %v2074, %v2090
        %v2092 = vsub.f32 1.0, %v2091
        %v2093 = vmul.f32 %v2090, %v2092
        %v2094 = vadd.f32 %v2090, %v2093
        %vm2095 = vweird.f32 %v2074
        %vm2096 = vweird.f32 %v2090
        %vm2097 = vmor %vm2095, %vm2096
        %v2098 = vsel %vm2097, %v2090, %v2094
        %v2099 = vand.u32 2147483647, %v2074
        %vm2100 = vcmp.eq.f32.partialorder %v2099, 8.507059e+37
        %v2101 = vand.u32 %v2074, 2147483648
        %v2102 = vor.u32 1.1754944e-38, %v2101
        %v2103 = vsel %vm2100, %v2102, %v2098
        %v2104 = vmul.f32 1.0, %v2103
        %v2105 = vsel %vm824, %v1971, %v1996
        %v2106 = vsel %vm824, %v1972, %v2002
        %v2107 = vld [vmem:[%s14] sm:$0x3]
        %v2108 = vld [vmem:[%s15] sm:$0x3]
        %2110 = vset.pattern.permute.xlu0 0
        %2111 = vperm.xlu0 %2110, %v2108
        %v2112 = vpop.permute.xlu0 %2111
        %v2115 = vsel %vm1113, %v2107, 0
        %2117 = vmatpush.msra.mxu0 0.0
        %2118 = vmatpush.msra.mxu0 0.0
        %2119 = vmatpush.msra.mxu0 0.0
        %2120 = vmatpush.msra.mxu0 0.0
        %2121 = vmatpush.msra.mxu0 0.0
        %2122 = vmatpush.msra.mxu0 0.0
        %2123 = vmatpush.msra.mxu0 0.0
        %2124 = vmatpush.msra.mxu0 0.0
        %2125 = vmatpush.msra.mxu0 0.0
        %2126 = vmatpush.msra.mxu0 0.0
        %2127 = vmatpush.msra.mxu0 0.0
        %2128 = vmatpush.msra.mxu0 0.0
        %2129 = vmatpush.msra.mxu0 0.0
        %2130 = vmatpush.msra.mxu0 0.0
        %2131 = vmatpush.msra.mxu0 %v2106
        %2132 = vmatpush.msra.mxu0 %v2105
        %2133 = vmatmul.f32.gmra.mxu0 %v2115
        %v2134 = vpop.f32.mrf.mxu0
        %v2135 = vadd.f32 %v2112, %v2134
        %2136 = vdwg.mxu0
        %v2137 = vmax.f32 %v2135, 0.0
        %v2138 = vld [vmem:[%s16] sm:$0xff]
        %v2139 = vld [vmem:[%s16 + $0x8] sm:$0xff]
        %v2140 = vld [vmem:[%s17] sm:$0xff]
        %v2141 = vld [vmem:[%s17 + $0x8] sm:$0xff]
        %2143 = vset.pattern.permute.xlu0 0
        %2144 = vperm.xlu0 %2143, %v2140
        %v2145 = vpop.permute.xlu0 %2144
        %2148 = vset.pattern.permute.xlu0 0
        %2149 = vperm.xlu0 %2148, %v2141
        %v2150 = vpop.permute.xlu0 %2149
        %v2153 = vsel %vm2033, %v2138, 0
        %v2156 = vsel %vm2033, %v2139, 0
        %v2159 = vsel %vm2040, %v2137, 0
        %2161 = vmatpush.msra.mxu0 0.0
        %2162 = vmatpush.msra.mxu0 0.0
        %2163 = vmatpush.msra.mxu0 0.0
        %2164 = vmatpush.msra.mxu0 0.0
        %2165 = vmatpush.msra.mxu0 0.0
        %2166 = vmatpush.msra.mxu0 0.0
        %2167 = vmatpush.msra.mxu0 0.0
        %2168 = vmatpush.msra.mxu0 0.0
        %2169 = vmatpush.msra.mxu0 0.0
        %2170 = vmatpush.msra.mxu0 0.0
        %2171 = vmatpush.msra.mxu0 0.0
        %2172 = vmatpush.msra.mxu0 0.0
        %2173 = vmatpush.msra.mxu0 0.0
        %2174 = vmatpush.msra.mxu0 0.0
        %2175 = vmatpush.msra.mxu0 0.0
        %2176 = vmatpush.msra.mxu0 %v2159
        %2177 = vmatmul.f32.gmra.mxu0 %v2153
        %v2178 = vpop.f32.mrf.mxu0
        %v2179 = vadd.f32 %v2145, %v2178
        %2180 = vmatmul.f32.gmra.mxu0 %v2156
        %v2181 = vpop.f32.mrf.mxu0
        %v2182 = vadd.f32 %v2150, %v2181
        %2183 = vdwg.mxu0
        %2186 = vrot.lane.b32.xlu0 %v2179, 127
        %v2187 = vpop.permute.xlu0 %2186
        %2188 = vrot.lane.b32.xlu0 %v2182, 127
        %v2189 = vpop.permute.xlu0 %2188
        %v2192 = vadd.f32 %v2179, %v2187
        %v2193 = vadd.f32 %v2182, %v2189
        %v2194 = vxor.u32 %v2192, 2147483648
        %v2195 = vxor.u32 %v2193, 2147483648
        %v2196 = vmul.f32 %v2194, 1.442695
        %v2197 = vpow.pop %v2196
        %v2198 = vmul.f32 %v2195, 1.442695
        %v2199 = vpow.pop %v2198
        %v2200 = vadd.f32 %v2197, 1.0
        %v2201 = vadd.f32 %v2199, 1.0
        %v2202 = vrcp.pop %v2200
        %v2203 = vmul.f32 %v2200, %v2202
        %v2204 = vsub.f32 1.0, %v2203
        %v2205 = vmul.f32 %v2202, %v2204
        %v2206 = vadd.f32 %v2202, %v2205
        %vm2207 = vweird.f32 %v2200
        %vm2208 = vweird.f32 %v2202
        %vm2209 = vmor %vm2207, %vm2208
        %v2210 = vsel %vm2209, %v2202, %v2206
        %v2211 = vand.u32 2147483647, %v2200
        %vm2212 = vcmp.eq.f32.partialorder %v2211, 8.507059e+37
        %v2213 = vand.u32 %v2200, 2147483648
        %v2214 = vor.u32 1.1754944e-38, %v2213
        %v2215 = vsel %vm2212, %v2214, %v2210
        %v2216 = vmul.f32 1.0, %v2215
        %v2217 = vrcp.pop %v2201
        %v2218 = vmul.f32 %v2201, %v2217
        %v2219 = vsub.f32 1.0, %v2218
        %v2220 = vmul.f32 %v2217, %v2219
        %v2221 = vadd.f32 %v2217, %v2220
        %vm2222 = vweird.f32 %v2201
        %vm2223 = vweird.f32 %v2217
        %vm2224 = vmor %vm2222, %vm2223
        %v2225 = vsel %vm2224, %v2217, %v2221
        %v2226 = vand.u32 2147483647, %v2201
        %vm2227 = vcmp.eq.f32.partialorder %v2226, 8.507059e+37
        %v2228 = vand.u32 %v2201, 2147483648
        %v2229 = vor.u32 1.1754944e-38, %v2228
        %v2230 = vsel %vm2227, %v2229, %v2225
        %v2231 = vmul.f32 1.0, %v2230
        %2233 = vset.pattern.permute.xlu0 0
        %2234 = vperm.xlu0 %2233, %v2089
        %v2235 = vpop.permute.xlu0 %2234
        %2238 = vset.pattern.permute.xlu0 0
        %2239 = vperm.xlu0 %2238, %v2104
        %v2240 = vpop.permute.xlu0 %2239
        %v2242 = vmul.f32 %v1808, %v2235
        %v2243 = vmul.f32 %v1854, %v2235
        %v2244 = vmul.f32 %v1900, %v2235
        %v2245 = vmul.f32 %v1946, %v2235
        %v2246 = vmul.f32 %v1811, %v2240
        %v2247 = vmul.f32 %v1857, %v2240
        %v2248 = vmul.f32 %v1903, %v2240
        %v2249 = vmul.f32 %v1949, %v2240
        %v2250 = vld [vmem:[%s10] sm:$0x3]
        %v2251 = vld [vmem:[%s11] sm:$0x3]
        %2253 = vset.pattern.permute.xlu0 0
        %2254 = vperm.xlu0 %2253, %v2251
        %v2255 = vpop.permute.xlu0 %2254
        %v2258 = vsel %vm1113, %v2250, 0
        %2260 = vmatpush.msra.mxu0 0.0
        %2261 = vmatpush.msra.mxu0 0.0
        %2262 = vmatpush.msra.mxu0 0.0
        %2263 = vmatpush.msra.mxu0 0.0
        %2264 = vmatpush.msra.mxu0 0.0
        %2265 = vmatpush.msra.mxu0 0.0
        %2266 = vmatpush.msra.mxu0 0.0
        %2267 = vmatpush.msra.mxu0 0.0
        %2268 = vmatpush.msra.mxu0 0.0
        %2269 = vmatpush.msra.mxu0 0.0
        %2270 = vmatpush.msra.mxu0 0.0
        %2271 = vmatpush.msra.mxu0 0.0
        %2272 = vmatpush.msra.mxu0 0.0
        %2273 = vmatpush.msra.mxu0 0.0
        %2274 = vmatpush.msra.mxu0 %v2246
        %2275 = vmatpush.msra.mxu0 %v2242
        %2276 = vmatmul.f32.gmra.mxu0 %v2258
        %v2277 = vpop.f32.mrf.mxu0
        %v2278 = vadd.f32 %v2255, %v2277
        %2279 = vdwg.mxu0
        %2280 = vmatpush.msra.mxu0 0.0
        %2281 = vmatpush.msra.mxu0 0.0
        %2282 = vmatpush.msra.mxu0 0.0
        %2283 = vmatpush.msra.mxu0 0.0
        %2284 = vmatpush.msra.mxu0 0.0
        %2285 = vmatpush.msra.mxu0 0.0
        %2286 = vmatpush.msra.mxu0 0.0
        %2287 = vmatpush.msra.mxu0 0.0
        %2288 = vmatpush.msra.mxu0 0.0
        %2289 = vmatpush.msra.mxu0 0.0
        %2290 = vmatpush.msra.mxu0 0.0
        %2291 = vmatpush.msra.mxu0 0.0
        %2292 = vmatpush.msra.mxu0 0.0
        %2293 = vmatpush.msra.mxu0 0.0
        %2294 = vmatpush.msra.mxu0 %v2247
        %2295 = vmatpush.msra.mxu0 %v2243
        %2296 = vmatmul.f32.gmra.mxu0 %v2258
        %v2297 = vpop.f32.mrf.mxu0
        %v2298 = vadd.f32 %v2255, %v2297
        %2299 = vdwg.mxu0
        %2300 = vmatpush.msra.mxu0 0.0
        %2301 = vmatpush.msra.mxu0 0.0
        %2302 = vmatpush.msra.mxu0 0.0
        %2303 = vmatpush.msra.mxu0 0.0
        %2304 = vmatpush.msra.mxu0 0.0
        %2305 = vmatpush.msra.mxu0 0.0
        %2306 = vmatpush.msra.mxu0 0.0
        %2307 = vmatpush.msra.mxu0 0.0
        %2308 = vmatpush.msra.mxu0 0.0
        %2309 = vmatpush.msra.mxu0 0.0
        %2310 = vmatpush.msra.mxu0 0.0
        %2311 = vmatpush.msra.mxu0 0.0
        %2312 = vmatpush.msra.mxu0 0.0
        %2313 = vmatpush.msra.mxu0 0.0
        %2314 = vmatpush.msra.mxu0 %v2248
        %2315 = vmatpush.msra.mxu0 %v2244
        %2316 = vmatmul.f32.gmra.mxu0 %v2258
        %v2317 = vpop.f32.mrf.mxu0
        %v2318 = vadd.f32 %v2255, %v2317
        %2319 = vdwg.mxu0
        %2320 = vmatpush.msra.mxu0 0.0
        %2321 = vmatpush.msra.mxu0 0.0
        %2322 = vmatpush.msra.mxu0 0.0
        %2323 = vmatpush.msra.mxu0 0.0
        %2324 = vmatpush.msra.mxu0 0.0
        %2325 = vmatpush.msra.mxu0 0.0
        %2326 = vmatpush.msra.mxu0 0.0
        %2327 = vmatpush.msra.mxu0 0.0
        %2328 = vmatpush.msra.mxu0 0.0
        %2329 = vmatpush.msra.mxu0 0.0
        %2330 = vmatpush.msra.mxu0 0.0
        %2331 = vmatpush.msra.mxu0 0.0
        %2332 = vmatpush.msra.mxu0 0.0
        %2333 = vmatpush.msra.mxu0 0.0
        %2334 = vmatpush.msra.mxu0 %v2249
        %2335 = vmatpush.msra.mxu0 %v2245
        %2336 = vmatmul.f32.gmra.mxu0 %v2258
        %v2337 = vpop.f32.mrf.mxu0
        %v2338 = vadd.f32 %v2255, %v2337
        %2339 = vdwg.mxu0
        %v2340 = vmax.f32 %v2278, 0.0
        %v2341 = vmax.f32 %v2298, 0.0
        %v2342 = vmax.f32 %v2318, 0.0
        %v2343 = vmax.f32 %v2338, 0.0
        %v2344 = vld [vmem:[%s12] sm:$0x1]
        %v2345 = vld [vmem:[#allocation3] sm:$0x1]
        %2347 = vset.pattern.permute.xlu0 0
        %2348 = vperm.xlu0 %2347, %v2345
        %v2349 = vpop.permute.xlu0 %2348
        %v2351 = vperm.slane %v2349, 0
        %v2353 = vsel %vm2033, %v2344, 0
        %v2356 = vsel %vm2040, %v2340, 0
        %v2359 = vsel %vm2040, %v2341, 0
        %v2362 = vsel %vm2040, %v2342, 0
        %v2365 = vsel %vm2040, %v2343, 0
        %2367 = vmatpush.msra.mxu0 0.0
        %2368 = vmatpush.msra.mxu0 0.0
        %2369 = vmatpush.msra.mxu0 0.0
        %2370 = vmatpush.msra.mxu0 0.0
        %2371 = vmatpush.msra.mxu0 0.0
        %2372 = vmatpush.msra.mxu0 0.0
        %2373 = vmatpush.msra.mxu0 0.0
        %2374 = vmatpush.msra.mxu0 0.0
        %2375 = vmatpush.msra.mxu0 0.0
        %2376 = vmatpush.msra.mxu0 0.0
        %2377 = vmatpush.msra.mxu0 0.0
        %2378 = vmatpush.msra.mxu0 0.0
        %2379 = vmatpush.msra.mxu0 0.0
        %2380 = vmatpush.msra.mxu0 0.0
        %2381 = vmatpush.msra.mxu0 0.0
        %2382 = vmatpush.msra.mxu0 %v2356
        %2383 = vmatmul.f32.gmra.mxu0 %v2353
        %v2384 = vpop.f32.mrf.mxu0
        %v2385 = vadd.f32 %v2351, %v2384
        %2386 = vdwg.mxu0
        %2387 = vmatpush.msra.mxu0 0.0
        %2388 = vmatpush.msra.mxu0 0.0
        %2389 = vmatpush.msra.mxu0 0.0
        %2390 = vmatpush.msra.mxu0 0.0
        %2391 = vmatpush.msra.mxu0 0.0
        %2392 = vmatpush.msra.mxu0 0.0
        %2393 = vmatpush.msra.mxu0 0.0
        %2394 = vmatpush.msra.mxu0 0.0
        %2395 = vmatpush.msra.mxu0 0.0
        %2396 = vmatpush.msra.mxu0 0.0
        %2397 = vmatpush.msra.mxu0 0.0
        %2398 = vmatpush.msra.mxu0 0.0
        %2399 = vmatpush.msra.mxu0 0.0
        %2400 = vmatpush.msra.mxu0 0.0
        %2401 = vmatpush.msra.mxu0 0.0
        %2402 = vmatpush.msra.mxu0 %v2359
        %2403 = vmatmul.f32.gmra.mxu0 %v2353
        %v2404 = vpop.f32.mrf.mxu0
        %v2405 = vadd.f32 %v2351, %v2404
        %2406 = vdwg.mxu0
        %2407 = vmatpush.msra.mxu0 0.0
        %2408 = vmatpush.msra.mxu0 0.0
        %2409 = vmatpush.msra.mxu0 0.0
        %2410 = vmatpush.msra.mxu0 0.0
        %2411 = vmatpush.msra.mxu0 0.0
        %2412 = vmatpush.msra.mxu0 0.0
        %2413 = vmatpush.msra.mxu0 0.0
        %2414 = vmatpush.msra.mxu0 0.0
        %2415 = vmatpush.msra.mxu0 0.0
        %2416 = vmatpush.msra.mxu0 0.0
        %2417 = vmatpush.msra.mxu0 0.0
        %2418 = vmatpush.msra.mxu0 0.0
        %2419 = vmatpush.msra.mxu0 0.0
        %2420 = vmatpush.msra.mxu0 0.0
        %2421 = vmatpush.msra.mxu0 0.0
        %2422 = vmatpush.msra.mxu0 %v2362
        %2423 = vmatmul.f32.gmra.mxu0 %v2353
        %v2424 = vpop.f32.mrf.mxu0
        %v2425 = vadd.f32 %v2351, %v2424
        %2426 = vdwg.mxu0
        %2427 = vmatpush.msra.mxu0 0.0
        %2428 = vmatpush.msra.mxu0 0.0
        %2429 = vmatpush.msra.mxu0 0.0
        %2430 = vmatpush.msra.mxu0 0.0
        %2431 = vmatpush.msra.mxu0 0.0
        %2432 = vmatpush.msra.mxu0 0.0
        %2433 = vmatpush.msra.mxu0 0.0
        %2434 = vmatpush.msra.mxu0 0.0
        %2435 = vmatpush.msra.mxu0 0.0
        %2436 = vmatpush.msra.mxu0 0.0
        %2437 = vmatpush.msra.mxu0 0.0
        %2438 = vmatpush.msra.mxu0 0.0
        %2439 = vmatpush.msra.mxu0 0.0
        %2440 = vmatpush.msra.mxu0 0.0
        %2441 = vmatpush.msra.mxu0 0.0
        %2442 = vmatpush.msra.mxu0 %v2365
        %2443 = vmatmul.f32.gmra.mxu0 %v2353
        %v2444 = vpop.f32.mrf.mxu0
        %v2445 = vadd.f32 %v2351, %v2444
        %2446 = vdwg.mxu0
        %v2447 = vxor.u32 %v2385, 2147483648
        %v2448 = vxor.u32 %v2405, 2147483648
        %v2449 = vxor.u32 %v2425, 2147483648
        %v2450 = vxor.u32 %v2445, 2147483648
        %v2451 = vmul.f32 %v2447, 1.442695
        %v2452 = vpow.pop %v2451
        %v2453 = vmul.f32 %v2448, 1.442695
        %v2454 = vpow.pop %v2453
        %v2455 = vmul.f32 %v2449, 1.442695
        %v2456 = vpow.pop %v2455
        %v2457 = vmul.f32 %v2450, 1.442695
        %v2458 = vpow.pop %v2457
        %v2459 = vadd.f32 %v2452, 1.0
        %v2460 = vadd.f32 %v2454, 1.0
        %v2461 = vadd.f32 %v2456, 1.0
        %v2462 = vadd.f32 %v2458, 1.0
        %v2463 = vrcp.pop %v2459
        %v2464 = vmul.f32 %v2459, %v2463
        %v2465 = vsub.f32 1.0, %v2464
        %v2466 = vmul.f32 %v2463, %v2465
        %v2467 = vadd.f32 %v2463, %v2466
        %vm2468 = vweird.f32 %v2459
        %vm2469 = vweird.f32 %v2463
        %vm2470 = vmor %vm2468, %vm2469
        %v2471 = vsel %vm2470, %v2463, %v2467
        %v2472 = vand.u32 2147483647, %v2459
        %vm2473 = vcmp.eq.f32.partialorder %v2472, 8.507059e+37
        %v2474 = vand.u32 %v2459, 2147483648
        %v2475 = vor.u32 1.1754944e-38, %v2474
        %v2476 = vsel %vm2473, %v2475, %v2471
        %v2477 = vmul.f32 1.0, %v2476
        %v2478 = vrcp.pop %v2460
        %v2479 = vmul.f32 %v2460, %v2478
        %v2480 = vsub.f32 1.0, %v2479
        %v2481 = vmul.f32 %v2478, %v2480
        %v2482 = vadd.f32 %v2478, %v2481
        %vm2483 = vweird.f32 %v2460
        %vm2484 = vweird.f32 %v2478
        %vm2485 = vmor %vm2483, %vm2484
        %v2486 = vsel %vm2485, %v2478, %v2482
        %v2487 = vand.u32 2147483647, %v2460
        %vm2488 = vcmp.eq.f32.partialorder %v2487, 8.507059e+37
        %v2489 = vand.u32 %v2460, 2147483648
        %v2490 = vor.u32 1.1754944e-38, %v2489
        %v2491 = vsel %vm2488, %v2490, %v2486
        %v2492 = vmul.f32 1.0, %v2491
        %v2493 = vrcp.pop %v2461
        %v2494 = vmul.f32 %v2461, %v2493
        %v2495 = vsub.f32 1.0, %v2494
        %v2496 = vmul.f32 %v2493, %v2495
        %v2497 = vadd.f32 %v2493, %v2496
        %vm2498 = vweird.f32 %v2461
        %vm2499 = vweird.f32 %v2493
        %vm2500 = vmor %vm2498, %vm2499
        %v2501 = vsel %vm2500, %v2493, %v2497
        %v2502 = vand.u32 2147483647, %v2461
        %vm2503 = vcmp.eq.f32.partialorder %v2502, 8.507059e+37
        %v2504 = vand.u32 %v2461, 2147483648
        %v2505 = vor.u32 1.1754944e-38, %v2504
        %v2506 = vsel %vm2503, %v2505, %v2501
        %v2507 = vmul.f32 1.0, %v2506
        %v2508 = vrcp.pop %v2462
        %v2509 = vmul.f32 %v2462, %v2508
        %v2510 = vsub.f32 1.0, %v2509
        %v2511 = vmul.f32 %v2508, %v2510
        %v2512 = vadd.f32 %v2508, %v2511
        %vm2513 = vweird.f32 %v2462
        %vm2514 = vweird.f32 %v2508
        %vm2515 = vmor %vm2513, %vm2514
        %v2516 = vsel %vm2515, %v2508, %v2512
        %v2517 = vand.u32 2147483647, %v2462
        %vm2518 = vcmp.eq.f32.partialorder %v2517, 8.507059e+37
        %v2519 = vand.u32 %v2462, 2147483648
        %v2520 = vor.u32 1.1754944e-38, %v2519
        %v2521 = vsel %vm2518, %v2520, %v2516
        %v2522 = vmul.f32 1.0, %v2521
        %2524 = vset.pattern.permute.xlu0 0
        %2525 = vperm.xlu0 %2524, %v2216
        %v2526 = vpop.permute.xlu0 %2525
        %2529 = vset.pattern.permute.xlu0 0
        %2530 = vperm.xlu0 %2529, %v2231
        %v2531 = vpop.permute.xlu0 %2530
        %v2533 = vmul.f32 %v1951, %v2526
        %v2534 = vmul.f32 %v1952, %v2526
        %v2535 = vmul.f32 %v1953, %v2526
        %v2536 = vmul.f32 %v1954, %v2526
        %v2537 = vmul.f32 %v1955, %v2531
        %v2538 = vmul.f32 %v1956, %v2531
        %v2539 = vmul.f32 %v1957, %v2531
        %v2540 = vmul.f32 %v1958, %v2531
        %v2541 = vmax.f32 %v2533, %v2537
        %v2542 = vrot.slane %v2541, 4
        %v2543 = vmax.f32 %v2541, %v2542
        %v2544 = vrot.slane %v2543, 2
        %v2545 = vmax.f32 %v2543, %v2544
        %v2546 = vrot.slane %v2545, 1
        %v2547 = vmax.f32 %v2545, %v2546
        %v2548 = vmax.f32 %v2534, %v2538
        %v2549 = vrot.slane %v2548, 4
        %v2550 = vmax.f32 %v2548, %v2549
        %v2551 = vrot.slane %v2550, 2
        %v2552 = vmax.f32 %v2550, %v2551
        %v2553 = vrot.slane %v2552, 1
        %v2554 = vmax.f32 %v2552, %v2553
        %v2555 = vmax.f32 %v2535, %v2539
        %v2556 = vrot.slane %v2555, 4
        %v2557 = vmax.f32 %v2555, %v2556
        %v2558 = vrot.slane %v2557, 2
        %v2559 = vmax.f32 %v2557, %v2558
        %v2560 = vrot.slane %v2559, 1
        %v2561 = vmax.f32 %v2559, %v2560
        %v2562 = vsel %vm720, %v2536, -inf
        %v2563 = vsel %vm720, %v2540, -inf
        %v2564 = vmax.f32 %v2562, %v2563
        %v2565 = vrot.slane %v2564, 4
        %v2566 = vmax.f32 %v2564, %v2565
        %v2567 = vrot.slane %v2566, 2
        %v2568 = vmax.f32 %v2566, %v2567
        %v2569 = vrot.slane %v2568, 1
        %v2570 = vmax.f32 %v2568, %v2569
        %v2571 = vadd.f32 %v2533, %v2537
        %v2572 = vrot.slane %v2571, 4
        %v2573 = vadd.f32 %v2571, %v2572
        %v2574 = vrot.slane %v2573, 2
        %v2575 = vadd.f32 %v2573, %v2574
        %v2576 = vrot.slane %v2575, 1
        %v2577 = vadd.f32 %v2575, %v2576
        %v2578 = vadd.f32 %v2534, %v2538
        %v2579 = vrot.slane %v2578, 4
        %v2580 = vadd.f32 %v2578, %v2579
        %v2581 = vrot.slane %v2580, 2
        %v2582 = vadd.f32 %v2580, %v2581
        %v2583 = vrot.slane %v2582, 1
        %v2584 = vadd.f32 %v2582, %v2583
        %v2585 = vadd.f32 %v2535, %v2539
        %v2586 = vrot.slane %v2585, 4
        %v2587 = vadd.f32 %v2585, %v2586
        %v2588 = vrot.slane %v2587, 2
        %v2589 = vadd.f32 %v2587, %v2588
        %v2590 = vrot.slane %v2589, 1
        %v2591 = vadd.f32 %v2589, %v2590
        %v2592 = vsel %vm720, %v2536, 0.0
        %v2593 = vsel %vm720, %v2540, 0.0
        %v2594 = vadd.f32 %v2592, %v2593
        %v2595 = vrot.slane %v2594, 4
        %v2596 = vadd.f32 %v2594, %v2595
        %v2597 = vrot.slane %v2596, 2
        %v2598 = vadd.f32 %v2596, %v2597
        %v2599 = vrot.slane %v2598, 1
        %v2600 = vadd.f32 %v2598, %v2599
        %v2601 = vrcp.pop 16.0
        %v2602 = vmul.f32 16.0, %v2601
        %v2603 = vsub.f32 1.0, %v2602
        %v2604 = vmul.f32 %v2601, %v2603
        %v2605 = vadd.f32 %v2601, %v2604
        %vm2606 = vweird.f32 %v2601
        %v2607 = vsel %vm2606, %v2601, %v2605
        %v2608 = vmul.f32 %v2577, %v2607
        %v2609 = vmul.f32 %v2584, %v2607
        %v2610 = vmul.f32 %v2591, %v2607
        %v2611 = vmul.f32 %v2600, %v2607
        %2616 = vrot.lane.b32.xlu0 %v2547, 69
        %v2617 = vpop.permute.xlu0 %2616
        %2618 = vrot.lane.b32.xlu0 %v2554, 69
        %v2619 = vpop.permute.xlu0 %2618
        %2620 = vrot.lane.b32.xlu0 %v2561, 69
        %v2621 = vpop.permute.xlu0 %2620
        %2622 = vrot.lane.b32.xlu0 %v2570, 69
        %v2623 = vpop.permute.xlu0 %2622
        %vm2624 = vcmask 564224
        %v2625 = vsel %vm2624, %v2617, %v2619
        %v2626 = vsel %vm2624, %v2619, %v2621
        %v2627 = vsel %vm2624, %v2621, %v2623
        %v2632 = vsel %vm2624, 0.0, %v2617
        %s2633 = sld [smem:[#allocation9]]
        %v2634 = vstv %s2633
        %v2635 = vmul.f32 %v2632, %v2634
        %v2636 = vmul.f32 %v2625, %v2634
        %v2637 = vmul.f32 %v2626, %v2634
        %v2638 = vmul.f32 %v2627, %v2634
        %v2639 = vadd.f32 %v2635, 0.0
        %v2640 = vadd.f32 %v2636, 0.0
        %v2641 = vadd.f32 %v2637, 0.0
        %v2642 = vadd.f32 %v2638, 0.0
        %2647 = vrot.lane.b32.xlu0 %v2608, 69
        %v2648 = vpop.permute.xlu0 %2647
        %2649 = vrot.lane.b32.xlu0 %v2609, 69
        %v2650 = vpop.permute.xlu0 %2649
        %2651 = vrot.lane.b32.xlu0 %v2610, 69
        %v2652 = vpop.permute.xlu0 %2651
        %2653 = vrot.lane.b32.xlu0 %v2611, 69
        %v2654 = vpop.permute.xlu0 %2653
        %v2655 = vsel %vm2624, %v2648, %v2650
        %v2656 = vsel %vm2624, %v2650, %v2652
        %v2657 = vsel %vm2624, %v2652, %v2654
        %v2662 = vsel %vm2624, 0.0, %v2648
        %s2663 = sld [smem:[#allocation9 + $0x1]]
        %v2664 = vstv %s2663
        %v2665 = vmul.f32 %v2662, %v2664
        %v2666 = vmul.f32 %v2655, %v2664
        %v2667 = vmul.f32 %v2656, %v2664
        %v2668 = vmul.f32 %v2657, %v2664
        %v2669 = vadd.f32 %v2639, %v2665
        %v2670 = vadd.f32 %v2640, %v2666
        %v2671 = vadd.f32 %v2641, %v2667
        %v2672 = vadd.f32 %v2642, %v2668
        %2673 = vrot.lane.b32.xlu0 %v2547, 68
        %v2674 = vpop.permute.xlu0 %2673
        %2675 = vrot.lane.b32.xlu0 %v2554, 68
        %v2676 = vpop.permute.xlu0 %2675
        %2677 = vrot.lane.b32.xlu0 %v2561, 68
        %v2678 = vpop.permute.xlu0 %2677
        %2679 = vrot.lane.b32.xlu0 %v2570, 68
        %v2680 = vpop.permute.xlu0 %2679
        %vm2681 = vcmask 556032
        %v2682 = vsel %vm2681, %v2674, %v2676
        %v2683 = vsel %vm2681, %v2676, %v2678
        %v2684 = vsel %vm2681, %v2678, %v2680
        %v2689 = vsel %vm2681, 0.0, %v2674
        %s2690 = sld [smem:[#allocation9 + $0x2]]
        %v2691 = vstv %s2690
        %v2692 = vmul.f32 %v2689, %v2691
        %v2693 = vmul.f32 %v2682, %v2691
        %v2694 = vmul.f32 %v2683, %v2691
        %v2695 = vmul.f32 %v2684, %v2691
        %v2696 = vadd.f32 %v2669, %v2692
        %v2697 = vadd.f32 %v2670, %v2693
        %v2698 = vadd.f32 %v2671, %v2694
        %v2699 = vadd.f32 %v2672, %v2695
        %2700 = vrot.lane.b32.xlu0 %v2608, 68
        %v2701 = vpop.permute.xlu0 %2700
        %2702 = vrot.lane.b32.xlu0 %v2609, 68
        %v2703 = vpop.permute.xlu0 %2702
        %2704 = vrot.lane.b32.xlu0 %v2610, 68
        %v2705 = vpop.permute.xlu0 %2704
        %2706 = vrot.lane.b32.xlu0 %v2611, 68
        %v2707 = vpop.permute.xlu0 %2706
        %v2708 = vsel %vm2681, %v2701, %v2703
        %v2709 = vsel %vm2681, %v2703, %v2705
        %v2710 = vsel %vm2681, %v2705, %v2707
        %v2715 = vsel %vm2681, 0.0, %v2701
        %s2716 = sld [smem:[#allocation9 + $0x3]]
        %v2717 = vstv %s2716
        %v2718 = vmul.f32 %v2715, %v2717
        %v2719 = vmul.f32 %v2708, %v2717
        %v2720 = vmul.f32 %v2709, %v2717
        %v2721 = vmul.f32 %v2710, %v2717
        %v2722 = vadd.f32 %v2696, %v2718
        %v2723 = vadd.f32 %v2697, %v2719
        %v2724 = vadd.f32 %v2698, %v2720
        %v2725 = vadd.f32 %v2699, %v2721
        %2726 = vrot.lane.b32.xlu0 %v2547, 67
        %v2727 = vpop.permute.xlu0 %2726
        %2728 = vrot.lane.b32.xlu0 %v2554, 67
        %v2729 = vpop.permute.xlu0 %2728
        %2730 = vrot.lane.b32.xlu0 %v2561, 67
        %v2731 = vpop.permute.xlu0 %2730
        %2732 = vrot.lane.b32.xlu0 %v2570, 67
        %v2733 = vpop.permute.xlu0 %2732
        %vm2734 = vcmask 547840
        %v2735 = vsel %vm2734, %v2727, %v2729
        %v2736 = vsel %vm2734, %v2729, %v2731
        %v2737 = vsel %vm2734, %v2731, %v2733
        %v2742 = vsel %vm2734, 0.0, %v2727
        %s2743 = sld [smem:[#allocation9 + $0x4]]
        %v2744 = vstv %s2743
        %v2745 = vmul.f32 %v2742, %v2744
        %v2746 = vmul.f32 %v2735, %v2744
        %v2747 = vmul.f32 %v2736, %v2744
        %v2748 = vmul.f32 %v2737, %v2744
        %v2749 = vadd.f32 %v2722, %v2745
        %v2750 = vadd.f32 %v2723, %v2746
        %v2751 = vadd.f32 %v2724, %v2747
        %v2752 = vadd.f32 %v2725, %v2748
        %2753 = vrot.lane.b32.xlu0 %v2608, 67
        %v2754 = vpop.permute.xlu0 %2753
        %2755 = vrot.lane.b32.xlu0 %v2609, 67
        %v2756 = vpop.permute.xlu0 %2755
        %2757 = vrot.lane.b32.xlu0 %v2610, 67
        %v2758 = vpop.permute.xlu0 %2757
        %2759 = vrot.lane.b32.xlu0 %v2611, 67
        %v2760 = vpop.permute.xlu0 %2759
        %v2761 = vsel %vm2734, %v2754, %v2756
        %v2762 = vsel %vm2734, %v2756, %v2758
        %v2763 = vsel %vm2734, %v2758, %v2760
        %v2768 = vsel %vm2734, 0.0, %v2754
        %s2769 = sld [smem:[#allocation9 + $0x5]]
        %v2770 = vstv %s2769
        %v2771 = vmul.f32 %v2768, %v2770
        %v2772 = vmul.f32 %v2761, %v2770
        %v2773 = vmul.f32 %v2762, %v2770
        %v2774 = vmul.f32 %v2763, %v2770
        %v2775 = vadd.f32 %v2749, %v2771
        %v2776 = vadd.f32 %v2750, %v2772
        %v2777 = vadd.f32 %v2751, %v2773
        %v2778 = vadd.f32 %v2752, %v2774
        %2779 = vrot.lane.b32.xlu0 %v2547, 66
        %v2780 = vpop.permute.xlu0 %2779
        %2781 = vrot.lane.b32.xlu0 %v2554, 66
        %v2782 = vpop.permute.xlu0 %2781
        %2783 = vrot.lane.b32.xlu0 %v2561, 66
        %v2784 = vpop.permute.xlu0 %2783
        %2785 = vrot.lane.b32.xlu0 %v2570, 66
        %v2786 = vpop.permute.xlu0 %2785
        %vm2787 = vcmask 539648
        %v2788 = vsel %vm2787, %v2780, %v2782
        %v2789 = vsel %vm2787, %v2782, %v2784
        %v2790 = vsel %vm2787, %v2784, %v2786
        %v2795 = vsel %vm2787, 0.0, %v2780
        %s2796 = sld [smem:[#allocation9 + $0x6]]
        %v2797 = vstv %s2796
        %v2798 = vmul.f32 %v2795, %v2797
        %v2799 = vmul.f32 %v2788, %v2797
        %v2800 = vmul.f32 %v2789, %v2797
        %v2801 = vmul.f32 %v2790, %v2797
        %v2802 = vadd.f32 %v2775, %v2798
        %v2803 = vadd.f32 %v2776, %v2799
        %v2804 = vadd.f32 %v2777, %v2800
        %v2805 = vadd.f32 %v2778, %v2801
        %2806 = vrot.lane.b32.xlu0 %v2608, 66
        %v2807 = vpop.permute.xlu0 %2806
        %2808 = vrot.lane.b32.xlu0 %v2609, 66
        %v2809 = vpop.permute.xlu0 %2808
        %2810 = vrot.lane.b32.xlu0 %v2610, 66
        %v2811 = vpop.permute.xlu0 %2810
        %2812 = vrot.lane.b32.xlu0 %v2611, 66
        %v2813 = vpop.permute.xlu0 %2812
        %v2814 = vsel %vm2787, %v2807, %v2809
        %v2815 = vsel %vm2787, %v2809, %v2811
        %v2816 = vsel %vm2787, %v2811, %v2813
        %v2821 = vsel %vm2787, 0.0, %v2807
        %s2822 = sld [smem:[#allocation9 + $0x7]]
        %v2823 = vstv %s2822
        %v2824 = vmul.f32 %v2821, %v2823
        %v2825 = vmul.f32 %v2814, %v2823
        %v2826 = vmul.f32 %v2815, %v2823
        %v2827 = vmul.f32 %v2816, %v2823
        %v2828 = vadd.f32 %v2802, %v2824
        %v2829 = vadd.f32 %v2803, %v2825
        %v2830 = vadd.f32 %v2804, %v2826
        %v2831 = vadd.f32 %v2805, %v2827
        %2832 = vrot.lane.b32.xlu0 %v2547, 65
        %v2833 = vpop.permute.xlu0 %2832
        %2834 = vrot.lane.b32.xlu0 %v2554, 65
        %v2835 = vpop.permute.xlu0 %2834
        %2836 = vrot.lane.b32.xlu0 %v2561, 65
        %v2837 = vpop.permute.xlu0 %2836
        %2838 = vrot.lane.b32.xlu0 %v2570, 65
        %v2839 = vpop.permute.xlu0 %2838
        %vm2840 = vcmask 531456
        %v2841 = vsel %vm2840, %v2833, %v2835
        %v2842 = vsel %vm2840, %v2835, %v2837
        %v2843 = vsel %vm2840, %v2837, %v2839
        %v2848 = vsel %vm2840, 0.0, %v2833
        %s2849 = sld [smem:[#allocation9 + $0x8]]
        %v2850 = vstv %s2849
        %v2851 = vmul.f32 %v2848, %v2850
        %v2852 = vmul.f32 %v2841, %v2850
        %v2853 = vmul.f32 %v2842, %v2850
        %v2854 = vmul.f32 %v2843, %v2850
        %v2855 = vadd.f32 %v2828, %v2851
        %v2856 = vadd.f32 %v2829, %v2852
        %v2857 = vadd.f32 %v2830, %v2853
        %v2858 = vadd.f32 %v2831, %v2854
        %2859 = vrot.lane.b32.xlu0 %v2608, 65
        %v2860 = vpop.permute.xlu0 %2859
        %2861 = vrot.lane.b32.xlu0 %v2609, 65
        %v2862 = vpop.permute.xlu0 %2861
        %2863 = vrot.lane.b32.xlu0 %v2610, 65
        %v2864 = vpop.permute.xlu0 %2863
        %2865 = vrot.lane.b32.xlu0 %v2611, 65
        %v2866 = vpop.permute.xlu0 %2865
        %v2867 = vsel %vm2840, %v2860, %v2862
        %v2868 = vsel %vm2840, %v2862, %v2864
        %v2869 = vsel %vm2840, %v2864, %v2866
        %v2874 = vsel %vm2840, 0.0, %v2860
        %s2875 = sld [smem:[#allocation9 + $0x9]]
        %v2876 = vstv %s2875
        %v2877 = vmul.f32 %v2874, %v2876
        %v2878 = vmul.f32 %v2867, %v2876
        %v2879 = vmul.f32 %v2868, %v2876
        %v2880 = vmul.f32 %v2869, %v2876
        %v2881 = vadd.f32 %v2855, %v2877
        %v2882 = vadd.f32 %v2856, %v2878
        %v2883 = vadd.f32 %v2857, %v2879
        %v2884 = vadd.f32 %v2858, %v2880
        %2885 = vrot.lane.b32.xlu0 %v2547, 64
        %v2886 = vpop.permute.xlu0 %2885
        %2887 = vrot.lane.b32.xlu0 %v2554, 64
        %v2888 = vpop.permute.xlu0 %2887
        %2889 = vrot.lane.b32.xlu0 %v2561, 64
        %v2890 = vpop.permute.xlu0 %2889
        %2891 = vrot.lane.b32.xlu0 %v2570, 64
        %v2892 = vpop.permute.xlu0 %2891
        %vm2893 = vcmask 523264
        %v2894 = vsel %vm2893, %v2886, %v2888
        %v2895 = vsel %vm2893, %v2888, %v2890
        %v2896 = vsel %vm2893, %v2890, %v2892
        %v2901 = vsel %vm2893, 0.0, %v2886
        %s2902 = sld [smem:[#allocation9 + $0xa]]
        %v2903 = vstv %s2902
        %v2904 = vmul.f32 %v2901, %v2903
        %v2905 = vmul.f32 %v2894, %v2903
        %v2906 = vmul.f32 %v2895, %v2903
        %v2907 = vmul.f32 %v2896, %v2903
        %v2908 = vadd.f32 %v2881, %v2904
        %v2909 = vadd.f32 %v2882, %v2905
        %v2910 = vadd.f32 %v2883, %v2906
        %v2911 = vadd.f32 %v2884, %v2907
        %2912 = vrot.lane.b32.xlu0 %v2608, 64
        %v2913 = vpop.permute.xlu0 %2912
        %2914 = vrot.lane.b32.xlu0 %v2609, 64
        %v2915 = vpop.permute.xlu0 %2914
        %2916 = vrot.lane.b32.xlu0 %v2610, 64
        %v2917 = vpop.permute.xlu0 %2916
        %2918 = vrot.lane.b32.xlu0 %v2611, 64
        %v2919 = vpop.permute.xlu0 %2918
        %v2920 = vsel %vm2893, %v2913, %v2915
        %v2921 = vsel %vm2893, %v2915, %v2917
        %v2922 = vsel %vm2893, %v2917, %v2919
        %v2927 = vsel %vm2893, 0.0, %v2913
        %s2928 = sld [smem:[#allocation9 + $0xb]]
        %v2929 = vstv %s2928
        %v2930 = vmul.f32 %v2927, %v2929
        %v2931 = vmul.f32 %v2920, %v2929
        %v2932 = vmul.f32 %v2921, %v2929
        %v2933 = vmul.f32 %v2922, %v2929
        %v2934 = vadd.f32 %v2908, %v2930
        %v2935 = vadd.f32 %v2909, %v2931
        %v2936 = vadd.f32 %v2910, %v2932
        %v2937 = vadd.f32 %v2911, %v2933
        %2938 = vrot.lane.b32.xlu0 %v2547, 63
        %v2939 = vpop.permute.xlu0 %2938
        %2940 = vrot.lane.b32.xlu0 %v2554, 63
        %v2941 = vpop.permute.xlu0 %2940
        %2942 = vrot.lane.b32.xlu0 %v2561, 63
        %v2943 = vpop.permute.xlu0 %2942
        %2944 = vrot.lane.b32.xlu0 %v2570, 63
        %v2945 = vpop.permute.xlu0 %2944
        %vm2946 = vcmask 515072
        %v2947 = vsel %vm2946, %v2939, %v2941
        %v2948 = vsel %vm2946, %v2941, %v2943
        %v2949 = vsel %vm2946, %v2943, %v2945
        %v2954 = vsel %vm2946, 0.0, %v2939
        %s2955 = sld [smem:[#allocation9 + $0xc]]
        %v2956 = vstv %s2955
        %v2957 = vmul.f32 %v2954, %v2956
        %v2958 = vmul.f32 %v2947, %v2956
        %v2959 = vmul.f32 %v2948, %v2956
        %v2960 = vmul.f32 %v2949, %v2956
        %v2961 = vadd.f32 %v2934, %v2957
        %v2962 = vadd.f32 %v2935, %v2958
        %v2963 = vadd.f32 %v2936, %v2959
        %v2964 = vadd.f32 %v2937, %v2960
        %2965 = vrot.lane.b32.xlu0 %v2608, 63
        %v2966 = vpop.permute.xlu0 %2965
        %2967 = vrot.lane.b32.xlu0 %v2609, 63
        %v2968 = vpop.permute.xlu0 %2967
        %2969 = vrot.lane.b32.xlu0 %v2610, 63
        %v2970 = vpop.permute.xlu0 %2969
        %2971 = vrot.lane.b32.xlu0 %v2611, 63
        %v2972 = vpop.permute.xlu0 %2971
        %v2973 = vsel %vm2946, %v2966, %v2968
        %v2974 = vsel %vm2946, %v2968, %v2970
        %v2975 = vsel %vm2946, %v2970, %v2972
        %v2980 = vsel %vm2946, 0.0, %v2966
        %s2981 = sld [smem:[#allocation9 + $0xd]]
        %v2982 = vstv %s2981
        %v2983 = vmul.f32 %v2980, %v2982
        %v2984 = vmul.f32 %v2973, %v2982
        %v2985 = vmul.f32 %v2974, %v2982
        %v2986 = vmul.f32 %v2975, %v2982
        %v2987 = vadd.f32 %v2961, %v2983
        %v2988 = vadd.f32 %v2962, %v2984
        %v2989 = vadd.f32 %v2963, %v2985
        %v2990 = vadd.f32 %v2964, %v2986
        %2991 = vrot.lane.b32.xlu0 %v2547, 47
        %v2992 = vpop.permute.xlu0 %2991
        %2993 = vrot.lane.b32.xlu0 %v2554, 47
        %v2994 = vpop.permute.xlu0 %2993
        %2995 = vrot.lane.b32.xlu0 %v2561, 47
        %v2996 = vpop.permute.xlu0 %2995
        %2997 = vrot.lane.b32.xlu0 %v2570, 47
        %v2998 = vpop.permute.xlu0 %2997
        %vm2999 = vcmask 384000
        %v3000 = vsel %vm2999, %v2992, %v2994
        %v3001 = vsel %vm2999, %v2994, %v2996
        %v3002 = vsel %vm2999, %v2996, %v2998
        %v3007 = vsel %vm2999, 0.0, %v2992
        %s3008 = sld [smem:[#allocation9 + $0xe]]
        %v3009 = vstv %s3008
        %v3010 = vmul.f32 %v3007, %v3009
        %v3011 = vmul.f32 %v3000, %v3009
        %v3012 = vmul.f32 %v3001, %v3009
        %v3013 = vmul.f32 %v3002, %v3009
        %v3014 = vadd.f32 %v2987, %v3010
        %v3015 = vadd.f32 %v2988, %v3011
        %v3016 = vadd.f32 %v2989, %v3012
        %v3017 = vadd.f32 %v2990, %v3013
        %3018 = vrot.lane.b32.xlu0 %v2608, 47
        %v3019 = vpop.permute.xlu0 %3018
        %3020 = vrot.lane.b32.xlu0 %v2609, 47
        %v3021 = vpop.permute.xlu0 %3020
        %3022 = vrot.lane.b32.xlu0 %v2610, 47
        %v3023 = vpop.permute.xlu0 %3022
        %3024 = vrot.lane.b32.xlu0 %v2611, 47
        %v3025 = vpop.permute.xlu0 %3024
        %v3026 = vsel %vm2999, %v3019, %v3021
        %v3027 = vsel %vm2999, %v3021, %v3023
        %v3028 = vsel %vm2999, %v3023, %v3025
        %v3033 = vsel %vm2999, 0.0, %v3019
        %s3034 = sld [smem:[#allocation9 + $0xf]]
        %v3035 = vstv %s3034
        %v3036 = vmul.f32 %v3033, %v3035
        %v3037 = vmul.f32 %v3026, %v3035
        %v3038 = vmul.f32 %v3027, %v3035
        %v3039 = vmul.f32 %v3028, %v3035
        %v3040 = vadd.f32 %v3014, %v3036
        %v3041 = vadd.f32 %v3015, %v3037
        %v3042 = vadd.f32 %v3016, %v3038
        %v3043 = vadd.f32 %v3017, %v3039
        %3044 = vrot.lane.b32.xlu0 %v2547, 46
        %v3045 = vpop.permute.xlu0 %3044
        %3046 = vrot.lane.b32.xlu0 %v2554, 46
        %v3047 = vpop.permute.xlu0 %3046
        %3048 = vrot.lane.b32.xlu0 %v2561, 46
        %v3049 = vpop.permute.xlu0 %3048
        %3050 = vrot.lane.b32.xlu0 %v2570, 46
        %v3051 = vpop.permute.xlu0 %3050
        %vm3052 = vcmask 375808
        %v3053 = vsel %vm3052, %v3045, %v3047
        %v3054 = vsel %vm3052, %v3047, %v3049
        %v3055 = vsel %vm3052, %v3049, %v3051
        %v3060 = vsel %vm3052, 0.0, %v3045
        %s3061 = sld [smem:[#allocation9 + $0x10]]
        %v3062 = vstv %s3061
        %v3063 = vmul.f32 %v3060, %v3062
        %v3064 = vmul.f32 %v3053, %v3062
        %v3065 = vmul.f32 %v3054, %v3062
        %v3066 = vmul.f32 %v3055, %v3062
        %v3067 = vadd.f32 %v3040, %v3063
        %v3068 = vadd.f32 %v3041, %v3064
        %v3069 = vadd.f32 %v3042, %v3065
        %v3070 = vadd.f32 %v3043, %v3066
        %3071 = vrot.lane.b32.xlu0 %v2608, 46
        %v3072 = vpop.permute.xlu0 %3071
        %3073 = vrot.lane.b32.xlu0 %v2609, 46
        %v3074 = vpop.permute.xlu0 %3073
        %3075 = vrot.lane.b32.xlu0 %v2610, 46
        %v3076 = vpop.permute.xlu0 %3075
        %3077 = vrot.lane.b32.xlu0 %v2611, 46
        %v3078 = vpop.permute.xlu0 %3077
        %v3079 = vsel %vm3052, %v3072, %v3074
        %v3080 = vsel %vm3052, %v3074, %v3076
        %v3081 = vsel %vm3052, %v3076, %v3078
        %v3086 = vsel %vm3052, 0.0, %v3072
        %s3087 = sld [smem:[#allocation9 + $0x11]]
        %v3088 = vstv %s3087
        %v3089 = vmul.f32 %v3086, %v3088
        %v3090 = vmul.f32 %v3079, %v3088
        %v3091 = vmul.f32 %v3080, %v3088
        %v3092 = vmul.f32 %v3081, %v3088
        %v3093 = vadd.f32 %v3067, %v3089
        %v3094 = vadd.f32 %v3068, %v3090
        %v3095 = vadd.f32 %v3069, %v3091
        %v3096 = vadd.f32 %v3070, %v3092
        %3097 = vrot.lane.b32.xlu0 %v2547, 45
        %v3098 = vpop.permute.xlu0 %3097
        %3099 = vrot.lane.b32.xlu0 %v2554, 45
        %v3100 = vpop.permute.xlu0 %3099
        %3101 = vrot.lane.b32.xlu0 %v2561, 45
        %v3102 = vpop.permute.xlu0 %3101
        %3103 = vrot.lane.b32.xlu0 %v2570, 45
        %v3104 = vpop.permute.xlu0 %3103
        %vm3105 = vcmask 367616
        %v3106 = vsel %vm3105, %v3098, %v3100
        %v3107 = vsel %vm3105, %v3100, %v3102
        %v3108 = vsel %vm3105, %v3102, %v3104
        %v3113 = vsel %vm3105, 0.0, %v3098
        %s3114 = sld [smem:[#allocation9 + $0x12]]
        %v3115 = vstv %s3114
        %v3116 = vmul.f32 %v3113, %v3115
        %v3117 = vmul.f32 %v3106, %v3115
        %v3118 = vmul.f32 %v3107, %v3115
        %v3119 = vmul.f32 %v3108, %v3115
        %v3120 = vadd.f32 %v3093, %v3116
        %v3121 = vadd.f32 %v3094, %v3117
        %v3122 = vadd.f32 %v3095, %v3118
        %v3123 = vadd.f32 %v3096, %v3119
        %3124 = vrot.lane.b32.xlu0 %v2608, 45
        %v3125 = vpop.permute.xlu0 %3124
        %3126 = vrot.lane.b32.xlu0 %v2609, 45
        %v3127 = vpop.permute.xlu0 %3126
        %3128 = vrot.lane.b32.xlu0 %v2610, 45
        %v3129 = vpop.permute.xlu0 %3128
        %3130 = vrot.lane.b32.xlu0 %v2611, 45
        %v3131 = vpop.permute.xlu0 %3130
        %v3132 = vsel %vm3105, %v3125, %v3127
        %v3133 = vsel %vm3105, %v3127, %v3129
        %v3134 = vsel %vm3105, %v3129, %v3131
        %v3139 = vsel %vm3105, 0.0, %v3125
        %s3140 = sld [smem:[#allocation9 + $0x13]]
        %v3141 = vstv %s3140
        %v3142 = vmul.f32 %v3139, %v3141
        %v3143 = vmul.f32 %v3132, %v3141
        %v3144 = vmul.f32 %v3133, %v3141
        %v3145 = vmul.f32 %v3134, %v3141
        %v3146 = vadd.f32 %v3120, %v3142
        %v3147 = vadd.f32 %v3121, %v3143
        %v3148 = vadd.f32 %v3122, %v3144
        %v3149 = vadd.f32 %v3123, %v3145
        %3150 = vrot.lane.b32.xlu0 %v2547, 44
        %v3151 = vpop.permute.xlu0 %3150
        %3152 = vrot.lane.b32.xlu0 %v2554, 44
        %v3153 = vpop.permute.xlu0 %3152
        %3154 = vrot.lane.b32.xlu0 %v2561, 44
        %v3155 = vpop.permute.xlu0 %3154
        %3156 = vrot.lane.b32.xlu0 %v2570, 44
        %v3157 = vpop.permute.xlu0 %3156
        %vm3158 = vcmask 359424
        %v3159 = vsel %vm3158, %v3151, %v3153
        %v3160 = vsel %vm3158, %v3153, %v3155
        %v3161 = vsel %vm3158, %v3155, %v3157
        %v3166 = vsel %vm3158, 0.0, %v3151
        %s3167 = sld [smem:[#allocation9 + $0x14]]
        %v3168 = vstv %s3167
        %v3169 = vmul.f32 %v3166, %v3168
        %v3170 = vmul.f32 %v3159, %v3168
        %v3171 = vmul.f32 %v3160, %v3168
        %v3172 = vmul.f32 %v3161, %v3168
        %v3173 = vadd.f32 %v3146, %v3169
        %v3174 = vadd.f32 %v3147, %v3170
        %v3175 = vadd.f32 %v3148, %v3171
        %v3176 = vadd.f32 %v3149, %v3172
        %3177 = vrot.lane.b32.xlu0 %v2608, 44
        %v3178 = vpop.permute.xlu0 %3177
        %3179 = vrot.lane.b32.xlu0 %v2609, 44
        %v3180 = vpop.permute.xlu0 %3179
        %3181 = vrot.lane.b32.xlu0 %v2610, 44
        %v3182 = vpop.permute.xlu0 %3181
        %3183 = vrot.lane.b32.xlu0 %v2611, 44
        %v3184 = vpop.permute.xlu0 %3183
        %v3185 = vsel %vm3158, %v3178, %v3180
        %v3186 = vsel %vm3158, %v3180, %v3182
        %v3187 = vsel %vm3158, %v3182, %v3184
        %v3192 = vsel %vm3158, 0.0, %v3178
        %s3193 = sld [smem:[#allocation9 + $0x15]]
        %v3194 = vstv %s3193
        %v3195 = vmul.f32 %v3192, %v3194
        %v3196 = vmul.f32 %v3185, %v3194
        %v3197 = vmul.f32 %v3186, %v3194
        %v3198 = vmul.f32 %v3187, %v3194
        %v3199 = vadd.f32 %v3173, %v3195
        %v3200 = vadd.f32 %v3174, %v3196
        %v3201 = vadd.f32 %v3175, %v3197
        %v3202 = vadd.f32 %v3176, %v3198
        %3203 = vrot.lane.b32.xlu0 %v2547, 43
        %v3204 = vpop.permute.xlu0 %3203
        %3205 = vrot.lane.b32.xlu0 %v2554, 43
        %v3206 = vpop.permute.xlu0 %3205
        %3207 = vrot.lane.b32.xlu0 %v2561, 43
        %v3208 = vpop.permute.xlu0 %3207
        %3209 = vrot.lane.b32.xlu0 %v2570, 43
        %v3210 = vpop.permute.xlu0 %3209
        %vm3211 = vcmask 351232
        %v3212 = vsel %vm3211, %v3204, %v3206
        %v3213 = vsel %vm3211, %v3206, %v3208
        %v3214 = vsel %vm3211, %v3208, %v3210
        %v3219 = vsel %vm3211, 0.0, %v3204
        %s3220 = sld [smem:[#allocation9 + $0x16]]
        %v3221 = vstv %s3220
        %v3222 = vmul.f32 %v3219, %v3221
        %v3223 = vmul.f32 %v3212, %v3221
        %v3224 = vmul.f32 %v3213, %v3221
        %v3225 = vmul.f32 %v3214, %v3221
        %v3226 = vadd.f32 %v3199, %v3222
        %v3227 = vadd.f32 %v3200, %v3223
        %v3228 = vadd.f32 %v3201, %v3224
        %v3229 = vadd.f32 %v3202, %v3225
        %3230 = vrot.lane.b32.xlu0 %v2608, 43
        %v3231 = vpop.permute.xlu0 %3230
        %3232 = vrot.lane.b32.xlu0 %v2609, 43
        %v3233 = vpop.permute.xlu0 %3232
        %3234 = vrot.lane.b32.xlu0 %v2610, 43
        %v3235 = vpop.permute.xlu0 %3234
        %3236 = vrot.lane.b32.xlu0 %v2611, 43
        %v3237 = vpop.permute.xlu0 %3236
        %v3238 = vsel %vm3211, %v3231, %v3233
        %v3239 = vsel %vm3211, %v3233, %v3235
        %v3240 = vsel %vm3211, %v3235, %v3237
        %v3245 = vsel %vm3211, 0.0, %v3231
        %s3246 = sld [smem:[#allocation9 + $0x17]]
        %v3247 = vstv %s3246
        %v3248 = vmul.f32 %v3245, %v3247
        %v3249 = vmul.f32 %v3238, %v3247
        %v3250 = vmul.f32 %v3239, %v3247
        %v3251 = vmul.f32 %v3240, %v3247
        %v3252 = vadd.f32 %v3226, %v3248
        %v3253 = vadd.f32 %v3227, %v3249
        %v3254 = vadd.f32 %v3228, %v3250
        %v3255 = vadd.f32 %v3229, %v3251
        %3256 = vrot.lane.b32.xlu0 %v2547, 42
        %v3257 = vpop.permute.xlu0 %3256
        %3258 = vrot.lane.b32.xlu0 %v2554, 42
        %v3259 = vpop.permute.xlu0 %3258
        %3260 = vrot.lane.b32.xlu0 %v2561, 42
        %v3261 = vpop.permute.xlu0 %3260
        %3262 = vrot.lane.b32.xlu0 %v2570, 42
        %v3263 = vpop.permute.xlu0 %3262
        %vm3264 = vcmask 343040
        %v3265 = vsel %vm3264, %v3257, %v3259
        %v3266 = vsel %vm3264, %v3259, %v3261
        %v3267 = vsel %vm3264, %v3261, %v3263
        %v3272 = vsel %vm3264, 0.0, %v3257
        %s3273 = sld [smem:[#allocation9 + $0x18]]
        %v3274 = vstv %s3273
        %v3275 = vmul.f32 %v3272, %v3274
        %v3276 = vmul.f32 %v3265, %v3274
        %v3277 = vmul.f32 %v3266, %v3274
        %v3278 = vmul.f32 %v3267, %v3274
        %v3279 = vadd.f32 %v3252, %v3275
        %v3280 = vadd.f32 %v3253, %v3276
        %v3281 = vadd.f32 %v3254, %v3277
        %v3282 = vadd.f32 %v3255, %v3278
        %3283 = vrot.lane.b32.xlu0 %v2608, 42
        %v3284 = vpop.permute.xlu0 %3283
        %3285 = vrot.lane.b32.xlu0 %v2609, 42
        %v3286 = vpop.permute.xlu0 %3285
        %3287 = vrot.lane.b32.xlu0 %v2610, 42
        %v3288 = vpop.permute.xlu0 %3287
        %3289 = vrot.lane.b32.xlu0 %v2611, 42
        %v3290 = vpop.permute.xlu0 %3289
        %v3291 = vsel %vm3264, %v3284, %v3286
        %v3292 = vsel %vm3264, %v3286, %v3288
        %v3293 = vsel %vm3264, %v3288, %v3290
        %v3298 = vsel %vm3264, 0.0, %v3284
        %s3299 = sld [smem:[#allocation9 + $0x19]]
        %v3300 = vstv %s3299
        %v3301 = vmul.f32 %v3298, %v3300
        %v3302 = vmul.f32 %v3291, %v3300
        %v3303 = vmul.f32 %v3292, %v3300
        %v3304 = vmul.f32 %v3293, %v3300
        %v3305 = vadd.f32 %v3279, %v3301
        %v3306 = vadd.f32 %v3280, %v3302
        %v3307 = vadd.f32 %v3281, %v3303
        %v3308 = vadd.f32 %v3282, %v3304
        %3309 = vrot.lane.b32.xlu0 %v2547, 41
        %v3310 = vpop.permute.xlu0 %3309
        %3311 = vrot.lane.b32.xlu0 %v2554, 41
        %v3312 = vpop.permute.xlu0 %3311
        %3313 = vrot.lane.b32.xlu0 %v2561, 41
        %v3314 = vpop.permute.xlu0 %3313
        %3315 = vrot.lane.b32.xlu0 %v2570, 41
        %v3316 = vpop.permute.xlu0 %3315
        %vm3317 = vcmask 334848
        %v3318 = vsel %vm3317, %v3310, %v3312
        %v3319 = vsel %vm3317, %v3312, %v3314
        %v3320 = vsel %vm3317, %v3314, %v3316
        %v3325 = vsel %vm3317, 0.0, %v3310
        %s3326 = sld [smem:[#allocation9 + $0x1a]]
        %v3327 = vstv %s3326
        %v3328 = vmul.f32 %v3325, %v3327
        %v3329 = vmul.f32 %v3318, %v3327
        %v3330 = vmul.f32 %v3319, %v3327
        %v3331 = vmul.f32 %v3320, %v3327
        %v3332 = vadd.f32 %v3305, %v3328
        %v3333 = vadd.f32 %v3306, %v3329
        %v3334 = vadd.f32 %v3307, %v3330
        %v3335 = vadd.f32 %v3308, %v3331
        %3336 = vrot.lane.b32.xlu0 %v2608, 41
        %v3337 = vpop.permute.xlu0 %3336
        %3338 = vrot.lane.b32.xlu0 %v2609, 41
        %v3339 = vpop.permute.xlu0 %3338
        %3340 = vrot.lane.b32.xlu0 %v2610, 41
        %v3341 = vpop.permute.xlu0 %3340
        %3342 = vrot.lane.b32.xlu0 %v2611, 41
        %v3343 = vpop.permute.xlu0 %3342
        %v3344 = vsel %vm3317, %v3337, %v3339
        %v3345 = vsel %vm3317, %v3339, %v3341
        %v3346 = vsel %vm3317, %v3341, %v3343
        %v3351 = vsel %vm3317, 0.0, %v3337
        %s3352 = sld [smem:[#allocation9 + $0x1b]]
        %v3353 = vstv %s3352
        %v3354 = vmul.f32 %v3351, %v3353
        %v3355 = vmul.f32 %v3344, %v3353
        %v3356 = vmul.f32 %v3345, %v3353
        %v3357 = vmul.f32 %v3346, %v3353
        %v3358 = vadd.f32 %v3332, %v3354
        %v3359 = vadd.f32 %v3333, %v3355
        %v3360 = vadd.f32 %v3334, %v3356
        %v3361 = vadd.f32 %v3335, %v3357
        %3362 = vrot.lane.b32.xlu0 %v2547, 25
        %v3363 = vpop.permute.xlu0 %3362
        %3364 = vrot.lane.b32.xlu0 %v2554, 25
        %v3365 = vpop.permute.xlu0 %3364
        %3366 = vrot.lane.b32.xlu0 %v2561, 25
        %v3367 = vpop.permute.xlu0 %3366
        %3368 = vrot.lane.b32.xlu0 %v2570, 25
        %v3369 = vpop.permute.xlu0 %3368
        %vm3370 = vcmask 203776
        %v3371 = vsel %vm3370, %v3363, %v3365
        %v3372 = vsel %vm3370, %v3365, %v3367
        %v3373 = vsel %vm3370, %v3367, %v3369
        %v3378 = vsel %vm3370, 0.0, %v3363
        %s3379 = sld [smem:[#allocation9 + $0x1c]]
        %v3380 = vstv %s3379
        %v3381 = vmul.f32 %v3378, %v3380
        %v3382 = vmul.f32 %v3371, %v3380
        %v3383 = vmul.f32 %v3372, %v3380
        %v3384 = vmul.f32 %v3373, %v3380
        %v3385 = vadd.f32 %v3358, %v3381
        %v3386 = vadd.f32 %v3359, %v3382
        %v3387 = vadd.f32 %v3360, %v3383
        %v3388 = vadd.f32 %v3361, %v3384
        %3389 = vrot.lane.b32.xlu0 %v2608, 25
        %v3390 = vpop.permute.xlu0 %3389
        %3391 = vrot.lane.b32.xlu0 %v2609, 25
        %v3392 = vpop.permute.xlu0 %3391
        %3393 = vrot.lane.b32.xlu0 %v2610, 25
        %v3394 = vpop.permute.xlu0 %3393
        %3395 = vrot.lane.b32.xlu0 %v2611, 25
        %v3396 = vpop.permute.xlu0 %3395
        %v3397 = vsel %vm3370, %v3390, %v3392
        %v3398 = vsel %vm3370, %v3392, %v3394
        %v3399 = vsel %vm3370, %v3394, %v3396
        %v3404 = vsel %vm3370, 0.0, %v3390
        %s3405 = sld [smem:[#allocation9 + $0x1d]]
        %v3406 = vstv %s3405
        %v3407 = vmul.f32 %v3404, %v3406
        %v3408 = vmul.f32 %v3397, %v3406
        %v3409 = vmul.f32 %v3398, %v3406
        %v3410 = vmul.f32 %v3399, %v3406
        %v3411 = vadd.f32 %v3385, %v3407
        %v3412 = vadd.f32 %v3386, %v3408
        %v3413 = vadd.f32 %v3387, %v3409
        %v3414 = vadd.f32 %v3388, %v3410
        %3415 = vrot.lane.b32.xlu0 %v2547, 24
        %v3416 = vpop.permute.xlu0 %3415
        %3417 = vrot.lane.b32.xlu0 %v2554, 24
        %v3418 = vpop.permute.xlu0 %3417
        %3419 = vrot.lane.b32.xlu0 %v2561, 24
        %v3420 = vpop.permute.xlu0 %3419
        %3421 = vrot.lane.b32.xlu0 %v2570, 24
        %v3422 = vpop.permute.xlu0 %3421
        %vm3423 = vcmask 195584
        %v3424 = vsel %vm3423, %v3416, %v3418
        %v3425 = vsel %vm3423, %v3418, %v3420
        %v3426 = vsel %vm3423, %v3420, %v3422
        %v3431 = vsel %vm3423, 0.0, %v3416
        %s3432 = sld [smem:[#allocation9 + $0x1e]]
        %v3433 = vstv %s3432
        %v3434 = vmul.f32 %v3431, %v3433
        %v3435 = vmul.f32 %v3424, %v3433
        %v3436 = vmul.f32 %v3425, %v3433
        %v3437 = vmul.f32 %v3426, %v3433
        %v3438 = vadd.f32 %v3411, %v3434
        %v3439 = vadd.f32 %v3412, %v3435
        %v3440 = vadd.f32 %v3413, %v3436
        %v3441 = vadd.f32 %v3414, %v3437
        %3442 = vrot.lane.b32.xlu0 %v2608, 24
        %v3443 = vpop.permute.xlu0 %3442
        %3444 = vrot.lane.b32.xlu0 %v2609, 24
        %v3445 = vpop.permute.xlu0 %3444
        %3446 = vrot.lane.b32.xlu0 %v2610, 24
        %v3447 = vpop.permute.xlu0 %3446
        %3448 = vrot.lane.b32.xlu0 %v2611, 24
        %v3449 = vpop.permute.xlu0 %3448
        %v3450 = vsel %vm3423, %v3443, %v3445
        %v3451 = vsel %vm3423, %v3445, %v3447
        %v3452 = vsel %vm3423, %v3447, %v3449
        %v3457 = vsel %vm3423, 0.0, %v3443
        %s3458 = sld [smem:[#allocation9 + $0x1f]]
        %v3459 = vstv %s3458
        %v3460 = vmul.f32 %v3457, %v3459
        %v3461 = vmul.f32 %v3450, %v3459
        %v3462 = vmul.f32 %v3451, %v3459
        %v3463 = vmul.f32 %v3452, %v3459
        %v3464 = vadd.f32 %v3438, %v3460
        %v3465 = vadd.f32 %v3439, %v3461
        %v3466 = vadd.f32 %v3440, %v3462
        %v3467 = vadd.f32 %v3441, %v3463
        %3468 = vrot.lane.b32.xlu0 %v2547, 23
        %v3469 = vpop.permute.xlu0 %3468
        %3470 = vrot.lane.b32.xlu0 %v2554, 23
        %v3471 = vpop.permute.xlu0 %3470
        %3472 = vrot.lane.b32.xlu0 %v2561, 23
        %v3473 = vpop.permute.xlu0 %3472
        %3474 = vrot.lane.b32.xlu0 %v2570, 23
        %v3475 = vpop.permute.xlu0 %3474
        %v3476 = vsel %vm700, %v3469, %v3471
        %v3477 = vsel %vm700, %v3471, %v3473
        %v3478 = vsel %vm700, %v3473, %v3475
        %v3483 = vsel %vm700, 0.0, %v3469
        %s3484 = sld [smem:[#allocation9 + $0x20]]
        %v3485 = vstv %s3484
        %v3486 = vmul.f32 %v3483, %v3485
        %v3487 = vmul.f32 %v3476, %v3485
        %v3488 = vmul.f32 %v3477, %v3485
        %v3489 = vmul.f32 %v3478, %v3485
        %v3490 = vadd.f32 %v3464, %v3486
        %v3491 = vadd.f32 %v3465, %v3487
        %v3492 = vadd.f32 %v3466, %v3488
        %v3493 = vadd.f32 %v3467, %v3489
        %3494 = vrot.lane.b32.xlu0 %v2608, 23
        %v3495 = vpop.permute.xlu0 %3494
        %3496 = vrot.lane.b32.xlu0 %v2609, 23
        %v3497 = vpop.permute.xlu0 %3496
        %3498 = vrot.lane.b32.xlu0 %v2610, 23
        %v3499 = vpop.permute.xlu0 %3498
        %3500 = vrot.lane.b32.xlu0 %v2611, 23
        %v3501 = vpop.permute.xlu0 %3500
        %v3502 = vsel %vm700, %v3495, %v3497
        %v3503 = vsel %vm700, %v3497, %v3499
        %v3504 = vsel %vm700, %v3499, %v3501
        %v3509 = vsel %vm700, 0.0, %v3495
        %s3510 = sld [smem:[#allocation9 + $0x21]]
        %v3511 = vstv %s3510
        %v3512 = vmul.f32 %v3509, %v3511
        %v3513 = vmul.f32 %v3502, %v3511
        %v3514 = vmul.f32 %v3503, %v3511
        %v3515 = vmul.f32 %v3504, %v3511
        %v3516 = vadd.f32 %v3490, %v3512
        %v3517 = vadd.f32 %v3491, %v3513
        %v3518 = vadd.f32 %v3492, %v3514
        %v3519 = vadd.f32 %v3493, %v3515
        %3520 = vrot.lane.b32.xlu0 %v2547, 22
        %v3521 = vpop.permute.xlu0 %3520
        %3522 = vrot.lane.b32.xlu0 %v2554, 22
        %v3523 = vpop.permute.xlu0 %3522
        %3524 = vrot.lane.b32.xlu0 %v2561, 22
        %v3525 = vpop.permute.xlu0 %3524
        %3526 = vrot.lane.b32.xlu0 %v2570, 22
        %v3527 = vpop.permute.xlu0 %3526
        %v3528 = vsel %vm742, %v3521, %v3523
        %v3529 = vsel %vm742, %v3523, %v3525
        %v3530 = vsel %vm742, %v3525, %v3527
        %v3535 = vsel %vm742, 0.0, %v3521
        %s3536 = sld [smem:[#allocation9 + $0x22]]
        %v3537 = vstv %s3536
        %v3538 = vmul.f32 %v3535, %v3537
        %v3539 = vmul.f32 %v3528, %v3537
        %v3540 = vmul.f32 %v3529, %v3537
        %v3541 = vmul.f32 %v3530, %v3537
        %v3542 = vadd.f32 %v3516, %v3538
        %v3543 = vadd.f32 %v3517, %v3539
        %v3544 = vadd.f32 %v3518, %v3540
        %v3545 = vadd.f32 %v3519, %v3541
        %3546 = vrot.lane.b32.xlu0 %v2608, 22
        %v3547 = vpop.permute.xlu0 %3546
        %3548 = vrot.lane.b32.xlu0 %v2609, 22
        %v3549 = vpop.permute.xlu0 %3548
        %3550 = vrot.lane.b32.xlu0 %v2610, 22
        %v3551 = vpop.permute.xlu0 %3550
        %3552 = vrot.lane.b32.xlu0 %v2611, 22
        %v3553 = vpop.permute.xlu0 %3552
        %v3554 = vsel %vm742, %v3547, %v3549
        %v3555 = vsel %vm742, %v3549, %v3551
        %v3556 = vsel %vm742, %v3551, %v3553
        %v3561 = vsel %vm742, 0.0, %v3547
        %s3562 = sld [smem:[#allocation9 + $0x23]]
        %v3563 = vstv %s3562
        %v3564 = vmul.f32 %v3561, %v3563
        %v3565 = vmul.f32 %v3554, %v3563
        %v3566 = vmul.f32 %v3555, %v3563
        %v3567 = vmul.f32 %v3556, %v3563
        %v3568 = vadd.f32 %v3542, %v3564
        %v3569 = vadd.f32 %v3543, %v3565
        %v3570 = vadd.f32 %v3544, %v3566
        %v3571 = vadd.f32 %v3545, %v3567
        %3572 = vrot.lane.b32.xlu0 %v2547, 21
        %v3573 = vpop.permute.xlu0 %3572
        %3574 = vrot.lane.b32.xlu0 %v2554, 21
        %v3575 = vpop.permute.xlu0 %3574
        %3576 = vrot.lane.b32.xlu0 %v2561, 21
        %v3577 = vpop.permute.xlu0 %3576
        %3578 = vrot.lane.b32.xlu0 %v2570, 21
        %v3579 = vpop.permute.xlu0 %3578
        %v3580 = vsel %vm783, %v3573, %v3575
        %v3581 = vsel %vm783, %v3575, %v3577
        %v3582 = vsel %vm783, %v3577, %v3579
        %v3587 = vsel %vm783, 0.0, %v3573
        %s3588 = sld [smem:[#allocation9 + $0x24]]
        %v3589 = vstv %s3588
        %v3590 = vmul.f32 %v3587, %v3589
        %v3591 = vmul.f32 %v3580, %v3589
        %v3592 = vmul.f32 %v3581, %v3589
        %v3593 = vmul.f32 %v3582, %v3589
        %v3594 = vadd.f32 %v3568, %v3590
        %v3595 = vadd.f32 %v3569, %v3591
        %v3596 = vadd.f32 %v3570, %v3592
        %v3597 = vadd.f32 %v3571, %v3593
        %3598 = vrot.lane.b32.xlu0 %v2608, 21
        %v3599 = vpop.permute.xlu0 %3598
        %3600 = vrot.lane.b32.xlu0 %v2609, 21
        %v3601 = vpop.permute.xlu0 %3600
        %3602 = vrot.lane.b32.xlu0 %v2610, 21
        %v3603 = vpop.permute.xlu0 %3602
        %3604 = vrot.lane.b32.xlu0 %v2611, 21
        %v3605 = vpop.permute.xlu0 %3604
        %v3606 = vsel %vm783, %v3599, %v3601
        %v3607 = vsel %vm783, %v3601, %v3603
        %v3608 = vsel %vm783, %v3603, %v3605
        %v3613 = vsel %vm783, 0.0, %v3599
        %s3614 = sld [smem:[#allocation9 + $0x25]]
        %v3615 = vstv %s3614
        %v3616 = vmul.f32 %v3613, %v3615
        %v3617 = vmul.f32 %v3606, %v3615
        %v3618 = vmul.f32 %v3607, %v3615
        %v3619 = vmul.f32 %v3608, %v3615
        %v3620 = vadd.f32 %v3594, %v3616
        %v3621 = vadd.f32 %v3595, %v3617
        %v3622 = vadd.f32 %v3596, %v3618
        %v3623 = vadd.f32 %v3597, %v3619
        %3624 = vrot.lane.b32.xlu0 %v2547, 20
        %v3625 = vpop.permute.xlu0 %3624
        %3626 = vrot.lane.b32.xlu0 %v2554, 20
        %v3627 = vpop.permute.xlu0 %3626
        %3628 = vrot.lane.b32.xlu0 %v2561, 20
        %v3629 = vpop.permute.xlu0 %3628
        %3630 = vrot.lane.b32.xlu0 %v2570, 20
        %v3631 = vpop.permute.xlu0 %3630
        %vm3632 = vcmask 162816
        %v3633 = vsel %vm3632, %v3625, %v3627
        %v3634 = vsel %vm3632, %v3627, %v3629
        %v3635 = vsel %vm3632, %v3629, %v3631
        %v3640 = vsel %vm3632, 0.0, %v3625
        %s3641 = sld [smem:[#allocation9 + $0x26]]
        %v3642 = vstv %s3641
        %v3643 = vmul.f32 %v3640, %v3642
        %v3644 = vmul.f32 %v3633, %v3642
        %v3645 = vmul.f32 %v3634, %v3642
        %v3646 = vmul.f32 %v3635, %v3642
        %v3647 = vadd.f32 %v3620, %v3643
        %v3648 = vadd.f32 %v3621, %v3644
        %v3649 = vadd.f32 %v3622, %v3645
        %v3650 = vadd.f32 %v3623, %v3646
        %3651 = vrot.lane.b32.xlu0 %v2608, 20
        %v3652 = vpop.permute.xlu0 %3651
        %3653 = vrot.lane.b32.xlu0 %v2609, 20
        %v3654 = vpop.permute.xlu0 %3653
        %3655 = vrot.lane.b32.xlu0 %v2610, 20
        %v3656 = vpop.permute.xlu0 %3655
        %3657 = vrot.lane.b32.xlu0 %v2611, 20
        %v3658 = vpop.permute.xlu0 %3657
        %v3659 = vsel %vm3632, %v3652, %v3654
        %v3660 = vsel %vm3632, %v3654, %v3656
        %v3661 = vsel %vm3632, %v3656, %v3658
        %v3666 = vsel %vm3632, 0.0, %v3652
        %s3667 = sld [smem:[#allocation9 + $0x27]]
        %v3668 = vstv %s3667
        %v3669 = vmul.f32 %v3666, %v3668
        %v3670 = vmul.f32 %v3659, %v3668
        %v3671 = vmul.f32 %v3660, %v3668
        %v3672 = vmul.f32 %v3661, %v3668
        %v3673 = vadd.f32 %v3647, %v3669
        %v3674 = vadd.f32 %v3648, %v3670
        %v3675 = vadd.f32 %v3649, %v3671
        %v3676 = vadd.f32 %v3650, %v3672
        %3677 = vrot.lane.b32.xlu0 %v2547, 19
        %v3678 = vpop.permute.xlu0 %3677
        %3679 = vrot.lane.b32.xlu0 %v2554, 19
        %v3680 = vpop.permute.xlu0 %3679
        %3681 = vrot.lane.b32.xlu0 %v2561, 19
        %v3682 = vpop.permute.xlu0 %3681
        %3683 = vrot.lane.b32.xlu0 %v2570, 19
        %v3684 = vpop.permute.xlu0 %3683
        %vm3685 = vcmask 154624
        %v3686 = vsel %vm3685, %v3678, %v3680
        %v3687 = vsel %vm3685, %v3680, %v3682
        %v3688 = vsel %vm3685, %v3682, %v3684
        %v3693 = vsel %vm3685, 0.0, %v3678
        %s3694 = sld [smem:[#allocation9 + $0x28]]
        %v3695 = vstv %s3694
        %v3696 = vmul.f32 %v3693, %v3695
        %v3697 = vmul.f32 %v3686, %v3695
        %v3698 = vmul.f32 %v3687, %v3695
        %v3699 = vmul.f32 %v3688, %v3695
        %v3700 = vadd.f32 %v3673, %v3696
        %v3701 = vadd.f32 %v3674, %v3697
        %v3702 = vadd.f32 %v3675, %v3698
        %v3703 = vadd.f32 %v3676, %v3699
        %3704 = vrot.lane.b32.xlu0 %v2608, 19
        %v3705 = vpop.permute.xlu0 %3704
        %3706 = vrot.lane.b32.xlu0 %v2609, 19
        %v3707 = vpop.permute.xlu0 %3706
        %3708 = vrot.lane.b32.xlu0 %v2610, 19
        %v3709 = vpop.permute.xlu0 %3708
        %3710 = vrot.lane.b32.xlu0 %v2611, 19
        %v3711 = vpop.permute.xlu0 %3710
        %v3712 = vsel %vm3685, %v3705, %v3707
        %v3713 = vsel %vm3685, %v3707, %v3709
        %v3714 = vsel %vm3685, %v3709, %v3711
        %v3719 = vsel %vm3685, 0.0, %v3705
        %s3720 = sld [smem:[#allocation9 + $0x29]]
        %v3721 = vstv %s3720
        %v3722 = vmul.f32 %v3719, %v3721
        %v3723 = vmul.f32 %v3712, %v3721
        %v3724 = vmul.f32 %v3713, %v3721
        %v3725 = vmul.f32 %v3714, %v3721
        %v3726 = vadd.f32 %v3700, %v3722
        %v3727 = vadd.f32 %v3701, %v3723
        %v3728 = vadd.f32 %v3702, %v3724
        %v3729 = vadd.f32 %v3703, %v3725
        %3730 = vrot.lane.b32.xlu0 %v2547, 3
        %v3731 = vpop.permute.xlu0 %3730
        %3732 = vrot.lane.b32.xlu0 %v2554, 3
        %v3733 = vpop.permute.xlu0 %3732
        %3734 = vrot.lane.b32.xlu0 %v2561, 3
        %v3735 = vpop.permute.xlu0 %3734
        %3736 = vrot.lane.b32.xlu0 %v2570, 3
        %v3737 = vpop.permute.xlu0 %3736
        %vm3738 = vcmask 23552
        %v3739 = vsel %vm3738, %v3731, %v3733
        %v3740 = vsel %vm3738, %v3733, %v3735
        %v3741 = vsel %vm3738, %v3735, %v3737
        %v3746 = vsel %vm3738, 0.0, %v3731
        %s3747 = sld [smem:[#allocation9 + $0x2a]]
        %v3748 = vstv %s3747
        %v3749 = vmul.f32 %v3746, %v3748
        %v3750 = vmul.f32 %v3739, %v3748
        %v3751 = vmul.f32 %v3740, %v3748
        %v3752 = vmul.f32 %v3741, %v3748
        %v3753 = vadd.f32 %v3726, %v3749
        %v3754 = vadd.f32 %v3727, %v3750
        %v3755 = vadd.f32 %v3728, %v3751
        %v3756 = vadd.f32 %v3729, %v3752
        %3757 = vrot.lane.b32.xlu0 %v2608, 3
        %v3758 = vpop.permute.xlu0 %3757
        %3759 = vrot.lane.b32.xlu0 %v2609, 3
        %v3760 = vpop.permute.xlu0 %3759
        %3761 = vrot.lane.b32.xlu0 %v2610, 3
        %v3762 = vpop.permute.xlu0 %3761
        %3763 = vrot.lane.b32.xlu0 %v2611, 3
        %v3764 = vpop.permute.xlu0 %3763
        %v3765 = vsel %vm3738, %v3758, %v3760
        %v3766 = vsel %vm3738, %v3760, %v3762
        %v3767 = vsel %vm3738, %v3762, %v3764
        %v3772 = vsel %vm3738, 0.0, %v3758
        %s3773 = sld [smem:[#allocation9 + $0x2b]]
        %v3774 = vstv %s3773
        %v3775 = vmul.f32 %v3772, %v3774
        %v3776 = vmul.f32 %v3765, %v3774
        %v3777 = vmul.f32 %v3766, %v3774
        %v3778 = vmul.f32 %v3767, %v3774
        %v3779 = vadd.f32 %v3753, %v3775
        %v3780 = vadd.f32 %v3754, %v3776
        %v3781 = vadd.f32 %v3755, %v3777
        %v3782 = vadd.f32 %v3756, %v3778
        %3783 = vrot.lane.b32.xlu0 %v2547, 2
        %v3784 = vpop.permute.xlu0 %3783
        %3785 = vrot.lane.b32.xlu0 %v2554, 2
        %v3786 = vpop.permute.xlu0 %3785
        %3787 = vrot.lane.b32.xlu0 %v2561, 2
        %v3788 = vpop.permute.xlu0 %3787
        %3789 = vrot.lane.b32.xlu0 %v2570, 2
        %v3790 = vpop.permute.xlu0 %3789
        %v3791 = vsel %vm2033, %v3784, %v3786
        %v3792 = vsel %vm2033, %v3786, %v3788
        %v3793 = vsel %vm2033, %v3788, %v3790
        %v3798 = vsel %vm2033, 0.0, %v3784
        %s3799 = sld [smem:[#allocation9 + $0x2c]]
        %v3800 = vstv %s3799
        %v3801 = vmul.f32 %v3798, %v3800
        %v3802 = vmul.f32 %v3791, %v3800
        %v3803 = vmul.f32 %v3792, %v3800
        %v3804 = vmul.f32 %v3793, %v3800
        %v3805 = vadd.f32 %v3779, %v3801
        %v3806 = vadd.f32 %v3780, %v3802
        %v3807 = vadd.f32 %v3781, %v3803
        %v3808 = vadd.f32 %v3782, %v3804
        %3809 = vrot.lane.b32.xlu0 %v2608, 2
        %v3810 = vpop.permute.xlu0 %3809
        %3811 = vrot.lane.b32.xlu0 %v2609, 2
        %v3812 = vpop.permute.xlu0 %3811
        %3813 = vrot.lane.b32.xlu0 %v2610, 2
        %v3814 = vpop.permute.xlu0 %3813
        %3815 = vrot.lane.b32.xlu0 %v2611, 2
        %v3816 = vpop.permute.xlu0 %3815
        %v3817 = vsel %vm2033, %v3810, %v3812
        %v3818 = vsel %vm2033, %v3812, %v3814
        %v3819 = vsel %vm2033, %v3814, %v3816
        %v3824 = vsel %vm2033, 0.0, %v3810
        %s3825 = sld [smem:[#allocation9 + $0x2d]]
        %v3826 = vstv %s3825
        %v3827 = vmul.f32 %v3824, %v3826
        %v3828 = vmul.f32 %v3817, %v3826
        %v3829 = vmul.f32 %v3818, %v3826
        %v3830 = vmul.f32 %v3819, %v3826
        %v3831 = vadd.f32 %v3805, %v3827
        %v3832 = vadd.f32 %v3806, %v3828
        %v3833 = vadd.f32 %v3807, %v3829
        %v3834 = vadd.f32 %v3808, %v3830
        %3835 = vrot.lane.b32.xlu0 %v2547, 1
        %v3836 = vpop.permute.xlu0 %3835
        %3837 = vrot.lane.b32.xlu0 %v2554, 1
        %v3838 = vpop.permute.xlu0 %3837
        %3839 = vrot.lane.b32.xlu0 %v2561, 1
        %v3840 = vpop.permute.xlu0 %3839
        %3841 = vrot.lane.b32.xlu0 %v2570, 1
        %v3842 = vpop.permute.xlu0 %3841
        %v3843 = vsel %vm824, %v3836, %v3838
        %v3844 = vsel %vm824, %v3838, %v3840
        %v3845 = vsel %vm824, %v3840, %v3842
        %v3850 = vsel %vm824, 0.0, %v3836
        %s3851 = sld [smem:[#allocation9 + $0x2e]]
        %v3852 = vstv %s3851
        %v3853 = vmul.f32 %v3850, %v3852
        %v3854 = vmul.f32 %v3843, %v3852
        %v3855 = vmul.f32 %v3844, %v3852
        %v3856 = vmul.f32 %v3845, %v3852
        %v3857 = vadd.f32 %v3831, %v3853
        %v3858 = vadd.f32 %v3832, %v3854
        %v3859 = vadd.f32 %v3833, %v3855
        %v3860 = vadd.f32 %v3834, %v3856
        %3861 = vrot.lane.b32.xlu0 %v2608, 1
        %v3862 = vpop.permute.xlu0 %3861
        %3863 = vrot.lane.b32.xlu0 %v2609, 1
        %v3864 = vpop.permute.xlu0 %3863
        %3865 = vrot.lane.b32.xlu0 %v2610, 1
        %v3866 = vpop.permute.xlu0 %3865
        %3867 = vrot.lane.b32.xlu0 %v2611, 1
        %v3868 = vpop.permute.xlu0 %3867
        %v3869 = vsel %vm824, %v3862, %v3864
        %v3870 = vsel %vm824, %v3864, %v3866
        %v3871 = vsel %vm824, %v3866, %v3868
        %v3876 = vsel %vm824, 0.0, %v3862
        %s3877 = sld [smem:[#allocation9 + $0x2f]]
        %v3878 = vstv %s3877
        %v3879 = vmul.f32 %v3876, %v3878
        %v3880 = vmul.f32 %v3869, %v3878
        %v3881 = vmul.f32 %v3870, %v3878
        %v3882 = vmul.f32 %v3871, %v3878
        %v3883 = vadd.f32 %v3857, %v3879
        %v3884 = vadd.f32 %v3858, %v3880
        %v3885 = vadd.f32 %v3859, %v3881
        %v3886 = vadd.f32 %v3860, %v3882
        %s3887 = sld [smem:[#allocation9 + $0x30]]
        %v3888 = vstv %s3887
        %v3889 = vmul.f32 %v2547, %v3888
        %v3890 = vmul.f32 %v2554, %v3888
        %v3891 = vmul.f32 %v2561, %v3888
        %v3892 = vmul.f32 %v2570, %v3888
        %v3893 = vadd.f32 %v3883, %v3889
        %v3894 = vadd.f32 %v3884, %v3890
        %v3895 = vadd.f32 %v3885, %v3891
        %v3896 = vadd.f32 %v3886, %v3892
        %s3897 = sld [smem:[#allocation9 + $0x31]]
        %v3898 = vstv %s3897
        %v3899 = vmul.f32 %v2608, %v3898
        %v3900 = vmul.f32 %v2609, %v3898
        %v3901 = vmul.f32 %v2610, %v3898
        %v3902 = vmul.f32 %v2611, %v3898
        %v3903 = vadd.f32 %v3893, %v3899
        %v3904 = vadd.f32 %v3894, %v3900
        %v3905 = vadd.f32 %v3895, %v3901
        %v3906 = vadd.f32 %v3896, %v3902
        %3907 = vrot.lane.b32.xlu0 %v2547, 127
        %v3908 = vpop.permute.xlu0 %3907
        %3909 = vrot.lane.b32.xlu0 %v2554, 127
        %v3910 = vpop.permute.xlu0 %3909
        %3911 = vrot.lane.b32.xlu0 %v2561, 127
        %v3912 = vpop.permute.xlu0 %3911
        %3913 = vrot.lane.b32.xlu0 %v2570, 127
        %v3914 = vpop.permute.xlu0 %3913
        %v3915 = vsel %vm873, %v3908, %v3910
        %v3916 = vsel %vm873, %v3910, %v3912
        %v3917 = vsel %vm873, %v3912, %v3914
        %v3922 = vsel %vm888, %v3914, 0.0
        %s3923 = sld [smem:[#allocation9 + $0x32]]
        %v3924 = vstv %s3923
        %v3925 = vmul.f32 %v3915, %v3924
        %v3926 = vmul.f32 %v3916, %v3924
        %v3927 = vmul.f32 %v3917, %v3924
        %v3928 = vmul.f32 %v3922, %v3924
        %v3929 = vadd.f32 %v3903, %v3925
        %v3930 = vadd.f32 %v3904, %v3926
        %v3931 = vadd.f32 %v3905, %v3927
        %v3932 = vadd.f32 %v3906, %v3928
        %3933 = vrot.lane.b32.xlu0 %v2608, 127
        %v3934 = vpop.permute.xlu0 %3933
        %3935 = vrot.lane.b32.xlu0 %v2609, 127
        %v3936 = vpop.permute.xlu0 %3935
        %3937 = vrot.lane.b32.xlu0 %v2610, 127
        %v3938 = vpop.permute.xlu0 %3937
        %3939 = vrot.lane.b32.xlu0 %v2611, 127
        %v3940 = vpop.permute.xlu0 %3939
        %v3941 = vsel %vm873, %v3934, %v3936
        %v3942 = vsel %vm873, %v3936, %v3938
        %v3943 = vsel %vm873, %v3938, %v3940
        %v3948 = vsel %vm888, %v3940, 0.0
        %s3949 = sld [smem:[#allocation9 + $0x33]]
        %v3950 = vstv %s3949
        %v3951 = vmul.f32 %v3941, %v3950
        %v3952 = vmul.f32 %v3942, %v3950
        %v3953 = vmul.f32 %v3943, %v3950
        %v3954 = vmul.f32 %v3948, %v3950
        %v3955 = vadd.f32 %v3929, %v3951
        %v3956 = vadd.f32 %v3930, %v3952
        %v3957 = vadd.f32 %v3931, %v3953
        %v3958 = vadd.f32 %v3932, %v3954
        %3959 = vrot.lane.b32.xlu0 %v2547, 126
        %v3960 = vpop.permute.xlu0 %3959
        %3961 = vrot.lane.b32.xlu0 %v2554, 126
        %v3962 = vpop.permute.xlu0 %3961
        %3963 = vrot.lane.b32.xlu0 %v2561, 126
        %v3964 = vpop.permute.xlu0 %3963
        %3965 = vrot.lane.b32.xlu0 %v2570, 126
        %v3966 = vpop.permute.xlu0 %3965
        %vm3967 = vcmask 1031168
        %v3968 = vsel %vm3967, %v3960, %v3962
        %v3969 = vsel %vm3967, %v3962, %v3964
        %v3970 = vsel %vm3967, %v3964, %v3966
        %vm3975 = vcmask 801792
        %v3976 = vsel %vm3975, %v3966, 0.0
        %s3977 = sld [smem:[#allocation9 + $0x34]]
        %v3978 = vstv %s3977
        %v3979 = vmul.f32 %v3968, %v3978
        %v3980 = vmul.f32 %v3969, %v3978
        %v3981 = vmul.f32 %v3970, %v3978
        %v3982 = vmul.f32 %v3976, %v3978
        %v3983 = vadd.f32 %v3955, %v3979
        %v3984 = vadd.f32 %v3956, %v3980
        %v3985 = vadd.f32 %v3957, %v3981
        %v3986 = vadd.f32 %v3958, %v3982
        %3987 = vrot.lane.b32.xlu0 %v2608, 126
        %v3988 = vpop.permute.xlu0 %3987
        %3989 = vrot.lane.b32.xlu0 %v2609, 126
        %v3990 = vpop.permute.xlu0 %3989
        %3991 = vrot.lane.b32.xlu0 %v2610, 126
        %v3992 = vpop.permute.xlu0 %3991
        %3993 = vrot.lane.b32.xlu0 %v2611, 126
        %v3994 = vpop.permute.xlu0 %3993
        %v3995 = vsel %vm3967, %v3988, %v3990
        %v3996 = vsel %vm3967, %v3990, %v3992
        %v3997 = vsel %vm3967, %v3992, %v3994
        %v4002 = vsel %vm3975, %v3994, 0.0
        %s4003 = sld [smem:[#allocation9 + $0x35]]
        %v4004 = vstv %s4003
        %v4005 = vmul.f32 %v3995, %v4004
        %v4006 = vmul.f32 %v3996, %v4004
        %v4007 = vmul.f32 %v3997, %v4004
        %v4008 = vmul.f32 %v4002, %v4004
        %v4009 = vadd.f32 %v3983, %v4005
        %v4010 = vadd.f32 %v3984, %v4006
        %v4011 = vadd.f32 %v3985, %v4007
        %v4012 = vadd.f32 %v3986, %v4008
        %4013 = vrot.lane.b32.xlu0 %v2547, 125
        %v4014 = vpop.permute.xlu0 %4013
        %4015 = vrot.lane.b32.xlu0 %v2554, 125
        %v4016 = vpop.permute.xlu0 %4015
        %4017 = vrot.lane.b32.xlu0 %v2561, 125
        %v4018 = vpop.permute.xlu0 %4017
        %4019 = vrot.lane.b32.xlu0 %v2570, 125
        %v4020 = vpop.permute.xlu0 %4019
        %vm4021 = vcmask 1022976
        %v4022 = vsel %vm4021, %v4014, %v4016
        %v4023 = vsel %vm4021, %v4016, %v4018
        %v4024 = vsel %vm4021, %v4018, %v4020
        %vm4029 = vcmask 793600
        %v4030 = vsel %vm4029, %v4020, 0.0
        %s4031 = sld [smem:[#allocation9 + $0x36]]
        %v4032 = vstv %s4031
        %v4033 = vmul.f32 %v4022, %v4032
        %v4034 = vmul.f32 %v4023, %v4032
        %v4035 = vmul.f32 %v4024, %v4032
        %v4036 = vmul.f32 %v4030, %v4032
        %v4037 = vadd.f32 %v4009, %v4033
        %v4038 = vadd.f32 %v4010, %v4034
        %v4039 = vadd.f32 %v4011, %v4035
        %v4040 = vadd.f32 %v4012, %v4036
        %4041 = vrot.lane.b32.xlu0 %v2608, 125
        %v4042 = vpop.permute.xlu0 %4041
        %4043 = vrot.lane.b32.xlu0 %v2609, 125
        %v4044 = vpop.permute.xlu0 %4043
        %4045 = vrot.lane.b32.xlu0 %v2610, 125
        %v4046 = vpop.permute.xlu0 %4045
        %4047 = vrot.lane.b32.xlu0 %v2611, 125
        %v4048 = vpop.permute.xlu0 %4047
        %v4049 = vsel %vm4021, %v4042, %v4044
        %v4050 = vsel %vm4021, %v4044, %v4046
        %v4051 = vsel %vm4021, %v4046, %v4048
        %v4056 = vsel %vm4029, %v4048, 0.0
        %s4057 = sld [smem:[#allocation9 + $0x37]]
        %v4058 = vstv %s4057
        %v4059 = vmul.f32 %v4049, %v4058
        %v4060 = vmul.f32 %v4050, %v4058
        %v4061 = vmul.f32 %v4051, %v4058
        %v4062 = vmul.f32 %v4056, %v4058
        %v4063 = vadd.f32 %v4037, %v4059
        %v4064 = vadd.f32 %v4038, %v4060
        %v4065 = vadd.f32 %v4039, %v4061
        %v4066 = vadd.f32 %v4040, %v4062
        %4067 = vrot.lane.b32.xlu0 %v2547, 109
        %v4068 = vpop.permute.xlu0 %4067
        %4069 = vrot.lane.b32.xlu0 %v2554, 109
        %v4070 = vpop.permute.xlu0 %4069
        %4071 = vrot.lane.b32.xlu0 %v2561, 109
        %v4072 = vpop.permute.xlu0 %4071
        %4073 = vrot.lane.b32.xlu0 %v2570, 109
        %v4074 = vpop.permute.xlu0 %4073
        %vm4075 = vcmask 891904
        %v4076 = vsel %vm4075, %v4068, %v4070
        %v4077 = vsel %vm4075, %v4070, %v4072
        %v4078 = vsel %vm4075, %v4072, %v4074
        %vm4083 = vcmask 662528
        %v4084 = vsel %vm4083, %v4074, 0.0
        %s4085 = sld [smem:[#allocation9 + $0x38]]
        %v4086 = vstv %s4085
        %v4087 = vmul.f32 %v4076, %v4086
        %v4088 = vmul.f32 %v4077, %v4086
        %v4089 = vmul.f32 %v4078, %v4086
        %v4090 = vmul.f32 %v4084, %v4086
        %v4091 = vadd.f32 %v4063, %v4087
        %v4092 = vadd.f32 %v4064, %v4088
        %v4093 = vadd.f32 %v4065, %v4089
        %v4094 = vadd.f32 %v4066, %v4090
        %4095 = vrot.lane.b32.xlu0 %v2608, 109
        %v4096 = vpop.permute.xlu0 %4095
        %4097 = vrot.lane.b32.xlu0 %v2609, 109
        %v4098 = vpop.permute.xlu0 %4097
        %4099 = vrot.lane.b32.xlu0 %v2610, 109
        %v4100 = vpop.permute.xlu0 %4099
        %4101 = vrot.lane.b32.xlu0 %v2611, 109
        %v4102 = vpop.permute.xlu0 %4101
        %v4103 = vsel %vm4075, %v4096, %v4098
        %v4104 = vsel %vm4075, %v4098, %v4100
        %v4105 = vsel %vm4075, %v4100, %v4102
        %v4110 = vsel %vm4083, %v4102, 0.0
        %s4111 = sld [smem:[#allocation9 + $0x39]]
        %v4112 = vstv %s4111
        %v4113 = vmul.f32 %v4103, %v4112
        %v4114 = vmul.f32 %v4104, %v4112
        %v4115 = vmul.f32 %v4105, %v4112
        %v4116 = vmul.f32 %v4110, %v4112
        %v4117 = vadd.f32 %v4091, %v4113
        %v4118 = vadd.f32 %v4092, %v4114
        %v4119 = vadd.f32 %v4093, %v4115
        %v4120 = vadd.f32 %v4094, %v4116
        %4121 = vrot.lane.b32.xlu0 %v2547, 108
        %v4122 = vpop.permute.xlu0 %4121
        %4123 = vrot.lane.b32.xlu0 %v2554, 108
        %v4124 = vpop.permute.xlu0 %4123
        %4125 = vrot.lane.b32.xlu0 %v2561, 108
        %v4126 = vpop.permute.xlu0 %4125
        %4127 = vrot.lane.b32.xlu0 %v2570, 108
        %v4128 = vpop.permute.xlu0 %4127
        %vm4129 = vcmask 883712
        %v4130 = vsel %vm4129, %v4122, %v4124
        %v4131 = vsel %vm4129, %v4124, %v4126
        %v4132 = vsel %vm4129, %v4126, %v4128
        %vm4137 = vcmask 654336
        %v4138 = vsel %vm4137, %v4128, 0.0
        %s4139 = sld [smem:[#allocation9 + $0x3a]]
        %v4140 = vstv %s4139
        %v4141 = vmul.f32 %v4130, %v4140
        %v4142 = vmul.f32 %v4131, %v4140
        %v4143 = vmul.f32 %v4132, %v4140
        %v4144 = vmul.f32 %v4138, %v4140
        %v4145 = vadd.f32 %v4117, %v4141
        %v4146 = vadd.f32 %v4118, %v4142
        %v4147 = vadd.f32 %v4119, %v4143
        %v4148 = vadd.f32 %v4120, %v4144
        %4149 = vrot.lane.b32.xlu0 %v2608, 108
        %v4150 = vpop.permute.xlu0 %4149
        %4151 = vrot.lane.b32.xlu0 %v2609, 108
        %v4152 = vpop.permute.xlu0 %4151
        %4153 = vrot.lane.b32.xlu0 %v2610, 108
        %v4154 = vpop.permute.xlu0 %4153
        %4155 = vrot.lane.b32.xlu0 %v2611, 108
        %v4156 = vpop.permute.xlu0 %4155
        %v4157 = vsel %vm4129, %v4150, %v4152
        %v4158 = vsel %vm4129, %v4152, %v4154
        %v4159 = vsel %vm4129, %v4154, %v4156
        %v4164 = vsel %vm4137, %v4156, 0.0
        %s4165 = sld [smem:[#allocation9 + $0x3b]]
        %v4166 = vstv %s4165
        %v4167 = vmul.f32 %v4157, %v4166
        %v4168 = vmul.f32 %v4158, %v4166
        %v4169 = vmul.f32 %v4159, %v4166
        %v4170 = vmul.f32 %v4164, %v4166
        %v4171 = vadd.f32 %v4145, %v4167
        %v4172 = vadd.f32 %v4146, %v4168
        %v4173 = vadd.f32 %v4147, %v4169
        %v4174 = vadd.f32 %v4148, %v4170
        %4175 = vrot.lane.b32.xlu0 %v2547, 107
        %v4176 = vpop.permute.xlu0 %4175
        %4177 = vrot.lane.b32.xlu0 %v2554, 107
        %v4178 = vpop.permute.xlu0 %4177
        %4179 = vrot.lane.b32.xlu0 %v2561, 107
        %v4180 = vpop.permute.xlu0 %4179
        %4181 = vrot.lane.b32.xlu0 %v2570, 107
        %v4182 = vpop.permute.xlu0 %4181
        %v4183 = vsel %vm915, %v4176, %v4178
        %v4184 = vsel %vm915, %v4178, %v4180
        %v4185 = vsel %vm915, %v4180, %v4182
        %v4190 = vsel %vm930, %v4182, 0.0
        %s4191 = sld [smem:[#allocation9 + $0x3c]]
        %v4192 = vstv %s4191
        %v4193 = vmul.f32 %v4183, %v4192
        %v4194 = vmul.f32 %v4184, %v4192
        %v4195 = vmul.f32 %v4185, %v4192
        %v4196 = vmul.f32 %v4190, %v4192
        %v4197 = vadd.f32 %v4171, %v4193
        %v4198 = vadd.f32 %v4172, %v4194
        %v4199 = vadd.f32 %v4173, %v4195
        %v4200 = vadd.f32 %v4174, %v4196
        %4201 = vrot.lane.b32.xlu0 %v2608, 107
        %v4202 = vpop.permute.xlu0 %4201
        %4203 = vrot.lane.b32.xlu0 %v2609, 107
        %v4204 = vpop.permute.xlu0 %4203
        %4205 = vrot.lane.b32.xlu0 %v2610, 107
        %v4206 = vpop.permute.xlu0 %4205
        %4207 = vrot.lane.b32.xlu0 %v2611, 107
        %v4208 = vpop.permute.xlu0 %4207
        %v4209 = vsel %vm915, %v4202, %v4204
        %v4210 = vsel %vm915, %v4204, %v4206
        %v4211 = vsel %vm915, %v4206, %v4208
        %v4216 = vsel %vm930, %v4208, 0.0
        %s4217 = sld [smem:[#allocation9 + $0x3d]]
        %v4218 = vstv %s4217
        %v4219 = vmul.f32 %v4209, %v4218
        %v4220 = vmul.f32 %v4210, %v4218
        %v4221 = vmul.f32 %v4211, %v4218
        %v4222 = vmul.f32 %v4216, %v4218
        %v4223 = vadd.f32 %v4197, %v4219
        %v4224 = vadd.f32 %v4198, %v4220
        %v4225 = vadd.f32 %v4199, %v4221
        %v4226 = vadd.f32 %v4200, %v4222
        %4227 = vrot.lane.b32.xlu0 %v2547, 106
        %v4228 = vpop.permute.xlu0 %4227
        %4229 = vrot.lane.b32.xlu0 %v2554, 106
        %v4230 = vpop.permute.xlu0 %4229
        %4231 = vrot.lane.b32.xlu0 %v2561, 106
        %v4232 = vpop.permute.xlu0 %4231
        %4233 = vrot.lane.b32.xlu0 %v2570, 106
        %v4234 = vpop.permute.xlu0 %4233
        %v4235 = vsel %vm957, %v4228, %v4230
        %v4236 = vsel %vm957, %v4230, %v4232
        %v4237 = vsel %vm957, %v4232, %v4234
        %v4242 = vsel %vm972, %v4234, 0.0
        %s4243 = sld [smem:[#allocation9 + $0x3e]]
        %v4244 = vstv %s4243
        %v4245 = vmul.f32 %v4235, %v4244
        %v4246 = vmul.f32 %v4236, %v4244
        %v4247 = vmul.f32 %v4237, %v4244
        %v4248 = vmul.f32 %v4242, %v4244
        %v4249 = vadd.f32 %v4223, %v4245
        %v4250 = vadd.f32 %v4224, %v4246
        %v4251 = vadd.f32 %v4225, %v4247
        %v4252 = vadd.f32 %v4226, %v4248
        %4253 = vrot.lane.b32.xlu0 %v2608, 106
        %v4254 = vpop.permute.xlu0 %4253
        %4255 = vrot.lane.b32.xlu0 %v2609, 106
        %v4256 = vpop.permute.xlu0 %4255
        %4257 = vrot.lane.b32.xlu0 %v2610, 106
        %v4258 = vpop.permute.xlu0 %4257
        %4259 = vrot.lane.b32.xlu0 %v2611, 106
        %v4260 = vpop.permute.xlu0 %4259
        %v4261 = vsel %vm957, %v4254, %v4256
        %v4262 = vsel %vm957, %v4256, %v4258
        %v4263 = vsel %vm957, %v4258, %v4260
        %v4268 = vsel %vm972, %v4260, 0.0
        %s4269 = sld [smem:[#allocation9 + $0x3f]]
        %v4270 = vstv %s4269
        %v4271 = vmul.f32 %v4261, %v4270
        %v4272 = vmul.f32 %v4262, %v4270
        %v4273 = vmul.f32 %v4263, %v4270
        %v4274 = vmul.f32 %v4268, %v4270
        %v4275 = vadd.f32 %v4249, %v4271
        %v4276 = vadd.f32 %v4250, %v4272
        %v4277 = vadd.f32 %v4251, %v4273
        %v4278 = vadd.f32 %v4252, %v4274
        %4279 = vrot.lane.b32.xlu0 %v2547, 105
        %v4280 = vpop.permute.xlu0 %4279
        %4281 = vrot.lane.b32.xlu0 %v2554, 105
        %v4282 = vpop.permute.xlu0 %4281
        %4283 = vrot.lane.b32.xlu0 %v2561, 105
        %v4284 = vpop.permute.xlu0 %4283
        %4285 = vrot.lane.b32.xlu0 %v2570, 105
        %v4286 = vpop.permute.xlu0 %4285
        %v4287 = vsel %vm999, %v4280, %v4282
        %v4288 = vsel %vm999, %v4282, %v4284
        %v4289 = vsel %vm999, %v4284, %v4286
        %v4294 = vsel %vm1014, %v4286, 0.0
        %s4295 = sld [smem:[#allocation9 + $0x40]]
        %v4296 = vstv %s4295
        %v4297 = vmul.f32 %v4287, %v4296
        %v4298 = vmul.f32 %v4288, %v4296
        %v4299 = vmul.f32 %v4289, %v4296
        %v4300 = vmul.f32 %v4294, %v4296
        %v4301 = vadd.f32 %v4275, %v4297
        %v4302 = vadd.f32 %v4276, %v4298
        %v4303 = vadd.f32 %v4277, %v4299
        %v4304 = vadd.f32 %v4278, %v4300
        %4305 = vrot.lane.b32.xlu0 %v2608, 105
        %v4306 = vpop.permute.xlu0 %4305
        %4307 = vrot.lane.b32.xlu0 %v2609, 105
        %v4308 = vpop.permute.xlu0 %4307
        %4309 = vrot.lane.b32.xlu0 %v2610, 105
        %v4310 = vpop.permute.xlu0 %4309
        %4311 = vrot.lane.b32.xlu0 %v2611, 105
        %v4312 = vpop.permute.xlu0 %4311
        %v4313 = vsel %vm999, %v4306, %v4308
        %v4314 = vsel %vm999, %v4308, %v4310
        %v4315 = vsel %vm999, %v4310, %v4312
        %v4320 = vsel %vm1014, %v4312, 0.0
        %s4321 = sld [smem:[#allocation9 + $0x41]]
        %v4322 = vstv %s4321
        %v4323 = vmul.f32 %v4313, %v4322
        %v4324 = vmul.f32 %v4314, %v4322
        %v4325 = vmul.f32 %v4315, %v4322
        %v4326 = vmul.f32 %v4320, %v4322
        %v4327 = vadd.f32 %v4301, %v4323
        %v4328 = vadd.f32 %v4302, %v4324
        %v4329 = vadd.f32 %v4303, %v4325
        %v4330 = vadd.f32 %v4304, %v4326
        %4331 = vrot.lane.b32.xlu0 %v2547, 104
        %v4332 = vpop.permute.xlu0 %4331
        %4333 = vrot.lane.b32.xlu0 %v2554, 104
        %v4334 = vpop.permute.xlu0 %4333
        %4335 = vrot.lane.b32.xlu0 %v2561, 104
        %v4336 = vpop.permute.xlu0 %4335
        %4337 = vrot.lane.b32.xlu0 %v2570, 104
        %v4338 = vpop.permute.xlu0 %4337
        %vm4339 = vcmask 850944
        %v4340 = vsel %vm4339, %v4332, %v4334
        %v4341 = vsel %vm4339, %v4334, %v4336
        %v4342 = vsel %vm4339, %v4336, %v4338
        %vm4347 = vcmask 621568
        %v4348 = vsel %vm4347, %v4338, 0.0
        %s4349 = sld [smem:[#allocation9 + $0x42]]
        %v4350 = vstv %s4349
        %v4351 = vmul.f32 %v4340, %v4350
        %v4352 = vmul.f32 %v4341, %v4350
        %v4353 = vmul.f32 %v4342, %v4350
        %v4354 = vmul.f32 %v4348, %v4350
        %v4355 = vadd.f32 %v4327, %v4351
        %v4356 = vadd.f32 %v4328, %v4352
        %v4357 = vadd.f32 %v4329, %v4353
        %v4358 = vadd.f32 %v4330, %v4354
        %4359 = vrot.lane.b32.xlu0 %v2608, 104
        %v4360 = vpop.permute.xlu0 %4359
        %4361 = vrot.lane.b32.xlu0 %v2609, 104
        %v4362 = vpop.permute.xlu0 %4361
        %4363 = vrot.lane.b32.xlu0 %v2610, 104
        %v4364 = vpop.permute.xlu0 %4363
        %4365 = vrot.lane.b32.xlu0 %v2611, 104
        %v4366 = vpop.permute.xlu0 %4365
        %v4367 = vsel %vm4339, %v4360, %v4362
        %v4368 = vsel %vm4339, %v4362, %v4364
        %v4369 = vsel %vm4339, %v4364, %v4366
        %v4374 = vsel %vm4347, %v4366, 0.0
        %s4375 = sld [smem:[#allocation9 + $0x43]]
        %v4376 = vstv %s4375
        %v4377 = vmul.f32 %v4367, %v4376
        %v4378 = vmul.f32 %v4368, %v4376
        %v4379 = vmul.f32 %v4369, %v4376
        %v4380 = vmul.f32 %v4374, %v4376
        %v4381 = vadd.f32 %v4355, %v4377
        %v4382 = vadd.f32 %v4356, %v4378
        %v4383 = vadd.f32 %v4357, %v4379
        %v4384 = vadd.f32 %v4358, %v4380
        %4385 = vrot.lane.b32.xlu0 %v2547, 103
        %v4386 = vpop.permute.xlu0 %4385
        %4387 = vrot.lane.b32.xlu0 %v2554, 103
        %v4388 = vpop.permute.xlu0 %4387
        %4389 = vrot.lane.b32.xlu0 %v2561, 103
        %v4390 = vpop.permute.xlu0 %4389
        %4391 = vrot.lane.b32.xlu0 %v2570, 103
        %v4392 = vpop.permute.xlu0 %4391
        %vm4393 = vcmask 842752
        %v4394 = vsel %vm4393, %v4386, %v4388
        %v4395 = vsel %vm4393, %v4388, %v4390
        %v4396 = vsel %vm4393, %v4390, %v4392
        %vm4401 = vcmask 613376
        %v4402 = vsel %vm4401, %v4392, 0.0
        %s4403 = sld [smem:[#allocation9 + $0x44]]
        %v4404 = vstv %s4403
        %v4405 = vmul.f32 %v4394, %v4404
        %v4406 = vmul.f32 %v4395, %v4404
        %v4407 = vmul.f32 %v4396, %v4404
        %v4408 = vmul.f32 %v4402, %v4404
        %v4409 = vadd.f32 %v4381, %v4405
        %v4410 = vadd.f32 %v4382, %v4406
        %v4411 = vadd.f32 %v4383, %v4407
        %v4412 = vadd.f32 %v4384, %v4408
        %4413 = vrot.lane.b32.xlu0 %v2608, 103
        %v4414 = vpop.permute.xlu0 %4413
        %4415 = vrot.lane.b32.xlu0 %v2609, 103
        %v4416 = vpop.permute.xlu0 %4415
        %4417 = vrot.lane.b32.xlu0 %v2610, 103
        %v4418 = vpop.permute.xlu0 %4417
        %4419 = vrot.lane.b32.xlu0 %v2611, 103
        %v4420 = vpop.permute.xlu0 %4419
        %v4421 = vsel %vm4393, %v4414, %v4416
        %v4422 = vsel %vm4393, %v4416, %v4418
        %v4423 = vsel %vm4393, %v4418, %v4420
        %v4428 = vsel %vm4401, %v4420, 0.0
        %s4429 = sld [smem:[#allocation9 + $0x45]]
        %v4430 = vstv %s4429
        %v4431 = vmul.f32 %v4421, %v4430
        %v4432 = vmul.f32 %v4422, %v4430
        %v4433 = vmul.f32 %v4423, %v4430
        %v4434 = vmul.f32 %v4428, %v4430
        %v4435 = vadd.f32 %v4409, %v4431
        %v4436 = vadd.f32 %v4410, %v4432
        %v4437 = vadd.f32 %v4411, %v4433
        %v4438 = vadd.f32 %v4412, %v4434
        %4439 = vrot.lane.b32.xlu0 %v2547, 87
        %v4440 = vpop.permute.xlu0 %4439
        %4441 = vrot.lane.b32.xlu0 %v2554, 87
        %v4442 = vpop.permute.xlu0 %4441
        %4443 = vrot.lane.b32.xlu0 %v2561, 87
        %v4444 = vpop.permute.xlu0 %4443
        %4445 = vrot.lane.b32.xlu0 %v2570, 87
        %v4446 = vpop.permute.xlu0 %4445
        %vm4447 = vcmask 711680
        %v4448 = vsel %vm4447, %v4440, %v4442
        %v4449 = vsel %vm4447, %v4442, %v4444
        %v4450 = vsel %vm4447, %v4444, %v4446
        %vm4455 = vcmask 482304
        %v4456 = vsel %vm4455, %v4446, 0.0
        %s4457 = sld [smem:[#allocation9 + $0x46]]
        %v4458 = vstv %s4457
        %v4459 = vmul.f32 %v4448, %v4458
        %v4460 = vmul.f32 %v4449, %v4458
        %v4461 = vmul.f32 %v4450, %v4458
        %v4462 = vmul.f32 %v4456, %v4458
        %v4463 = vadd.f32 %v4435, %v4459
        %v4464 = vadd.f32 %v4436, %v4460
        %v4465 = vadd.f32 %v4437, %v4461
        %v4466 = vadd.f32 %v4438, %v4462
        %4467 = vrot.lane.b32.xlu0 %v2608, 87
        %v4468 = vpop.permute.xlu0 %4467
        %4469 = vrot.lane.b32.xlu0 %v2609, 87
        %v4470 = vpop.permute.xlu0 %4469
        %4471 = vrot.lane.b32.xlu0 %v2610, 87
        %v4472 = vpop.permute.xlu0 %4471
        %4473 = vrot.lane.b32.xlu0 %v2611, 87
        %v4474 = vpop.permute.xlu0 %4473
        %v4475 = vsel %vm4447, %v4468, %v4470
        %v4476 = vsel %vm4447, %v4470, %v4472
        %v4477 = vsel %vm4447, %v4472, %v4474
        %v4482 = vsel %vm4455, %v4474, 0.0
        %s4483 = sld [smem:[#allocation9 + $0x47]]
        %v4484 = vstv %s4483
        %v4485 = vmul.f32 %v4475, %v4484
        %v4486 = vmul.f32 %v4476, %v4484
        %v4487 = vmul.f32 %v4477, %v4484
        %v4488 = vmul.f32 %v4482, %v4484
        %v4489 = vadd.f32 %v4463, %v4485
        %v4490 = vadd.f32 %v4464, %v4486
        %v4491 = vadd.f32 %v4465, %v4487
        %v4492 = vadd.f32 %v4466, %v4488
        %4493 = vrot.lane.b32.xlu0 %v2547, 86
        %v4494 = vpop.permute.xlu0 %4493
        %4495 = vrot.lane.b32.xlu0 %v2554, 86
        %v4496 = vpop.permute.xlu0 %4495
        %4497 = vrot.lane.b32.xlu0 %v2561, 86
        %v4498 = vpop.permute.xlu0 %4497
        %4499 = vrot.lane.b32.xlu0 %v2570, 86
        %v4500 = vpop.permute.xlu0 %4499
        %vm4501 = vcmask 703488
        %v4502 = vsel %vm4501, %v4494, %v4496
        %v4503 = vsel %vm4501, %v4496, %v4498
        %v4504 = vsel %vm4501, %v4498, %v4500
        %vm4509 = vcmask 474112
        %v4510 = vsel %vm4509, %v4500, 0.0
        %s4511 = sld [smem:[#allocation9 + $0x48]]
        %v4512 = vstv %s4511
        %v4513 = vmul.f32 %v4502, %v4512
        %v4514 = vmul.f32 %v4503, %v4512
        %v4515 = vmul.f32 %v4504, %v4512
        %v4516 = vmul.f32 %v4510, %v4512
        %v4517 = vadd.f32 %v4489, %v4513
        %v4518 = vadd.f32 %v4490, %v4514
        %v4519 = vadd.f32 %v4491, %v4515
        %v4520 = vadd.f32 %v4492, %v4516
        %4521 = vrot.lane.b32.xlu0 %v2608, 86
        %v4522 = vpop.permute.xlu0 %4521
        %4523 = vrot.lane.b32.xlu0 %v2609, 86
        %v4524 = vpop.permute.xlu0 %4523
        %4525 = vrot.lane.b32.xlu0 %v2610, 86
        %v4526 = vpop.permute.xlu0 %4525
        %4527 = vrot.lane.b32.xlu0 %v2611, 86
        %v4528 = vpop.permute.xlu0 %4527
        %v4529 = vsel %vm4501, %v4522, %v4524
        %v4530 = vsel %vm4501, %v4524, %v4526
        %v4531 = vsel %vm4501, %v4526, %v4528
        %v4536 = vsel %vm4509, %v4528, 0.0
        %s4537 = sld [smem:[#allocation9 + $0x49]]
        %v4538 = vstv %s4537
        %v4539 = vmul.f32 %v4529, %v4538
        %v4540 = vmul.f32 %v4530, %v4538
        %v4541 = vmul.f32 %v4531, %v4538
        %v4542 = vmul.f32 %v4536, %v4538
        %v4543 = vadd.f32 %v4517, %v4539
        %v4544 = vadd.f32 %v4518, %v4540
        %v4545 = vadd.f32 %v4519, %v4541
        %v4546 = vadd.f32 %v4520, %v4542
        %4547 = vrot.lane.b32.xlu0 %v2547, 85
        %v4548 = vpop.permute.xlu0 %4547
        %4549 = vrot.lane.b32.xlu0 %v2554, 85
        %v4550 = vpop.permute.xlu0 %4549
        %4551 = vrot.lane.b32.xlu0 %v2561, 85
        %v4552 = vpop.permute.xlu0 %4551
        %4553 = vrot.lane.b32.xlu0 %v2570, 85
        %v4554 = vpop.permute.xlu0 %4553
        %vm4555 = vcmask 695296
        %v4556 = vsel %vm4555, %v4548, %v4550
        %v4557 = vsel %vm4555, %v4550, %v4552
        %v4558 = vsel %vm4555, %v4552, %v4554
        %vm4563 = vcmask 465920
        %v4564 = vsel %vm4563, %v4554, 0.0
        %s4565 = sld [smem:[#allocation9 + $0x4a]]
        %v4566 = vstv %s4565
        %v4567 = vmul.f32 %v4556, %v4566
        %v4568 = vmul.f32 %v4557, %v4566
        %v4569 = vmul.f32 %v4558, %v4566
        %v4570 = vmul.f32 %v4564, %v4566
        %v4571 = vadd.f32 %v4543, %v4567
        %v4572 = vadd.f32 %v4544, %v4568
        %v4573 = vadd.f32 %v4545, %v4569
        %v4574 = vadd.f32 %v4546, %v4570
        %4575 = vrot.lane.b32.xlu0 %v2608, 85
        %v4576 = vpop.permute.xlu0 %4575
        %4577 = vrot.lane.b32.xlu0 %v2609, 85
        %v4578 = vpop.permute.xlu0 %4577
        %4579 = vrot.lane.b32.xlu0 %v2610, 85
        %v4580 = vpop.permute.xlu0 %4579
        %4581 = vrot.lane.b32.xlu0 %v2611, 85
        %v4582 = vpop.permute.xlu0 %4581
        %v4583 = vsel %vm4555, %v4576, %v4578
        %v4584 = vsel %vm4555, %v4578, %v4580
        %v4585 = vsel %vm4555, %v4580, %v4582
        %v4590 = vsel %vm4563, %v4582, 0.0
        %s4591 = sld [smem:[#allocation9 + $0x4b]]
        %v4592 = vstv %s4591
        %v4593 = vmul.f32 %v4583, %v4592
        %v4594 = vmul.f32 %v4584, %v4592
        %v4595 = vmul.f32 %v4585, %v4592
        %v4596 = vmul.f32 %v4590, %v4592
        %v4597 = vadd.f32 %v4571, %v4593
        %v4598 = vadd.f32 %v4572, %v4594
        %v4599 = vadd.f32 %v4573, %v4595
        %v4600 = vadd.f32 %v4574, %v4596
        %4601 = vrot.lane.b32.xlu0 %v2547, 84
        %v4602 = vpop.permute.xlu0 %4601
        %4603 = vrot.lane.b32.xlu0 %v2554, 84
        %v4604 = vpop.permute.xlu0 %4603
        %4605 = vrot.lane.b32.xlu0 %v2561, 84
        %v4606 = vpop.permute.xlu0 %4605
        %4607 = vrot.lane.b32.xlu0 %v2570, 84
        %v4608 = vpop.permute.xlu0 %4607
        %vm4609 = vcmask 687104
        %v4610 = vsel %vm4609, %v4602, %v4604
        %v4611 = vsel %vm4609, %v4604, %v4606
        %v4612 = vsel %vm4609, %v4606, %v4608
        %vm4617 = vcmask 457728
        %v4618 = vsel %vm4617, %v4608, 0.0
        %s4619 = sld [smem:[#allocation9 + $0x4c]]
        %v4620 = vstv %s4619
        %v4621 = vmul.f32 %v4610, %v4620
        %v4622 = vmul.f32 %v4611, %v4620
        %v4623 = vmul.f32 %v4612, %v4620
        %v4624 = vmul.f32 %v4618, %v4620
        %v4625 = vadd.f32 %v4597, %v4621
        %v4626 = vadd.f32 %v4598, %v4622
        %v4627 = vadd.f32 %v4599, %v4623
        %v4628 = vadd.f32 %v4600, %v4624
        %4629 = vrot.lane.b32.xlu0 %v2608, 84
        %v4630 = vpop.permute.xlu0 %4629
        %4631 = vrot.lane.b32.xlu0 %v2609, 84
        %v4632 = vpop.permute.xlu0 %4631
        %4633 = vrot.lane.b32.xlu0 %v2610, 84
        %v4634 = vpop.permute.xlu0 %4633
        %4635 = vrot.lane.b32.xlu0 %v2611, 84
        %v4636 = vpop.permute.xlu0 %4635
        %v4637 = vsel %vm4609, %v4630, %v4632
        %v4638 = vsel %vm4609, %v4632, %v4634
        %v4639 = vsel %vm4609, %v4634, %v4636
        %v4644 = vsel %vm4617, %v4636, 0.0
        %s4645 = sld [smem:[#allocation9 + $0x4d]]
        %v4646 = vstv %s4645
        %v4647 = vmul.f32 %v4637, %v4646
        %v4648 = vmul.f32 %v4638, %v4646
        %v4649 = vmul.f32 %v4639, %v4646
        %v4650 = vmul.f32 %v4644, %v4646
        %v4651 = vadd.f32 %v4625, %v4647
        %v4652 = vadd.f32 %v4626, %v4648
        %v4653 = vadd.f32 %v4627, %v4649
        %v4654 = vadd.f32 %v4628, %v4650
        %4655 = vrot.lane.b32.xlu0 %v2547, 83
        %v4656 = vpop.permute.xlu0 %4655
        %4657 = vrot.lane.b32.xlu0 %v2554, 83
        %v4658 = vpop.permute.xlu0 %4657
        %4659 = vrot.lane.b32.xlu0 %v2561, 83
        %v4660 = vpop.permute.xlu0 %4659
        %4661 = vrot.lane.b32.xlu0 %v2570, 83
        %v4662 = vpop.permute.xlu0 %4661
        %vm4663 = vcmask 678912
        %v4664 = vsel %vm4663, %v4656, %v4658
        %v4665 = vsel %vm4663, %v4658, %v4660
        %v4666 = vsel %vm4663, %v4660, %v4662
        %vm4671 = vcmask 449536
        %v4672 = vsel %vm4671, %v4662, 0.0
        %s4673 = sld [smem:[#allocation9 + $0x4e]]
        %v4674 = vstv %s4673
        %v4675 = vmul.f32 %v4664, %v4674
        %v4676 = vmul.f32 %v4665, %v4674
        %v4677 = vmul.f32 %v4666, %v4674
        %v4678 = vmul.f32 %v4672, %v4674
        %v4679 = vadd.f32 %v4651, %v4675
        %v4680 = vadd.f32 %v4652, %v4676
        %v4681 = vadd.f32 %v4653, %v4677
        %v4682 = vadd.f32 %v4654, %v4678
        %4683 = vrot.lane.b32.xlu0 %v2608, 83
        %v4684 = vpop.permute.xlu0 %4683
        %4685 = vrot.lane.b32.xlu0 %v2609, 83
        %v4686 = vpop.permute.xlu0 %4685
        %4687 = vrot.lane.b32.xlu0 %v2610, 83
        %v4688 = vpop.permute.xlu0 %4687
        %4689 = vrot.lane.b32.xlu0 %v2611, 83
        %v4690 = vpop.permute.xlu0 %4689
        %v4691 = vsel %vm4663, %v4684, %v4686
        %v4692 = vsel %vm4663, %v4686, %v4688
        %v4693 = vsel %vm4663, %v4688, %v4690
        %v4698 = vsel %vm4671, %v4690, 0.0
        %s4699 = sld [smem:[#allocation9 + $0x4f]]
        %v4700 = vstv %s4699
        %v4701 = vmul.f32 %v4691, %v4700
        %v4702 = vmul.f32 %v4692, %v4700
        %v4703 = vmul.f32 %v4693, %v4700
        %v4704 = vmul.f32 %v4698, %v4700
        %v4705 = vadd.f32 %v4679, %v4701
        %v4706 = vadd.f32 %v4680, %v4702
        %v4707 = vadd.f32 %v4681, %v4703
        %v4708 = vadd.f32 %v4682, %v4704
        %4709 = vrot.lane.b32.xlu0 %v2547, 82
        %v4710 = vpop.permute.xlu0 %4709
        %4711 = vrot.lane.b32.xlu0 %v2554, 82
        %v4712 = vpop.permute.xlu0 %4711
        %4713 = vrot.lane.b32.xlu0 %v2561, 82
        %v4714 = vpop.permute.xlu0 %4713
        %4715 = vrot.lane.b32.xlu0 %v2570, 82
        %v4716 = vpop.permute.xlu0 %4715
        %vm4717 = vcmask 670720
        %v4718 = vsel %vm4717, %v4710, %v4712
        %v4719 = vsel %vm4717, %v4712, %v4714
        %v4720 = vsel %vm4717, %v4714, %v4716
        %vm4725 = vcmask 441344
        %v4726 = vsel %vm4725, %v4716, 0.0
        %s4727 = sld [smem:[#allocation9 + $0x50]]
        %v4728 = vstv %s4727
        %v4729 = vmul.f32 %v4718, %v4728
        %v4730 = vmul.f32 %v4719, %v4728
        %v4731 = vmul.f32 %v4720, %v4728
        %v4732 = vmul.f32 %v4726, %v4728
        %v4733 = vadd.f32 %v4705, %v4729
        %v4734 = vadd.f32 %v4706, %v4730
        %v4735 = vadd.f32 %v4707, %v4731
        %v4736 = vadd.f32 %v4708, %v4732
        %4737 = vrot.lane.b32.xlu0 %v2608, 82
        %v4738 = vpop.permute.xlu0 %4737
        %4739 = vrot.lane.b32.xlu0 %v2609, 82
        %v4740 = vpop.permute.xlu0 %4739
        %4741 = vrot.lane.b32.xlu0 %v2610, 82
        %v4742 = vpop.permute.xlu0 %4741
        %4743 = vrot.lane.b32.xlu0 %v2611, 82
        %v4744 = vpop.permute.xlu0 %4743
        %v4745 = vsel %vm4717, %v4738, %v4740
        %v4746 = vsel %vm4717, %v4740, %v4742
        %v4747 = vsel %vm4717, %v4742, %v4744
        %v4752 = vsel %vm4725, %v4744, 0.0
        %s4753 = sld [smem:[#allocation9 + $0x51]]
        %v4754 = vstv %s4753
        %v4755 = vmul.f32 %v4745, %v4754
        %v4756 = vmul.f32 %v4746, %v4754
        %v4757 = vmul.f32 %v4747, %v4754
        %v4758 = vmul.f32 %v4752, %v4754
        %v4759 = vadd.f32 %v4733, %v4755
        %v4760 = vadd.f32 %v4734, %v4756
        %v4761 = vadd.f32 %v4735, %v4757
        %v4762 = vadd.f32 %v4736, %v4758
        %4763 = vrot.lane.b32.xlu0 %v2547, 81
        %v4764 = vpop.permute.xlu0 %4763
        %4765 = vrot.lane.b32.xlu0 %v2554, 81
        %v4766 = vpop.permute.xlu0 %4765
        %4767 = vrot.lane.b32.xlu0 %v2561, 81
        %v4768 = vpop.permute.xlu0 %4767
        %4769 = vrot.lane.b32.xlu0 %v2570, 81
        %v4770 = vpop.permute.xlu0 %4769
        %v4771 = vsel %vm4083, %v4764, %v4766
        %v4772 = vsel %vm4083, %v4766, %v4768
        %v4773 = vsel %vm4083, %v4768, %v4770
        %vm4778 = vcmask 433152
        %v4779 = vsel %vm4778, %v4770, 0.0
        %s4780 = sld [smem:[#allocation9 + $0x52]]
        %v4781 = vstv %s4780
        %v4782 = vmul.f32 %v4771, %v4781
        %v4783 = vmul.f32 %v4772, %v4781
        %v4784 = vmul.f32 %v4773, %v4781
        %v4785 = vmul.f32 %v4779, %v4781
        %v4786 = vadd.f32 %v4759, %v4782
        %v4787 = vadd.f32 %v4760, %v4783
        %v4788 = vadd.f32 %v4761, %v4784
        %v4789 = vadd.f32 %v4762, %v4785
        %4790 = vrot.lane.b32.xlu0 %v2608, 81
        %v4791 = vpop.permute.xlu0 %4790
        %4792 = vrot.lane.b32.xlu0 %v2609, 81
        %v4793 = vpop.permute.xlu0 %4792
        %4794 = vrot.lane.b32.xlu0 %v2610, 81
        %v4795 = vpop.permute.xlu0 %4794
        %4796 = vrot.lane.b32.xlu0 %v2611, 81
        %v4797 = vpop.permute.xlu0 %4796
        %v4798 = vsel %vm4083, %v4791, %v4793
        %v4799 = vsel %vm4083, %v4793, %v4795
        %v4800 = vsel %vm4083, %v4795, %v4797
        %v4805 = vsel %vm4778, %v4797, 0.0
        %s4806 = sld [smem:[#allocation9 + $0x53]]
        %v4807 = vstv %s4806
        %v4808 = vmul.f32 %v4798, %v4807
        %v4809 = vmul.f32 %v4799, %v4807
        %v4810 = vmul.f32 %v4800, %v4807
        %v4811 = vmul.f32 %v4805, %v4807
        %v4812 = vadd.f32 %v4786, %v4808
        %v4813 = vadd.f32 %v4787, %v4809
        %v4814 = vadd.f32 %v4788, %v4810
        %v4815 = vadd.f32 %v4789, %v4811
        %vm4817 = vcmask 302080
        %v4818 = vsel %vm4817, %v2839, 0.0
        %s4819 = sld [smem:[#allocation9 + $0x54]]
        %v4820 = vstv %s4819
        %v4821 = vmul.f32 %v2841, %v4820
        %v4822 = vmul.f32 %v2842, %v4820
        %v4823 = vmul.f32 %v2843, %v4820
        %v4824 = vmul.f32 %v4818, %v4820
        %v4825 = vadd.f32 %v4812, %v4821
        %v4826 = vadd.f32 %v4813, %v4822
        %v4827 = vadd.f32 %v4814, %v4823
        %v4828 = vadd.f32 %v4815, %v4824
        %v4830 = vsel %vm4817, %v2866, 0.0
        %s4831 = sld [smem:[#allocation9 + $0x55]]
        %v4832 = vstv %s4831
        %v4833 = vmul.f32 %v2867, %v4832
        %v4834 = vmul.f32 %v2868, %v4832
        %v4835 = vmul.f32 %v2869, %v4832
        %v4836 = vmul.f32 %v4830, %v4832
        %v4837 = vadd.f32 %v4825, %v4833
        %v4838 = vadd.f32 %v4826, %v4834
        %v4839 = vadd.f32 %v4827, %v4835
        %v4840 = vadd.f32 %v4828, %v4836
        %vm4842 = vcmask 293888
        %v4843 = vsel %vm4842, %v2892, 0.0
        %s4844 = sld [smem:[#allocation9 + $0x56]]
        %v4845 = vstv %s4844
        %v4846 = vmul.f32 %v2894, %v4845
        %v4847 = vmul.f32 %v2895, %v4845
        %v4848 = vmul.f32 %v2896, %v4845
        %v4849 = vmul.f32 %v4843, %v4845
        %v4850 = vadd.f32 %v4837, %v4846
        %v4851 = vadd.f32 %v4838, %v4847
        %v4852 = vadd.f32 %v4839, %v4848
        %v4853 = vadd.f32 %v4840, %v4849
        %v4855 = vsel %vm4842, %v2919, 0.0
        %s4856 = sld [smem:[#allocation9 + $0x57]]
        %v4857 = vstv %s4856
        %v4858 = vmul.f32 %v2920, %v4857
        %v4859 = vmul.f32 %v2921, %v4857
        %v4860 = vmul.f32 %v2922, %v4857
        %v4861 = vmul.f32 %v4855, %v4857
        %v4862 = vadd.f32 %v4850, %v4858
        %v4863 = vadd.f32 %v4851, %v4859
        %v4864 = vadd.f32 %v4852, %v4860
        %v4865 = vadd.f32 %v4853, %v4861
        %vm4867 = vcmask 285696
        %v4868 = vsel %vm4867, %v2945, 0.0
        %s4869 = sld [smem:[#allocation9 + $0x58]]
        %v4870 = vstv %s4869
        %v4871 = vmul.f32 %v2947, %v4870
        %v4872 = vmul.f32 %v2948, %v4870
        %v4873 = vmul.f32 %v2949, %v4870
        %v4874 = vmul.f32 %v4868, %v4870
        %v4875 = vadd.f32 %v4862, %v4871
        %v4876 = vadd.f32 %v4863, %v4872
        %v4877 = vadd.f32 %v4864, %v4873
        %v4878 = vadd.f32 %v4865, %v4874
        %v4880 = vsel %vm4867, %v2972, 0.0
        %s4881 = sld [smem:[#allocation9 + $0x59]]
        %v4882 = vstv %s4881
        %v4883 = vmul.f32 %v2973, %v4882
        %v4884 = vmul.f32 %v2974, %v4882
        %v4885 = vmul.f32 %v2975, %v4882
        %v4886 = vmul.f32 %v4880, %v4882
        %v4887 = vadd.f32 %v4875, %v4883
        %v4888 = vadd.f32 %v4876, %v4884
        %v4889 = vadd.f32 %v4877, %v4885
        %v4890 = vadd.f32 %v4878, %v4886
        %4891 = vrot.lane.b32.xlu0 %v2547, 62
        %v4892 = vpop.permute.xlu0 %4891
        %4893 = vrot.lane.b32.xlu0 %v2554, 62
        %v4894 = vpop.permute.xlu0 %4893
        %4895 = vrot.lane.b32.xlu0 %v2561, 62
        %v4896 = vpop.permute.xlu0 %4895
        %4897 = vrot.lane.b32.xlu0 %v2570, 62
        %v4898 = vpop.permute.xlu0 %4897
        %vm4899 = vcmask 506880
        %v4900 = vsel %vm4899, %v4892, %v4894
        %v4901 = vsel %vm4899, %v4894, %v4896
        %v4902 = vsel %vm4899, %v4896, %v4898
        %vm4907 = vcmask 277504
        %v4908 = vsel %vm4907, %v4898, 0.0
        %s4909 = sld [smem:[#allocation9 + $0x5a]]
        %v4910 = vstv %s4909
        %v4911 = vmul.f32 %v4900, %v4910
        %v4912 = vmul.f32 %v4901, %v4910
        %v4913 = vmul.f32 %v4902, %v4910
        %v4914 = vmul.f32 %v4908, %v4910
        %v4915 = vadd.f32 %v4887, %v4911
        %v4916 = vadd.f32 %v4888, %v4912
        %v4917 = vadd.f32 %v4889, %v4913
        %v4918 = vadd.f32 %v4890, %v4914
        %4919 = vrot.lane.b32.xlu0 %v2608, 62
        %v4920 = vpop.permute.xlu0 %4919
        %4921 = vrot.lane.b32.xlu0 %v2609, 62
        %v4922 = vpop.permute.xlu0 %4921
        %4923 = vrot.lane.b32.xlu0 %v2610, 62
        %v4924 = vpop.permute.xlu0 %4923
        %4925 = vrot.lane.b32.xlu0 %v2611, 62
        %v4926 = vpop.permute.xlu0 %4925
        %v4927 = vsel %vm4899, %v4920, %v4922
        %v4928 = vsel %vm4899, %v4922, %v4924
        %v4929 = vsel %vm4899, %v4924, %v4926
        %v4934 = vsel %vm4907, %v4926, 0.0
        %s4935 = sld [smem:[#allocation9 + $0x5b]]
        %v4936 = vstv %s4935
        %v4937 = vmul.f32 %v4927, %v4936
        %v4938 = vmul.f32 %v4928, %v4936
        %v4939 = vmul.f32 %v4929, %v4936
        %v4940 = vmul.f32 %v4934, %v4936
        %v4941 = vadd.f32 %v4915, %v4937
        %v4942 = vadd.f32 %v4916, %v4938
        %v4943 = vadd.f32 %v4917, %v4939
        %v4944 = vadd.f32 %v4918, %v4940
        %4945 = vrot.lane.b32.xlu0 %v2547, 61
        %v4946 = vpop.permute.xlu0 %4945
        %4947 = vrot.lane.b32.xlu0 %v2554, 61
        %v4948 = vpop.permute.xlu0 %4947
        %4949 = vrot.lane.b32.xlu0 %v2561, 61
        %v4950 = vpop.permute.xlu0 %4949
        %4951 = vrot.lane.b32.xlu0 %v2570, 61
        %v4952 = vpop.permute.xlu0 %4951
        %vm4953 = vcmask 498688
        %v4954 = vsel %vm4953, %v4946, %v4948
        %v4955 = vsel %vm4953, %v4948, %v4950
        %v4956 = vsel %vm4953, %v4950, %v4952
        %vm4961 = vcmask 269312
        %v4962 = vsel %vm4961, %v4952, 0.0
        %s4963 = sld [smem:[#allocation9 + $0x5c]]
        %v4964 = vstv %s4963
        %v4965 = vmul.f32 %v4954, %v4964
        %v4966 = vmul.f32 %v4955, %v4964
        %v4967 = vmul.f32 %v4956, %v4964
        %v4968 = vmul.f32 %v4962, %v4964
        %v4969 = vadd.f32 %v4941, %v4965
        %v4970 = vadd.f32 %v4942, %v4966
        %v4971 = vadd.f32 %v4943, %v4967
        %v4972 = vadd.f32 %v4944, %v4968
        %4973 = vrot.lane.b32.xlu0 %v2608, 61
        %v4974 = vpop.permute.xlu0 %4973
        %4975 = vrot.lane.b32.xlu0 %v2609, 61
        %v4976 = vpop.permute.xlu0 %4975
        %4977 = vrot.lane.b32.xlu0 %v2610, 61
        %v4978 = vpop.permute.xlu0 %4977
        %4979 = vrot.lane.b32.xlu0 %v2611, 61
        %v4980 = vpop.permute.xlu0 %4979
        %v4981 = vsel %vm4953, %v4974, %v4976
        %v4982 = vsel %vm4953, %v4976, %v4978
        %v4983 = vsel %vm4953, %v4978, %v4980
        %v4988 = vsel %vm4961, %v4980, 0.0
        %s4989 = sld [smem:[#allocation9 + $0x5d]]
        %v4990 = vstv %s4989
        %v4991 = vmul.f32 %v4981, %v4990
        %v4992 = vmul.f32 %v4982, %v4990
        %v4993 = vmul.f32 %v4983, %v4990
        %v4994 = vmul.f32 %v4988, %v4990
        %v4995 = vadd.f32 %v4969, %v4991
        %v4996 = vadd.f32 %v4970, %v4992
        %v4997 = vadd.f32 %v4971, %v4993
        %v4998 = vadd.f32 %v4972, %v4994
        %4999 = vrot.lane.b32.xlu0 %v2547, 60
        %v5000 = vpop.permute.xlu0 %4999
        %5001 = vrot.lane.b32.xlu0 %v2554, 60
        %v5002 = vpop.permute.xlu0 %5001
        %5003 = vrot.lane.b32.xlu0 %v2561, 60
        %v5004 = vpop.permute.xlu0 %5003
        %5005 = vrot.lane.b32.xlu0 %v2570, 60
        %v5006 = vpop.permute.xlu0 %5005
        %vm5007 = vcmask 490496
        %v5008 = vsel %vm5007, %v5000, %v5002
        %v5009 = vsel %vm5007, %v5002, %v5004
        %v5010 = vsel %vm5007, %v5004, %v5006
        %vm5015 = vcmask 261120
        %v5016 = vsel %vm5015, %v5006, 0.0
        %s5017 = sld [smem:[#allocation9 + $0x5e]]
        %v5018 = vstv %s5017
        %v5019 = vmul.f32 %v5008, %v5018
        %v5020 = vmul.f32 %v5009, %v5018
        %v5021 = vmul.f32 %v5010, %v5018
        %v5022 = vmul.f32 %v5016, %v5018
        %v5023 = vadd.f32 %v4995, %v5019
        %v5024 = vadd.f32 %v4996, %v5020
        %v5025 = vadd.f32 %v4997, %v5021
        %v5026 = vadd.f32 %v4998, %v5022
        %5027 = vrot.lane.b32.xlu0 %v2608, 60
        %v5028 = vpop.permute.xlu0 %5027
        %5029 = vrot.lane.b32.xlu0 %v2609, 60
        %v5030 = vpop.permute.xlu0 %5029
        %5031 = vrot.lane.b32.xlu0 %v2610, 60
        %v5032 = vpop.permute.xlu0 %5031
        %5033 = vrot.lane.b32.xlu0 %v2611, 60
        %v5034 = vpop.permute.xlu0 %5033
        %v5035 = vsel %vm5007, %v5028, %v5030
        %v5036 = vsel %vm5007, %v5030, %v5032
        %v5037 = vsel %vm5007, %v5032, %v5034
        %v5042 = vsel %vm5015, %v5034, 0.0
        %s5043 = sld [smem:[#allocation9 + $0x5f]]
        %v5044 = vstv %s5043
        %v5045 = vmul.f32 %v5035, %v5044
        %v5046 = vmul.f32 %v5036, %v5044
        %v5047 = vmul.f32 %v5037, %v5044
        %v5048 = vmul.f32 %v5042, %v5044
        %v5049 = vadd.f32 %v5023, %v5045
        %v5050 = vadd.f32 %v5024, %v5046
        %v5051 = vadd.f32 %v5025, %v5047
        %v5052 = vadd.f32 %v5026, %v5048
        %5053 = vrot.lane.b32.xlu0 %v2547, 59
        %v5054 = vpop.permute.xlu0 %5053
        %5055 = vrot.lane.b32.xlu0 %v2554, 59
        %v5056 = vpop.permute.xlu0 %5055
        %5057 = vrot.lane.b32.xlu0 %v2561, 59
        %v5058 = vpop.permute.xlu0 %5057
        %5059 = vrot.lane.b32.xlu0 %v2570, 59
        %v5060 = vpop.permute.xlu0 %5059
        %v5061 = vsel %vm4455, %v5054, %v5056
        %v5062 = vsel %vm4455, %v5056, %v5058
        %v5063 = vsel %vm4455, %v5058, %v5060
        %vm5068 = vcmask 252928
        %v5069 = vsel %vm5068, %v5060, 0.0
        %s5070 = sld [smem:[#allocation9 + $0x60]]
        %v5071 = vstv %s5070
        %v5072 = vmul.f32 %v5061, %v5071
        %v5073 = vmul.f32 %v5062, %v5071
        %v5074 = vmul.f32 %v5063, %v5071
        %v5075 = vmul.f32 %v5069, %v5071
        %v5076 = vadd.f32 %v5049, %v5072
        %v5077 = vadd.f32 %v5050, %v5073
        %v5078 = vadd.f32 %v5051, %v5074
        %v5079 = vadd.f32 %v5052, %v5075
        %5080 = vrot.lane.b32.xlu0 %v2608, 59
        %v5081 = vpop.permute.xlu0 %5080
        %5082 = vrot.lane.b32.xlu0 %v2609, 59
        %v5083 = vpop.permute.xlu0 %5082
        %5084 = vrot.lane.b32.xlu0 %v2610, 59
        %v5085 = vpop.permute.xlu0 %5084
        %5086 = vrot.lane.b32.xlu0 %v2611, 59
        %v5087 = vpop.permute.xlu0 %5086
        %v5088 = vsel %vm4455, %v5081, %v5083
        %v5089 = vsel %vm4455, %v5083, %v5085
        %v5090 = vsel %vm4455, %v5085, %v5087
        %v5095 = vsel %vm5068, %v5087, 0.0
        %s5096 = sld [smem:[#allocation9 + $0x61]]
        %v5097 = vstv %s5096
        %v5098 = vmul.f32 %v5088, %v5097
        %v5099 = vmul.f32 %v5089, %v5097
        %v5100 = vmul.f32 %v5090, %v5097
        %v5101 = vmul.f32 %v5095, %v5097
        %v5102 = vadd.f32 %v5076, %v5098
        %v5103 = vadd.f32 %v5077, %v5099
        %v5104 = vadd.f32 %v5078, %v5100
        %v5105 = vadd.f32 %v5079, %v5101
        %s5106 = sld [smem:[#allocation4]]
        %v5107 = vstv %s5106
        %v5108 = vadd.f32 %v5102, %v5107
        %v5109 = vadd.f32 %v5103, %v5107
        %v5110 = vadd.f32 %v5104, %v5107
        %v5111 = vadd.f32 %v5105, %v5107
        %v5112 = vxor.u32 %v5108, 2147483648
        %v5113 = vxor.u32 %v5109, 2147483648
        %v5114 = vxor.u32 %v5110, 2147483648
        %v5115 = vxor.u32 %v5111, 2147483648
        %v5116 = vmul.f32 %v5112, 1.442695
        %v5117 = vpow.pop %v5116
        %v5118 = vmul.f32 %v5113, 1.442695
        %v5119 = vpow.pop %v5118
        %v5120 = vmul.f32 %v5114, 1.442695
        %v5121 = vpow.pop %v5120
        %v5122 = vmul.f32 %v5115, 1.442695
        %v5123 = vpow.pop %v5122
        %v5124 = vadd.f32 %v5117, 1.0
        %v5125 = vadd.f32 %v5119, 1.0
        %v5126 = vadd.f32 %v5121, 1.0
        %v5127 = vadd.f32 %v5123, 1.0
        %v5128 = vrcp.pop %v5124
        %v5129 = vmul.f32 %v5124, %v5128
        %v5130 = vsub.f32 1.0, %v5129
        %v5131 = vmul.f32 %v5128, %v5130
        %v5132 = vadd.f32 %v5128, %v5131
        %vm5133 = vweird.f32 %v5124
        %vm5134 = vweird.f32 %v5128
        %vm5135 = vmor %vm5133, %vm5134
        %v5136 = vsel %vm5135, %v5128, %v5132
        %v5137 = vand.u32 2147483647, %v5124
        %vm5138 = vcmp.eq.f32.partialorder %v5137, 8.507059e+37
        %v5139 = vand.u32 %v5124, 2147483648
        %v5140 = vor.u32 1.1754944e-38, %v5139
        %v5141 = vsel %vm5138, %v5140, %v5136
        %v5142 = vmul.f32 1.0, %v5141
        %v5143 = vrcp.pop %v5125
        %v5144 = vmul.f32 %v5125, %v5143
        %v5145 = vsub.f32 1.0, %v5144
        %v5146 = vmul.f32 %v5143, %v5145
        %v5147 = vadd.f32 %v5143, %v5146
        %vm5148 = vweird.f32 %v5125
        %vm5149 = vweird.f32 %v5143
        %vm5150 = vmor %vm5148, %vm5149
        %v5151 = vsel %vm5150, %v5143, %v5147
        %v5152 = vand.u32 2147483647, %v5125
        %vm5153 = vcmp.eq.f32.partialorder %v5152, 8.507059e+37
        %v5154 = vand.u32 %v5125, 2147483648
        %v5155 = vor.u32 1.1754944e-38, %v5154
        %v5156 = vsel %vm5153, %v5155, %v5151
        %v5157 = vmul.f32 1.0, %v5156
        %v5158 = vrcp.pop %v5126
        %v5159 = vmul.f32 %v5126, %v5158
        %v5160 = vsub.f32 1.0, %v5159
        %v5161 = vmul.f32 %v5158, %v5160
        %v5162 = vadd.f32 %v5158, %v5161
        %vm5163 = vweird.f32 %v5126
        %vm5164 = vweird.f32 %v5158
        %vm5165 = vmor %vm5163, %vm5164
        %v5166 = vsel %vm5165, %v5158, %v5162
        %v5167 = vand.u32 2147483647, %v5126
        %vm5168 = vcmp.eq.f32.partialorder %v5167, 8.507059e+37
        %v5169 = vand.u32 %v5126, 2147483648
        %v5170 = vor.u32 1.1754944e-38, %v5169
        %v5171 = vsel %vm5168, %v5170, %v5166
        %v5172 = vmul.f32 1.0, %v5171
        %v5173 = vrcp.pop %v5127
        %v5174 = vmul.f32 %v5127, %v5173
        %v5175 = vsub.f32 1.0, %v5174
        %v5176 = vmul.f32 %v5173, %v5175
        %v5177 = vadd.f32 %v5173, %v5176
        %vm5178 = vweird.f32 %v5127
        %vm5179 = vweird.f32 %v5173
        %vm5180 = vmor %vm5178, %vm5179
        %v5181 = vsel %vm5180, %v5173, %v5177
        %v5182 = vand.u32 2147483647, %v5127
        %vm5183 = vcmp.eq.f32.partialorder %v5182, 8.507059e+37
        %v5184 = vand.u32 %v5127, 2147483648
        %v5185 = vor.u32 1.1754944e-38, %v5184
        %v5186 = vsel %vm5183, %v5185, %v5181
        %v5187 = vmul.f32 1.0, %v5186
        %v5188 = vmul.f32 %v1808, %v1808
        %v5189 = vmul.f32 %v1854, %v1854
        %v5190 = vmul.f32 %v1900, %v1900
        %v5191 = vmul.f32 %v1946, %v1946
        %v5192 = vmul.f32 %v1811, %v1811
        %v5193 = vmul.f32 %v1857, %v1857
        %v5194 = vmul.f32 %v1903, %v1903
        %v5195 = vmul.f32 %v1949, %v1949
        %v5196 = vmul.f32 %v2089, %v2216
        %v5197 = vmul.f32 %v2104, %v2231
        %5199 = vset.pattern.permute.xlu0 0
        %5200 = vperm.xlu0 %5199, %v5196
        %v5201 = vpop.permute.xlu0 %5200
        %5204 = vset.pattern.permute.xlu0 0
        %5205 = vperm.xlu0 %5204, %v5197
        %v5206 = vpop.permute.xlu0 %5205
        %v5208 = vmul.f32 %v5188, %v5201
        %v5209 = vmul.f32 %v5189, %v5201
        %v5210 = vmul.f32 %v5190, %v5201
        %v5211 = vmul.f32 %v5191, %v5201
        %v5212 = vmul.f32 %v5192, %v5206
        %v5213 = vmul.f32 %v5193, %v5206
        %v5214 = vmul.f32 %v5194, %v5206
        %v5215 = vmul.f32 %v5195, %v5206
        %v5216 = vmul.f32 %v2477, %v5142
        %v5217 = vmul.f32 %v2492, %v5157
        %v5218 = vmul.f32 %v2507, %v5172
        %v5219 = vmul.f32 %v2522, %v5187
        %v5220 = vperm.slane %v5216, 0
        %v5221 = vperm.slane %v5217, 0
        %v5222 = vperm.slane %v5218, 0
        %v5223 = vperm.slane %v5219, 0
        %v5224 = vmul.f32 %v5208, %v5220
        %v5225 = vmul.f32 %v5209, %v5221
        %v5226 = vmul.f32 %v5210, %v5222
        %v5227 = vmul.f32 %v5211, %v5223
        %v5228 = vmul.f32 %v5212, %v5220
        %v5229 = vmul.f32 %v5213, %v5221
        %v5230 = vmul.f32 %v5214, %v5222
        %v5231 = vmul.f32 %v5215, %v5223
        %v5232 = vadd.f32 %v5224, %v667
        %v5233 = vadd.f32 %v5225, %v668
        %v5234 = vadd.f32 %v5226, %v669
        %v5235 = vadd.f32 %v5227, %v670
        %v5236 = vadd.f32 %v5228, %v671
        %v5237 = vadd.f32 %v5229, %v672
        %v5238 = vadd.f32 %v5230, %v673
        %v5239 = vadd.f32 %v5231, %v674
        %5240 = vst [vmem:[%s666] sm:$0xff] %v5232
        %5241 = vst [vmem:[%s666 + $0x8] sm:$0xff] %v5233
        %5242 = vst [vmem:[%s666 + $0x10] sm:$0xff] %v5234
        %5243 = vst.msk [vmem:[%s666 + $0x18] sm:$0xff] %vm720, %v5235
        %5244 = vst [vmem:[%s666 + $0x20] sm:$0xff] %v5236
        %5245 = vst [vmem:[%s666 + $0x28] sm:$0xff] %v5237
        %5246 = vst [vmem:[%s666 + $0x30] sm:$0xff] %v5238
        %5247 = vst.msk [vmem:[%s666 + $0x38] sm:$0xff] %vm720, %v5239
        %s5248 = sand.u32 %s474, 1
        %s5249 = scalar_lea.sflag [#allocation7], %s5248
        %s5250 = sand.u32 %s474, 1
        %s5251 = smul.addr %s5250, 64
        %s5252 = scalar_lea.vmem [#allocation10], %s5251
        // Predicated region
        $region109: #{tpu_custom_call.1} parent=99 // pred_check
          %p5253 = pneg %p484
        $region110: #{tpu_custom_call.1} parent=99 // pred_check_branch
          %5255 = sbr.rel (%p5253) target = $region112
        $region111: #{tpu_custom_call.1} parent=99 // pred_region
          %5257 = vsyncadd %s5249, 0
          %s5258 = smul.addr %s41, 8
          %s5259 = smul.addr %s5258, 8
          %s5260 = scalar_lea.hbm %s20, %s5259
          %s5261 = sshll.u32 %s5252, 4
          %s5262 = int_to_ptr.vmem [resolvable:$true] %s5261
          %s5263 = sshll.u32 %s5260, 4
          %s5264 = int_to_ptr.hbm [resolvable:$true] %s5263
          %5269 = dma.vmem_to_hbm [thread:$0]  %s5262, 1024, %s5264, %s5249, 512, 512, 32
        $region112: #{tpu_custom_call.1} parent=99 // pred_fallthru
          _
      $region100: #{tpu_custom_call.1} parent=5 // pred_fallthru
        _
      %p5270 = scmp.le.s32.totalorder 2, %s36
      // Predicated region
      $region113: #{tpu_custom_call.1} parent=5 // pred_check
        %p5271 = pneg %p5270
      $region114: #{tpu_custom_call.1} parent=5 // pred_check_branch
        %5273 = sbr.rel (%p5271) target = $region116
      $region115: #{tpu_custom_call.1} parent=5 // pred_region
        %s5274 = ssub.s32 %s36, 2
        // Predicated region
        $region117: #{tpu_custom_call.1} parent=115 // pred_check
          %p5275 = pneg %p490
        $region118: #{tpu_custom_call.1} parent=115 // pred_check_branch
          %5277 = sbr.rel (%p5275) target = $region120
        $region119: #{tpu_custom_call.1} parent=115 // pred_region
          %s5278 = sand.u32 %s475, 1
          %s5279 = scalar_lea.sflag [#allocation7], %s5278
          %s5280 = sand.u32 %s475, 1
          %s5281 = smul.addr %s5280, 64
          %s5282 = scalar_lea.vmem [#allocation10], %s5281
          %5284 = dma.done %s5279, 1024
        $region120: #{tpu_custom_call.1} parent=115 // pred_fallthru
          _
      $region116: #{tpu_custom_call.1} parent=5 // pred_fallthru
        _
    $region6: #{tpu_custom_call.1} parent=1 // loop_footer
      %s40 = sadd.s32 1, %s36
    $region7: #{tpu_custom_call.1} parent=1 // loop_footer_branch
      %35 = sbr.rel target = $region3
    $region8: #{tpu_custom_call.1} parent=1 // loop_exit
      _
    %5285 = vsyncpa [#allocation6], 1
    %s5286 = scalar_lea.sflag [#allocation6], 1
    %5287 = vsyncpa %s5286, 1
    %5288 = vsyncpa [#allocation7], 1
    %s5289 = scalar_lea.sflag [#allocation7], 1
    %5290 = vsyncpa %s5289, 1
    %5291 = vsyncpa [#allocation8], 1
    %s5292 = scalar_lea.sflag [#allocation8], 1
    %5293 = vsyncpa %s5292, 1

</llo_original>
